<compile_context>
chip_gen: v6e
topology: v6e:2x2x1
jax: 0.10.0
libtpu: 0.0.40
codegen_flags: <defaults>
</compile_context>

<pallas_src>
import jax
import jax.numpy as jnp
from jax.experimental import pallas as pl
from jax.experimental.pallas import tpu as pltpu


def make_textrnn_kernel(Bp, T, Hp):
    G4 = 4 * Hp  # per-direction gate width; each gate owns its own Hp lanes

    def kernel(x_ref, len_ref, w0_ref, wf_ref, wb_ref, whh_ref, bias_ref,
               wlinf_ref, wlinb_ref, blin_ref, out_ref,
               buf_f, buf_b, proj_ref):
        l = pl.program_id(0)
        lens = len_ref[...]                               # (Bp, 1) int32

        # ---- hoisted input projection: one big matmul per layer covering all
        # T timesteps and BOTH directions (+ bias). Only h @ W_hh^T remains on
        # the per-timestep critical path. Weights are bf16, accumulate in f32.
        @pl.when(l == 0)
        def _():
            proj_ref[...] = (jnp.dot(x_ref[...], w0_ref[...],
                                     preferred_element_type=jnp.float32)
                             + bias_ref[0])

        @pl.when(l > 0)
        def _():
            # split-weight form: pf@Wf + pb@Wb avoids a per-step lane concat.
            pf = buf_f[...].astype(jnp.bfloat16)
            pb = buf_b[...].astype(jnp.bfloat16)
            proj_ref[...] = (jnp.dot(pf, wf_ref[0],
                                     preferred_element_type=jnp.float32)
                             + jnp.dot(pb, wb_ref[0],
                                       preferred_element_type=jnp.float32)
                             + bias_ref[0])

        whh_f = whh_ref[0, 0]                             # (Hp, 4Hp) bf16
        whh_b = whh_ref[0, 1]

        def lstm_gates(g, c):
            # lane order (i, f, o, g): one contiguous sigmoid slice + one tanh.
            s = jax.nn.sigmoid(g[:, 0:3 * Hp])
            i_g = s[:, 0 * Hp:1 * Hp]
            f_g = s[:, 1 * Hp:2 * Hp]
            o_g = s[:, 2 * Hp:3 * Hp]
            g_g = jnp.tanh(g[:, 3 * Hp:4 * Hp])
            c_new = f_g * c + i_g * g_g
            h_new = o_g * jnp.tanh(c_new)
            return h_new, c_new

        # ---- interleaved fwd/bwd recurrence, fully unrolled (T static).
        # buf_f/buf_b can be overwritten in place: once proj is materialized,
        # the previous layer's outputs are dead.
        zeros = jnp.zeros((Bp, Hp), jnp.float32)
        hf, cf, hb, cb = zeros, zeros, zeros, zeros
        for t in range(T):
            tb = T - 1 - t
            gf = (proj_ref[pl.ds(t * Bp, Bp), pl.ds(0, G4)]
                  + jnp.dot(hf.astype(jnp.bfloat16), whh_f,
                            preferred_element_type=jnp.float32))
            gb = (proj_ref[pl.ds(tb * Bp, Bp), pl.ds(G4, G4)]
                  + jnp.dot(hb.astype(jnp.bfloat16), whh_b,
                            preferred_element_type=jnp.float32))
            hf_new, cf_new = lstm_gates(gf, cf)
            hb_new, cb_new = lstm_gates(gb, cb)
            mf = lens > t                                 # (Bp,1), broadcasts
            mb = lens > tb
            hf = jnp.where(mf, hf_new, hf)
            cf = jnp.where(mf, cf_new, cf)
            hb = jnp.where(mb, hb_new, hb)
            cb = jnp.where(mb, cb_new, cb)
            # full (8,128) tile stores (batch padded to 8, hidden to 128)
            buf_f[pl.ds(t * Bp, Bp), :] = jnp.where(mf, hf_new, 0.0)
            buf_b[pl.ds(tb * Bp, Bp), :] = jnp.where(mb, hb_new, 0.0)

        # classifier on the padded output at the last time index T-1,
        # split fwd/bwd weight halves (no lane concat); written on last layer.
        @pl.when(l == pl.num_programs(0) - 1)
        def _():
            featf = buf_f[pl.ds((T - 1) * Bp, Bp), :]     # (Bp, Hp) f32
            featb = buf_b[pl.ds((T - 1) * Bp, Bp), :]
            out_ref[...] = (jnp.dot(featf, wlinf_ref[...],
                                    preferred_element_type=jnp.float32)
                            + jnp.dot(featb, wlinb_ref[...],
                                      preferred_element_type=jnp.float32)
                            + blin_ref[...])

    return kernel


def init_params(key, V, E, H, L, OUT):
    ks = jax.random.split(key, 8)
    k_lstm = 1.0 / (H ** 0.5)
    k_lin = 1.0 / ((2 * H) ** 0.5)
    return dict(
        emb=jax.random.normal(ks[0], (V, E), jnp.float32) * 0.1,
        wih0=jax.random.uniform(ks[1], (2, 4 * H, E), jnp.float32, -k_lstm, k_lstm),
        wihr=jax.random.uniform(ks[2], (max(L - 1, 1), 2, 4 * H, 2 * H),
                                jnp.float32, -k_lstm, k_lstm),
        whh=jax.random.uniform(ks[3], (L, 2, 4 * H, H), jnp.float32, -k_lstm, k_lstm),
        bih=jax.random.uniform(ks[4], (L, 2, 4 * H), jnp.float32, -k_lstm, k_lstm),
        bhh=jax.random.uniform(ks[5], (L, 2, 4 * H), jnp.float32, -k_lstm, k_lstm),
        wlin=jax.random.uniform(ks[6], (OUT, 2 * H), jnp.float32, -k_lin, k_lin),
        blin=jax.random.uniform(ks[7], (OUT,), jnp.float32, -k_lin, k_lin),
    )


def prepare_weights(params, H, Hp, Ep, L, OUT, OUTp):
    """Host-side relayout: gate-reorder (i,f,g,o)->(i,f,o,g), pad H->Hp per
    gate, transpose, split fwd/bwd, cast matmul weights to bf16."""
    f32, bf16 = jnp.float32, jnp.bfloat16
    gate_order = (0, 1, 3, 2)   # torch (i,f,g,o) -> kernel (i,f,o,g)

    def pad_gate_rows(w):
        # (4H, K) -> (4Hp, K): gate slot s gets its H real rows at [s*Hp, s*Hp+H)
        K = w.shape[-1]
        out = jnp.zeros((4 * Hp, K), f32)
        for slot, g in enumerate(gate_order):
            out = out.at[slot * Hp:slot * Hp + H].set(w[g * H:(g + 1) * H])
        return out

    def pad_gate_vec(b):
        out = jnp.zeros((4 * Hp,), f32)
        for slot, g in enumerate(gate_order):
            out = out.at[slot * Hp:slot * Hp + H].set(b[g * H:(g + 1) * H])
        return out

    def to_cols(w, rows):
        wt = pad_gate_rows(w).T                           # (K, 4Hp)
        return jnp.pad(wt, ((0, rows - wt.shape[0]), (0, 0)))

    # layer 0 input weights, both directions side by side: (Ep, 8Hp) bf16
    w0 = jnp.concatenate([to_cols(params["wih0"][d], Ep) for d in range(2)],
                         axis=-1).astype(bf16)

    # layers 1..L-1, split into fwd-input / bwd-input halves: (L-1, Hp, 8Hp) bf16
    if L > 1:
        wf = jnp.stack([
            jnp.concatenate([to_cols(params["wihr"][l, d][:, :H], Hp)
                             for d in range(2)], axis=-1)
            for l in range(L - 1)]).astype(bf16)
        wb = jnp.stack([
            jnp.concatenate([to_cols(params["wihr"][l, d][:, H:], Hp)
                             for d in range(2)], axis=-1)
            for l in range(L - 1)]).astype(bf16)
    else:
        wf = jnp.zeros((1, Hp, 8 * Hp), bf16)
        wb = jnp.zeros((1, Hp, 8 * Hp), bf16)

    # hidden-to-hidden: (L, 2, Hp, 4Hp) bf16
    whh = jnp.stack([
        jnp.stack([to_cols(params["whh"][l, d], Hp) for d in range(2)])
        for l in range(L)]).astype(bf16)

    # combined bias (b_ih + b_hh), both directions: (L, 1, 8Hp) f32
    bias = jnp.stack([
        jnp.concatenate([pad_gate_vec(params["bih"][l, d] + params["bhh"][l, d])
                         for d in range(2)])[None]
        for l in range(L)])

    # classifier split into fwd / bwd halves, padded to (Hp, OUTp) f32
    wlin = params["wlin"].astype(f32)                     # (OUT, 2H)
    wlinf = jnp.pad(wlin[:, :H].T, ((0, Hp - H), (0, OUTp - OUT)))
    wlinb = jnp.pad(wlin[:, H:].T, ((0, Hp - H), (0, OUTp - OUT)))
    blin = jnp.pad(params["blin"].astype(f32).reshape(1, OUT),
                   ((0, 0), (0, OUTp - OUT)))
    return w0, wf, wb, whh, bias, wlinf, wlinb, blin


def textrnn_forward(tokens, contents_len, params, H, L, OUT, Hp=128):
    B, T = tokens.shape
    E = params["emb"].shape[1]
    Bp = max(8, ((B + 7) // 8) * 8)            # pad batch to full sublane tiles
    Ep = ((E + 127) // 128) * 128              # aligned K for layer-0 projection
    OUTp = ((OUT + 127) // 128) * 128          # lane-dense final store

    # Glue outside the kernel: embedding gather, time-major layout, padding.
    x = jnp.take(params["emb"], tokens, axis=0).astype(jnp.float32)   # (B, T, E)
    x = jnp.transpose(x, (1, 0, 2))                                   # (T, B, E)
    x = jnp.pad(x, ((0, 0), (0, Bp - B), (0, Ep - E)))                # (T, Bp, Ep)
    x = x.reshape(T * Bp, Ep).astype(jnp.bfloat16)
    lens = jnp.pad(contents_len.astype(jnp.int32), (0, Bp - B)).reshape(Bp, 1)

    w0, wf, wb, whh, bias, wlinf, wlinb, blin = prepare_weights(
        params, H, Hp, Ep, L, OUT, OUTp)

    kernel = make_textrnn_kernel(Bp, T, Hp)

    grid_spec = pltpu.PrefetchScalarGridSpec(
        num_scalar_prefetch=0,
        grid=(L,),
        in_specs=[
            # fetched once (constant block index across layers)
            pl.BlockSpec((T * Bp, Ep), lambda l: (0, 0)),            # x
            pl.BlockSpec((Bp, 1), lambda l: (0, 0)),                 # lens
            pl.BlockSpec((Ep, 8 * Hp), lambda l: (0, 0)),            # w0 (layer 0)
            # streamed per layer (prefetch of layer l+1 overlaps layer l compute)
            pl.BlockSpec((1, Hp, 8 * Hp),
                         lambda l: (jnp.maximum(l - 1, 0), 0, 0)),   # wf
            pl.BlockSpec((1, Hp, 8 * Hp),
                         lambda l: (jnp.maximum(l - 1, 0), 0, 0)),   # wb
            pl.BlockSpec((1, 2, Hp, 4 * Hp), lambda l: (l, 0, 0, 0)),  # whh
            pl.BlockSpec((1, 1, 8 * Hp), lambda l: (l, 0, 0)),       # bias
            # fetched once (used only on last layer)
            pl.BlockSpec((Hp, OUTp), lambda l: (0, 0)),              # wlinf
            pl.BlockSpec((Hp, OUTp), lambda l: (0, 0)),              # wlinb
            pl.BlockSpec((1, OUTp), lambda l: (0, 0)),               # blin
        ],
        out_specs=pl.BlockSpec((Bp, OUTp), lambda l: (0, 0)),
        scratch_shapes=[
            pltpu.VMEM((T * Bp, Hp), jnp.float32),       # fwd layer outputs
            pltpu.VMEM((T * Bp, Hp), jnp.float32),       # bwd layer outputs
            pltpu.VMEM((T * Bp, 8 * Hp), jnp.float32),   # hoisted projection
        ],
    )

    out = pl.pallas_call(
        kernel,
        out_shape=jax.ShapeDtypeStruct((Bp, OUTp), jnp.float32),
        grid_spec=grid_spec,
        compiler_params=pltpu.CompilerParams(
            dimension_semantics=("arbitrary",),
            vmem_limit_bytes=32 * 1024 * 1024),
    )(x, lens, w0, wf, wb, whh, bias, wlinf, wlinb, blin)
    return out[:B, :OUT]


if __name__ == "__main__":
    B, T, V = 4, 8, 32              # batch, max seq len, vocab
    E, H, L, OUT = 100, 10, 5, 3    # embedding_size, hidden_size, num_layers, output_size

    key = jax.random.PRNGKey(0)
    kp, kt = jax.random.split(key)
    params = init_params(kp, V, E, H, L, OUT)
    tokens = jax.random.randint(kt, (B, T), 0, V, dtype=jnp.int32)
    # pack_padded_sequence (enforce_sorted=True) requires descending lengths.
    contents_len = jnp.array([8, 6, 5, 3], dtype=jnp.int32)

    out = textrnn_forward(tokens, contents_len, params, H, L, OUT)
    out = jax.block_until_ready(out)
    assert out.shape == (B, OUT)
    print("KERNEL_OK")
</pallas_src>

<mosaic_0001>
module attributes {stable_mosaic.version = 11 : i64} {
  func.func @kernel(%arg0: i32, %arg1: memref<64x128xbf16, #tpu.memory_space<vmem>>, %arg2: memref<8x1xi32, #tpu.memory_space<vmem>>, %arg3: memref<128x1024xbf16, #tpu.memory_space<vmem>>, %arg4: memref<1x128x1024xbf16, #tpu.memory_space<vmem>>, %arg5: memref<1x128x1024xbf16, #tpu.memory_space<vmem>>, %arg6: memref<1x2x128x512xbf16, #tpu.memory_space<vmem>>, %arg7: memref<1x1x1024xf32, #tpu.memory_space<vmem>>, %arg8: memref<128x128xf32, #tpu.memory_space<vmem>>, %arg9: memref<128x128xf32, #tpu.memory_space<vmem>>, %arg10: memref<1x128xf32, #tpu.memory_space<vmem>>, %arg11: memref<8x128xf32, #tpu.memory_space<vmem>>, %arg12: memref<64x128xf32, #tpu.memory_space<vmem>>, %arg13: memref<64x128xf32, #tpu.memory_space<vmem>>, %arg14: memref<64x1024xf32, #tpu.memory_space<vmem>>) attributes {dimension_semantics = [#tpu.dimension_semantics<arbitrary>], iteration_bounds = array<i64: 5>, scalar_prefetch = 0 : i64, scratch_operands = 3 : i64, tpu.core_type = #tpu.core_type<tc>, window_params = [{pipeline_mode = #tpu.pipeline_mode<synchronous>, transform_indices = @transform_0, window_bounds = array<i64: 64, 128>}, {pipeline_mode = #tpu.pipeline_mode<synchronous>, transform_indices = @transform_1, window_bounds = array<i64: 8, 1>}, {pipeline_mode = #tpu.pipeline_mode<synchronous>, transform_indices = @transform_2, window_bounds = array<i64: 128, 1024>}, {transform_indices = @transform_3, window_bounds = array<i64: 1, 128, 1024>}, {transform_indices = @transform_4, window_bounds = array<i64: 1, 128, 1024>}, {transform_indices = @transform_5, window_bounds = array<i64: 1, 2, 128, 512>}, {transform_indices = @transform_6, window_bounds = array<i64: 1, 1, 1024>}, {pipeline_mode = #tpu.pipeline_mode<synchronous>, transform_indices = @transform_7, window_bounds = array<i64: 128, 128>}, {pipeline_mode = #tpu.pipeline_mode<synchronous>, transform_indices = @transform_8, window_bounds = array<i64: 128, 128>}, {pipeline_mode = #tpu.pipeline_mode<synchronous>, transform_indices = @transform_9, window_bounds = array<i64: 1, 128>}, {pipeline_mode = #tpu.pipeline_mode<synchronous>, transform_indices = @transform_10, window_bounds = array<i64: 8, 128>}]} {
    %c0 = arith.constant 0 : index
    %c0_0 = arith.constant 0 : index
    %0 = vector.load %arg2[%c0, %c0_0] : memref<8x1xi32, #tpu.memory_space<vmem>>, vector<8x1xi32>
    %c0_i32 = arith.constant 0 : i32
    %1 = arith.cmpi eq, %arg0, %c0_i32 : i32
    %2 = arith.extui %1 : i1 to i32
    %c0_i32_1 = arith.constant 0 : i32
    %3 = arith.cmpi ne, %2, %c0_i32_1 : i32
    scf.if %3 {
      %c0_126 = arith.constant 0 : index
      %c0_127 = arith.constant 0 : index
      %531 = vector.load %arg1[%c0_126, %c0_127] : memref<64x128xbf16, #tpu.memory_space<vmem>>, vector<64x128xbf16>
      %c0_128 = arith.constant 0 : index
      %c0_129 = arith.constant 0 : index
      %532 = vector.load %arg3[%c0_128, %c0_129] : memref<128x1024xbf16, #tpu.memory_space<vmem>>, vector<128x1024xbf16>
      %cst_130 = arith.constant dense<0.000000e+00> : vector<64x1024xf32>
      %533 = tpu.matmul %531, %532, %cst_130 {dimension_numbers = #tpu.dot_dimension_numbers<[1], [0], [0], [1], [0, 0, 1, 1], [], []>} : vector<64x128xbf16>, vector<128x1024xbf16>, vector<64x1024xf32> -> vector<64x1024xf32>
      %c0_131 = arith.constant 0 : index
      %c0_132 = arith.constant 0 : index
      %c0_133 = arith.constant 0 : index
      %534 = vector.load %arg7[%c0_131, %c0_132, %c0_133] : memref<1x1x1024xf32, #tpu.memory_space<vmem>>, vector<1x1x1024xf32>
      %535 = vector.shape_cast %534 : vector<1x1x1024xf32> to vector<1x1024xf32>
      %536 = vector.broadcast %535 : vector<1x1024xf32> to vector<64x1024xf32>
      %537 = arith.addf %533, %536 : vector<64x1024xf32>
      %c0_134 = arith.constant 0 : index
      %c0_135 = arith.constant 0 : index
      %538 = vector.load %arg14[%c0_134, %c0_135] : memref<64x1024xf32, #tpu.memory_space<vmem>>, vector<64x1024xf32>
      tpu.vector_store %arg14[%c0_134, %c0_135], %537 {strides = array<i32>} : memref<64x1024xf32, #tpu.memory_space<vmem>>, vector<64x1024xf32>,
    } else {
    }
    %c0_i32_2 = arith.constant 0 : i32
    %4 = arith.cmpi sgt, %arg0, %c0_i32_2 : i32
    %5 = arith.extui %4 : i1 to i32
    %c0_i32_3 = arith.constant 0 : i32
    %6 = arith.cmpi ne, %5, %c0_i32_3 : i32
    scf.if %6 {
      %c0_126 = arith.constant 0 : index
      %c0_127 = arith.constant 0 : index
      %531 = vector.load %arg12[%c0_126, %c0_127] : memref<64x128xf32, #tpu.memory_space<vmem>>, vector<64x128xf32>
      %532 = arith.truncf %531 : vector<64x128xf32> to vector<64x128xbf16>
      %c0_128 = arith.constant 0 : index
      %c0_129 = arith.constant 0 : index
      %533 = vector.load %arg13[%c0_128, %c0_129] : memref<64x128xf32, #tpu.memory_space<vmem>>, vector<64x128xf32>
      %534 = arith.truncf %533 : vector<64x128xf32> to vector<64x128xbf16>
      %c0_130 = arith.constant 0 : index
      %c0_131 = arith.constant 0 : index
      %c0_132 = arith.constant 0 : index
      %535 = vector.load %arg4[%c0_130, %c0_131, %c0_132] : memref<1x128x1024xbf16, #tpu.memory_space<vmem>>, vector<1x128x1024xbf16>
      %536 = vector.shape_cast %535 : vector<1x128x1024xbf16> to vector<128x1024xbf16>
      %cst_133 = arith.constant dense<0.000000e+00> : vector<64x1024xf32>
      %537 = tpu.matmul %532, %536, %cst_133 {dimension_numbers = #tpu.dot_dimension_numbers<[1], [0], [0], [1], [0, 0, 1, 1], [], []>} : vector<64x128xbf16>, vector<128x1024xbf16>, vector<64x1024xf32> -> vector<64x1024xf32>
      %c0_134 = arith.constant 0 : index
      %c0_135 = arith.constant 0 : index
      %c0_136 = arith.constant 0 : index
      %538 = vector.load %arg5[%c0_134, %c0_135, %c0_136] : memref<1x128x1024xbf16, #tpu.memory_space<vmem>>, vector<1x128x1024xbf16>
      %539 = vector.shape_cast %538 : vector<1x128x1024xbf16> to vector<128x1024xbf16>
      %cst_137 = arith.constant dense<0.000000e+00> : vector<64x1024xf32>
      %540 = tpu.matmul %534, %539, %cst_137 {dimension_numbers = #tpu.dot_dimension_numbers<[1], [0], [0], [1], [0, 0, 1, 1], [], []>} : vector<64x128xbf16>, vector<128x1024xbf16>, vector<64x1024xf32> -> vector<64x1024xf32>
      %541 = arith.addf %537, %540 : vector<64x1024xf32>
      %c0_138 = arith.constant 0 : index
      %c0_139 = arith.constant 0 : index
      %c0_140 = arith.constant 0 : index
      %542 = vector.load %arg7[%c0_138, %c0_139, %c0_140] : memref<1x1x1024xf32, #tpu.memory_space<vmem>>, vector<1x1x1024xf32>
      %543 = vector.shape_cast %542 : vector<1x1x1024xf32> to vector<1x1024xf32>
      %544 = vector.broadcast %543 : vector<1x1024xf32> to vector<64x1024xf32>
      %545 = arith.addf %541, %544 : vector<64x1024xf32>
      %c0_141 = arith.constant 0 : index
      %c0_142 = arith.constant 0 : index
      %546 = vector.load %arg14[%c0_141, %c0_142] : memref<64x1024xf32, #tpu.memory_space<vmem>>, vector<64x1024xf32>
      tpu.vector_store %arg14[%c0_141, %c0_142], %545 {strides = array<i32>} : memref<64x1024xf32, #tpu.memory_space<vmem>>, vector<64x1024xf32>,
    } else {
    }
    %c0_4 = arith.constant 0 : index
    %c0_5 = arith.constant 0 : index
    %c0_6 = arith.constant 0 : index
    %c0_7 = arith.constant 0 : index
    %7 = vector.load %arg6[%c0_4, %c0_5, %c0_6, %c0_7] : memref<1x2x128x512xbf16, #tpu.memory_space<vmem>>, vector<1x1x128x512xbf16>
    %8 = vector.shape_cast %7 : vector<1x1x128x512xbf16> to vector<128x512xbf16>
    %c0_8 = arith.constant 0 : index
    %c1 = arith.constant 1 : index
    %c0_9 = arith.constant 0 : index
    %c0_10 = arith.constant 0 : index
    %9 = vector.load %arg6[%c0_8, %c1, %c0_9, %c0_10] : memref<1x2x128x512xbf16, #tpu.memory_space<vmem>>, vector<1x1x128x512xbf16>
    %10 = vector.shape_cast %9 : vector<1x1x128x512xbf16> to vector<128x512xbf16>
    %cst = arith.constant 0.000000e+00 : f32
    %11 = vector.broadcast %cst : f32 to vector<8x128xf32>
    %c0_11 = arith.constant 0 : index
    %c0_12 = arith.constant 0 : index
    %12 = vector.load %arg14[%c0_11, %c0_12] : memref<64x1024xf32, #tpu.memory_space<vmem>>, vector<8x512xf32>
    %13 = arith.truncf %11 : vector<8x128xf32> to vector<8x128xbf16>
    %cst_13 = arith.constant dense<0.000000e+00> : vector<8x512xf32>
    %14 = tpu.matmul %13, %8, %cst_13 {dimension_numbers = #tpu.dot_dimension_numbers<[1], [0], [0], [1], [0, 0, 1, 1], [], []>} : vector<8x128xbf16>, vector<128x512xbf16>, vector<8x512xf32> -> vector<8x512xf32>
    %15 = arith.addf %12, %14 : vector<8x512xf32>
    %c56 = arith.constant 56 : index
    %c512 = arith.constant 512 : index
    %16 = vector.load %arg14[%c56, %c512] : memref<64x1024xf32, #tpu.memory_space<vmem>>, vector<8x512xf32>
    %17 = arith.truncf %11 : vector<8x128xf32> to vector<8x128xbf16>
    %cst_14 = arith.constant dense<0.000000e+00> : vector<8x512xf32>
    %18 = tpu.matmul %17, %10, %cst_14 {dimension_numbers = #tpu.dot_dimension_numbers<[1], [0], [0], [1], [0, 0, 1, 1], [], []>} : vector<8x128xbf16>, vector<128x512xbf16>, vector<8x512xf32> -> vector<8x512xf32>
    %19 = arith.addf %16, %18 : vector<8x512xf32>
    %20 = vector.extract_strided_slice %15 {offsets = [0, 0], sizes = [8, 384], strides = [1, 1]} : vector<8x512xf32> to vector<8x384xf32>
    %21 = arith.negf %20 : vector<8x384xf32>
    %22 = math.exp %21 : vector<8x384xf32>
    %cst_15 = arith.constant 1.000000e+00 : f32
    %23 = vector.broadcast %cst_15 : f32 to vector<8x384xf32>
    %24 = arith.addf %23, %22 : vector<8x384xf32>
    %25 = arith.divf %23, %24 : vector<8x384xf32>
    %26 = vector.extract_strided_slice %25 {offsets = [0, 0], sizes = [8, 128], strides = [1, 1]} : vector<8x384xf32> to vector<8x128xf32>
    %27 = vector.extract_strided_slice %25 {offsets = [0, 128], sizes = [8, 128], strides = [1, 1]} : vector<8x384xf32> to vector<8x128xf32>
    %28 = vector.extract_strided_slice %25 {offsets = [0, 256], sizes = [8, 128], strides = [1, 1]} : vector<8x384xf32> to vector<8x128xf32>
    %29 = vector.extract_strided_slice %15 {offsets = [0, 384], sizes = [8, 128], strides = [1, 1]} : vector<8x512xf32> to vector<8x128xf32>
    %30 = math.tanh %29 : vector<8x128xf32>
    %31 = arith.mulf %27, %11 : vector<8x128xf32>
    %32 = arith.mulf %26, %30 : vector<8x128xf32>
    %33 = arith.addf %31, %32 : vector<8x128xf32>
    %34 = math.tanh %33 : vector<8x128xf32>
    %35 = arith.mulf %28, %34 : vector<8x128xf32>
    %36 = vector.extract_strided_slice %19 {offsets = [0, 0], sizes = [8, 384], strides = [1, 1]} : vector<8x512xf32> to vector<8x384xf32>
    %37 = arith.negf %36 : vector<8x384xf32>
    %38 = math.exp %37 : vector<8x384xf32>
    %cst_16 = arith.constant 1.000000e+00 : f32
    %39 = vector.broadcast %cst_16 : f32 to vector<8x384xf32>
    %40 = arith.addf %39, %38 : vector<8x384xf32>
    %41 = arith.divf %39, %40 : vector<8x384xf32>
    %42 = vector.extract_strided_slice %41 {offsets = [0, 0], sizes = [8, 128], strides = [1, 1]} : vector<8x384xf32> to vector<8x128xf32>
    %43 = vector.extract_strided_slice %41 {offsets = [0, 128], sizes = [8, 128], strides = [1, 1]} : vector<8x384xf32> to vector<8x128xf32>
    %44 = vector.extract_strided_slice %41 {offsets = [0, 256], sizes = [8, 128], strides = [1, 1]} : vector<8x384xf32> to vector<8x128xf32>
    %45 = vector.extract_strided_slice %19 {offsets = [0, 384], sizes = [8, 128], strides = [1, 1]} : vector<8x512xf32> to vector<8x128xf32>
    %46 = math.tanh %45 : vector<8x128xf32>
    %47 = arith.mulf %43, %11 : vector<8x128xf32>
    %48 = arith.mulf %42, %46 : vector<8x128xf32>
    %49 = arith.addf %47, %48 : vector<8x128xf32>
    %50 = math.tanh %49 : vector<8x128xf32>
    %51 = arith.mulf %44, %50 : vector<8x128xf32>
    %c0_i32_17 = arith.constant 0 : i32
    %52 = vector.broadcast %c0_i32_17 : i32 to vector<8x1xi32>
    %53 = arith.cmpi sgt, %0, %52 : vector<8x1xi32>
    %c7_i32 = arith.constant 7 : i32
    %54 = vector.broadcast %c7_i32 : i32 to vector<8x1xi32>
    %55 = arith.cmpi sgt, %0, %54 : vector<8x1xi32>
    %56 = vector.shape_cast %53 : vector<8x1xi1> to vector<8x1xi1>
    %57 = vector.broadcast %56 : vector<8x1xi1> to vector<8x128xi1>
    %58 = arith.select %57, %35, %11 : vector<8x128xi1>, vector<8x128xf32>
    %59 = vector.shape_cast %53 : vector<8x1xi1> to vector<8x1xi1>
    %60 = vector.broadcast %59 : vector<8x1xi1> to vector<8x128xi1>
    %61 = arith.select %60, %33, %11 : vector<8x128xi1>, vector<8x128xf32>
    %62 = vector.shape_cast %55 : vector<8x1xi1> to vector<8x1xi1>
    %63 = vector.broadcast %62 : vector<8x1xi1> to vector<8x128xi1>
    %64 = arith.select %63, %51, %11 : vector<8x128xi1>, vector<8x128xf32>
    %65 = vector.shape_cast %55 : vector<8x1xi1> to vector<8x1xi1>
    %66 = vector.broadcast %65 : vector<8x1xi1> to vector<8x128xi1>
    %67 = arith.select %66, %49, %11 : vector<8x128xi1>, vector<8x128xf32>
    %cst_18 = arith.constant 0.000000e+00 : f32
    %68 = vector.shape_cast %53 : vector<8x1xi1> to vector<8x1xi1>
    %69 = vector.broadcast %68 : vector<8x1xi1> to vector<8x128xi1>
    %70 = vector.broadcast %cst_18 : f32 to vector<8x128xf32>
    %71 = arith.select %69, %35, %70 : vector<8x128xi1>, vector<8x128xf32>
    %c0_19 = arith.constant 0 : index
    %c0_20 = arith.constant 0 : index
    %72 = vector.load %arg12[%c0_19, %c0_20] : memref<64x128xf32, #tpu.memory_space<vmem>>, vector<8x128xf32>
    tpu.vector_store %arg12[%c0_19, %c0_20], %71 {strides = array<i32>} : memref<64x128xf32, #tpu.memory_space<vmem>>, vector<8x128xf32>,
    %cst_21 = arith.constant 0.000000e+00 : f32
    %73 = vector.shape_cast %55 : vector<8x1xi1> to vector<8x1xi1>
    %74 = vector.broadcast %73 : vector<8x1xi1> to vector<8x128xi1>
    %75 = vector.broadcast %cst_21 : f32 to vector<8x128xf32>
    %76 = arith.select %74, %51, %75 : vector<8x128xi1>, vector<8x128xf32>
    %c56_22 = arith.constant 56 : index
    %c0_23 = arith.constant 0 : index
    %77 = vector.load %arg13[%c56_22, %c0_23] : memref<64x128xf32, #tpu.memory_space<vmem>>, vector<8x128xf32>
    tpu.vector_store %arg13[%c56_22, %c0_23], %76 {strides = array<i32>} : memref<64x128xf32, #tpu.memory_space<vmem>>, vector<8x128xf32>,
    %c8 = arith.constant 8 : index
    %c0_24 = arith.constant 0 : index
    %78 = vector.load %arg14[%c8, %c0_24] : memref<64x1024xf32, #tpu.memory_space<vmem>>, vector<8x512xf32>
    %79 = arith.truncf %58 : vector<8x128xf32> to vector<8x128xbf16>
    %cst_25 = arith.constant dense<0.000000e+00> : vector<8x512xf32>
    %80 = tpu.matmul %79, %8, %cst_25 {dimension_numbers = #tpu.dot_dimension_numbers<[1], [0], [0], [1], [0, 0, 1, 1], [], []>} : vector<8x128xbf16>, vector<128x512xbf16>, vector<8x512xf32> -> vector<8x512xf32>
    %81 = arith.addf %78, %80 : vector<8x512xf32>
    %c48 = arith.constant 48 : index
    %c512_26 = arith.constant 512 : index
    %82 = vector.load %arg14[%c48, %c512_26] : memref<64x1024xf32, #tpu.memory_space<vmem>>, vector<8x512xf32>
    %83 = arith.truncf %64 : vector<8x128xf32> to vector<8x128xbf16>
    %cst_27 = arith.constant dense<0.000000e+00> : vector<8x512xf32>
    %84 = tpu.matmul %83, %10, %cst_27 {dimension_numbers = #tpu.dot_dimension_numbers<[1], [0], [0], [1], [0, 0, 1, 1], [], []>} : vector<8x128xbf16>, vector<128x512xbf16>, vector<8x512xf32> -> vector<8x512xf32>
    %85 = arith.addf %82, %84 : vector<8x512xf32>
    %86 = vector.extract_strided_slice %81 {offsets = [0, 0], sizes = [8, 384], strides = [1, 1]} : vector<8x512xf32> to vector<8x384xf32>
    %87 = arith.negf %86 : vector<8x384xf32>
    %88 = math.exp %87 : vector<8x384xf32>
    %cst_28 = arith.constant 1.000000e+00 : f32
    %89 = vector.broadcast %cst_28 : f32 to vector<8x384xf32>
    %90 = arith.addf %89, %88 : vector<8x384xf32>
    %91 = arith.divf %89, %90 : vector<8x384xf32>
    %92 = vector.extract_strided_slice %91 {offsets = [0, 0], sizes = [8, 128], strides = [1, 1]} : vector<8x384xf32> to vector<8x128xf32>
    %93 = vector.extract_strided_slice %91 {offsets = [0, 128], sizes = [8, 128], strides = [1, 1]} : vector<8x384xf32> to vector<8x128xf32>
    %94 = vector.extract_strided_slice %91 {offsets = [0, 256], sizes = [8, 128], strides = [1, 1]} : vector<8x384xf32> to vector<8x128xf32>
    %95 = vector.extract_strided_slice %81 {offsets = [0, 384], sizes = [8, 128], strides = [1, 1]} : vector<8x512xf32> to vector<8x128xf32>
    %96 = math.tanh %95 : vector<8x128xf32>
    %97 = arith.mulf %93, %61 : vector<8x128xf32>
    %98 = arith.mulf %92, %96 : vector<8x128xf32>
    %99 = arith.addf %97, %98 : vector<8x128xf32>
    %100 = math.tanh %99 : vector<8x128xf32>
    %101 = arith.mulf %94, %100 : vector<8x128xf32>
    %102 = vector.extract_strided_slice %85 {offsets = [0, 0], sizes = [8, 384], strides = [1, 1]} : vector<8x512xf32> to vector<8x384xf32>
    %103 = arith.negf %102 : vector<8x384xf32>
    %104 = math.exp %103 : vector<8x384xf32>
    %cst_29 = arith.constant 1.000000e+00 : f32
    %105 = vector.broadcast %cst_29 : f32 to vector<8x384xf32>
    %106 = arith.addf %105, %104 : vector<8x384xf32>
    %107 = arith.divf %105, %106 : vector<8x384xf32>
    %108 = vector.extract_strided_slice %107 {offsets = [0, 0], sizes = [8, 128], strides = [1, 1]} : vector<8x384xf32> to vector<8x128xf32>
    %109 = vector.extract_strided_slice %107 {offsets = [0, 128], sizes = [8, 128], strides = [1, 1]} : vector<8x384xf32> to vector<8x128xf32>
    %110 = vector.extract_strided_slice %107 {offsets = [0, 256], sizes = [8, 128], strides = [1, 1]} : vector<8x384xf32> to vector<8x128xf32>
    %111 = vector.extract_strided_slice %85 {offsets = [0, 384], sizes = [8, 128], strides = [1, 1]} : vector<8x512xf32> to vector<8x128xf32>
    %112 = math.tanh %111 : vector<8x128xf32>
    %113 = arith.mulf %109, %67 : vector<8x128xf32>
    %114 = arith.mulf %108, %112 : vector<8x128xf32>
    %115 = arith.addf %113, %114 : vector<8x128xf32>
    %116 = math.tanh %115 : vector<8x128xf32>
    %117 = arith.mulf %110, %116 : vector<8x128xf32>
    %c1_i32 = arith.constant 1 : i32
    %118 = vector.broadcast %c1_i32 : i32 to vector<8x1xi32>
    %119 = arith.cmpi sgt, %0, %118 : vector<8x1xi32>
    %c6_i32 = arith.constant 6 : i32
    %120 = vector.broadcast %c6_i32 : i32 to vector<8x1xi32>
    %121 = arith.cmpi sgt, %0, %120 : vector<8x1xi32>
    %122 = vector.shape_cast %119 : vector<8x1xi1> to vector<8x1xi1>
    %123 = vector.broadcast %122 : vector<8x1xi1> to vector<8x128xi1>
    %124 = arith.select %123, %101, %58 : vector<8x128xi1>, vector<8x128xf32>
    %125 = vector.shape_cast %119 : vector<8x1xi1> to vector<8x1xi1>
    %126 = vector.broadcast %125 : vector<8x1xi1> to vector<8x128xi1>
    %127 = arith.select %126, %99, %61 : vector<8x128xi1>, vector<8x128xf32>
    %128 = vector.shape_cast %121 : vector<8x1xi1> to vector<8x1xi1>
    %129 = vector.broadcast %128 : vector<8x1xi1> to vector<8x128xi1>
    %130 = arith.select %129, %117, %64 : vector<8x128xi1>, vector<8x128xf32>
    %131 = vector.shape_cast %121 : vector<8x1xi1> to vector<8x1xi1>
    %132 = vector.broadcast %131 : vector<8x1xi1> to vector<8x128xi1>
    %133 = arith.select %132, %115, %67 : vector<8x128xi1>, vector<8x128xf32>
    %cst_30 = arith.constant 0.000000e+00 : f32
    %134 = vector.shape_cast %119 : vector<8x1xi1> to vector<8x1xi1>
    %135 = vector.broadcast %134 : vector<8x1xi1> to vector<8x128xi1>
    %136 = vector.broadcast %cst_30 : f32 to vector<8x128xf32>
    %137 = arith.select %135, %101, %136 : vector<8x128xi1>, vector<8x128xf32>
    %c8_31 = arith.constant 8 : index
    %c0_32 = arith.constant 0 : index
    %138 = vector.load %arg12[%c8_31, %c0_32] : memref<64x128xf32, #tpu.memory_space<vmem>>, vector<8x128xf32>
    tpu.vector_store %arg12[%c8_31, %c0_32], %137 {strides = array<i32>} : memref<64x128xf32, #tpu.memory_space<vmem>>, vector<8x128xf32>,
    %cst_33 = arith.constant 0.000000e+00 : f32
    %139 = vector.shape_cast %121 : vector<8x1xi1> to vector<8x1xi1>
    %140 = vector.broadcast %139 : vector<8x1xi1> to vector<8x128xi1>
    %141 = vector.broadcast %cst_33 : f32 to vector<8x128xf32>
    %142 = arith.select %140, %117, %141 : vector<8x128xi1>, vector<8x128xf32>
    %c48_34 = arith.constant 48 : index
    %c0_35 = arith.constant 0 : index
    %143 = vector.load %arg13[%c48_34, %c0_35] : memref<64x128xf32, #tpu.memory_space<vmem>>, vector<8x128xf32>
    tpu.vector_store %arg13[%c48_34, %c0_35], %142 {strides = array<i32>} : memref<64x128xf32, #tpu.memory_space<vmem>>, vector<8x128xf32>,
    %c16 = arith.constant 16 : index
    %c0_36 = arith.constant 0 : index
    %144 = vector.load %arg14[%c16, %c0_36] : memref<64x1024xf32, #tpu.memory_space<vmem>>, vector<8x512xf32>
    %145 = arith.truncf %124 : vector<8x128xf32> to vector<8x128xbf16>
    %cst_37 = arith.constant dense<0.000000e+00> : vector<8x512xf32>
    %146 = tpu.matmul %145, %8, %cst_37 {dimension_numbers = #tpu.dot_dimension_numbers<[1], [0], [0], [1], [0, 0, 1, 1], [], []>} : vector<8x128xbf16>, vector<128x512xbf16>, vector<8x512xf32> -> vector<8x512xf32>
    %147 = arith.addf %144, %146 : vector<8x512xf32>
    %c40 = arith.constant 40 : index
    %c512_38 = arith.constant 512 : index
    %148 = vector.load %arg14[%c40, %c512_38] : memref<64x1024xf32, #tpu.memory_space<vmem>>, vector<8x512xf32>
    %149 = arith.truncf %130 : vector<8x128xf32> to vector<8x128xbf16>
    %cst_39 = arith.constant dense<0.000000e+00> : vector<8x512xf32>
    %150 = tpu.matmul %149, %10, %cst_39 {dimension_numbers = #tpu.dot_dimension_numbers<[1], [0], [0], [1], [0, 0, 1, 1], [], []>} : vector<8x128xbf16>, vector<128x512xbf16>, vector<8x512xf32> -> vector<8x512xf32>
    %151 = arith.addf %148, %150 : vector<8x512xf32>
    %152 = vector.extract_strided_slice %147 {offsets = [0, 0], sizes = [8, 384], strides = [1, 1]} : vector<8x512xf32> to vector<8x384xf32>
    %153 = arith.negf %152 : vector<8x384xf32>
    %154 = math.exp %153 : vector<8x384xf32>
    %cst_40 = arith.constant 1.000000e+00 : f32
    %155 = vector.broadcast %cst_40 : f32 to vector<8x384xf32>
    %156 = arith.addf %155, %154 : vector<8x384xf32>
    %157 = arith.divf %155, %156 : vector<8x384xf32>
    %158 = vector.extract_strided_slice %157 {offsets = [0, 0], sizes = [8, 128], strides = [1, 1]} : vector<8x384xf32> to vector<8x128xf32>
    %159 = vector.extract_strided_slice %157 {offsets = [0, 128], sizes = [8, 128], strides = [1, 1]} : vector<8x384xf32> to vector<8x128xf32>
    %160 = vector.extract_strided_slice %157 {offsets = [0, 256], sizes = [8, 128], strides = [1, 1]} : vector<8x384xf32> to vector<8x128xf32>
    %161 = vector.extract_strided_slice %147 {offsets = [0, 384], sizes = [8, 128], strides = [1, 1]} : vector<8x512xf32> to vector<8x128xf32>
    %162 = math.tanh %161 : vector<8x128xf32>
    %163 = arith.mulf %159, %127 : vector<8x128xf32>
    %164 = arith.mulf %158, %162 : vector<8x128xf32>
    %165 = arith.addf %163, %164 : vector<8x128xf32>
    %166 = math.tanh %165 : vector<8x128xf32>
    %167 = arith.mulf %160, %166 : vector<8x128xf32>
    %168 = vector.extract_strided_slice %151 {offsets = [0, 0], sizes = [8, 384], strides = [1, 1]} : vector<8x512xf32> to vector<8x384xf32>
    %169 = arith.negf %168 : vector<8x384xf32>
    %170 = math.exp %169 : vector<8x384xf32>
    %cst_41 = arith.constant 1.000000e+00 : f32
    %171 = vector.broadcast %cst_41 : f32 to vector<8x384xf32>
    %172 = arith.addf %171, %170 : vector<8x384xf32>
    %173 = arith.divf %171, %172 : vector<8x384xf32>
    %174 = vector.extract_strided_slice %173 {offsets = [0, 0], sizes = [8, 128], strides = [1, 1]} : vector<8x384xf32> to vector<8x128xf32>
    %175 = vector.extract_strided_slice %173 {offsets = [0, 128], sizes = [8, 128], strides = [1, 1]} : vector<8x384xf32> to vector<8x128xf32>
    %176 = vector.extract_strided_slice %173 {offsets = [0, 256], sizes = [8, 128], strides = [1, 1]} : vector<8x384xf32> to vector<8x128xf32>
    %177 = vector.extract_strided_slice %151 {offsets = [0, 384], sizes = [8, 128], strides = [1, 1]} : vector<8x512xf32> to vector<8x128xf32>
    %178 = math.tanh %177 : vector<8x128xf32>
    %179 = arith.mulf %175, %133 : vector<8x128xf32>
    %180 = arith.mulf %174, %178 : vector<8x128xf32>
    %181 = arith.addf %179, %180 : vector<8x128xf32>
    %182 = math.tanh %181 : vector<8x128xf32>
    %183 = arith.mulf %176, %182 : vector<8x128xf32>
    %c2_i32 = arith.constant 2 : i32
    %184 = vector.broadcast %c2_i32 : i32 to vector<8x1xi32>
    %185 = arith.cmpi sgt, %0, %184 : vector<8x1xi32>
    %c5_i32 = arith.constant 5 : i32
    %186 = vector.broadcast %c5_i32 : i32 to vector<8x1xi32>
    %187 = arith.cmpi sgt, %0, %186 : vector<8x1xi32>
    %188 = vector.shape_cast %185 : vector<8x1xi1> to vector<8x1xi1>
    %189 = vector.broadcast %188 : vector<8x1xi1> to vector<8x128xi1>
    %190 = arith.select %189, %167, %124 : vector<8x128xi1>, vector<8x128xf32>
    %191 = vector.shape_cast %185 : vector<8x1xi1> to vector<8x1xi1>
    %192 = vector.broadcast %191 : vector<8x1xi1> to vector<8x128xi1>
    %193 = arith.select %192, %165, %127 : vector<8x128xi1>, vector<8x128xf32>
    %194 = vector.shape_cast %187 : vector<8x1xi1> to vector<8x1xi1>
    %195 = vector.broadcast %194 : vector<8x1xi1> to vector<8x128xi1>
    %196 = arith.select %195, %183, %130 : vector<8x128xi1>, vector<8x128xf32>
    %197 = vector.shape_cast %187 : vector<8x1xi1> to vector<8x1xi1>
    %198 = vector.broadcast %197 : vector<8x1xi1> to vector<8x128xi1>
    %199 = arith.select %198, %181, %133 : vector<8x128xi1>, vector<8x128xf32>
    %cst_42 = arith.constant 0.000000e+00 : f32
    %200 = vector.shape_cast %185 : vector<8x1xi1> to vector<8x1xi1>
    %201 = vector.broadcast %200 : vector<8x1xi1> to vector<8x128xi1>
    %202 = vector.broadcast %cst_42 : f32 to vector<8x128xf32>
    %203 = arith.select %201, %167, %202 : vector<8x128xi1>, vector<8x128xf32>
    %c16_43 = arith.constant 16 : index
    %c0_44 = arith.constant 0 : index
    %204 = vector.load %arg12[%c16_43, %c0_44] : memref<64x128xf32, #tpu.memory_space<vmem>>, vector<8x128xf32>
    tpu.vector_store %arg12[%c16_43, %c0_44], %203 {strides = array<i32>} : memref<64x128xf32, #tpu.memory_space<vmem>>, vector<8x128xf32>,
    %cst_45 = arith.constant 0.000000e+00 : f32
    %205 = vector.shape_cast %187 : vector<8x1xi1> to vector<8x1xi1>
    %206 = vector.broadcast %205 : vector<8x1xi1> to vector<8x128xi1>
    %207 = vector.broadcast %cst_45 : f32 to vector<8x128xf32>
    %208 = arith.select %206, %183, %207 : vector<8x128xi1>, vector<8x128xf32>
    %c40_46 = arith.constant 40 : index
    %c0_47 = arith.constant 0 : index
    %209 = vector.load %arg13[%c40_46, %c0_47] : memref<64x128xf32, #tpu.memory_space<vmem>>, vector<8x128xf32>
    tpu.vector_store %arg13[%c40_46, %c0_47], %208 {strides = array<i32>} : memref<64x128xf32, #tpu.memory_space<vmem>>, vector<8x128xf32>,
    %c24 = arith.constant 24 : index
    %c0_48 = arith.constant 0 : index
    %210 = vector.load %arg14[%c24, %c0_48] : memref<64x1024xf32, #tpu.memory_space<vmem>>, vector<8x512xf32>
    %211 = arith.truncf %190 : vector<8x128xf32> to vector<8x128xbf16>
    %cst_49 = arith.constant dense<0.000000e+00> : vector<8x512xf32>
    %212 = tpu.matmul %211, %8, %cst_49 {dimension_numbers = #tpu.dot_dimension_numbers<[1], [0], [0], [1], [0, 0, 1, 1], [], []>} : vector<8x128xbf16>, vector<128x512xbf16>, vector<8x512xf32> -> vector<8x512xf32>
    %213 = arith.addf %210, %212 : vector<8x512xf32>
    %c32 = arith.constant 32 : index
    %c512_50 = arith.constant 512 : index
    %214 = vector.load %arg14[%c32, %c512_50] : memref<64x1024xf32, #tpu.memory_space<vmem>>, vector<8x512xf32>
    %215 = arith.truncf %196 : vector<8x128xf32> to vector<8x128xbf16>
    %cst_51 = arith.constant dense<0.000000e+00> : vector<8x512xf32>
    %216 = tpu.matmul %215, %10, %cst_51 {dimension_numbers = #tpu.dot_dimension_numbers<[1], [0], [0], [1], [0, 0, 1, 1], [], []>} : vector<8x128xbf16>, vector<128x512xbf16>, vector<8x512xf32> -> vector<8x512xf32>
    %217 = arith.addf %214, %216 : vector<8x512xf32>
    %218 = vector.extract_strided_slice %213 {offsets = [0, 0], sizes = [8, 384], strides = [1, 1]} : vector<8x512xf32> to vector<8x384xf32>
    %219 = arith.negf %218 : vector<8x384xf32>
    %220 = math.exp %219 : vector<8x384xf32>
    %cst_52 = arith.constant 1.000000e+00 : f32
    %221 = vector.broadcast %cst_52 : f32 to vector<8x384xf32>
    %222 = arith.addf %221, %220 : vector<8x384xf32>
    %223 = arith.divf %221, %222 : vector<8x384xf32>
    %224 = vector.extract_strided_slice %223 {offsets = [0, 0], sizes = [8, 128], strides = [1, 1]} : vector<8x384xf32> to vector<8x128xf32>
    %225 = vector.extract_strided_slice %223 {offsets = [0, 128], sizes = [8, 128], strides = [1, 1]} : vector<8x384xf32> to vector<8x128xf32>
    %226 = vector.extract_strided_slice %223 {offsets = [0, 256], sizes = [8, 128], strides = [1, 1]} : vector<8x384xf32> to vector<8x128xf32>
    %227 = vector.extract_strided_slice %213 {offsets = [0, 384], sizes = [8, 128], strides = [1, 1]} : vector<8x512xf32> to vector<8x128xf32>
    %228 = math.tanh %227 : vector<8x128xf32>
    %229 = arith.mulf %225, %193 : vector<8x128xf32>
    %230 = arith.mulf %224, %228 : vector<8x128xf32>
    %231 = arith.addf %229, %230 : vector<8x128xf32>
    %232 = math.tanh %231 : vector<8x128xf32>
    %233 = arith.mulf %226, %232 : vector<8x128xf32>
    %234 = vector.extract_strided_slice %217 {offsets = [0, 0], sizes = [8, 384], strides = [1, 1]} : vector<8x512xf32> to vector<8x384xf32>
    %235 = arith.negf %234 : vector<8x384xf32>
    %236 = math.exp %235 : vector<8x384xf32>
    %cst_53 = arith.constant 1.000000e+00 : f32
    %237 = vector.broadcast %cst_53 : f32 to vector<8x384xf32>
    %238 = arith.addf %237, %236 : vector<8x384xf32>
    %239 = arith.divf %237, %238 : vector<8x384xf32>
    %240 = vector.extract_strided_slice %239 {offsets = [0, 0], sizes = [8, 128], strides = [1, 1]} : vector<8x384xf32> to vector<8x128xf32>
    %241 = vector.extract_strided_slice %239 {offsets = [0, 128], sizes = [8, 128], strides = [1, 1]} : vector<8x384xf32> to vector<8x128xf32>
    %242 = vector.extract_strided_slice %239 {offsets = [0, 256], sizes = [8, 128], strides = [1, 1]} : vector<8x384xf32> to vector<8x128xf32>
    %243 = vector.extract_strided_slice %217 {offsets = [0, 384], sizes = [8, 128], strides = [1, 1]} : vector<8x512xf32> to vector<8x128xf32>
    %244 = math.tanh %243 : vector<8x128xf32>
    %245 = arith.mulf %241, %199 : vector<8x128xf32>
    %246 = arith.mulf %240, %244 : vector<8x128xf32>
    %247 = arith.addf %245, %246 : vector<8x128xf32>
    %248 = math.tanh %247 : vector<8x128xf32>
    %249 = arith.mulf %242, %248 : vector<8x128xf32>
    %c3_i32 = arith.constant 3 : i32
    %250 = vector.broadcast %c3_i32 : i32 to vector<8x1xi32>
    %251 = arith.cmpi sgt, %0, %250 : vector<8x1xi32>
    %c4_i32 = arith.constant 4 : i32
    %252 = vector.broadcast %c4_i32 : i32 to vector<8x1xi32>
    %253 = arith.cmpi sgt, %0, %252 : vector<8x1xi32>
    %254 = vector.shape_cast %251 : vector<8x1xi1> to vector<8x1xi1>
    %255 = vector.broadcast %254 : vector<8x1xi1> to vector<8x128xi1>
    %256 = arith.select %255, %233, %190 : vector<8x128xi1>, vector<8x128xf32>
    %257 = vector.shape_cast %251 : vector<8x1xi1> to vector<8x1xi1>
    %258 = vector.broadcast %257 : vector<8x1xi1> to vector<8x128xi1>
    %259 = arith.select %258, %231, %193 : vector<8x128xi1>, vector<8x128xf32>
    %260 = vector.shape_cast %253 : vector<8x1xi1> to vector<8x1xi1>
    %261 = vector.broadcast %260 : vector<8x1xi1> to vector<8x128xi1>
    %262 = arith.select %261, %249, %196 : vector<8x128xi1>, vector<8x128xf32>
    %263 = vector.shape_cast %253 : vector<8x1xi1> to vector<8x1xi1>
    %264 = vector.broadcast %263 : vector<8x1xi1> to vector<8x128xi1>
    %265 = arith.select %264, %247, %199 : vector<8x128xi1>, vector<8x128xf32>
    %cst_54 = arith.constant 0.000000e+00 : f32
    %266 = vector.shape_cast %251 : vector<8x1xi1> to vector<8x1xi1>
    %267 = vector.broadcast %266 : vector<8x1xi1> to vector<8x128xi1>
    %268 = vector.broadcast %cst_54 : f32 to vector<8x128xf32>
    %269 = arith.select %267, %233, %268 : vector<8x128xi1>, vector<8x128xf32>
    %c24_55 = arith.constant 24 : index
    %c0_56 = arith.constant 0 : index
    %270 = vector.load %arg12[%c24_55, %c0_56] : memref<64x128xf32, #tpu.memory_space<vmem>>, vector<8x128xf32>
    tpu.vector_store %arg12[%c24_55, %c0_56], %269 {strides = array<i32>} : memref<64x128xf32, #tpu.memory_space<vmem>>, vector<8x128xf32>,
    %cst_57 = arith.constant 0.000000e+00 : f32
    %271 = vector.shape_cast %253 : vector<8x1xi1> to vector<8x1xi1>
    %272 = vector.broadcast %271 : vector<8x1xi1> to vector<8x128xi1>
    %273 = vector.broadcast %cst_57 : f32 to vector<8x128xf32>
    %274 = arith.select %272, %249, %273 : vector<8x128xi1>, vector<8x128xf32>
    %c32_58 = arith.constant 32 : index
    %c0_59 = arith.constant 0 : index
    %275 = vector.load %arg13[%c32_58, %c0_59] : memref<64x128xf32, #tpu.memory_space<vmem>>, vector<8x128xf32>
    tpu.vector_store %arg13[%c32_58, %c0_59], %274 {strides = array<i32>} : memref<64x128xf32, #tpu.memory_space<vmem>>, vector<8x128xf32>,
    %c32_60 = arith.constant 32 : index
    %c0_61 = arith.constant 0 : index
    %276 = vector.load %arg14[%c32_60, %c0_61] : memref<64x1024xf32, #tpu.memory_space<vmem>>, vector<8x512xf32>
    %277 = arith.truncf %256 : vector<8x128xf32> to vector<8x128xbf16>
    %cst_62 = arith.constant dense<0.000000e+00> : vector<8x512xf32>
    %278 = tpu.matmul %277, %8, %cst_62 {dimension_numbers = #tpu.dot_dimension_numbers<[1], [0], [0], [1], [0, 0, 1, 1], [], []>} : vector<8x128xbf16>, vector<128x512xbf16>, vector<8x512xf32> -> vector<8x512xf32>
    %279 = arith.addf %276, %278 : vector<8x512xf32>
    %c24_63 = arith.constant 24 : index
    %c512_64 = arith.constant 512 : index
    %280 = vector.load %arg14[%c24_63, %c512_64] : memref<64x1024xf32, #tpu.memory_space<vmem>>, vector<8x512xf32>
    %281 = arith.truncf %262 : vector<8x128xf32> to vector<8x128xbf16>
    %cst_65 = arith.constant dense<0.000000e+00> : vector<8x512xf32>
    %282 = tpu.matmul %281, %10, %cst_65 {dimension_numbers = #tpu.dot_dimension_numbers<[1], [0], [0], [1], [0, 0, 1, 1], [], []>} : vector<8x128xbf16>, vector<128x512xbf16>, vector<8x512xf32> -> vector<8x512xf32>
    %283 = arith.addf %280, %282 : vector<8x512xf32>
    %284 = vector.extract_strided_slice %279 {offsets = [0, 0], sizes = [8, 384], strides = [1, 1]} : vector<8x512xf32> to vector<8x384xf32>
    %285 = arith.negf %284 : vector<8x384xf32>
    %286 = math.exp %285 : vector<8x384xf32>
    %cst_66 = arith.constant 1.000000e+00 : f32
    %287 = vector.broadcast %cst_66 : f32 to vector<8x384xf32>
    %288 = arith.addf %287, %286 : vector<8x384xf32>
    %289 = arith.divf %287, %288 : vector<8x384xf32>
    %290 = vector.extract_strided_slice %289 {offsets = [0, 0], sizes = [8, 128], strides = [1, 1]} : vector<8x384xf32> to vector<8x128xf32>
    %291 = vector.extract_strided_slice %289 {offsets = [0, 128], sizes = [8, 128], strides = [1, 1]} : vector<8x384xf32> to vector<8x128xf32>
    %292 = vector.extract_strided_slice %289 {offsets = [0, 256], sizes = [8, 128], strides = [1, 1]} : vector<8x384xf32> to vector<8x128xf32>
    %293 = vector.extract_strided_slice %279 {offsets = [0, 384], sizes = [8, 128], strides = [1, 1]} : vector<8x512xf32> to vector<8x128xf32>
    %294 = math.tanh %293 : vector<8x128xf32>
    %295 = arith.mulf %291, %259 : vector<8x128xf32>
    %296 = arith.mulf %290, %294 : vector<8x128xf32>
    %297 = arith.addf %295, %296 : vector<8x128xf32>
    %298 = math.tanh %297 : vector<8x128xf32>
    %299 = arith.mulf %292, %298 : vector<8x128xf32>
    %300 = vector.extract_strided_slice %283 {offsets = [0, 0], sizes = [8, 384], strides = [1, 1]} : vector<8x512xf32> to vector<8x384xf32>
    %301 = arith.negf %300 : vector<8x384xf32>
    %302 = math.exp %301 : vector<8x384xf32>
    %cst_67 = arith.constant 1.000000e+00 : f32
    %303 = vector.broadcast %cst_67 : f32 to vector<8x384xf32>
    %304 = arith.addf %303, %302 : vector<8x384xf32>
    %305 = arith.divf %303, %304 : vector<8x384xf32>
    %306 = vector.extract_strided_slice %305 {offsets = [0, 0], sizes = [8, 128], strides = [1, 1]} : vector<8x384xf32> to vector<8x128xf32>
    %307 = vector.extract_strided_slice %305 {offsets = [0, 128], sizes = [8, 128], strides = [1, 1]} : vector<8x384xf32> to vector<8x128xf32>
    %308 = vector.extract_strided_slice %305 {offsets = [0, 256], sizes = [8, 128], strides = [1, 1]} : vector<8x384xf32> to vector<8x128xf32>
    %309 = vector.extract_strided_slice %283 {offsets = [0, 384], sizes = [8, 128], strides = [1, 1]} : vector<8x512xf32> to vector<8x128xf32>
    %310 = math.tanh %309 : vector<8x128xf32>
    %311 = arith.mulf %307, %265 : vector<8x128xf32>
    %312 = arith.mulf %306, %310 : vector<8x128xf32>
    %313 = arith.addf %311, %312 : vector<8x128xf32>
    %314 = math.tanh %313 : vector<8x128xf32>
    %315 = arith.mulf %308, %314 : vector<8x128xf32>
    %c4_i32_68 = arith.constant 4 : i32
    %316 = vector.broadcast %c4_i32_68 : i32 to vector<8x1xi32>
    %317 = arith.cmpi sgt, %0, %316 : vector<8x1xi32>
    %c3_i32_69 = arith.constant 3 : i32
    %318 = vector.broadcast %c3_i32_69 : i32 to vector<8x1xi32>
    %319 = arith.cmpi sgt, %0, %318 : vector<8x1xi32>
    %320 = vector.shape_cast %317 : vector<8x1xi1> to vector<8x1xi1>
    %321 = vector.broadcast %320 : vector<8x1xi1> to vector<8x128xi1>
    %322 = arith.select %321, %299, %256 : vector<8x128xi1>, vector<8x128xf32>
    %323 = vector.shape_cast %317 : vector<8x1xi1> to vector<8x1xi1>
    %324 = vector.broadcast %323 : vector<8x1xi1> to vector<8x128xi1>
    %325 = arith.select %324, %297, %259 : vector<8x128xi1>, vector<8x128xf32>
    %326 = vector.shape_cast %319 : vector<8x1xi1> to vector<8x1xi1>
    %327 = vector.broadcast %326 : vector<8x1xi1> to vector<8x128xi1>
    %328 = arith.select %327, %315, %262 : vector<8x128xi1>, vector<8x128xf32>
    %329 = vector.shape_cast %319 : vector<8x1xi1> to vector<8x1xi1>
    %330 = vector.broadcast %329 : vector<8x1xi1> to vector<8x128xi1>
    %331 = arith.select %330, %313, %265 : vector<8x128xi1>, vector<8x128xf32>
    %cst_70 = arith.constant 0.000000e+00 : f32
    %332 = vector.shape_cast %317 : vector<8x1xi1> to vector<8x1xi1>
    %333 = vector.broadcast %332 : vector<8x1xi1> to vector<8x128xi1>
    %334 = vector.broadcast %cst_70 : f32 to vector<8x128xf32>
    %335 = arith.select %333, %299, %334 : vector<8x128xi1>, vector<8x128xf32>
    %c32_71 = arith.constant 32 : index
    %c0_72 = arith.constant 0 : index
    %336 = vector.load %arg12[%c32_71, %c0_72] : memref<64x128xf32, #tpu.memory_space<vmem>>, vector<8x128xf32>
    tpu.vector_store %arg12[%c32_71, %c0_72], %335 {strides = array<i32>} : memref<64x128xf32, #tpu.memory_space<vmem>>, vector<8x128xf32>,
    %cst_73 = arith.constant 0.000000e+00 : f32
    %337 = vector.shape_cast %319 : vector<8x1xi1> to vector<8x1xi1>
    %338 = vector.broadcast %337 : vector<8x1xi1> to vector<8x128xi1>
    %339 = vector.broadcast %cst_73 : f32 to vector<8x128xf32>
    %340 = arith.select %338, %315, %339 : vector<8x128xi1>, vector<8x128xf32>
    %c24_74 = arith.constant 24 : index
    %c0_75 = arith.constant 0 : index
    %341 = vector.load %arg13[%c24_74, %c0_75] : memref<64x128xf32, #tpu.memory_space<vmem>>, vector<8x128xf32>
    tpu.vector_store %arg13[%c24_74, %c0_75], %340 {strides = array<i32>} : memref<64x128xf32, #tpu.memory_space<vmem>>, vector<8x128xf32>,
    %c40_76 = arith.constant 40 : index
    %c0_77 = arith.constant 0 : index
    %342 = vector.load %arg14[%c40_76, %c0_77] : memref<64x1024xf32, #tpu.memory_space<vmem>>, vector<8x512xf32>
    %343 = arith.truncf %322 : vector<8x128xf32> to vector<8x128xbf16>
    %cst_78 = arith.constant dense<0.000000e+00> : vector<8x512xf32>
    %344 = tpu.matmul %343, %8, %cst_78 {dimension_numbers = #tpu.dot_dimension_numbers<[1], [0], [0], [1], [0, 0, 1, 1], [], []>} : vector<8x128xbf16>, vector<128x512xbf16>, vector<8x512xf32> -> vector<8x512xf32>
    %345 = arith.addf %342, %344 : vector<8x512xf32>
    %c16_79 = arith.constant 16 : index
    %c512_80 = arith.constant 512 : index
    %346 = vector.load %arg14[%c16_79, %c512_80] : memref<64x1024xf32, #tpu.memory_space<vmem>>, vector<8x512xf32>
    %347 = arith.truncf %328 : vector<8x128xf32> to vector<8x128xbf16>
    %cst_81 = arith.constant dense<0.000000e+00> : vector<8x512xf32>
    %348 = tpu.matmul %347, %10, %cst_81 {dimension_numbers = #tpu.dot_dimension_numbers<[1], [0], [0], [1], [0, 0, 1, 1], [], []>} : vector<8x128xbf16>, vector<128x512xbf16>, vector<8x512xf32> -> vector<8x512xf32>
    %349 = arith.addf %346, %348 : vector<8x512xf32>
    %350 = vector.extract_strided_slice %345 {offsets = [0, 0], sizes = [8, 384], strides = [1, 1]} : vector<8x512xf32> to vector<8x384xf32>
    %351 = arith.negf %350 : vector<8x384xf32>
    %352 = math.exp %351 : vector<8x384xf32>
    %cst_82 = arith.constant 1.000000e+00 : f32
    %353 = vector.broadcast %cst_82 : f32 to vector<8x384xf32>
    %354 = arith.addf %353, %352 : vector<8x384xf32>
    %355 = arith.divf %353, %354 : vector<8x384xf32>
    %356 = vector.extract_strided_slice %355 {offsets = [0, 0], sizes = [8, 128], strides = [1, 1]} : vector<8x384xf32> to vector<8x128xf32>
    %357 = vector.extract_strided_slice %355 {offsets = [0, 128], sizes = [8, 128], strides = [1, 1]} : vector<8x384xf32> to vector<8x128xf32>
    %358 = vector.extract_strided_slice %355 {offsets = [0, 256], sizes = [8, 128], strides = [1, 1]} : vector<8x384xf32> to vector<8x128xf32>
    %359 = vector.extract_strided_slice %345 {offsets = [0, 384], sizes = [8, 128], strides = [1, 1]} : vector<8x512xf32> to vector<8x128xf32>
    %360 = math.tanh %359 : vector<8x128xf32>
    %361 = arith.mulf %357, %325 : vector<8x128xf32>
    %362 = arith.mulf %356, %360 : vector<8x128xf32>
    %363 = arith.addf %361, %362 : vector<8x128xf32>
    %364 = math.tanh %363 : vector<8x128xf32>
    %365 = arith.mulf %358, %364 : vector<8x128xf32>
    %366 = vector.extract_strided_slice %349 {offsets = [0, 0], sizes = [8, 384], strides = [1, 1]} : vector<8x512xf32> to vector<8x384xf32>
    %367 = arith.negf %366 : vector<8x384xf32>
    %368 = math.exp %367 : vector<8x384xf32>
    %cst_83 = arith.constant 1.000000e+00 : f32
    %369 = vector.broadcast %cst_83 : f32 to vector<8x384xf32>
    %370 = arith.addf %369, %368 : vector<8x384xf32>
    %371 = arith.divf %369, %370 : vector<8x384xf32>
    %372 = vector.extract_strided_slice %371 {offsets = [0, 0], sizes = [8, 128], strides = [1, 1]} : vector<8x384xf32> to vector<8x128xf32>
    %373 = vector.extract_strided_slice %371 {offsets = [0, 128], sizes = [8, 128], strides = [1, 1]} : vector<8x384xf32> to vector<8x128xf32>
    %374 = vector.extract_strided_slice %371 {offsets = [0, 256], sizes = [8, 128], strides = [1, 1]} : vector<8x384xf32> to vector<8x128xf32>
    %375 = vector.extract_strided_slice %349 {offsets = [0, 384], sizes = [8, 128], strides = [1, 1]} : vector<8x512xf32> to vector<8x128xf32>
    %376 = math.tanh %375 : vector<8x128xf32>
    %377 = arith.mulf %373, %331 : vector<8x128xf32>
    %378 = arith.mulf %372, %376 : vector<8x128xf32>
    %379 = arith.addf %377, %378 : vector<8x128xf32>
    %380 = math.tanh %379 : vector<8x128xf32>
    %381 = arith.mulf %374, %380 : vector<8x128xf32>
    %c5_i32_84 = arith.constant 5 : i32
    %382 = vector.broadcast %c5_i32_84 : i32 to vector<8x1xi32>
    %383 = arith.cmpi sgt, %0, %382 : vector<8x1xi32>
    %c2_i32_85 = arith.constant 2 : i32
    %384 = vector.broadcast %c2_i32_85 : i32 to vector<8x1xi32>
    %385 = arith.cmpi sgt, %0, %384 : vector<8x1xi32>
    %386 = vector.shape_cast %383 : vector<8x1xi1> to vector<8x1xi1>
    %387 = vector.broadcast %386 : vector<8x1xi1> to vector<8x128xi1>
    %388 = arith.select %387, %365, %322 : vector<8x128xi1>, vector<8x128xf32>
    %389 = vector.shape_cast %383 : vector<8x1xi1> to vector<8x1xi1>
    %390 = vector.broadcast %389 : vector<8x1xi1> to vector<8x128xi1>
    %391 = arith.select %390, %363, %325 : vector<8x128xi1>, vector<8x128xf32>
    %392 = vector.shape_cast %385 : vector<8x1xi1> to vector<8x1xi1>
    %393 = vector.broadcast %392 : vector<8x1xi1> to vector<8x128xi1>
    %394 = arith.select %393, %381, %328 : vector<8x128xi1>, vector<8x128xf32>
    %395 = vector.shape_cast %385 : vector<8x1xi1> to vector<8x1xi1>
    %396 = vector.broadcast %395 : vector<8x1xi1> to vector<8x128xi1>
    %397 = arith.select %396, %379, %331 : vector<8x128xi1>, vector<8x128xf32>
    %cst_86 = arith.constant 0.000000e+00 : f32
    %398 = vector.shape_cast %383 : vector<8x1xi1> to vector<8x1xi1>
    %399 = vector.broadcast %398 : vector<8x1xi1> to vector<8x128xi1>
    %400 = vector.broadcast %cst_86 : f32 to vector<8x128xf32>
    %401 = arith.select %399, %365, %400 : vector<8x128xi1>, vector<8x128xf32>
    %c40_87 = arith.constant 40 : index
    %c0_88 = arith.constant 0 : index
    %402 = vector.load %arg12[%c40_87, %c0_88] : memref<64x128xf32, #tpu.memory_space<vmem>>, vector<8x128xf32>
    tpu.vector_store %arg12[%c40_87, %c0_88], %401 {strides = array<i32>} : memref<64x128xf32, #tpu.memory_space<vmem>>, vector<8x128xf32>,
    %cst_89 = arith.constant 0.000000e+00 : f32
    %403 = vector.shape_cast %385 : vector<8x1xi1> to vector<8x1xi1>
    %404 = vector.broadcast %403 : vector<8x1xi1> to vector<8x128xi1>
    %405 = vector.broadcast %cst_89 : f32 to vector<8x128xf32>
    %406 = arith.select %404, %381, %405 : vector<8x128xi1>, vector<8x128xf32>
    %c16_90 = arith.constant 16 : index
    %c0_91 = arith.constant 0 : index
    %407 = vector.load %arg13[%c16_90, %c0_91] : memref<64x128xf32, #tpu.memory_space<vmem>>, vector<8x128xf32>
    tpu.vector_store %arg13[%c16_90, %c0_91], %406 {strides = array<i32>} : memref<64x128xf32, #tpu.memory_space<vmem>>, vector<8x128xf32>,
    %c48_92 = arith.constant 48 : index
    %c0_93 = arith.constant 0 : index
    %408 = vector.load %arg14[%c48_92, %c0_93] : memref<64x1024xf32, #tpu.memory_space<vmem>>, vector<8x512xf32>
    %409 = arith.truncf %388 : vector<8x128xf32> to vector<8x128xbf16>
    %cst_94 = arith.constant dense<0.000000e+00> : vector<8x512xf32>
    %410 = tpu.matmul %409, %8, %cst_94 {dimension_numbers = #tpu.dot_dimension_numbers<[1], [0], [0], [1], [0, 0, 1, 1], [], []>} : vector<8x128xbf16>, vector<128x512xbf16>, vector<8x512xf32> -> vector<8x512xf32>
    %411 = arith.addf %408, %410 : vector<8x512xf32>
    %c8_95 = arith.constant 8 : index
    %c512_96 = arith.constant 512 : index
    %412 = vector.load %arg14[%c8_95, %c512_96] : memref<64x1024xf32, #tpu.memory_space<vmem>>, vector<8x512xf32>
    %413 = arith.truncf %394 : vector<8x128xf32> to vector<8x128xbf16>
    %cst_97 = arith.constant dense<0.000000e+00> : vector<8x512xf32>
    %414 = tpu.matmul %413, %10, %cst_97 {dimension_numbers = #tpu.dot_dimension_numbers<[1], [0], [0], [1], [0, 0, 1, 1], [], []>} : vector<8x128xbf16>, vector<128x512xbf16>, vector<8x512xf32> -> vector<8x512xf32>
    %415 = arith.addf %412, %414 : vector<8x512xf32>
    %416 = vector.extract_strided_slice %411 {offsets = [0, 0], sizes = [8, 384], strides = [1, 1]} : vector<8x512xf32> to vector<8x384xf32>
    %417 = arith.negf %416 : vector<8x384xf32>
    %418 = math.exp %417 : vector<8x384xf32>
    %cst_98 = arith.constant 1.000000e+00 : f32
    %419 = vector.broadcast %cst_98 : f32 to vector<8x384xf32>
    %420 = arith.addf %419, %418 : vector<8x384xf32>
    %421 = arith.divf %419, %420 : vector<8x384xf32>
    %422 = vector.extract_strided_slice %421 {offsets = [0, 0], sizes = [8, 128], strides = [1, 1]} : vector<8x384xf32> to vector<8x128xf32>
    %423 = vector.extract_strided_slice %421 {offsets = [0, 128], sizes = [8, 128], strides = [1, 1]} : vector<8x384xf32> to vector<8x128xf32>
    %424 = vector.extract_strided_slice %421 {offsets = [0, 256], sizes = [8, 128], strides = [1, 1]} : vector<8x384xf32> to vector<8x128xf32>
    %425 = vector.extract_strided_slice %411 {offsets = [0, 384], sizes = [8, 128], strides = [1, 1]} : vector<8x512xf32> to vector<8x128xf32>
    %426 = math.tanh %425 : vector<8x128xf32>
    %427 = arith.mulf %423, %391 : vector<8x128xf32>
    %428 = arith.mulf %422, %426 : vector<8x128xf32>
    %429 = arith.addf %427, %428 : vector<8x128xf32>
    %430 = math.tanh %429 : vector<8x128xf32>
    %431 = arith.mulf %424, %430 : vector<8x128xf32>
    %432 = vector.extract_strided_slice %415 {offsets = [0, 0], sizes = [8, 384], strides = [1, 1]} : vector<8x512xf32> to vector<8x384xf32>
    %433 = arith.negf %432 : vector<8x384xf32>
    %434 = math.exp %433 : vector<8x384xf32>
    %cst_99 = arith.constant 1.000000e+00 : f32
    %435 = vector.broadcast %cst_99 : f32 to vector<8x384xf32>
    %436 = arith.addf %435, %434 : vector<8x384xf32>
    %437 = arith.divf %435, %436 : vector<8x384xf32>
    %438 = vector.extract_strided_slice %437 {offsets = [0, 0], sizes = [8, 128], strides = [1, 1]} : vector<8x384xf32> to vector<8x128xf32>
    %439 = vector.extract_strided_slice %437 {offsets = [0, 128], sizes = [8, 128], strides = [1, 1]} : vector<8x384xf32> to vector<8x128xf32>
    %440 = vector.extract_strided_slice %437 {offsets = [0, 256], sizes = [8, 128], strides = [1, 1]} : vector<8x384xf32> to vector<8x128xf32>
    %441 = vector.extract_strided_slice %415 {offsets = [0, 384], sizes = [8, 128], strides = [1, 1]} : vector<8x512xf32> to vector<8x128xf32>
    %442 = math.tanh %441 : vector<8x128xf32>
    %443 = arith.mulf %439, %397 : vector<8x128xf32>
    %444 = arith.mulf %438, %442 : vector<8x128xf32>
    %445 = arith.addf %443, %444 : vector<8x128xf32>
    %446 = math.tanh %445 : vector<8x128xf32>
    %447 = arith.mulf %440, %446 : vector<8x128xf32>
    %c6_i32_100 = arith.constant 6 : i32
    %448 = vector.broadcast %c6_i32_100 : i32 to vector<8x1xi32>
    %449 = arith.cmpi sgt, %0, %448 : vector<8x1xi32>
    %c1_i32_101 = arith.constant 1 : i32
    %450 = vector.broadcast %c1_i32_101 : i32 to vector<8x1xi32>
    %451 = arith.cmpi sgt, %0, %450 : vector<8x1xi32>
    %452 = vector.shape_cast %449 : vector<8x1xi1> to vector<8x1xi1>
    %453 = vector.broadcast %452 : vector<8x1xi1> to vector<8x128xi1>
    %454 = arith.select %453, %431, %388 : vector<8x128xi1>, vector<8x128xf32>
    %455 = vector.shape_cast %449 : vector<8x1xi1> to vector<8x1xi1>
    %456 = vector.broadcast %455 : vector<8x1xi1> to vector<8x128xi1>
    %457 = arith.select %456, %429, %391 : vector<8x128xi1>, vector<8x128xf32>
    %458 = vector.shape_cast %451 : vector<8x1xi1> to vector<8x1xi1>
    %459 = vector.broadcast %458 : vector<8x1xi1> to vector<8x128xi1>
    %460 = arith.select %459, %447, %394 : vector<8x128xi1>, vector<8x128xf32>
    %461 = vector.shape_cast %451 : vector<8x1xi1> to vector<8x1xi1>
    %462 = vector.broadcast %461 : vector<8x1xi1> to vector<8x128xi1>
    %463 = arith.select %462, %445, %397 : vector<8x128xi1>, vector<8x128xf32>
    %cst_102 = arith.constant 0.000000e+00 : f32
    %464 = vector.shape_cast %449 : vector<8x1xi1> to vector<8x1xi1>
    %465 = vector.broadcast %464 : vector<8x1xi1> to vector<8x128xi1>
    %466 = vector.broadcast %cst_102 : f32 to vector<8x128xf32>
    %467 = arith.select %465, %431, %466 : vector<8x128xi1>, vector<8x128xf32>
    %c48_103 = arith.constant 48 : index
    %c0_104 = arith.constant 0 : index
    %468 = vector.load %arg12[%c48_103, %c0_104] : memref<64x128xf32, #tpu.memory_space<vmem>>, vector<8x128xf32>
    tpu.vector_store %arg12[%c48_103, %c0_104], %467 {strides = array<i32>} : memref<64x128xf32, #tpu.memory_space<vmem>>, vector<8x128xf32>,
    %cst_105 = arith.constant 0.000000e+00 : f32
    %469 = vector.shape_cast %451 : vector<8x1xi1> to vector<8x1xi1>
    %470 = vector.broadcast %469 : vector<8x1xi1> to vector<8x128xi1>
    %471 = vector.broadcast %cst_105 : f32 to vector<8x128xf32>
    %472 = arith.select %470, %447, %471 : vector<8x128xi1>, vector<8x128xf32>
    %c8_106 = arith.constant 8 : index
    %c0_107 = arith.constant 0 : index
    %473 = vector.load %arg13[%c8_106, %c0_107] : memref<64x128xf32, #tpu.memory_space<vmem>>, vector<8x128xf32>
    tpu.vector_store %arg13[%c8_106, %c0_107], %472 {strides = array<i32>} : memref<64x128xf32, #tpu.memory_space<vmem>>, vector<8x128xf32>,
    %c56_108 = arith.constant 56 : index
    %c0_109 = arith.constant 0 : index
    %474 = vector.load %arg14[%c56_108, %c0_109] : memref<64x1024xf32, #tpu.memory_space<vmem>>, vector<8x512xf32>
    %475 = arith.truncf %454 : vector<8x128xf32> to vector<8x128xbf16>
    %cst_110 = arith.constant dense<0.000000e+00> : vector<8x512xf32>
    %476 = tpu.matmul %475, %8, %cst_110 {dimension_numbers = #tpu.dot_dimension_numbers<[1], [0], [0], [1], [0, 0, 1, 1], [], []>} : vector<8x128xbf16>, vector<128x512xbf16>, vector<8x512xf32> -> vector<8x512xf32>
    %477 = arith.addf %474, %476 : vector<8x512xf32>
    %c0_111 = arith.constant 0 : index
    %c512_112 = arith.constant 512 : index
    %478 = vector.load %arg14[%c0_111, %c512_112] : memref<64x1024xf32, #tpu.memory_space<vmem>>, vector<8x512xf32>
    %479 = arith.truncf %460 : vector<8x128xf32> to vector<8x128xbf16>
    %cst_113 = arith.constant dense<0.000000e+00> : vector<8x512xf32>
    %480 = tpu.matmul %479, %10, %cst_113 {dimension_numbers = #tpu.dot_dimension_numbers<[1], [0], [0], [1], [0, 0, 1, 1], [], []>} : vector<8x128xbf16>, vector<128x512xbf16>, vector<8x512xf32> -> vector<8x512xf32>
    %481 = arith.addf %478, %480 : vector<8x512xf32>
    %482 = vector.extract_strided_slice %477 {offsets = [0, 0], sizes = [8, 384], strides = [1, 1]} : vector<8x512xf32> to vector<8x384xf32>
    %483 = arith.negf %482 : vector<8x384xf32>
    %484 = math.exp %483 : vector<8x384xf32>
    %cst_114 = arith.constant 1.000000e+00 : f32
    %485 = vector.broadcast %cst_114 : f32 to vector<8x384xf32>
    %486 = arith.addf %485, %484 : vector<8x384xf32>
    %487 = arith.divf %485, %486 : vector<8x384xf32>
    %488 = vector.extract_strided_slice %487 {offsets = [0, 0], sizes = [8, 128], strides = [1, 1]} : vector<8x384xf32> to vector<8x128xf32>
    %489 = vector.extract_strided_slice %487 {offsets = [0, 128], sizes = [8, 128], strides = [1, 1]} : vector<8x384xf32> to vector<8x128xf32>
    %490 = vector.extract_strided_slice %487 {offsets = [0, 256], sizes = [8, 128], strides = [1, 1]} : vector<8x384xf32> to vector<8x128xf32>
    %491 = vector.extract_strided_slice %477 {offsets = [0, 384], sizes = [8, 128], strides = [1, 1]} : vector<8x512xf32> to vector<8x128xf32>
    %492 = math.tanh %491 : vector<8x128xf32>
    %493 = arith.mulf %489, %457 : vector<8x128xf32>
    %494 = arith.mulf %488, %492 : vector<8x128xf32>
    %495 = arith.addf %493, %494 : vector<8x128xf32>
    %496 = math.tanh %495 : vector<8x128xf32>
    %497 = arith.mulf %490, %496 : vector<8x128xf32>
    %498 = vector.extract_strided_slice %481 {offsets = [0, 0], sizes = [8, 384], strides = [1, 1]} : vector<8x512xf32> to vector<8x384xf32>
    %499 = arith.negf %498 : vector<8x384xf32>
    %500 = math.exp %499 : vector<8x384xf32>
    %cst_115 = arith.constant 1.000000e+00 : f32
    %501 = vector.broadcast %cst_115 : f32 to vector<8x384xf32>
    %502 = arith.addf %501, %500 : vector<8x384xf32>
    %503 = arith.divf %501, %502 : vector<8x384xf32>
    %504 = vector.extract_strided_slice %503 {offsets = [0, 0], sizes = [8, 128], strides = [1, 1]} : vector<8x384xf32> to vector<8x128xf32>
    %505 = vector.extract_strided_slice %503 {offsets = [0, 128], sizes = [8, 128], strides = [1, 1]} : vector<8x384xf32> to vector<8x128xf32>
    %506 = vector.extract_strided_slice %503 {offsets = [0, 256], sizes = [8, 128], strides = [1, 1]} : vector<8x384xf32> to vector<8x128xf32>
    %507 = vector.extract_strided_slice %481 {offsets = [0, 384], sizes = [8, 128], strides = [1, 1]} : vector<8x512xf32> to vector<8x128xf32>
    %508 = math.tanh %507 : vector<8x128xf32>
    %509 = arith.mulf %505, %463 : vector<8x128xf32>
    %510 = arith.mulf %504, %508 : vector<8x128xf32>
    %511 = arith.addf %509, %510 : vector<8x128xf32>
    %512 = math.tanh %511 : vector<8x128xf32>
    %513 = arith.mulf %506, %512 : vector<8x128xf32>
    %c7_i32_116 = arith.constant 7 : i32
    %514 = vector.broadcast %c7_i32_116 : i32 to vector<8x1xi32>
    %515 = arith.cmpi sgt, %0, %514 : vector<8x1xi32>
    %c0_i32_117 = arith.constant 0 : i32
    %516 = vector.broadcast %c0_i32_117 : i32 to vector<8x1xi32>
    %517 = arith.cmpi sgt, %0, %516 : vector<8x1xi32>
    %cst_118 = arith.constant 0.000000e+00 : f32
    %518 = vector.shape_cast %515 : vector<8x1xi1> to vector<8x1xi1>
    %519 = vector.broadcast %518 : vector<8x1xi1> to vector<8x128xi1>
    %520 = vector.broadcast %cst_118 : f32 to vector<8x128xf32>
    %521 = arith.select %519, %497, %520 : vector<8x128xi1>, vector<8x128xf32>
    %c56_119 = arith.constant 56 : index
    %c0_120 = arith.constant 0 : index
    %522 = vector.load %arg12[%c56_119, %c0_120] : memref<64x128xf32, #tpu.memory_space<vmem>>, vector<8x128xf32>
    tpu.vector_store %arg12[%c56_119, %c0_120], %521 {strides = array<i32>} : memref<64x128xf32, #tpu.memory_space<vmem>>, vector<8x128xf32>,
    %cst_121 = arith.constant 0.000000e+00 : f32
    %523 = vector.shape_cast %517 : vector<8x1xi1> to vector<8x1xi1>
    %524 = vector.broadcast %523 : vector<8x1xi1> to vector<8x128xi1>
    %525 = vector.broadcast %cst_121 : f32 to vector<8x128xf32>
    %526 = arith.select %524, %513, %525 : vector<8x128xi1>, vector<8x128xf32>
    %c0_122 = arith.constant 0 : index
    %c0_123 = arith.constant 0 : index
    %527 = vector.load %arg13[%c0_122, %c0_123] : memref<64x128xf32, #tpu.memory_space<vmem>>, vector<8x128xf32>
    tpu.vector_store %arg13[%c0_122, %c0_123], %526 {strides = array<i32>} : memref<64x128xf32, #tpu.memory_space<vmem>>, vector<8x128xf32>,
    %c4_i32_124 = arith.constant 4 : i32
    %528 = arith.cmpi eq, %arg0, %c4_i32_124 : i32
    %529 = arith.extui %528 : i1 to i32
    %c0_i32_125 = arith.constant 0 : i32
    %530 = arith.cmpi ne, %529, %c0_i32_125 : i32
    scf.if %530 {
      %c56_126 = arith.constant 56 : index
      %c0_127 = arith.constant 0 : index
      %531 = vector.load %arg12[%c56_126, %c0_127] : memref<64x128xf32, #tpu.memory_space<vmem>>, vector<8x128xf32>
      %c56_128 = arith.constant 56 : index
      %c0_129 = arith.constant 0 : index
      %532 = vector.load %arg13[%c56_128, %c0_129] : memref<64x128xf32, #tpu.memory_space<vmem>>, vector<8x128xf32>
      %c0_130 = arith.constant 0 : index
      %c0_131 = arith.constant 0 : index
      %533 = vector.load %arg8[%c0_130, %c0_131] : memref<128x128xf32, #tpu.memory_space<vmem>>, vector<128x128xf32>
      %cst_132 = arith.constant dense<0.000000e+00> : vector<8x128xf32>
      %534 = tpu.matmul %531, %533, %cst_132 {dimension_numbers = #tpu.dot_dimension_numbers<[1], [0], [0], [1], [0, 0, 1, 1], [], []>} : vector<8x128xf32>, vector<128x128xf32>, vector<8x128xf32> -> vector<8x128xf32>
      %c0_133 = arith.constant 0 : index
      %c0_134 = arith.constant 0 : index
      %535 = vector.load %arg9[%c0_133, %c0_134] : memref<128x128xf32, #tpu.memory_space<vmem>>, vector<128x128xf32>
      %cst_135 = arith.constant dense<0.000000e+00> : vector<8x128xf32>
      %536 = tpu.matmul %532, %535, %cst_135 {dimension_numbers = #tpu.dot_dimension_numbers<[1], [0], [0], [1], [0, 0, 1, 1], [], []>} : vector<8x128xf32>, vector<128x128xf32>, vector<8x128xf32> -> vector<8x128xf32>
      %537 = arith.addf %534, %536 : vector<8x128xf32>
      %c0_136 = arith.constant 0 : index
      %c0_137 = arith.constant 0 : index
      %538 = vector.load %arg10[%c0_136, %c0_137] : memref<1x128xf32, #tpu.memory_space<vmem>>, vector<1x128xf32>
      %539 = vector.broadcast %538 : vector<1x128xf32> to vector<8x128xf32>
      %540 = arith.addf %537, %539 : vector<8x128xf32>
      %c0_138 = arith.constant 0 : index
      %c0_139 = arith.constant 0 : index
      %541 = vector.load %arg11[%c0_138, %c0_139] : memref<8x128xf32, #tpu.memory_space<vmem>>, vector<8x128xf32>
      tpu.vector_store %arg11[%c0_138, %c0_139], %540 {strides = array<i32>} : memref<8x128xf32, #tpu.memory_space<vmem>>, vector<8x128xf32>,
    } else {
    }
    return
  }
  func.func @transform_0(%arg0: i32) -> (i32, i32) {
    %c0_i32 = arith.constant 0 : i32
    %c0_i32_0 = arith.constant 0 : i32
    %c0_i32_1 = arith.constant 0 : i32
    return %c0_i32, %c0_i32_0 : i32, i32
  }
  func.func @transform_1(%arg0: i32) -> (i32, i32) {
    %c0_i32 = arith.constant 0 : i32
    %c0_i32_0 = arith.constant 0 : i32
    %c0_i32_1 = arith.constant 0 : i32
    return %c0_i32, %c0_i32_0 : i32, i32
  }
  func.func @transform_2(%arg0: i32) -> (i32, i32) {
    %c0_i32 = arith.constant 0 : i32
    %c0_i32_0 = arith.constant 0 : i32
    %c0_i32_1 = arith.constant 0 : i32
    return %c0_i32, %c0_i32_0 : i32, i32
  }
  func.func @transform_3(%arg0: i32) -> (i32, i32, i32) {
    %c1_i32 = arith.constant 1 : i32
    %0 = arith.subi %arg0, %c1_i32 : i32
    %c0_i32 = arith.constant 0 : i32
    %1 = arith.maxsi %0, %c0_i32 : i32
    %c0_i32_0 = arith.constant 0 : i32
    %c0_i32_1 = arith.constant 0 : i32
    %c0_i32_2 = arith.constant 0 : i32
    return %1, %c0_i32_0, %c0_i32_1 : i32, i32, i32
  }
  func.func @transform_4(%arg0: i32) -> (i32, i32, i32) {
    %c1_i32 = arith.constant 1 : i32
    %0 = arith.subi %arg0, %c1_i32 : i32
    %c0_i32 = arith.constant 0 : i32
    %1 = arith.maxsi %0, %c0_i32 : i32
    %c0_i32_0 = arith.constant 0 : i32
    %c0_i32_1 = arith.constant 0 : i32
    %c0_i32_2 = arith.constant 0 : i32
    return %1, %c0_i32_0, %c0_i32_1 : i32, i32, i32
  }
  func.func @transform_5(%arg0: i32) -> (i32, i32, i32, i32) {
    %c0_i32 = arith.constant 0 : i32
    %c0_i32_0 = arith.constant 0 : i32
    %c0_i32_1 = arith.constant 0 : i32
    %c0_i32_2 = arith.constant 0 : i32
    return %arg0, %c0_i32, %c0_i32_0, %c0_i32_1 : i32, i32, i32, i32
  }
  func.func @transform_6(%arg0: i32) -> (i32, i32, i32) {
    %c0_i32 = arith.constant 0 : i32
    %c0_i32_0 = arith.constant 0 : i32
    %c0_i32_1 = arith.constant 0 : i32
    return %arg0, %c0_i32, %c0_i32_0 : i32, i32, i32
  }
  func.func @transform_7(%arg0: i32) -> (i32, i32) {
    %c0_i32 = arith.constant 0 : i32
    %c0_i32_0 = arith.constant 0 : i32
    %c0_i32_1 = arith.constant 0 : i32
    return %c0_i32, %c0_i32_0 : i32, i32
  }
  func.func @transform_8(%arg0: i32) -> (i32, i32) {
    %c0_i32 = arith.constant 0 : i32
    %c0_i32_0 = arith.constant 0 : i32
    %c0_i32_1 = arith.constant 0 : i32
    return %c0_i32, %c0_i32_0 : i32, i32
  }
  func.func @transform_9(%arg0: i32) -> (i32, i32) {
    %c0_i32 = arith.constant 0 : i32
    %c0_i32_0 = arith.constant 0 : i32
    %c0_i32_1 = arith.constant 0 : i32
    return %c0_i32, %c0_i32_0 : i32, i32
  }
  func.func @transform_10(%arg0: i32) -> (i32, i32) {
    %c0_i32 = arith.constant 0 : i32
    %c0_i32_0 = arith.constant 0 : i32
    %c0_i32_1 = arith.constant 0 : i32
    return %c0_i32, %c0_i32_0 : i32, i32
  }
}

</mosaic_0001>

<llo_original>
// kernel: tpu_custom_call.1
$region0: #{tpu_custom_call.1}
  #allocation0 [shape = 'u32[]', space=smem, size = 0x4, offset = 0x4, fixed_abs, tag = 'smem constant byte address 0x4 - core index']
  #allocation1 [shape = 'u32[144,128]{1,0:T(1,128)}', space=vmem, size = 0x12000, scoped, tag = 'internal scratch']
  #allocation2 [shape = 'f32[64,128]{1,0:T(8,128)}', space=vmem, size = 0x8000, scoped, tag = 'scratch operand']
  #allocation3 [shape = 'f32[64,128]{1,0:T(8,128)}', space=vmem, size = 0x8000, scoped, tag = 'scratch operand']
  #allocation4 [shape = 'f32[64,1024]{1,0:T(8,128)}', space=vmem, size = 0x40000, scoped, tag = 'scratch operand']
  %s0 = inlined_call_operand.hbm [shape: bf16[64,128], index: 0, kind: input, shape index: {}]
  %s1 = inlined_call_operand.vmem [shape: s32[8,1], index: 1, kind: input, shape index: {}]
  %s2 = inlined_call_operand.hbm [shape: bf16[128,1024], index: 2, kind: input, shape index: {}]
  %s3 = inlined_call_operand.hbm [shape: bf16[4,128,1024], index: 3, kind: input, shape index: {}]
  %s4 = inlined_call_operand.hbm [shape: bf16[4,128,1024], index: 4, kind: input, shape index: {}]
  %s5 = inlined_call_operand.hbm [shape: bf16[5,2,128,512], index: 5, kind: input, shape index: {}]
  %s6 = inlined_call_operand.hbm [shape: f32[5,1,1024], index: 6, kind: input, shape index: {}]
  %s7 = inlined_call_operand.hbm [shape: f32[128,128], index: 7, kind: input, shape index: {}]
  %s8 = inlined_call_operand.hbm [shape: f32[128,128], index: 8, kind: input, shape index: {}]
  %s9 = inlined_call_operand.hbm [shape: f32[1,128], index: 9, kind: input, shape index: {}]
  %s10 = inlined_call_operand.hbm [shape: f32[8,128], index: 10, kind: output, shape index: {}]
  %s11 = sld [smem:[#allocation0]]
  $region121: #{tpu_custom_call.1} parent=0
    _
  %s13 = ssub.s32 1, %s11
  %s14 = scalar_select 0, %s13, %s11
  $region1: #{tpu_custom_call.1} parent=0
    #allocation5 [shape = 'u8[16384]{0}', space=vmem, size = 0x4000, scoped, tag = 'input window, operand 0, single buffered']
    #allocation6 [shape = 's32[2]{0}', space=sflag, size = 0x8, scoped, tag = 'scoped memory for tpu_custom_call.1']
    #allocation7 [shape = 's32[2]{0}', space=sflag, size = 0x8, scoped, tag = 'scoped memory for tpu_custom_call.1']
    #allocation8 [shape = 'u8[262144]{0}', space=vmem, size = 0x40000, scoped, tag = 'input window, operand 2, single buffered']
    #allocation9 [shape = 's32[1]{0}', space=sflag, size = 0x4, scoped, tag = 'scoped memory for tpu_custom_call.1']
    #allocation10 [shape = 'u8[524288]{0}', space=vmem, size = 0x80000, scoped, tag = 'input window, operand 3']
    #allocation11 [shape = 'u8[524288]{0}', space=vmem, size = 0x80000, scoped, tag = 'input window, operand 4']
    #allocation12 [shape = 'u8[524288]{0}', space=vmem, size = 0x80000, scoped, tag = 'input window, operand 5']
    #allocation13 [shape = 'u8[8192]{0}', space=vmem, size = 0x2000, scoped, tag = 'input window, operand 6']
    #allocation14 [shape = 'u8[65536]{0}', space=vmem, size = 0x10000, scoped, tag = 'input window, operand 7, single buffered']
    #allocation15 [shape = 'u8[65536]{0}', space=vmem, size = 0x10000, scoped, tag = 'input window, operand 8, single buffered']
    #allocation16 [shape = 's32[1]{0}', space=sflag, size = 0x4, scoped, tag = 'scoped memory for tpu_custom_call.1']
    #allocation17 [shape = 'u8[512]{0}', space=vmem, size = 0x400, scoped, tag = 'input window, operand 9, single buffered']
    #allocation18 [shape = 'u8[4096]{0}', space=vmem, size = 0x1000, scoped, tag = 'output window, operand 0, single buffered']
    %15 = vsyncpa [#allocation6], 0
    %16 = vsyncpa [#allocation9], 0
    %17 = vsyncpa [#allocation16], 0
    %18 = vsyncpa [#allocation7], 0
    loop: start=0, step=1, limit=7
    $region2: #{tpu_custom_call.1} parent=1 // loop_pre_header
      _
    $region3: #{tpu_custom_call.1} parent=1 // loop_header
      %s20 = sphi 0, %s24
      %p21 = scmp.ge.s32.totalorder %s20, 7
      %s28 = sphi 0, %s28
      %s30 = sphi 0, %s28
      %s31 = sphi 0, %s30
      %s45 = sphi 0, %s31
      %s49 = sphi 0, %s49
      %s51 = sphi 0, %s49
      %s52 = sphi 0, %s51
      %s66 = sphi 0, %s52
      %s70 = sphi 0, %s70
      %s72 = sphi 0, %s70
      %s73 = sphi 0, %s72
      %s87 = sphi 0, %s73
      %s99 = sphi 0, %s101
      %s102 = sphi 0, %s99
      %s103 = sphi 0, %s102
      %s119 = sphi 0, %s103
      %s131 = sphi 0, %s133
      %s134 = sphi 0, %s131
      %s135 = sphi 0, %s134
      %s151 = sphi 0, %s135
      %s157 = sphi 0, %s159
      %s160 = sphi 0, %s157
      %s161 = sphi 0, %s160
      %s177 = sphi 0, %s161
      %s183 = sphi 0, %s185
      %s186 = sphi 0, %s183
      %s187 = sphi 0, %s186
      %s203 = sphi 0, %s187
      %s207 = sphi 0, %s207
      %s209 = sphi 0, %s207
      %s210 = sphi 0, %s209
      %s224 = sphi 0, %s210
      %s228 = sphi 0, %s228
      %s230 = sphi 0, %s228
      %s231 = sphi 0, %s230
      %s245 = sphi 0, %s231
      %s249 = sphi 0, %s249
      %s251 = sphi 0, %s249
      %s252 = sphi 0, %s251
      %s266 = sphi 0, %s252
      %s270 = sphi 0, %s270
      %s272 = sphi 0, %s270
      %s273 = sphi 0, %s272
      %s287 = sphi 0, %s273
    $region4: #{tpu_custom_call.1} parent=1 // loop_header_branch
      %23 = sbr.rel (%p21) target = $region8
    $region5: #{tpu_custom_call.1} parent=1 // loop_body
      %s25 = ssub.s32 %s20, 1
      %s26 = ssub.s32 %s20, 2
      %s27 = sadd.s32 %s20, 1
      %s29 = sadd.s32 %s28, 1
      %p32 = scmp.eq.s32.totalorder %s20, 4
      %p33 = scmp.ne.s32.totalorder %s28, %s30
      %p34 = scmp.eq.s32.totalorder %s20, 0
      %p35 = por %p33, %p34
      %p36 = scmp.ne.s32.totalorder %s28, %s30
      %p37 = scmp.eq.s32.totalorder %s25, 4
      %p38 = por %p36, %p37
      %p39 = scmp.ne.s32.totalorder %s30, %s31
      %p40 = scmp.eq.s32.totalorder %s25, 0
      %p41 = por %p39, %p40
      %p42 = scmp.ne.s32.totalorder %s30, %s31
      %p43 = scmp.eq.s32.totalorder %s26, 4
      %p44 = por %p42, %p43
      %p46 = scmp.ne.s32.totalorder %s31, %s45
      %p47 = scmp.eq.s32.totalorder %s26, 0
      %p48 = por %p46, %p47
      %s50 = sadd.s32 %s49, 1
      %p53 = scmp.eq.s32.totalorder %s20, 4
      %p54 = scmp.ne.s32.totalorder %s49, %s51
      %p55 = scmp.eq.s32.totalorder %s20, 0
      %p56 = por %p54, %p55
      %p57 = scmp.ne.s32.totalorder %s49, %s51
      %p58 = scmp.eq.s32.totalorder %s25, 4
      %p59 = por %p57, %p58
      %p60 = scmp.ne.s32.totalorder %s51, %s52
      %p61 = scmp.eq.s32.totalorder %s25, 0
      %p62 = por %p60, %p61
      %p63 = scmp.ne.s32.totalorder %s51, %s52
      %p64 = scmp.eq.s32.totalorder %s26, 4
      %p65 = por %p63, %p64
      %p67 = scmp.ne.s32.totalorder %s52, %s66
      %p68 = scmp.eq.s32.totalorder %s26, 0
      %p69 = por %p67, %p68
      %s71 = sadd.s32 %s70, 1
      %p74 = scmp.eq.s32.totalorder %s20, 4
      %p75 = scmp.ne.s32.totalorder %s70, %s72
      %p76 = scmp.eq.s32.totalorder %s20, 0
      %p77 = por %p75, %p76
      %p78 = scmp.ne.s32.totalorder %s70, %s72
      %p79 = scmp.eq.s32.totalorder %s25, 4
      %p80 = por %p78, %p79
      %p81 = scmp.ne.s32.totalorder %s72, %s73
      %p82 = scmp.eq.s32.totalorder %s25, 0
      %p83 = por %p81, %p82
      %p84 = scmp.ne.s32.totalorder %s72, %s73
      %p85 = scmp.eq.s32.totalorder %s26, 4
      %p86 = por %p84, %p85
      %p88 = scmp.ne.s32.totalorder %s73, %s87
      %p89 = scmp.eq.s32.totalorder %s26, 0
      %p90 = por %p88, %p89
      %s91 = ssub.s32 %s20, 1
      %p92 = scmp.gt.s32.totalorder %s91, 0
      %s93 = scalar_select %p92, %s91, 0
      %s94 = ssub.s32 %s27, 1
      %p95 = scmp.gt.s32.totalorder %s94, 0
      %s96 = scalar_select %p95, %s94, 0
      %s97 = ssub.s32 %s93, %s96
      %p98 = scmp.eq.s32.totalorder %s97, 0
      %s100 = sadd.s32 %s99, 1
      %s101 = scalar_select %p98, %s99, %s100
      %p104 = pneg %p98
      %p105 = scmp.eq.s32.totalorder %s20, 4
      %p106 = por %p104, %p105
      %p107 = scmp.ne.s32.totalorder %s99, %s102
      %p108 = scmp.eq.s32.totalorder %s20, 0
      %p109 = por %p107, %p108
      %p110 = scmp.ne.s32.totalorder %s99, %s102
      %p111 = scmp.eq.s32.totalorder %s25, 4
      %p112 = por %p110, %p111
      %p113 = scmp.ne.s32.totalorder %s102, %s103
      %p114 = scmp.eq.s32.totalorder %s25, 0
      %p115 = por %p113, %p114
      %p116 = scmp.ne.s32.totalorder %s102, %s103
      %p117 = scmp.eq.s32.totalorder %s26, 4
      %p118 = por %p116, %p117
      %p120 = scmp.ne.s32.totalorder %s103, %s119
      %p121 = scmp.eq.s32.totalorder %s26, 0
      %p122 = por %p120, %p121
      %s123 = ssub.s32 %s20, 1
      %p124 = scmp.gt.s32.totalorder %s123, 0
      %s125 = scalar_select %p124, %s123, 0
      %s126 = ssub.s32 %s27, 1
      %p127 = scmp.gt.s32.totalorder %s126, 0
      %s128 = scalar_select %p127, %s126, 0
      %s129 = ssub.s32 %s125, %s128
      %p130 = scmp.eq.s32.totalorder %s129, 0
      %s132 = sadd.s32 %s131, 1
      %s133 = scalar_select %p130, %s131, %s132
      %p136 = pneg %p130
      %p137 = scmp.eq.s32.totalorder %s20, 4
      %p138 = por %p136, %p137
      %p139 = scmp.ne.s32.totalorder %s131, %s134
      %p140 = scmp.eq.s32.totalorder %s20, 0
      %p141 = por %p139, %p140
      %p142 = scmp.ne.s32.totalorder %s131, %s134
      %p143 = scmp.eq.s32.totalorder %s25, 4
      %p144 = por %p142, %p143
      %p145 = scmp.ne.s32.totalorder %s134, %s135
      %p146 = scmp.eq.s32.totalorder %s25, 0
      %p147 = por %p145, %p146
      %p148 = scmp.ne.s32.totalorder %s134, %s135
      %p149 = scmp.eq.s32.totalorder %s26, 4
      %p150 = por %p148, %p149
      %p152 = scmp.ne.s32.totalorder %s135, %s151
      %p153 = scmp.eq.s32.totalorder %s26, 0
      %p154 = por %p152, %p153
      %s155 = ssub.s32 %s20, %s27
      %p156 = scmp.eq.s32.totalorder %s155, 0
      %s158 = sadd.s32 %s157, 1
      %s159 = scalar_select %p156, %s157, %s158
      %p162 = pneg %p156
      %p163 = scmp.eq.s32.totalorder %s20, 4
      %p164 = por %p162, %p163
      %p165 = scmp.ne.s32.totalorder %s157, %s160
      %p166 = scmp.eq.s32.totalorder %s20, 0
      %p167 = por %p165, %p166
      %p168 = scmp.ne.s32.totalorder %s157, %s160
      %p169 = scmp.eq.s32.totalorder %s25, 4
      %p170 = por %p168, %p169
      %p171 = scmp.ne.s32.totalorder %s160, %s161
      %p172 = scmp.eq.s32.totalorder %s25, 0
      %p173 = por %p171, %p172
      %p174 = scmp.ne.s32.totalorder %s160, %s161
      %p175 = scmp.eq.s32.totalorder %s26, 4
      %p176 = por %p174, %p175
      %p178 = scmp.ne.s32.totalorder %s161, %s177
      %p179 = scmp.eq.s32.totalorder %s26, 0
      %p180 = por %p178, %p179
      %s181 = ssub.s32 %s20, %s27
      %p182 = scmp.eq.s32.totalorder %s181, 0
      %s184 = sadd.s32 %s183, 1
      %s185 = scalar_select %p182, %s183, %s184
      %p188 = pneg %p182
      %p189 = scmp.eq.s32.totalorder %s20, 4
      %p190 = por %p188, %p189
      %p191 = scmp.ne.s32.totalorder %s183, %s186
      %p192 = scmp.eq.s32.totalorder %s20, 0
      %p193 = por %p191, %p192
      %p194 = scmp.ne.s32.totalorder %s183, %s186
      %p195 = scmp.eq.s32.totalorder %s25, 4
      %p196 = por %p194, %p195
      %p197 = scmp.ne.s32.totalorder %s186, %s187
      %p198 = scmp.eq.s32.totalorder %s25, 0
      %p199 = por %p197, %p198
      %p200 = scmp.ne.s32.totalorder %s186, %s187
      %p201 = scmp.eq.s32.totalorder %s26, 4
      %p202 = por %p200, %p201
      %p204 = scmp.ne.s32.totalorder %s187, %s203
      %p205 = scmp.eq.s32.totalorder %s26, 0
      %p206 = por %p204, %p205
      %s208 = sadd.s32 %s207, 1
      %p211 = scmp.eq.s32.totalorder %s20, 4
      %p212 = scmp.ne.s32.totalorder %s207, %s209
      %p213 = scmp.eq.s32.totalorder %s20, 0
      %p214 = por %p212, %p213
      %p215 = scmp.ne.s32.totalorder %s207, %s209
      %p216 = scmp.eq.s32.totalorder %s25, 4
      %p217 = por %p215, %p216
      %p218 = scmp.ne.s32.totalorder %s209, %s210
      %p219 = scmp.eq.s32.totalorder %s25, 0
      %p220 = por %p218, %p219
      %p221 = scmp.ne.s32.totalorder %s209, %s210
      %p222 = scmp.eq.s32.totalorder %s26, 4
      %p223 = por %p221, %p222
      %p225 = scmp.ne.s32.totalorder %s210, %s224
      %p226 = scmp.eq.s32.totalorder %s26, 0
      %p227 = por %p225, %p226
      %s229 = sadd.s32 %s228, 1
      %p232 = scmp.eq.s32.totalorder %s20, 4
      %p233 = scmp.ne.s32.totalorder %s228, %s230
      %p234 = scmp.eq.s32.totalorder %s20, 0
      %p235 = por %p233, %p234
      %p236 = scmp.ne.s32.totalorder %s228, %s230
      %p237 = scmp.eq.s32.totalorder %s25, 4
      %p238 = por %p236, %p237
      %p239 = scmp.ne.s32.totalorder %s230, %s231
      %p240 = scmp.eq.s32.totalorder %s25, 0
      %p241 = por %p239, %p240
      %p242 = scmp.ne.s32.totalorder %s230, %s231
      %p243 = scmp.eq.s32.totalorder %s26, 4
      %p244 = por %p242, %p243
      %p246 = scmp.ne.s32.totalorder %s231, %s245
      %p247 = scmp.eq.s32.totalorder %s26, 0
      %p248 = por %p246, %p247
      %s250 = sadd.s32 %s249, 1
      %p253 = scmp.eq.s32.totalorder %s20, 4
      %p254 = scmp.ne.s32.totalorder %s249, %s251
      %p255 = scmp.eq.s32.totalorder %s20, 0
      %p256 = por %p254, %p255
      %p257 = scmp.ne.s32.totalorder %s249, %s251
      %p258 = scmp.eq.s32.totalorder %s25, 4
      %p259 = por %p257, %p258
      %p260 = scmp.ne.s32.totalorder %s251, %s252
      %p261 = scmp.eq.s32.totalorder %s25, 0
      %p262 = por %p260, %p261
      %p263 = scmp.ne.s32.totalorder %s251, %s252
      %p264 = scmp.eq.s32.totalorder %s26, 4
      %p265 = por %p263, %p264
      %p267 = scmp.ne.s32.totalorder %s252, %s266
      %p268 = scmp.eq.s32.totalorder %s26, 0
      %p269 = por %p267, %p268
      %s271 = sadd.s32 %s270, 1
      %p274 = scmp.eq.s32.totalorder %s20, 4
      %p275 = scmp.ne.s32.totalorder %s270, %s272
      %p276 = scmp.eq.s32.totalorder %s20, 0
      %p277 = por %p275, %p276
      %p278 = scmp.ne.s32.totalorder %s270, %s272
      %p279 = scmp.eq.s32.totalorder %s25, 4
      %p280 = por %p278, %p279
      %p281 = scmp.ne.s32.totalorder %s272, %s273
      %p282 = scmp.eq.s32.totalorder %s25, 0
      %p283 = por %p281, %p282
      %p284 = scmp.ne.s32.totalorder %s272, %s273
      %p285 = scmp.eq.s32.totalorder %s26, 4
      %p286 = por %p284, %p285
      %p288 = scmp.ne.s32.totalorder %s273, %s287
      %p289 = scmp.eq.s32.totalorder %s26, 0
      %p290 = por %p288, %p289
      %p291 = scmp.le.s32.totalorder 1, %s20
      %p292 = scmp.lt.s32.totalorder %s20, 6
      %p293 = pnand %p291, %p292
      %p294 = pneg %p293
      // Predicated region
      $region9: #{tpu_custom_call.1} parent=5 // pred_check
        _
      $region10: #{tpu_custom_call.1} parent=5 // pred_check_branch
        %296 = sbr.rel (%p293) target = $region12
      $region11: #{tpu_custom_call.1} parent=5 // pred_region
        %s297 = ssub.s32 %s20, 1
        // Predicated region
        $region13: #{tpu_custom_call.1} parent=11 // pred_check
          %p298 = pneg %p41
        $region14: #{tpu_custom_call.1} parent=11 // pred_check_branch
          %300 = sbr.rel (%p298) target = $region16
        $region15: #{tpu_custom_call.1} parent=11 // pred_region
          %s302 = ssub.s32 512, 512
          %303 = vsyncadd [#allocation6], %s302
          %s304 = sshll.u32 [#allocation5], 4
          %s305 = int_to_ptr.vmem [resolvable:$true] %s304
          %310 = dma.hbm_to_vmem [thread:$0]  %s0, 512, %s305, [#allocation6], 64, 64, 4
        $region16: #{tpu_custom_call.1} parent=11 // pred_fallthru
          _
        // Predicated region
        $region17: #{tpu_custom_call.1} parent=11 // pred_check
          %p311 = pneg %p62
        $region18: #{tpu_custom_call.1} parent=11 // pred_check_branch
          %313 = sbr.rel (%p311) target = $region20
        $region19: #{tpu_custom_call.1} parent=11 // pred_region
          _
        $region20: #{tpu_custom_call.1} parent=11 // pred_fallthru
          _
        // Predicated region
        $region21: #{tpu_custom_call.1} parent=11 // pred_check
          %p314 = pneg %p83
        $region22: #{tpu_custom_call.1} parent=11 // pred_check_branch
          %316 = sbr.rel (%p314) target = $region24
        $region23: #{tpu_custom_call.1} parent=11 // pred_region
          %s318 = ssub.s32 8192, 8192
          %319 = vsyncadd [#allocation9], %s318
          %s320 = sshll.u32 [#allocation8], 4
          %s321 = int_to_ptr.vmem [resolvable:$true] %s320
          %326 = dma.hbm_to_vmem [thread:$0]  %s2, 8192, %s321, [#allocation9], 512, 512, 32
        $region24: #{tpu_custom_call.1} parent=11 // pred_fallthru
          _
        // Predicated region
        $region25: #{tpu_custom_call.1} parent=11 // pred_check
          %p327 = pneg %p220
        $region26: #{tpu_custom_call.1} parent=11 // pred_check_branch
          %329 = sbr.rel (%p327) target = $region28
        $region27: #{tpu_custom_call.1} parent=11 // pred_region
          %s331 = ssub.s32 2048, 2048
          %332 = vsyncadd [#allocation9], %s331
          %s333 = sshll.u32 [#allocation14], 4
          %s334 = int_to_ptr.vmem [resolvable:$true] %s333
          %339 = dma.hbm_to_vmem [thread:$0]  %s7, 2048, %s334, [#allocation9], 128, 128, 8
        $region28: #{tpu_custom_call.1} parent=11 // pred_fallthru
          _
        // Predicated region
        $region29: #{tpu_custom_call.1} parent=11 // pred_check
          %p340 = pneg %p241
        $region30: #{tpu_custom_call.1} parent=11 // pred_check_branch
          %342 = sbr.rel (%p340) target = $region32
        $region31: #{tpu_custom_call.1} parent=11 // pred_region
          %s344 = ssub.s32 2048, 2048
          %345 = vsyncadd [#allocation16], %s344
          %s346 = sshll.u32 [#allocation15], 4
          %s347 = int_to_ptr.vmem [resolvable:$true] %s346
          %352 = dma.hbm_to_vmem [thread:$0]  %s8, 2048, %s347, [#allocation16], 128, 128, 8
        $region32: #{tpu_custom_call.1} parent=11 // pred_fallthru
          _
        // Predicated region
        $region33: #{tpu_custom_call.1} parent=11 // pred_check
          %p353 = pneg %p262
        $region34: #{tpu_custom_call.1} parent=11 // pred_check_branch
          %355 = sbr.rel (%p353) target = $region36
        $region35: #{tpu_custom_call.1} parent=11 // pred_region
          %s357 = ssub.s32 16, 16
          %358 = vsyncadd [#allocation16], %s357
          %s360 = sshll.u32 [#allocation17], 4
          %s361 = int_to_ptr.vmem [resolvable:$true] %s360
          %363 = dma.hbm_to_vmem [thread:$0]  %s9, 16, %s361, [#allocation16]
        $region36: #{tpu_custom_call.1} parent=11 // pred_fallthru
          _
      $region12: #{tpu_custom_call.1} parent=5 // pred_fallthru
        _
      %p364 = scmp.lt.s32.totalorder %s20, 5
      // Predicated region
      $region37: #{tpu_custom_call.1} parent=5 // pred_check
        %p365 = pneg %p364
      $region38: #{tpu_custom_call.1} parent=5 // pred_check_branch
        %367 = sbr.rel (%p365) target = $region40
      $region39: #{tpu_custom_call.1} parent=5 // pred_region
        // Predicated region
        $region41: #{tpu_custom_call.1} parent=39 // pred_check
          %p368 = pneg %p109
        $region42: #{tpu_custom_call.1} parent=39 // pred_check_branch
          %370 = sbr.rel (%p368) target = $region44
        $region43: #{tpu_custom_call.1} parent=39 // pred_region
          %s371 = sand.u32 %s20, 1
          %s372 = scalar_lea.sflag [#allocation6], %s371
          %s373 = sand.u32 %s99, 1
          %s374 = smul.addr %s373, 512
          %s375 = scalar_lea.vmem [#allocation10], %s374
          %s376 = ssub.s32 %s20, 1
          %p377 = scmp.gt.s32.totalorder %s376, 0
          %s378 = scalar_select %p377, %s376, 0
          %s380 = ssub.s32 8192, 8192
          %381 = vsyncadd %s372, %s380
          %s382 = smul.addr %s378, 128
          %s383 = smul.addr %s382, 64
          %s384 = scalar_lea.hbm %s3, %s383
          %s385 = sshll.u32 %s375, 4
          %s386 = int_to_ptr.vmem [resolvable:$true] %s385
          %391 = dma.hbm_to_vmem [thread:$0]  %s384, 8192, %s386, %s372, 512, 512, 32
        $region44: #{tpu_custom_call.1} parent=39 // pred_fallthru
          _
        // Predicated region
        $region45: #{tpu_custom_call.1} parent=39 // pred_check
          %p392 = pneg %p141
        $region46: #{tpu_custom_call.1} parent=39 // pred_check_branch
          %394 = sbr.rel (%p392) target = $region48
        $region47: #{tpu_custom_call.1} parent=39 // pred_region
          %s395 = sand.u32 %s20, 1
          %s396 = scalar_lea.sflag [#allocation6], %s395
          %s397 = sand.u32 %s131, 1
          %s398 = smul.addr %s397, 512
          %s399 = scalar_lea.vmem [#allocation11], %s398
          %s400 = ssub.s32 %s20, 1
          %p401 = scmp.gt.s32.totalorder %s400, 0
          %s402 = scalar_select %p401, %s400, 0
          %s404 = ssub.s32 8192, 8192
          %405 = vsyncadd %s396, %s404
          %s406 = smul.addr %s402, 128
          %s407 = smul.addr %s406, 64
          %s408 = scalar_lea.hbm %s4, %s407
          %s409 = sshll.u32 %s399, 4
          %s410 = int_to_ptr.vmem [resolvable:$true] %s409
          %415 = dma.hbm_to_vmem [thread:$0]  %s408, 8192, %s410, %s396, 512, 512, 32
        $region48: #{tpu_custom_call.1} parent=39 // pred_fallthru
          _
        // Predicated region
        $region49: #{tpu_custom_call.1} parent=39 // pred_check
          %p416 = pneg %p167
        $region50: #{tpu_custom_call.1} parent=39 // pred_check_branch
          %418 = sbr.rel (%p416) target = $region52
        $region51: #{tpu_custom_call.1} parent=39 // pred_region
          %s419 = sand.u32 %s20, 1
          %s420 = scalar_lea.sflag [#allocation6], %s419
          %s421 = sand.u32 %s157, 1
          %s422 = smul.addr %s421, 512
          %s423 = scalar_lea.vmem [#allocation12], %s422
          %s425 = ssub.s32 8192, 8192
          %426 = vsyncadd %s420, %s425
          %s427 = smul.addr %s20, 128
          %s428 = smul.addr %s427, 64
          %s429 = scalar_lea.hbm %s5, %s428
          %s430 = sshll.u32 %s423, 4
          %s431 = int_to_ptr.vmem [resolvable:$true] %s430
          %436 = dma.hbm_to_vmem [thread:$0]  %s429, 8192, %s431, %s420, 256, 256, 16
        $region52: #{tpu_custom_call.1} parent=39 // pred_fallthru
          _
        // Predicated region
        $region53: #{tpu_custom_call.1} parent=39 // pred_check
          %p437 = pneg %p193
        $region54: #{tpu_custom_call.1} parent=39 // pred_check_branch
          %439 = sbr.rel (%p437) target = $region56
        $region55: #{tpu_custom_call.1} parent=39 // pred_region
          %s440 = sand.u32 %s20, 1
          %s441 = scalar_lea.sflag [#allocation6], %s440
          %s442 = sand.u32 %s183, 1
          %s443 = smul.addr %s442, 8
          %s444 = scalar_lea.vmem [#allocation13], %s443
          %s446 = ssub.s32 128, 128
          %447 = vsyncadd %s441, %s446
          %s448 = smul.addr %s20, 8
          %s449 = smul.addr %s448, 16
          %s450 = scalar_lea.hbm %s6, %s449
          %s452 = sshll.u32 %s444, 4
          %s453 = int_to_ptr.vmem [resolvable:$true] %s452
          %455 = dma.hbm_to_vmem [thread:$0]  %s450, 128, %s453, %s441
        $region56: #{tpu_custom_call.1} parent=39 // pred_fallthru
          _
      $region40: #{tpu_custom_call.1} parent=5 // pred_fallthru
        _
      %p456 = scmp.le.s32.totalorder 1, %s20
      %p457 = scmp.lt.s32.totalorder %s20, 6
      %p458 = pnand %p456, %p457
      %p459 = pneg %p458
      // Predicated region
      $region57: #{tpu_custom_call.1} parent=5 // pred_check
        _
      $region58: #{tpu_custom_call.1} parent=5 // pred_check_branch
        %461 = sbr.rel (%p458) target = $region60
      $region59: #{tpu_custom_call.1} parent=5 // pred_region
        %s462 = ssub.s32 %s20, 1
        // Predicated region
        $region61: #{tpu_custom_call.1} parent=59 // pred_check
          %p463 = pneg %p41
        $region62: #{tpu_custom_call.1} parent=59 // pred_check_branch
          %465 = sbr.rel (%p463) target = $region64
        $region63: #{tpu_custom_call.1} parent=59 // pred_region
          %466 = dma.done [#allocation6], 512
        $region64: #{tpu_custom_call.1} parent=59 // pred_fallthru
          _
        // Predicated region
        $region65: #{tpu_custom_call.1} parent=59 // pred_check
          %p467 = pneg %p83
        $region66: #{tpu_custom_call.1} parent=59 // pred_check_branch
          %469 = sbr.rel (%p467) target = $region68
        $region67: #{tpu_custom_call.1} parent=59 // pred_region
          %470 = dma.done [#allocation9], 8192
        $region68: #{tpu_custom_call.1} parent=59 // pred_fallthru
          _
        %s471 = sand.u32 %s25, 1
        %s472 = scalar_lea.sflag [#allocation6], %s471
        %s473 = sand.u32 %s102, 1
        %s474 = smul.addr %s473, 512
        %s475 = scalar_lea.vmem [#allocation10], %s474
        // Predicated region
        $region69: #{tpu_custom_call.1} parent=59 // pred_check
          %p476 = pneg %p115
        $region70: #{tpu_custom_call.1} parent=59 // pred_check_branch
          %478 = sbr.rel (%p476) target = $region72
        $region71: #{tpu_custom_call.1} parent=59 // pred_region
          %479 = dma.done %s472, 8192
        $region72: #{tpu_custom_call.1} parent=59 // pred_fallthru
          _
        %s480 = sand.u32 %s25, 1
        %s481 = scalar_lea.sflag [#allocation6], %s480
        %s482 = sand.u32 %s134, 1
        %s483 = smul.addr %s482, 512
        %s484 = scalar_lea.vmem [#allocation11], %s483
        // Predicated region
        $region73: #{tpu_custom_call.1} parent=59 // pred_check
          %p485 = pneg %p147
        $region74: #{tpu_custom_call.1} parent=59 // pred_check_branch
          %487 = sbr.rel (%p485) target = $region76
        $region75: #{tpu_custom_call.1} parent=59 // pred_region
          %488 = dma.done %s481, 8192
        $region76: #{tpu_custom_call.1} parent=59 // pred_fallthru
          _
        %s489 = sand.u32 %s25, 1
        %s490 = scalar_lea.sflag [#allocation6], %s489
        %s491 = sand.u32 %s160, 1
        %s492 = smul.addr %s491, 512
        %s493 = scalar_lea.vmem [#allocation12], %s492
        // Predicated region
        $region77: #{tpu_custom_call.1} parent=59 // pred_check
          %p494 = pneg %p173
        $region78: #{tpu_custom_call.1} parent=59 // pred_check_branch
          %496 = sbr.rel (%p494) target = $region80
        $region79: #{tpu_custom_call.1} parent=59 // pred_region
          %497 = dma.done %s490, 8192
        $region80: #{tpu_custom_call.1} parent=59 // pred_fallthru
          _
        %s498 = sand.u32 %s25, 1
        %s499 = scalar_lea.sflag [#allocation6], %s498
        %s500 = sand.u32 %s186, 1
        %s501 = smul.addr %s500, 8
        %s502 = scalar_lea.vmem [#allocation13], %s501
        // Predicated region
        $region81: #{tpu_custom_call.1} parent=59 // pred_check
          %p503 = pneg %p199
        $region82: #{tpu_custom_call.1} parent=59 // pred_check_branch
          %505 = sbr.rel (%p503) target = $region84
        $region83: #{tpu_custom_call.1} parent=59 // pred_region
          %506 = dma.done %s499, 128
        $region84: #{tpu_custom_call.1} parent=59 // pred_fallthru
          _
        // Predicated region
        $region85: #{tpu_custom_call.1} parent=59 // pred_check
          %p507 = pneg %p220
        $region86: #{tpu_custom_call.1} parent=59 // pred_check_branch
          %509 = sbr.rel (%p507) target = $region88
        $region87: #{tpu_custom_call.1} parent=59 // pred_region
          %510 = dma.done [#allocation9], 2048
        $region88: #{tpu_custom_call.1} parent=59 // pred_fallthru
          _
        // Predicated region
        $region89: #{tpu_custom_call.1} parent=59 // pred_check
          %p511 = pneg %p241
        $region90: #{tpu_custom_call.1} parent=59 // pred_check_branch
          %513 = sbr.rel (%p511) target = $region92
        $region91: #{tpu_custom_call.1} parent=59 // pred_region
          %514 = dma.done [#allocation16], 2048
        $region92: #{tpu_custom_call.1} parent=59 // pred_fallthru
          _
        // Predicated region
        $region93: #{tpu_custom_call.1} parent=59 // pred_check
          %p515 = pneg %p262
        $region94: #{tpu_custom_call.1} parent=59 // pred_check_branch
          %517 = sbr.rel (%p515) target = $region96
        $region95: #{tpu_custom_call.1} parent=59 // pred_region
          %518 = dma.done [#allocation16], 16
        $region96: #{tpu_custom_call.1} parent=59 // pred_fallthru
          _
        %p519 = pneg %p41
        %p520 = pneg %p38
        %p521 = pneg %p62
        %p522 = pneg %p59
        %p523 = pneg %p83
        %p524 = pneg %p80
        %s525 = sand.u32 %s25, 1
        %s526 = scalar_lea.sflag [#allocation6], %s525
        %s527 = sand.u32 %s102, 1
        %s528 = smul.addr %s527, 512
        %s529 = scalar_lea.vmem [#allocation10], %s528
        %p530 = pneg %p115
        %p531 = pneg %p112
        %s532 = sand.u32 %s25, 1
        %s533 = scalar_lea.sflag [#allocation6], %s532
        %s534 = sand.u32 %s134, 1
        %s535 = smul.addr %s534, 512
        %s536 = scalar_lea.vmem [#allocation11], %s535
        %p537 = pneg %p147
        %p538 = pneg %p144
        %s539 = sand.u32 %s25, 1
        %s540 = scalar_lea.sflag [#allocation6], %s539
        %s541 = sand.u32 %s160, 1
        %s542 = smul.addr %s541, 512
        %s543 = scalar_lea.vmem [#allocation12], %s542
        %p544 = pneg %p173
        %p545 = pneg %p170
        %s546 = sand.u32 %s25, 1
        %s547 = scalar_lea.sflag [#allocation6], %s546
        %s548 = sand.u32 %s186, 1
        %s549 = smul.addr %s548, 8
        %s550 = scalar_lea.vmem [#allocation13], %s549
        %p551 = pneg %p199
        %p552 = pneg %p196
        %p553 = pneg %p220
        %p554 = pneg %p217
        %p555 = pneg %p241
        %p556 = pneg %p238
        %p557 = pneg %p262
        %p558 = pneg %p259
        %p559 = pneg %p283
        %p560 = pneg %p280
        %s561 = ssub.s32 %s25, 1
        %p562 = scmp.gt.s32.totalorder %s561, 0
        %s563 = scalar_select %p562, %s561, 0
        %s564 = ssub.s32 %s25, 1
        %p565 = scmp.gt.s32.totalorder %s564, 0
        %s566 = scalar_select %p565, %s564, 0
        %v568 = vld [vmem:[%s1] sm:$0xff]
        %p569 = scmp.eq.s32.totalorder %s25, 0
        // Predicated region
        $region97: #{tpu_custom_call.1} parent=59 // pred_check
          %p570 = pneg %p569
        $region98: #{tpu_custom_call.1} parent=59 // pred_check_branch
          %572 = sbr.rel (%p570) target = $region100
        $region99: #{tpu_custom_call.1} parent=59 // pred_region
          %v573 = vld [vmem:[#allocation5] sm:$0xf]
          %v574 = vld [vmem:[#allocation5 + $0x4] sm:$0xf]
          %v575 = vld [vmem:[#allocation5 + $0x8] sm:$0xf]
          %v576 = vld [vmem:[#allocation5 + $0xc] sm:$0xf]
          %v577 = vld [vmem:[#allocation5 + $0x10] sm:$0xf]
          %v578 = vld [vmem:[#allocation5 + $0x14] sm:$0xf]
          %v579 = vld [vmem:[#allocation5 + $0x18] sm:$0xf]
          %v580 = vld [vmem:[#allocation5 + $0x1c] sm:$0xf]
          %v581 = vld [vmem:[#allocation8] sm:$0xff]
          %v582 = vld [vmem:[#allocation8 + $0x8] sm:$0xff]
          %v583 = vld [vmem:[#allocation8 + $0x10] sm:$0xff]
          %v584 = vld [vmem:[#allocation8 + $0x18] sm:$0xff]
          %v585 = vld [vmem:[#allocation8 + $0x20] sm:$0xff]
          %v586 = vld [vmem:[#allocation8 + $0x28] sm:$0xff]
          %v587 = vld [vmem:[#allocation8 + $0x30] sm:$0xff]
          %v588 = vld [vmem:[#allocation8 + $0x38] sm:$0xff]
          %v589 = vld [vmem:[#allocation8 + $0x40] sm:$0xff]
          %v590 = vld [vmem:[#allocation8 + $0x48] sm:$0xff]
          %v591 = vld [vmem:[#allocation8 + $0x50] sm:$0xff]
          %v592 = vld [vmem:[#allocation8 + $0x58] sm:$0xff]
          %v593 = vld [vmem:[#allocation8 + $0x60] sm:$0xff]
          %v594 = vld [vmem:[#allocation8 + $0x68] sm:$0xff]
          %v595 = vld [vmem:[#allocation8 + $0x70] sm:$0xff]
          %v596 = vld [vmem:[#allocation8 + $0x78] sm:$0xff]
          %v597 = vld [vmem:[#allocation8 + $0x80] sm:$0xff]
          %v598 = vld [vmem:[#allocation8 + $0x88] sm:$0xff]
          %v599 = vld [vmem:[#allocation8 + $0x90] sm:$0xff]
          %v600 = vld [vmem:[#allocation8 + $0x98] sm:$0xff]
          %v601 = vld [vmem:[#allocation8 + $0xa0] sm:$0xff]
          %v602 = vld [vmem:[#allocation8 + $0xa8] sm:$0xff]
          %v603 = vld [vmem:[#allocation8 + $0xb0] sm:$0xff]
          %v604 = vld [vmem:[#allocation8 + $0xb8] sm:$0xff]
          %v605 = vld [vmem:[#allocation8 + $0xc0] sm:$0xff]
          %v606 = vld [vmem:[#allocation8 + $0xc8] sm:$0xff]
          %v607 = vld [vmem:[#allocation8 + $0xd0] sm:$0xff]
          %v608 = vld [vmem:[#allocation8 + $0xd8] sm:$0xff]
          %v609 = vld [vmem:[#allocation8 + $0xe0] sm:$0xff]
          %v610 = vld [vmem:[#allocation8 + $0xe8] sm:$0xff]
          %v611 = vld [vmem:[#allocation8 + $0xf0] sm:$0xff]
          %v612 = vld [vmem:[#allocation8 + $0xf8] sm:$0xff]
          %v613 = vld [vmem:[#allocation8 + $0x100] sm:$0xff]
          %v614 = vld [vmem:[#allocation8 + $0x108] sm:$0xff]
          %v615 = vld [vmem:[#allocation8 + $0x110] sm:$0xff]
          %v616 = vld [vmem:[#allocation8 + $0x118] sm:$0xff]
          %v617 = vld [vmem:[#allocation8 + $0x120] sm:$0xff]
          %v618 = vld [vmem:[#allocation8 + $0x128] sm:$0xff]
          %v619 = vld [vmem:[#allocation8 + $0x130] sm:$0xff]
          %v620 = vld [vmem:[#allocation8 + $0x138] sm:$0xff]
          %v621 = vld [vmem:[#allocation8 + $0x140] sm:$0xff]
          %v622 = vld [vmem:[#allocation8 + $0x148] sm:$0xff]
          %v623 = vld [vmem:[#allocation8 + $0x150] sm:$0xff]
          %v624 = vld [vmem:[#allocation8 + $0x158] sm:$0xff]
          %v625 = vld [vmem:[#allocation8 + $0x160] sm:$0xff]
          %v626 = vld [vmem:[#allocation8 + $0x168] sm:$0xff]
          %v627 = vld [vmem:[#allocation8 + $0x170] sm:$0xff]
          %v628 = vld [vmem:[#allocation8 + $0x178] sm:$0xff]
          %v629 = vld [vmem:[#allocation8 + $0x180] sm:$0xff]
          %v630 = vld [vmem:[#allocation8 + $0x188] sm:$0xff]
          %v631 = vld [vmem:[#allocation8 + $0x190] sm:$0xff]
          %v632 = vld [vmem:[#allocation8 + $0x198] sm:$0xff]
          %v633 = vld [vmem:[#allocation8 + $0x1a0] sm:$0xff]
          %v634 = vld [vmem:[#allocation8 + $0x1a8] sm:$0xff]
          %v635 = vld [vmem:[#allocation8 + $0x1b0] sm:$0xff]
          %v636 = vld [vmem:[#allocation8 + $0x1b8] sm:$0xff]
          %v637 = vld [vmem:[#allocation8 + $0x1c0] sm:$0xff]
          %v638 = vld [vmem:[#allocation8 + $0x1c8] sm:$0xff]
          %v639 = vld [vmem:[#allocation8 + $0x1d0] sm:$0xff]
          %v640 = vld [vmem:[#allocation8 + $0x1d8] sm:$0xff]
          %v641 = vld [vmem:[#allocation8 + $0x1e0] sm:$0xff]
          %v642 = vld [vmem:[#allocation8 + $0x1e8] sm:$0xff]
          %v643 = vld [vmem:[#allocation8 + $0x1f0] sm:$0xff]
          %v644 = vld [vmem:[#allocation8 + $0x1f8] sm:$0xff]
          %v645 = vld [vmem:[%s502] sm:$0xff]
          %v647 = vlaneseq
          %v648 = vshrl.u32 %v647, 7
          %v649 = vsub.s32 0, %v648
          %v650 = vrot.slane %v645, %v649
          %v651 = vlaneseq
          %v652 = vshrl.u32 %v651, 7
          %v653 = vsub.s32 1, %v652
          %v654 = vrot.slane %v645, %v653
          %v655 = vlaneseq
          %v656 = vshrl.u32 %v655, 7
          %v657 = vsub.s32 2, %v656
          %v658 = vrot.slane %v645, %v657
          %v659 = vlaneseq
          %v660 = vshrl.u32 %v659, 7
          %v661 = vsub.s32 3, %v660
          %v662 = vrot.slane %v645, %v661
          %v663 = vlaneseq
          %v664 = vshrl.u32 %v663, 7
          %v665 = vsub.s32 4, %v664
          %v666 = vrot.slane %v645, %v665
          %v667 = vlaneseq
          %v668 = vshrl.u32 %v667, 7
          %v669 = vsub.s32 5, %v668
          %v670 = vrot.slane %v645, %v669
          %v671 = vlaneseq
          %v672 = vshrl.u32 %v671, 7
          %v673 = vsub.s32 6, %v672
          %v674 = vrot.slane %v645, %v673
          %v675 = vlaneseq
          %v676 = vshrl.u32 %v675, 7
          %v677 = vsub.s32 7, %v676
          %v678 = vrot.slane %v645, %v677
          %v695 = vunpack.c.l.b16 %v573
          %v696 = vunpack.c.l.b16 %v574
          %v697 = vunpack.c.l.b16 %v575
          %v698 = vunpack.c.l.b16 %v576
          %v699 = vunpack.c.l.b16 %v577
          %v700 = vunpack.c.l.b16 %v578
          %v701 = vunpack.c.l.b16 %v579
          %v702 = vunpack.c.l.b16 %v580
          %v703 = vpack.c.b16 %v696, %v695
          %v704 = vpack.c.b16 %v698, %v697
          %v705 = vpack.c.b16 %v700, %v699
          %v706 = vpack.c.b16 %v702, %v701
          %v775 = vunpack.c.l.b16 %v581
          %v776 = vunpack.c.h.b16 %v581
          %v777 = vunpack.c.l.b16 %v582
          %v778 = vunpack.c.h.b16 %v582
          %v779 = vunpack.c.l.b16 %v583
          %v780 = vunpack.c.h.b16 %v583
          %v781 = vunpack.c.l.b16 %v584
          %v782 = vunpack.c.h.b16 %v584
          %v783 = vunpack.c.l.b16 %v585
          %v784 = vunpack.c.h.b16 %v585
          %v785 = vunpack.c.l.b16 %v586
          %v786 = vunpack.c.h.b16 %v586
          %v787 = vunpack.c.l.b16 %v587
          %v788 = vunpack.c.h.b16 %v587
          %v789 = vunpack.c.l.b16 %v588
          %v790 = vunpack.c.h.b16 %v588
          %v791 = vunpack.c.l.b16 %v589
          %v792 = vunpack.c.h.b16 %v589
          %v793 = vunpack.c.l.b16 %v590
          %v794 = vunpack.c.h.b16 %v590
          %v795 = vunpack.c.l.b16 %v591
          %v796 = vunpack.c.h.b16 %v591
          %v797 = vunpack.c.l.b16 %v592
          %v798 = vunpack.c.h.b16 %v592
          %v799 = vunpack.c.l.b16 %v593
          %v800 = vunpack.c.h.b16 %v593
          %v801 = vunpack.c.l.b16 %v594
          %v802 = vunpack.c.h.b16 %v594
          %v803 = vunpack.c.l.b16 %v595
          %v804 = vunpack.c.h.b16 %v595
          %v805 = vunpack.c.l.b16 %v596
          %v806 = vunpack.c.h.b16 %v596
          %v807 = vunpack.c.l.b16 %v597
          %v808 = vunpack.c.h.b16 %v597
          %v809 = vunpack.c.l.b16 %v598
          %v810 = vunpack.c.h.b16 %v598
          %v811 = vunpack.c.l.b16 %v599
          %v812 = vunpack.c.h.b16 %v599
          %v813 = vunpack.c.l.b16 %v600
          %v814 = vunpack.c.h.b16 %v600
          %v815 = vunpack.c.l.b16 %v601
          %v816 = vunpack.c.h.b16 %v601
          %v817 = vunpack.c.l.b16 %v602
          %v818 = vunpack.c.h.b16 %v602
          %v819 = vunpack.c.l.b16 %v603
          %v820 = vunpack.c.h.b16 %v603
          %v821 = vunpack.c.l.b16 %v604
          %v822 = vunpack.c.h.b16 %v604
          %v823 = vunpack.c.l.b16 %v605
          %v824 = vunpack.c.h.b16 %v605
          %v825 = vunpack.c.l.b16 %v606
          %v826 = vunpack.c.h.b16 %v606
          %v827 = vunpack.c.l.b16 %v607
          %v828 = vunpack.c.h.b16 %v607
          %v829 = vunpack.c.l.b16 %v608
          %v830 = vunpack.c.h.b16 %v608
          %v831 = vunpack.c.l.b16 %v609
          %v832 = vunpack.c.h.b16 %v609
          %v833 = vunpack.c.l.b16 %v610
          %v834 = vunpack.c.h.b16 %v610
          %v835 = vunpack.c.l.b16 %v611
          %v836 = vunpack.c.h.b16 %v611
          %v837 = vunpack.c.l.b16 %v612
          %v838 = vunpack.c.h.b16 %v612
          %v839 = vunpack.c.l.b16 %v613
          %v840 = vunpack.c.h.b16 %v613
          %v841 = vunpack.c.l.b16 %v614
          %v842 = vunpack.c.h.b16 %v614
          %v843 = vunpack.c.l.b16 %v615
          %v844 = vunpack.c.h.b16 %v615
          %v845 = vunpack.c.l.b16 %v616
          %v846 = vunpack.c.h.b16 %v616
          %v847 = vunpack.c.l.b16 %v617
          %v848 = vunpack.c.h.b16 %v617
          %v849 = vunpack.c.l.b16 %v618
          %v850 = vunpack.c.h.b16 %v618
          %v851 = vunpack.c.l.b16 %v619
          %v852 = vunpack.c.h.b16 %v619
          %v853 = vunpack.c.l.b16 %v620
          %v854 = vunpack.c.h.b16 %v620
          %v855 = vunpack.c.l.b16 %v621
          %v856 = vunpack.c.h.b16 %v621
          %v857 = vunpack.c.l.b16 %v622
          %v858 = vunpack.c.h.b16 %v622
          %v859 = vunpack.c.l.b16 %v623
          %v860 = vunpack.c.h.b16 %v623
          %v861 = vunpack.c.l.b16 %v624
          %v862 = vunpack.c.h.b16 %v624
          %v863 = vunpack.c.l.b16 %v625
          %v864 = vunpack.c.h.b16 %v625
          %v865 = vunpack.c.l.b16 %v626
          %v866 = vunpack.c.h.b16 %v626
          %v867 = vunpack.c.l.b16 %v627
          %v868 = vunpack.c.h.b16 %v627
          %v869 = vunpack.c.l.b16 %v628
          %v870 = vunpack.c.h.b16 %v628
          %v871 = vunpack.c.l.b16 %v629
          %v872 = vunpack.c.h.b16 %v629
          %v873 = vunpack.c.l.b16 %v630
          %v874 = vunpack.c.h.b16 %v630
          %v875 = vunpack.c.l.b16 %v631
          %v876 = vunpack.c.h.b16 %v631
          %v877 = vunpack.c.l.b16 %v632
          %v878 = vunpack.c.h.b16 %v632
          %v879 = vunpack.c.l.b16 %v633
          %v880 = vunpack.c.h.b16 %v633
          %v881 = vunpack.c.l.b16 %v634
          %v882 = vunpack.c.h.b16 %v634
          %v883 = vunpack.c.l.b16 %v635
          %v884 = vunpack.c.h.b16 %v635
          %v885 = vunpack.c.l.b16 %v636
          %v886 = vunpack.c.h.b16 %v636
          %v887 = vunpack.c.l.b16 %v637
          %v888 = vunpack.c.h.b16 %v637
          %v889 = vunpack.c.l.b16 %v638
          %v890 = vunpack.c.h.b16 %v638
          %v891 = vunpack.c.l.b16 %v639
          %v892 = vunpack.c.h.b16 %v639
          %v893 = vunpack.c.l.b16 %v640
          %v894 = vunpack.c.h.b16 %v640
          %v895 = vunpack.c.l.b16 %v641
          %v896 = vunpack.c.h.b16 %v641
          %v897 = vunpack.c.l.b16 %v642
          %v898 = vunpack.c.h.b16 %v642
          %v899 = vunpack.c.l.b16 %v643
          %v900 = vunpack.c.h.b16 %v643
          %v901 = vunpack.c.l.b16 %v644
          %v902 = vunpack.c.h.b16 %v644
          %v903 = vpack.c.b16 %v783, %v775
          %v904 = vpack.c.b16 %v784, %v776
          %v905 = vpack.c.b16 %v785, %v777
          %v906 = vpack.c.b16 %v786, %v778
          %v907 = vpack.c.b16 %v787, %v779
          %v908 = vpack.c.b16 %v788, %v780
          %v909 = vpack.c.b16 %v789, %v781
          %v910 = vpack.c.b16 %v790, %v782
          %v911 = vpack.c.b16 %v799, %v791
          %v912 = vpack.c.b16 %v800, %v792
          %v913 = vpack.c.b16 %v801, %v793
          %v914 = vpack.c.b16 %v802, %v794
          %v915 = vpack.c.b16 %v803, %v795
          %v916 = vpack.c.b16 %v804, %v796
          %v917 = vpack.c.b16 %v805, %v797
          %v918 = vpack.c.b16 %v806, %v798
          %v919 = vpack.c.b16 %v815, %v807
          %v920 = vpack.c.b16 %v816, %v808
          %v921 = vpack.c.b16 %v817, %v809
          %v922 = vpack.c.b16 %v818, %v810
          %v923 = vpack.c.b16 %v819, %v811
          %v924 = vpack.c.b16 %v820, %v812
          %v925 = vpack.c.b16 %v821, %v813
          %v926 = vpack.c.b16 %v822, %v814
          %v927 = vpack.c.b16 %v831, %v823
          %v928 = vpack.c.b16 %v832, %v824
          %v929 = vpack.c.b16 %v833, %v825
          %v930 = vpack.c.b16 %v834, %v826
          %v931 = vpack.c.b16 %v835, %v827
          %v932 = vpack.c.b16 %v836, %v828
          %v933 = vpack.c.b16 %v837, %v829
          %v934 = vpack.c.b16 %v838, %v830
          %v935 = vpack.c.b16 %v847, %v839
          %v936 = vpack.c.b16 %v848, %v840
          %v937 = vpack.c.b16 %v849, %v841
          %v938 = vpack.c.b16 %v850, %v842
          %v939 = vpack.c.b16 %v851, %v843
          %v940 = vpack.c.b16 %v852, %v844
          %v941 = vpack.c.b16 %v853, %v845
          %v942 = vpack.c.b16 %v854, %v846
          %v943 = vpack.c.b16 %v863, %v855
          %v944 = vpack.c.b16 %v864, %v856
          %v945 = vpack.c.b16 %v865, %v857
          %v946 = vpack.c.b16 %v866, %v858
          %v947 = vpack.c.b16 %v867, %v859
          %v948 = vpack.c.b16 %v868, %v860
          %v949 = vpack.c.b16 %v869, %v861
          %v950 = vpack.c.b16 %v870, %v862
          %v951 = vpack.c.b16 %v879, %v871
          %v952 = vpack.c.b16 %v880, %v872
          %v953 = vpack.c.b16 %v881, %v873
          %v954 = vpack.c.b16 %v882, %v874
          %v955 = vpack.c.b16 %v883, %v875
          %v956 = vpack.c.b16 %v884, %v876
          %v957 = vpack.c.b16 %v885, %v877
          %v958 = vpack.c.b16 %v886, %v878
          %v959 = vpack.c.b16 %v895, %v887
          %v960 = vpack.c.b16 %v896, %v888
          %v961 = vpack.c.b16 %v897, %v889
          %v962 = vpack.c.b16 %v898, %v890
          %v963 = vpack.c.b16 %v899, %v891
          %v964 = vpack.c.b16 %v900, %v892
          %v965 = vpack.c.b16 %v901, %v893
          %v966 = vpack.c.b16 %v902, %v894
          %1031 = vmatprep.subr.bf16.mxu0 %v960
          %1032 = vmatpush1.bf16.msra.mxu0 %v959
          %1033 = vmatprep.subr.bf16.mxu0 %v952
          %1034 = vmatpush1.bf16.msra.mxu0 %v951
          %1035 = vmatprep.subr.bf16.mxu0 %v944
          %1036 = vmatpush1.bf16.msra.mxu0 %v943
          %1037 = vmatprep.subr.bf16.mxu0 %v936
          %1038 = vmatpush1.bf16.msra.mxu0 %v935
          %1039 = vmatprep.subr.bf16.mxu0 %v928
          %1040 = vmatpush1.bf16.msra.mxu0 %v927
          %1041 = vmatprep.subr.bf16.mxu0 %v920
          %1042 = vmatpush1.bf16.msra.mxu0 %v919
          %1043 = vmatprep.subr.bf16.mxu0 %v912
          %1044 = vmatpush1.bf16.msra.mxu0 %v911
          %1045 = vmatprep.subr.bf16.mxu0 %v904
          %1046 = vmatpush1.bf16.msra.mxu0 %v903
          %1047 = vmatprep.subr.bf16.mxu0 0
          %1048 = vmatpush2.bf16.msra.mxu0 0
          %1049 = vmatprep.subr.bf16.mxu0 0
          %1050 = vmatpush2.bf16.msra.mxu0 0
          %1051 = vmatprep.subr.bf16.mxu0 0
          %1052 = vmatpush2.bf16.msra.mxu0 0
          %1053 = vmatprep.subr.bf16.mxu0 0
          %1054 = vmatpush2.bf16.msra.mxu0 0
          %1055 = vmatprep.subr.bf16.mxu0 0
          %1056 = vmatpush2.bf16.msra.mxu0 0
          %1057 = vmatprep.subr.bf16.mxu0 0
          %1058 = vmatpush2.bf16.msra.mxu0 0
          %1059 = vmatprep.subr.bf16.mxu0 0
          %1060 = vmatpush2.bf16.msra.mxu0 0
          %1061 = vmatprep.subr.bf16.mxu0 0
          %1062 = vmatpush2.bf16.msra.mxu0 0
          %1063 = vmatprep.mubr.bf16.mxu0 0
          %1064 = vmatmul.mubr.bf16.gmra.mxu0 %v703
          %v1065 = vpop.f32.mrf.mxu0
          %v1066 = vadd.f32 %v650, %v1065
          %v1067 = vpop.f32.mrf.mxu0
          %v1068 = vadd.f32 %v654, %v1067
          %v1069 = vpop.f32.mrf.mxu0
          %v1070 = vadd.f32 %v650, %v1069
          %v1071 = vpop.f32.mrf.mxu0
          %v1072 = vadd.f32 %v654, %v1071
          %1073 = vmatprep.mubr.bf16.mxu0 0
          %1074 = vmatmul.mubr.bf16.gmra.mxu0 %v704
          %v1075 = vpop.f32.mrf.mxu0
          %v1076 = vadd.f32 %v650, %v1075
          %v1077 = vpop.f32.mrf.mxu0
          %v1078 = vadd.f32 %v654, %v1077
          %v1079 = vpop.f32.mrf.mxu0
          %v1080 = vadd.f32 %v650, %v1079
          %v1081 = vpop.f32.mrf.mxu0
          %v1082 = vadd.f32 %v654, %v1081
          %1083 = vmatprep.mubr.bf16.mxu0 0
          %1084 = vmatmul.mubr.bf16.gmra.mxu0 %v705
          %v1085 = vpop.f32.mrf.mxu0
          %v1086 = vadd.f32 %v650, %v1085
          %v1087 = vpop.f32.mrf.mxu0
          %v1088 = vadd.f32 %v654, %v1087
          %v1089 = vpop.f32.mrf.mxu0
          %v1090 = vadd.f32 %v650, %v1089
          %v1091 = vpop.f32.mrf.mxu0
          %v1092 = vadd.f32 %v654, %v1091
          %1093 = vmatprep.mubr.bf16.mxu0 0
          %1094 = vmatmul.mubr.bf16.gmra.mxu0 %v706
          %v1095 = vpop.f32.mrf.mxu0
          %v1096 = vadd.f32 %v650, %v1095
          %v1097 = vpop.f32.mrf.mxu0
          %v1098 = vadd.f32 %v654, %v1097
          %v1099 = vpop.f32.mrf.mxu0
          %v1100 = vadd.f32 %v650, %v1099
          %v1101 = vpop.f32.mrf.mxu0
          %v1102 = vadd.f32 %v654, %v1101
          %1103 = vdwg.mxu0
          %1104 = vmatprep.subr.bf16.mxu0 %v962
          %1105 = vmatpush1.bf16.msra.mxu0 %v961
          %1106 = vmatprep.subr.bf16.mxu0 %v954
          %1107 = vmatpush1.bf16.msra.mxu0 %v953
          %1108 = vmatprep.subr.bf16.mxu0 %v946
          %1109 = vmatpush1.bf16.msra.mxu0 %v945
          %1110 = vmatprep.subr.bf16.mxu0 %v938
          %1111 = vmatpush1.bf16.msra.mxu0 %v937
          %1112 = vmatprep.subr.bf16.mxu0 %v930
          %1113 = vmatpush1.bf16.msra.mxu0 %v929
          %1114 = vmatprep.subr.bf16.mxu0 %v922
          %1115 = vmatpush1.bf16.msra.mxu0 %v921
          %1116 = vmatprep.subr.bf16.mxu0 %v914
          %1117 = vmatpush1.bf16.msra.mxu0 %v913
          %1118 = vmatprep.subr.bf16.mxu0 %v906
          %1119 = vmatpush1.bf16.msra.mxu0 %v905
          %1120 = vmatprep.subr.bf16.mxu0 0
          %1121 = vmatpush2.bf16.msra.mxu0 0
          %1122 = vmatprep.subr.bf16.mxu0 0
          %1123 = vmatpush2.bf16.msra.mxu0 0
          %1124 = vmatprep.subr.bf16.mxu0 0
          %1125 = vmatpush2.bf16.msra.mxu0 0
          %1126 = vmatprep.subr.bf16.mxu0 0
          %1127 = vmatpush2.bf16.msra.mxu0 0
          %1128 = vmatprep.subr.bf16.mxu0 0
          %1129 = vmatpush2.bf16.msra.mxu0 0
          %1130 = vmatprep.subr.bf16.mxu0 0
          %1131 = vmatpush2.bf16.msra.mxu0 0
          %1132 = vmatprep.subr.bf16.mxu0 0
          %1133 = vmatpush2.bf16.msra.mxu0 0
          %1134 = vmatprep.subr.bf16.mxu0 0
          %1135 = vmatpush2.bf16.msra.mxu0 0
          %1136 = vmatprep.mubr.bf16.mxu0 0
          %1137 = vmatmul.mubr.bf16.gmra.mxu0 %v703
          %v1138 = vpop.f32.mrf.mxu0
          %v1139 = vadd.f32 %v658, %v1138
          %v1140 = vpop.f32.mrf.mxu0
          %v1141 = vadd.f32 %v662, %v1140
          %v1142 = vpop.f32.mrf.mxu0
          %v1143 = vadd.f32 %v658, %v1142
          %v1144 = vpop.f32.mrf.mxu0
          %v1145 = vadd.f32 %v662, %v1144
          %1146 = vmatprep.mubr.bf16.mxu0 0
          %1147 = vmatmul.mubr.bf16.gmra.mxu0 %v704
          %v1148 = vpop.f32.mrf.mxu0
          %v1149 = vadd.f32 %v658, %v1148
          %v1150 = vpop.f32.mrf.mxu0
          %v1151 = vadd.f32 %v662, %v1150
          %v1152 = vpop.f32.mrf.mxu0
          %v1153 = vadd.f32 %v658, %v1152
          %v1154 = vpop.f32.mrf.mxu0
          %v1155 = vadd.f32 %v662, %v1154
          %1156 = vmatprep.mubr.bf16.mxu0 0
          %1157 = vmatmul.mubr.bf16.gmra.mxu0 %v705
          %v1158 = vpop.f32.mrf.mxu0
          %v1159 = vadd.f32 %v658, %v1158
          %v1160 = vpop.f32.mrf.mxu0
          %v1161 = vadd.f32 %v662, %v1160
          %v1162 = vpop.f32.mrf.mxu0
          %v1163 = vadd.f32 %v658, %v1162
          %v1164 = vpop.f32.mrf.mxu0
          %v1165 = vadd.f32 %v662, %v1164
          %1166 = vmatprep.mubr.bf16.mxu0 0
          %1167 = vmatmul.mubr.bf16.gmra.mxu0 %v706
          %v1168 = vpop.f32.mrf.mxu0
          %v1169 = vadd.f32 %v658, %v1168
          %v1170 = vpop.f32.mrf.mxu0
          %v1171 = vadd.f32 %v662, %v1170
          %v1172 = vpop.f32.mrf.mxu0
          %v1173 = vadd.f32 %v658, %v1172
          %v1174 = vpop.f32.mrf.mxu0
          %v1175 = vadd.f32 %v662, %v1174
          %1176 = vdwg.mxu0
          %1177 = vmatprep.subr.bf16.mxu0 %v964
          %1178 = vmatpush1.bf16.msra.mxu0 %v963
          %1179 = vmatprep.subr.bf16.mxu0 %v956
          %1180 = vmatpush1.bf16.msra.mxu0 %v955
          %1181 = vmatprep.subr.bf16.mxu0 %v948
          %1182 = vmatpush1.bf16.msra.mxu0 %v947
          %1183 = vmatprep.subr.bf16.mxu0 %v940
          %1184 = vmatpush1.bf16.msra.mxu0 %v939
          %1185 = vmatprep.subr.bf16.mxu0 %v932
          %1186 = vmatpush1.bf16.msra.mxu0 %v931
          %1187 = vmatprep.subr.bf16.mxu0 %v924
          %1188 = vmatpush1.bf16.msra.mxu0 %v923
          %1189 = vmatprep.subr.bf16.mxu0 %v916
          %1190 = vmatpush1.bf16.msra.mxu0 %v915
          %1191 = vmatprep.subr.bf16.mxu0 %v908
          %1192 = vmatpush1.bf16.msra.mxu0 %v907
          %1193 = vmatprep.subr.bf16.mxu0 0
          %1194 = vmatpush2.bf16.msra.mxu0 0
          %1195 = vmatprep.subr.bf16.mxu0 0
          %1196 = vmatpush2.bf16.msra.mxu0 0
          %1197 = vmatprep.subr.bf16.mxu0 0
          %1198 = vmatpush2.bf16.msra.mxu0 0
          %1199 = vmatprep.subr.bf16.mxu0 0
          %1200 = vmatpush2.bf16.msra.mxu0 0
          %1201 = vmatprep.subr.bf16.mxu0 0
          %1202 = vmatpush2.bf16.msra.mxu0 0
          %1203 = vmatprep.subr.bf16.mxu0 0
          %1204 = vmatpush2.bf16.msra.mxu0 0
          %1205 = vmatprep.subr.bf16.mxu0 0
          %1206 = vmatpush2.bf16.msra.mxu0 0
          %1207 = vmatprep.subr.bf16.mxu0 0
          %1208 = vmatpush2.bf16.msra.mxu0 0
          %1209 = vmatprep.mubr.bf16.mxu0 0
          %1210 = vmatmul.mubr.bf16.gmra.mxu0 %v703
          %v1211 = vpop.f32.mrf.mxu0
          %v1212 = vadd.f32 %v666, %v1211
          %v1213 = vpop.f32.mrf.mxu0
          %v1214 = vadd.f32 %v670, %v1213
          %v1215 = vpop.f32.mrf.mxu0
          %v1216 = vadd.f32 %v666, %v1215
          %v1217 = vpop.f32.mrf.mxu0
          %v1218 = vadd.f32 %v670, %v1217
          %1219 = vmatprep.mubr.bf16.mxu0 0
          %1220 = vmatmul.mubr.bf16.gmra.mxu0 %v704
          %v1221 = vpop.f32.mrf.mxu0
          %v1222 = vadd.f32 %v666, %v1221
          %v1223 = vpop.f32.mrf.mxu0
          %v1224 = vadd.f32 %v670, %v1223
          %v1225 = vpop.f32.mrf.mxu0
          %v1226 = vadd.f32 %v666, %v1225
          %v1227 = vpop.f32.mrf.mxu0
          %v1228 = vadd.f32 %v670, %v1227
          %1229 = vmatprep.mubr.bf16.mxu0 0
          %1230 = vmatmul.mubr.bf16.gmra.mxu0 %v705
          %v1231 = vpop.f32.mrf.mxu0
          %v1232 = vadd.f32 %v666, %v1231
          %v1233 = vpop.f32.mrf.mxu0
          %v1234 = vadd.f32 %v670, %v1233
          %v1235 = vpop.f32.mrf.mxu0
          %v1236 = vadd.f32 %v666, %v1235
          %v1237 = vpop.f32.mrf.mxu0
          %v1238 = vadd.f32 %v670, %v1237
          %1239 = vmatprep.mubr.bf16.mxu0 0
          %1240 = vmatmul.mubr.bf16.gmra.mxu0 %v706
          %v1241 = vpop.f32.mrf.mxu0
          %v1242 = vadd.f32 %v666, %v1241
          %v1243 = vpop.f32.mrf.mxu0
          %v1244 = vadd.f32 %v670, %v1243
          %v1245 = vpop.f32.mrf.mxu0
          %v1246 = vadd.f32 %v666, %v1245
          %v1247 = vpop.f32.mrf.mxu0
          %v1248 = vadd.f32 %v670, %v1247
          %1249 = vdwg.mxu0
          %1250 = vmatprep.subr.bf16.mxu0 %v966
          %1251 = vmatpush1.bf16.msra.mxu0 %v965
          %1252 = vmatprep.subr.bf16.mxu0 %v958
          %1253 = vmatpush1.bf16.msra.mxu0 %v957
          %1254 = vmatprep.subr.bf16.mxu0 %v950
          %1255 = vmatpush1.bf16.msra.mxu0 %v949
          %1256 = vmatprep.subr.bf16.mxu0 %v942
          %1257 = vmatpush1.bf16.msra.mxu0 %v941
          %1258 = vmatprep.subr.bf16.mxu0 %v934
          %1259 = vmatpush1.bf16.msra.mxu0 %v933
          %1260 = vmatprep.subr.bf16.mxu0 %v926
          %1261 = vmatpush1.bf16.msra.mxu0 %v925
          %1262 = vmatprep.subr.bf16.mxu0 %v918
          %1263 = vmatpush1.bf16.msra.mxu0 %v917
          %1264 = vmatprep.subr.bf16.mxu0 %v910
          %1265 = vmatpush1.bf16.msra.mxu0 %v909
          %1266 = vmatprep.subr.bf16.mxu0 0
          %1267 = vmatpush2.bf16.msra.mxu0 0
          %1268 = vmatprep.subr.bf16.mxu0 0
          %1269 = vmatpush2.bf16.msra.mxu0 0
          %1270 = vmatprep.subr.bf16.mxu0 0
          %1271 = vmatpush2.bf16.msra.mxu0 0
          %1272 = vmatprep.subr.bf16.mxu0 0
          %1273 = vmatpush2.bf16.msra.mxu0 0
          %1274 = vmatprep.subr.bf16.mxu0 0
          %1275 = vmatpush2.bf16.msra.mxu0 0
          %1276 = vmatprep.subr.bf16.mxu0 0
          %1277 = vmatpush2.bf16.msra.mxu0 0
          %1278 = vmatprep.subr.bf16.mxu0 0
          %1279 = vmatpush2.bf16.msra.mxu0 0
          %1280 = vmatprep.subr.bf16.mxu0 0
          %1281 = vmatpush2.bf16.msra.mxu0 0
          %1282 = vmatprep.mubr.bf16.mxu0 0
          %1283 = vmatmul.mubr.bf16.gmra.mxu0 %v703
          %v1284 = vpop.f32.mrf.mxu0
          %v1285 = vadd.f32 %v674, %v1284
          %v1286 = vpop.f32.mrf.mxu0
          %v1287 = vadd.f32 %v678, %v1286
          %v1288 = vpop.f32.mrf.mxu0
          %v1289 = vadd.f32 %v674, %v1288
          %v1290 = vpop.f32.mrf.mxu0
          %v1291 = vadd.f32 %v678, %v1290
          %1292 = vmatprep.mubr.bf16.mxu0 0
          %1293 = vmatmul.mubr.bf16.gmra.mxu0 %v704
          %v1294 = vpop.f32.mrf.mxu0
          %v1295 = vadd.f32 %v674, %v1294
          %v1296 = vpop.f32.mrf.mxu0
          %v1297 = vadd.f32 %v678, %v1296
          %v1298 = vpop.f32.mrf.mxu0
          %v1299 = vadd.f32 %v674, %v1298
          %v1300 = vpop.f32.mrf.mxu0
          %v1301 = vadd.f32 %v678, %v1300
          %1302 = vmatprep.mubr.bf16.mxu0 0
          %1303 = vmatmul.mubr.bf16.gmra.mxu0 %v705
          %v1304 = vpop.f32.mrf.mxu0
          %v1305 = vadd.f32 %v674, %v1304
          %v1306 = vpop.f32.mrf.mxu0
          %v1307 = vadd.f32 %v678, %v1306
          %v1308 = vpop.f32.mrf.mxu0
          %v1309 = vadd.f32 %v674, %v1308
          %v1310 = vpop.f32.mrf.mxu0
          %v1311 = vadd.f32 %v678, %v1310
          %1312 = vmatprep.mubr.bf16.mxu0 0
          %1313 = vmatmul.mubr.bf16.gmra.mxu0 %v706
          %v1314 = vpop.f32.mrf.mxu0
          %v1315 = vadd.f32 %v674, %v1314
          %v1316 = vpop.f32.mrf.mxu0
          %v1317 = vadd.f32 %v678, %v1316
          %v1318 = vpop.f32.mrf.mxu0
          %v1319 = vadd.f32 %v674, %v1318
          %v1320 = vpop.f32.mrf.mxu0
          %v1321 = vadd.f32 %v678, %v1320
          %1322 = vdwg.mxu0
          %1323 = vst [vmem:[#allocation4] sm:$0xff] %v1066
          %1324 = vst [vmem:[#allocation4 + $0x8] sm:$0xff] %v1068
          %1325 = vst [vmem:[#allocation4 + $0x10] sm:$0xff] %v1139
          %1326 = vst [vmem:[#allocation4 + $0x18] sm:$0xff] %v1141
          %1327 = vst [vmem:[#allocation4 + $0x20] sm:$0xff] %v1212
          %1328 = vst [vmem:[#allocation4 + $0x28] sm:$0xff] %v1214
          %1329 = vst [vmem:[#allocation4 + $0x30] sm:$0xff] %v1285
          %1330 = vst [vmem:[#allocation4 + $0x38] sm:$0xff] %v1287
          %1331 = vst [vmem:[#allocation4 + $0x40] sm:$0xff] %v1070
          %1332 = vst [vmem:[#allocation4 + $0x48] sm:$0xff] %v1072
          %1333 = vst [vmem:[#allocation4 + $0x50] sm:$0xff] %v1143
          %1334 = vst [vmem:[#allocation4 + $0x58] sm:$0xff] %v1145
          %1335 = vst [vmem:[#allocation4 + $0x60] sm:$0xff] %v1216
          %1336 = vst [vmem:[#allocation4 + $0x68] sm:$0xff] %v1218
          %1337 = vst [vmem:[#allocation4 + $0x70] sm:$0xff] %v1289
          %1338 = vst [vmem:[#allocation4 + $0x78] sm:$0xff] %v1291
          %1339 = vst [vmem:[#allocation4 + $0x80] sm:$0xff] %v1076
          %1340 = vst [vmem:[#allocation4 + $0x88] sm:$0xff] %v1078
          %1341 = vst [vmem:[#allocation4 + $0x90] sm:$0xff] %v1149
          %1342 = vst [vmem:[#allocation4 + $0x98] sm:$0xff] %v1151
          %1343 = vst [vmem:[#allocation4 + $0xa0] sm:$0xff] %v1222
          %1344 = vst [vmem:[#allocation4 + $0xa8] sm:$0xff] %v1224
          %1345 = vst [vmem:[#allocation4 + $0xb0] sm:$0xff] %v1295
          %1346 = vst [vmem:[#allocation4 + $0xb8] sm:$0xff] %v1297
          %1347 = vst [vmem:[#allocation4 + $0xc0] sm:$0xff] %v1080
          %1348 = vst [vmem:[#allocation4 + $0xc8] sm:$0xff] %v1082
          %1349 = vst [vmem:[#allocation4 + $0xd0] sm:$0xff] %v1153
          %1350 = vst [vmem:[#allocation4 + $0xd8] sm:$0xff] %v1155
          %1351 = vst [vmem:[#allocation4 + $0xe0] sm:$0xff] %v1226
          %1352 = vst [vmem:[#allocation4 + $0xe8] sm:$0xff] %v1228
          %1353 = vst [vmem:[#allocation4 + $0xf0] sm:$0xff] %v1299
          %1354 = vst [vmem:[#allocation4 + $0xf8] sm:$0xff] %v1301
          %1355 = vst [vmem:[#allocation4 + $0x100] sm:$0xff] %v1086
          %1356 = vst [vmem:[#allocation4 + $0x108] sm:$0xff] %v1088
          %1357 = vst [vmem:[#allocation4 + $0x110] sm:$0xff] %v1159
          %1358 = vst [vmem:[#allocation4 + $0x118] sm:$0xff] %v1161
          %1359 = vst [vmem:[#allocation4 + $0x120] sm:$0xff] %v1232
          %1360 = vst [vmem:[#allocation4 + $0x128] sm:$0xff] %v1234
          %1361 = vst [vmem:[#allocation4 + $0x130] sm:$0xff] %v1305
          %1362 = vst [vmem:[#allocation4 + $0x138] sm:$0xff] %v1307
          %1363 = vst [vmem:[#allocation4 + $0x140] sm:$0xff] %v1090
          %1364 = vst [vmem:[#allocation4 + $0x148] sm:$0xff] %v1092
          %1365 = vst [vmem:[#allocation4 + $0x150] sm:$0xff] %v1163
          %1366 = vst [vmem:[#allocation4 + $0x158] sm:$0xff] %v1165
          %1367 = vst [vmem:[#allocation4 + $0x160] sm:$0xff] %v1236
          %1368 = vst [vmem:[#allocation4 + $0x168] sm:$0xff] %v1238
          %1369 = vst [vmem:[#allocation4 + $0x170] sm:$0xff] %v1309
          %1370 = vst [vmem:[#allocation4 + $0x178] sm:$0xff] %v1311
          %1371 = vst [vmem:[#allocation4 + $0x180] sm:$0xff] %v1096
          %1372 = vst [vmem:[#allocation4 + $0x188] sm:$0xff] %v1098
          %1373 = vst [vmem:[#allocation4 + $0x190] sm:$0xff] %v1169
          %1374 = vst [vmem:[#allocation4 + $0x198] sm:$0xff] %v1171
          %1375 = vst [vmem:[#allocation4 + $0x1a0] sm:$0xff] %v1242
          %1376 = vst [vmem:[#allocation4 + $0x1a8] sm:$0xff] %v1244
          %1377 = vst [vmem:[#allocation4 + $0x1b0] sm:$0xff] %v1315
          %1378 = vst [vmem:[#allocation4 + $0x1b8] sm:$0xff] %v1317
          %1379 = vst [vmem:[#allocation4 + $0x1c0] sm:$0xff] %v1100
          %1380 = vst [vmem:[#allocation4 + $0x1c8] sm:$0xff] %v1102
          %1381 = vst [vmem:[#allocation4 + $0x1d0] sm:$0xff] %v1173
          %1382 = vst [vmem:[#allocation4 + $0x1d8] sm:$0xff] %v1175
          %1383 = vst [vmem:[#allocation4 + $0x1e0] sm:$0xff] %v1246
          %1384 = vst [vmem:[#allocation4 + $0x1e8] sm:$0xff] %v1248
          %1385 = vst [vmem:[#allocation4 + $0x1f0] sm:$0xff] %v1319
          %1386 = vst [vmem:[#allocation4 + $0x1f8] sm:$0xff] %v1321
        $region100: #{tpu_custom_call.1} parent=59 // pred_fallthru
          _
        %p1387 = scmp.gt.s32.totalorder %s25, 0
        // Predicated region
        $region101: #{tpu_custom_call.1} parent=59 // pred_check
          %p1388 = pneg %p1387
        $region102: #{tpu_custom_call.1} parent=59 // pred_check_branch
          %1390 = sbr.rel (%p1388) target = $region104
        $region103: #{tpu_custom_call.1} parent=59 // pred_region
          %v1391 = vld [vmem:[#allocation2] sm:$0xff]
          %v1392 = vld [vmem:[#allocation2 + $0x8] sm:$0xff]
          %v1393 = vld [vmem:[#allocation2 + $0x10] sm:$0xff]
          %v1394 = vld [vmem:[#allocation2 + $0x18] sm:$0xff]
          %v1395 = vld [vmem:[#allocation2 + $0x20] sm:$0xff]
          %v1396 = vld [vmem:[#allocation2 + $0x28] sm:$0xff]
          %v1397 = vld [vmem:[#allocation2 + $0x30] sm:$0xff]
          %v1398 = vld [vmem:[#allocation2 + $0x38] sm:$0xff]
          %v1399 = vpack.c.bf16 %v1392, %v1391
          %v1400 = vpack.c.bf16 %v1394, %v1393
          %v1401 = vpack.c.bf16 %v1396, %v1395
          %v1402 = vpack.c.bf16 %v1398, %v1397
          %v1403 = vld [vmem:[#allocation3] sm:$0xff]
          %v1404 = vld [vmem:[#allocation3 + $0x8] sm:$0xff]
          %v1405 = vld [vmem:[#allocation3 + $0x10] sm:$0xff]
          %v1406 = vld [vmem:[#allocation3 + $0x18] sm:$0xff]
          %v1407 = vld [vmem:[#allocation3 + $0x20] sm:$0xff]
          %v1408 = vld [vmem:[#allocation3 + $0x28] sm:$0xff]
          %v1409 = vld [vmem:[#allocation3 + $0x30] sm:$0xff]
          %v1410 = vld [vmem:[#allocation3 + $0x38] sm:$0xff]
          %v1411 = vpack.c.bf16 %v1404, %v1403
          %v1412 = vpack.c.bf16 %v1406, %v1405
          %v1413 = vpack.c.bf16 %v1408, %v1407
          %v1414 = vpack.c.bf16 %v1410, %v1409
          %v1415 = vld [vmem:[%s475] sm:$0xff]
          %v1416 = vld [vmem:[%s475 + $0x8] sm:$0xff]
          %v1417 = vld [vmem:[%s475 + $0x10] sm:$0xff]
          %v1418 = vld [vmem:[%s475 + $0x18] sm:$0xff]
          %v1419 = vld [vmem:[%s475 + $0x20] sm:$0xff]
          %v1420 = vld [vmem:[%s475 + $0x28] sm:$0xff]
          %v1421 = vld [vmem:[%s475 + $0x30] sm:$0xff]
          %v1422 = vld [vmem:[%s475 + $0x38] sm:$0xff]
          %v1423 = vld [vmem:[%s475 + $0x40] sm:$0xff]
          %v1424 = vld [vmem:[%s475 + $0x48] sm:$0xff]
          %v1425 = vld [vmem:[%s475 + $0x50] sm:$0xff]
          %v1426 = vld [vmem:[%s475 + $0x58] sm:$0xff]
          %v1427 = vld [vmem:[%s475 + $0x60] sm:$0xff]
          %v1428 = vld [vmem:[%s475 + $0x68] sm:$0xff]
          %v1429 = vld [vmem:[%s475 + $0x70] sm:$0xff]
          %v1430 = vld [vmem:[%s475 + $0x78] sm:$0xff]
          %v1431 = vld [vmem:[%s475 + $0x80] sm:$0xff]
          %v1432 = vld [vmem:[%s475 + $0x88] sm:$0xff]
          %v1433 = vld [vmem:[%s475 + $0x90] sm:$0xff]
          %v1434 = vld [vmem:[%s475 + $0x98] sm:$0xff]
          %v1435 = vld [vmem:[%s475 + $0xa0] sm:$0xff]
          %v1436 = vld [vmem:[%s475 + $0xa8] sm:$0xff]
          %v1437 = vld [vmem:[%s475 + $0xb0] sm:$0xff]
          %v1438 = vld [vmem:[%s475 + $0xb8] sm:$0xff]
          %v1439 = vld [vmem:[%s475 + $0xc0] sm:$0xff]
          %v1440 = vld [vmem:[%s475 + $0xc8] sm:$0xff]
          %v1441 = vld [vmem:[%s475 + $0xd0] sm:$0xff]
          %v1442 = vld [vmem:[%s475 + $0xd8] sm:$0xff]
          %v1443 = vld [vmem:[%s475 + $0xe0] sm:$0xff]
          %v1444 = vld [vmem:[%s475 + $0xe8] sm:$0xff]
          %v1445 = vld [vmem:[%s475 + $0xf0] sm:$0xff]
          %v1446 = vld [vmem:[%s475 + $0xf8] sm:$0xff]
          %v1447 = vld [vmem:[%s475 + $0x100] sm:$0xff]
          %v1448 = vld [vmem:[%s475 + $0x108] sm:$0xff]
          %v1449 = vld [vmem:[%s475 + $0x110] sm:$0xff]
          %v1450 = vld [vmem:[%s475 + $0x118] sm:$0xff]
          %v1451 = vld [vmem:[%s475 + $0x120] sm:$0xff]
          %v1452 = vld [vmem:[%s475 + $0x128] sm:$0xff]
          %v1453 = vld [vmem:[%s475 + $0x130] sm:$0xff]
          %v1454 = vld [vmem:[%s475 + $0x138] sm:$0xff]
          %v1455 = vld [vmem:[%s475 + $0x140] sm:$0xff]
          %v1456 = vld [vmem:[%s475 + $0x148] sm:$0xff]
          %v1457 = vld [vmem:[%s475 + $0x150] sm:$0xff]
          %v1458 = vld [vmem:[%s475 + $0x158] sm:$0xff]
          %v1459 = vld [vmem:[%s475 + $0x160] sm:$0xff]
          %v1460 = vld [vmem:[%s475 + $0x168] sm:$0xff]
          %v1461 = vld [vmem:[%s475 + $0x170] sm:$0xff]
          %v1462 = vld [vmem:[%s475 + $0x178] sm:$0xff]
          %v1463 = vld [vmem:[%s475 + $0x180] sm:$0xff]
          %v1464 = vld [vmem:[%s475 + $0x188] sm:$0xff]
          %v1465 = vld [vmem:[%s475 + $0x190] sm:$0xff]
          %v1466 = vld [vmem:[%s475 + $0x198] sm:$0xff]
          %v1467 = vld [vmem:[%s475 + $0x1a0] sm:$0xff]
          %v1468 = vld [vmem:[%s475 + $0x1a8] sm:$0xff]
          %v1469 = vld [vmem:[%s475 + $0x1b0] sm:$0xff]
          %v1470 = vld [vmem:[%s475 + $0x1b8] sm:$0xff]
          %v1471 = vld [vmem:[%s475 + $0x1c0] sm:$0xff]
          %v1472 = vld [vmem:[%s475 + $0x1c8] sm:$0xff]
          %v1473 = vld [vmem:[%s475 + $0x1d0] sm:$0xff]
          %v1474 = vld [vmem:[%s475 + $0x1d8] sm:$0xff]
          %v1475 = vld [vmem:[%s475 + $0x1e0] sm:$0xff]
          %v1476 = vld [vmem:[%s475 + $0x1e8] sm:$0xff]
          %v1477 = vld [vmem:[%s475 + $0x1f0] sm:$0xff]
          %v1478 = vld [vmem:[%s475 + $0x1f8] sm:$0xff]
          %v1479 = vld [vmem:[%s484] sm:$0xff]
          %v1480 = vld [vmem:[%s484 + $0x8] sm:$0xff]
          %v1481 = vld [vmem:[%s484 + $0x10] sm:$0xff]
          %v1482 = vld [vmem:[%s484 + $0x18] sm:$0xff]
          %v1483 = vld [vmem:[%s484 + $0x20] sm:$0xff]
          %v1484 = vld [vmem:[%s484 + $0x28] sm:$0xff]
          %v1485 = vld [vmem:[%s484 + $0x30] sm:$0xff]
          %v1486 = vld [vmem:[%s484 + $0x38] sm:$0xff]
          %v1487 = vld [vmem:[%s484 + $0x40] sm:$0xff]
          %v1488 = vld [vmem:[%s484 + $0x48] sm:$0xff]
          %v1489 = vld [vmem:[%s484 + $0x50] sm:$0xff]
          %v1490 = vld [vmem:[%s484 + $0x58] sm:$0xff]
          %v1491 = vld [vmem:[%s484 + $0x60] sm:$0xff]
          %v1492 = vld [vmem:[%s484 + $0x68] sm:$0xff]
          %v1493 = vld [vmem:[%s484 + $0x70] sm:$0xff]
          %v1494 = vld [vmem:[%s484 + $0x78] sm:$0xff]
          %v1495 = vld [vmem:[%s484 + $0x80] sm:$0xff]
          %v1496 = vld [vmem:[%s484 + $0x88] sm:$0xff]
          %v1497 = vld [vmem:[%s484 + $0x90] sm:$0xff]
          %v1498 = vld [vmem:[%s484 + $0x98] sm:$0xff]
          %v1499 = vld [vmem:[%s484 + $0xa0] sm:$0xff]
          %v1500 = vld [vmem:[%s484 + $0xa8] sm:$0xff]
          %v1501 = vld [vmem:[%s484 + $0xb0] sm:$0xff]
          %v1502 = vld [vmem:[%s484 + $0xb8] sm:$0xff]
          %v1503 = vld [vmem:[%s484 + $0xc0] sm:$0xff]
          %v1504 = vld [vmem:[%s484 + $0xc8] sm:$0xff]
          %v1505 = vld [vmem:[%s484 + $0xd0] sm:$0xff]
          %v1506 = vld [vmem:[%s484 + $0xd8] sm:$0xff]
          %v1507 = vld [vmem:[%s484 + $0xe0] sm:$0xff]
          %v1508 = vld [vmem:[%s484 + $0xe8] sm:$0xff]
          %v1509 = vld [vmem:[%s484 + $0xf0] sm:$0xff]
          %v1510 = vld [vmem:[%s484 + $0xf8] sm:$0xff]
          %v1511 = vld [vmem:[%s484 + $0x100] sm:$0xff]
          %v1512 = vld [vmem:[%s484 + $0x108] sm:$0xff]
          %v1513 = vld [vmem:[%s484 + $0x110] sm:$0xff]
          %v1514 = vld [vmem:[%s484 + $0x118] sm:$0xff]
          %v1515 = vld [vmem:[%s484 + $0x120] sm:$0xff]
          %v1516 = vld [vmem:[%s484 + $0x128] sm:$0xff]
          %v1517 = vld [vmem:[%s484 + $0x130] sm:$0xff]
          %v1518 = vld [vmem:[%s484 + $0x138] sm:$0xff]
          %v1519 = vld [vmem:[%s484 + $0x140] sm:$0xff]
          %v1520 = vld [vmem:[%s484 + $0x148] sm:$0xff]
          %v1521 = vld [vmem:[%s484 + $0x150] sm:$0xff]
          %v1522 = vld [vmem:[%s484 + $0x158] sm:$0xff]
          %v1523 = vld [vmem:[%s484 + $0x160] sm:$0xff]
          %v1524 = vld [vmem:[%s484 + $0x168] sm:$0xff]
          %v1525 = vld [vmem:[%s484 + $0x170] sm:$0xff]
          %v1526 = vld [vmem:[%s484 + $0x178] sm:$0xff]
          %v1527 = vld [vmem:[%s484 + $0x180] sm:$0xff]
          %v1528 = vld [vmem:[%s484 + $0x188] sm:$0xff]
          %v1529 = vld [vmem:[%s484 + $0x190] sm:$0xff]
          %v1530 = vld [vmem:[%s484 + $0x198] sm:$0xff]
          %v1531 = vld [vmem:[%s484 + $0x1a0] sm:$0xff]
          %v1532 = vld [vmem:[%s484 + $0x1a8] sm:$0xff]
          %v1533 = vld [vmem:[%s484 + $0x1b0] sm:$0xff]
          %v1534 = vld [vmem:[%s484 + $0x1b8] sm:$0xff]
          %v1535 = vld [vmem:[%s484 + $0x1c0] sm:$0xff]
          %v1536 = vld [vmem:[%s484 + $0x1c8] sm:$0xff]
          %v1537 = vld [vmem:[%s484 + $0x1d0] sm:$0xff]
          %v1538 = vld [vmem:[%s484 + $0x1d8] sm:$0xff]
          %v1539 = vld [vmem:[%s484 + $0x1e0] sm:$0xff]
          %v1540 = vld [vmem:[%s484 + $0x1e8] sm:$0xff]
          %v1541 = vld [vmem:[%s484 + $0x1f0] sm:$0xff]
          %v1542 = vld [vmem:[%s484 + $0x1f8] sm:$0xff]
          %v1607 = vunpack.c.l.b16 %v1479
          %v1608 = vunpack.c.h.b16 %v1479
          %v1609 = vunpack.c.l.b16 %v1480
          %v1610 = vunpack.c.h.b16 %v1480
          %v1611 = vunpack.c.l.b16 %v1481
          %v1612 = vunpack.c.h.b16 %v1481
          %v1613 = vunpack.c.l.b16 %v1482
          %v1614 = vunpack.c.h.b16 %v1482
          %v1615 = vunpack.c.l.b16 %v1483
          %v1616 = vunpack.c.h.b16 %v1483
          %v1617 = vunpack.c.l.b16 %v1484
          %v1618 = vunpack.c.h.b16 %v1484
          %v1619 = vunpack.c.l.b16 %v1485
          %v1620 = vunpack.c.h.b16 %v1485
          %v1621 = vunpack.c.l.b16 %v1486
          %v1622 = vunpack.c.h.b16 %v1486
          %v1623 = vunpack.c.l.b16 %v1487
          %v1624 = vunpack.c.h.b16 %v1487
          %v1625 = vunpack.c.l.b16 %v1488
          %v1626 = vunpack.c.h.b16 %v1488
          %v1627 = vunpack.c.l.b16 %v1489
          %v1628 = vunpack.c.h.b16 %v1489
          %v1629 = vunpack.c.l.b16 %v1490
          %v1630 = vunpack.c.h.b16 %v1490
          %v1631 = vunpack.c.l.b16 %v1491
          %v1632 = vunpack.c.h.b16 %v1491
          %v1633 = vunpack.c.l.b16 %v1492
          %v1634 = vunpack.c.h.b16 %v1492
          %v1635 = vunpack.c.l.b16 %v1493
          %v1636 = vunpack.c.h.b16 %v1493
          %v1637 = vunpack.c.l.b16 %v1494
          %v1638 = vunpack.c.h.b16 %v1494
          %v1639 = vunpack.c.l.b16 %v1495
          %v1640 = vunpack.c.h.b16 %v1495
          %v1641 = vunpack.c.l.b16 %v1496
          %v1642 = vunpack.c.h.b16 %v1496
          %v1643 = vunpack.c.l.b16 %v1497
          %v1644 = vunpack.c.h.b16 %v1497
          %v1645 = vunpack.c.l.b16 %v1498
          %v1646 = vunpack.c.h.b16 %v1498
          %v1647 = vunpack.c.l.b16 %v1499
          %v1648 = vunpack.c.h.b16 %v1499
          %v1649 = vunpack.c.l.b16 %v1500
          %v1650 = vunpack.c.h.b16 %v1500
          %v1651 = vunpack.c.l.b16 %v1501
          %v1652 = vunpack.c.h.b16 %v1501
          %v1653 = vunpack.c.l.b16 %v1502
          %v1654 = vunpack.c.h.b16 %v1502
          %v1655 = vunpack.c.l.b16 %v1503
          %v1656 = vunpack.c.h.b16 %v1503
          %v1657 = vunpack.c.l.b16 %v1504
          %v1658 = vunpack.c.h.b16 %v1504
          %v1659 = vunpack.c.l.b16 %v1505
          %v1660 = vunpack.c.h.b16 %v1505
          %v1661 = vunpack.c.l.b16 %v1506
          %v1662 = vunpack.c.h.b16 %v1506
          %v1663 = vunpack.c.l.b16 %v1507
          %v1664 = vunpack.c.h.b16 %v1507
          %v1665 = vunpack.c.l.b16 %v1508
          %v1666 = vunpack.c.h.b16 %v1508
          %v1667 = vunpack.c.l.b16 %v1509
          %v1668 = vunpack.c.h.b16 %v1509
          %v1669 = vunpack.c.l.b16 %v1510
          %v1670 = vunpack.c.h.b16 %v1510
          %v1671 = vunpack.c.l.b16 %v1511
          %v1672 = vunpack.c.h.b16 %v1511
          %v1673 = vunpack.c.l.b16 %v1512
          %v1674 = vunpack.c.h.b16 %v1512
          %v1675 = vunpack.c.l.b16 %v1513
          %v1676 = vunpack.c.h.b16 %v1513
          %v1677 = vunpack.c.l.b16 %v1514
          %v1678 = vunpack.c.h.b16 %v1514
          %v1679 = vunpack.c.l.b16 %v1515
          %v1680 = vunpack.c.h.b16 %v1515
          %v1681 = vunpack.c.l.b16 %v1516
          %v1682 = vunpack.c.h.b16 %v1516
          %v1683 = vunpack.c.l.b16 %v1517
          %v1684 = vunpack.c.h.b16 %v1517
          %v1685 = vunpack.c.l.b16 %v1518
          %v1686 = vunpack.c.h.b16 %v1518
          %v1687 = vunpack.c.l.b16 %v1519
          %v1688 = vunpack.c.h.b16 %v1519
          %v1689 = vunpack.c.l.b16 %v1520
          %v1690 = vunpack.c.h.b16 %v1520
          %v1691 = vunpack.c.l.b16 %v1521
          %v1692 = vunpack.c.h.b16 %v1521
          %v1693 = vunpack.c.l.b16 %v1522
          %v1694 = vunpack.c.h.b16 %v1522
          %v1695 = vunpack.c.l.b16 %v1523
          %v1696 = vunpack.c.h.b16 %v1523
          %v1697 = vunpack.c.l.b16 %v1524
          %v1698 = vunpack.c.h.b16 %v1524
          %v1699 = vunpack.c.l.b16 %v1525
          %v1700 = vunpack.c.h.b16 %v1525
          %v1701 = vunpack.c.l.b16 %v1526
          %v1702 = vunpack.c.h.b16 %v1526
          %v1703 = vunpack.c.l.b16 %v1527
          %v1704 = vunpack.c.h.b16 %v1527
          %v1705 = vunpack.c.l.b16 %v1528
          %v1706 = vunpack.c.h.b16 %v1528
          %v1707 = vunpack.c.l.b16 %v1529
          %v1708 = vunpack.c.h.b16 %v1529
          %v1709 = vunpack.c.l.b16 %v1530
          %v1710 = vunpack.c.h.b16 %v1530
          %v1711 = vunpack.c.l.b16 %v1531
          %v1712 = vunpack.c.h.b16 %v1531
          %v1713 = vunpack.c.l.b16 %v1532
          %v1714 = vunpack.c.h.b16 %v1532
          %v1715 = vunpack.c.l.b16 %v1533
          %v1716 = vunpack.c.h.b16 %v1533
          %v1717 = vunpack.c.l.b16 %v1534
          %v1718 = vunpack.c.h.b16 %v1534
          %v1719 = vunpack.c.l.b16 %v1535
          %v1720 = vunpack.c.h.b16 %v1535
          %v1721 = vunpack.c.l.b16 %v1536
          %v1722 = vunpack.c.h.b16 %v1536
          %v1723 = vunpack.c.l.b16 %v1537
          %v1724 = vunpack.c.h.b16 %v1537
          %v1725 = vunpack.c.l.b16 %v1538
          %v1726 = vunpack.c.h.b16 %v1538
          %v1727 = vunpack.c.l.b16 %v1539
          %v1728 = vunpack.c.h.b16 %v1539
          %v1729 = vunpack.c.l.b16 %v1540
          %v1730 = vunpack.c.h.b16 %v1540
          %v1731 = vunpack.c.l.b16 %v1541
          %v1732 = vunpack.c.h.b16 %v1541
          %v1733 = vunpack.c.l.b16 %v1542
          %v1734 = vunpack.c.h.b16 %v1542
          %v1735 = vpack.c.b16 %v1615, %v1607
          %v1736 = vpack.c.b16 %v1616, %v1608
          %v1737 = vpack.c.b16 %v1617, %v1609
          %v1738 = vpack.c.b16 %v1618, %v1610
          %v1739 = vpack.c.b16 %v1619, %v1611
          %v1740 = vpack.c.b16 %v1620, %v1612
          %v1741 = vpack.c.b16 %v1621, %v1613
          %v1742 = vpack.c.b16 %v1622, %v1614
          %v1743 = vpack.c.b16 %v1631, %v1623
          %v1744 = vpack.c.b16 %v1632, %v1624
          %v1745 = vpack.c.b16 %v1633, %v1625
          %v1746 = vpack.c.b16 %v1634, %v1626
          %v1747 = vpack.c.b16 %v1635, %v1627
          %v1748 = vpack.c.b16 %v1636, %v1628
          %v1749 = vpack.c.b16 %v1637, %v1629
          %v1750 = vpack.c.b16 %v1638, %v1630
          %v1751 = vpack.c.b16 %v1647, %v1639
          %v1752 = vpack.c.b16 %v1648, %v1640
          %v1753 = vpack.c.b16 %v1649, %v1641
          %v1754 = vpack.c.b16 %v1650, %v1642
          %v1755 = vpack.c.b16 %v1651, %v1643
          %v1756 = vpack.c.b16 %v1652, %v1644
          %v1757 = vpack.c.b16 %v1653, %v1645
          %v1758 = vpack.c.b16 %v1654, %v1646
          %v1759 = vpack.c.b16 %v1663, %v1655
          %v1760 = vpack.c.b16 %v1664, %v1656
          %v1761 = vpack.c.b16 %v1665, %v1657
          %v1762 = vpack.c.b16 %v1666, %v1658
          %v1763 = vpack.c.b16 %v1667, %v1659
          %v1764 = vpack.c.b16 %v1668, %v1660
          %v1765 = vpack.c.b16 %v1669, %v1661
          %v1766 = vpack.c.b16 %v1670, %v1662
          %v1767 = vpack.c.b16 %v1679, %v1671
          %v1768 = vpack.c.b16 %v1680, %v1672
          %v1769 = vpack.c.b16 %v1681, %v1673
          %v1770 = vpack.c.b16 %v1682, %v1674
          %v1771 = vpack.c.b16 %v1683, %v1675
          %v1772 = vpack.c.b16 %v1684, %v1676
          %v1773 = vpack.c.b16 %v1685, %v1677
          %v1774 = vpack.c.b16 %v1686, %v1678
          %v1775 = vpack.c.b16 %v1695, %v1687
          %v1776 = vpack.c.b16 %v1696, %v1688
          %v1777 = vpack.c.b16 %v1697, %v1689
          %v1778 = vpack.c.b16 %v1698, %v1690
          %v1779 = vpack.c.b16 %v1699, %v1691
          %v1780 = vpack.c.b16 %v1700, %v1692
          %v1781 = vpack.c.b16 %v1701, %v1693
          %v1782 = vpack.c.b16 %v1702, %v1694
          %v1783 = vpack.c.b16 %v1711, %v1703
          %v1784 = vpack.c.b16 %v1712, %v1704
          %v1785 = vpack.c.b16 %v1713, %v1705
          %v1786 = vpack.c.b16 %v1714, %v1706
          %v1787 = vpack.c.b16 %v1715, %v1707
          %v1788 = vpack.c.b16 %v1716, %v1708
          %v1789 = vpack.c.b16 %v1717, %v1709
          %v1790 = vpack.c.b16 %v1718, %v1710
          %v1791 = vpack.c.b16 %v1727, %v1719
          %v1792 = vpack.c.b16 %v1728, %v1720
          %v1793 = vpack.c.b16 %v1729, %v1721
          %v1794 = vpack.c.b16 %v1730, %v1722
          %v1795 = vpack.c.b16 %v1731, %v1723
          %v1796 = vpack.c.b16 %v1732, %v1724
          %v1797 = vpack.c.b16 %v1733, %v1725
          %v1798 = vpack.c.b16 %v1734, %v1726
          %1863 = vmatprep.subr.bf16.mxu0 %v1792
          %1864 = vmatpush1.bf16.msra.mxu0 %v1791
          %1865 = vmatprep.subr.bf16.mxu0 %v1784
          %1866 = vmatpush1.bf16.msra.mxu0 %v1783
          %1867 = vmatprep.subr.bf16.mxu0 %v1776
          %1868 = vmatpush1.bf16.msra.mxu0 %v1775
          %1869 = vmatprep.subr.bf16.mxu0 %v1768
          %1870 = vmatpush1.bf16.msra.mxu0 %v1767
          %1871 = vmatprep.subr.bf16.mxu0 %v1760
          %1872 = vmatpush1.bf16.msra.mxu0 %v1759
          %1873 = vmatprep.subr.bf16.mxu0 %v1752
          %1874 = vmatpush1.bf16.msra.mxu0 %v1751
          %1875 = vmatprep.subr.bf16.mxu0 %v1744
          %1876 = vmatpush1.bf16.msra.mxu0 %v1743
          %1877 = vmatprep.subr.bf16.mxu0 %v1736
          %1878 = vmatpush1.bf16.msra.mxu0 %v1735
          %1879 = vmatprep.subr.bf16.mxu0 0
          %1880 = vmatpush2.bf16.msra.mxu0 0
          %1881 = vmatprep.subr.bf16.mxu0 0
          %1882 = vmatpush2.bf16.msra.mxu0 0
          %1883 = vmatprep.subr.bf16.mxu0 0
          %1884 = vmatpush2.bf16.msra.mxu0 0
          %1885 = vmatprep.subr.bf16.mxu0 0
          %1886 = vmatpush2.bf16.msra.mxu0 0
          %1887 = vmatprep.subr.bf16.mxu0 0
          %1888 = vmatpush2.bf16.msra.mxu0 0
          %1889 = vmatprep.subr.bf16.mxu0 0
          %1890 = vmatpush2.bf16.msra.mxu0 0
          %1891 = vmatprep.subr.bf16.mxu0 0
          %1892 = vmatpush2.bf16.msra.mxu0 0
          %1893 = vmatprep.subr.bf16.mxu0 0
          %1894 = vmatpush2.bf16.msra.mxu0 0
          %1895 = vmatprep.mubr.bf16.mxu0 0
          %1896 = vmatmul.mubr.bf16.gmra.mxu0 %v1411
          %v1897 = vpop.f32.mrf.mxu0
          %v1898 = vadd.f32 0.0, %v1897
          %v1899 = vpop.f32.mrf.mxu0
          %v1900 = vadd.f32 0.0, %v1899
          %v1901 = vpop.f32.mrf.mxu0
          %v1902 = vadd.f32 0.0, %v1901
          %v1903 = vpop.f32.mrf.mxu0
          %v1904 = vadd.f32 0.0, %v1903
          %1905 = vmatprep.mubr.bf16.mxu0 0
          %1906 = vmatmul.mubr.bf16.gmra.mxu0 %v1412
          %v1907 = vpop.f32.mrf.mxu0
          %v1908 = vadd.f32 0.0, %v1907
          %v1909 = vpop.f32.mrf.mxu0
          %v1910 = vadd.f32 0.0, %v1909
          %v1911 = vpop.f32.mrf.mxu0
          %v1912 = vadd.f32 0.0, %v1911
          %v1913 = vpop.f32.mrf.mxu0
          %v1914 = vadd.f32 0.0, %v1913
          %1915 = vmatprep.mubr.bf16.mxu0 0
          %1916 = vmatmul.mubr.bf16.gmra.mxu0 %v1413
          %v1917 = vpop.f32.mrf.mxu0
          %v1918 = vadd.f32 0.0, %v1917
          %v1919 = vpop.f32.mrf.mxu0
          %v1920 = vadd.f32 0.0, %v1919
          %v1921 = vpop.f32.mrf.mxu0
          %v1922 = vadd.f32 0.0, %v1921
          %v1923 = vpop.f32.mrf.mxu0
          %v1924 = vadd.f32 0.0, %v1923
          %1925 = vmatprep.mubr.bf16.mxu0 0
          %1926 = vmatmul.mubr.bf16.gmra.mxu0 %v1414
          %v1927 = vpop.f32.mrf.mxu0
          %v1928 = vadd.f32 0.0, %v1927
          %v1929 = vpop.f32.mrf.mxu0
          %v1930 = vadd.f32 0.0, %v1929
          %v1931 = vpop.f32.mrf.mxu0
          %v1932 = vadd.f32 0.0, %v1931
          %v1933 = vpop.f32.mrf.mxu0
          %v1934 = vadd.f32 0.0, %v1933
          %1935 = vdwg.mxu0
          %1936 = vmatprep.subr.bf16.mxu0 %v1794
          %1937 = vmatpush1.bf16.msra.mxu0 %v1793
          %1938 = vmatprep.subr.bf16.mxu0 %v1786
          %1939 = vmatpush1.bf16.msra.mxu0 %v1785
          %1940 = vmatprep.subr.bf16.mxu0 %v1778
          %1941 = vmatpush1.bf16.msra.mxu0 %v1777
          %1942 = vmatprep.subr.bf16.mxu0 %v1770
          %1943 = vmatpush1.bf16.msra.mxu0 %v1769
          %1944 = vmatprep.subr.bf16.mxu0 %v1762
          %1945 = vmatpush1.bf16.msra.mxu0 %v1761
          %1946 = vmatprep.subr.bf16.mxu0 %v1754
          %1947 = vmatpush1.bf16.msra.mxu0 %v1753
          %1948 = vmatprep.subr.bf16.mxu0 %v1746
          %1949 = vmatpush1.bf16.msra.mxu0 %v1745
          %1950 = vmatprep.subr.bf16.mxu0 %v1738
          %1951 = vmatpush1.bf16.msra.mxu0 %v1737
          %1952 = vmatprep.subr.bf16.mxu0 0
          %1953 = vmatpush2.bf16.msra.mxu0 0
          %1954 = vmatprep.subr.bf16.mxu0 0
          %1955 = vmatpush2.bf16.msra.mxu0 0
          %1956 = vmatprep.subr.bf16.mxu0 0
          %1957 = vmatpush2.bf16.msra.mxu0 0
          %1958 = vmatprep.subr.bf16.mxu0 0
          %1959 = vmatpush2.bf16.msra.mxu0 0
          %1960 = vmatprep.subr.bf16.mxu0 0
          %1961 = vmatpush2.bf16.msra.mxu0 0
          %1962 = vmatprep.subr.bf16.mxu0 0
          %1963 = vmatpush2.bf16.msra.mxu0 0
          %1964 = vmatprep.subr.bf16.mxu0 0
          %1965 = vmatpush2.bf16.msra.mxu0 0
          %1966 = vmatprep.subr.bf16.mxu0 0
          %1967 = vmatpush2.bf16.msra.mxu0 0
          %1968 = vmatprep.mubr.bf16.mxu0 0
          %1969 = vmatmul.mubr.bf16.gmra.mxu0 %v1411
          %v1970 = vpop.f32.mrf.mxu0
          %v1971 = vadd.f32 0.0, %v1970
          %v1972 = vpop.f32.mrf.mxu0
          %v1973 = vadd.f32 0.0, %v1972
          %v1974 = vpop.f32.mrf.mxu0
          %v1975 = vadd.f32 0.0, %v1974
          %v1976 = vpop.f32.mrf.mxu0
          %v1977 = vadd.f32 0.0, %v1976
          %1978 = vmatprep.mubr.bf16.mxu0 0
          %1979 = vmatmul.mubr.bf16.gmra.mxu0 %v1412
          %v1980 = vpop.f32.mrf.mxu0
          %v1981 = vadd.f32 0.0, %v1980
          %v1982 = vpop.f32.mrf.mxu0
          %v1983 = vadd.f32 0.0, %v1982
          %v1984 = vpop.f32.mrf.mxu0
          %v1985 = vadd.f32 0.0, %v1984
          %v1986 = vpop.f32.mrf.mxu0
          %v1987 = vadd.f32 0.0, %v1986
          %1988 = vmatprep.mubr.bf16.mxu0 0
          %1989 = vmatmul.mubr.bf16.gmra.mxu0 %v1413
          %v1990 = vpop.f32.mrf.mxu0
          %v1991 = vadd.f32 0.0, %v1990
          %v1992 = vpop.f32.mrf.mxu0
          %v1993 = vadd.f32 0.0, %v1992
          %v1994 = vpop.f32.mrf.mxu0
          %v1995 = vadd.f32 0.0, %v1994
          %v1996 = vpop.f32.mrf.mxu0
          %v1997 = vadd.f32 0.0, %v1996
          %1998 = vmatprep.mubr.bf16.mxu0 0
          %1999 = vmatmul.mubr.bf16.gmra.mxu0 %v1414
          %v2000 = vpop.f32.mrf.mxu0
          %v2001 = vadd.f32 0.0, %v2000
          %v2002 = vpop.f32.mrf.mxu0
          %v2003 = vadd.f32 0.0, %v2002
          %v2004 = vpop.f32.mrf.mxu0
          %v2005 = vadd.f32 0.0, %v2004
          %v2006 = vpop.f32.mrf.mxu0
          %v2007 = vadd.f32 0.0, %v2006
          %2008 = vdwg.mxu0
          %2009 = vmatprep.subr.bf16.mxu0 %v1796
          %2010 = vmatpush1.bf16.msra.mxu0 %v1795
          %2011 = vmatprep.subr.bf16.mxu0 %v1788
          %2012 = vmatpush1.bf16.msra.mxu0 %v1787
          %2013 = vmatprep.subr.bf16.mxu0 %v1780
          %2014 = vmatpush1.bf16.msra.mxu0 %v1779
          %2015 = vmatprep.subr.bf16.mxu0 %v1772
          %2016 = vmatpush1.bf16.msra.mxu0 %v1771
          %2017 = vmatprep.subr.bf16.mxu0 %v1764
          %2018 = vmatpush1.bf16.msra.mxu0 %v1763
          %2019 = vmatprep.subr.bf16.mxu0 %v1756
          %2020 = vmatpush1.bf16.msra.mxu0 %v1755
          %2021 = vmatprep.subr.bf16.mxu0 %v1748
          %2022 = vmatpush1.bf16.msra.mxu0 %v1747
          %2023 = vmatprep.subr.bf16.mxu0 %v1740
          %2024 = vmatpush1.bf16.msra.mxu0 %v1739
          %2025 = vmatprep.subr.bf16.mxu0 0
          %2026 = vmatpush2.bf16.msra.mxu0 0
          %2027 = vmatprep.subr.bf16.mxu0 0
          %2028 = vmatpush2.bf16.msra.mxu0 0
          %2029 = vmatprep.subr.bf16.mxu0 0
          %2030 = vmatpush2.bf16.msra.mxu0 0
          %2031 = vmatprep.subr.bf16.mxu0 0
          %2032 = vmatpush2.bf16.msra.mxu0 0
          %2033 = vmatprep.subr.bf16.mxu0 0
          %2034 = vmatpush2.bf16.msra.mxu0 0
          %2035 = vmatprep.subr.bf16.mxu0 0
          %2036 = vmatpush2.bf16.msra.mxu0 0
          %2037 = vmatprep.subr.bf16.mxu0 0
          %2038 = vmatpush2.bf16.msra.mxu0 0
          %2039 = vmatprep.subr.bf16.mxu0 0
          %2040 = vmatpush2.bf16.msra.mxu0 0
          %2041 = vmatprep.mubr.bf16.mxu0 0
          %2042 = vmatmul.mubr.bf16.gmra.mxu0 %v1411
          %v2043 = vpop.f32.mrf.mxu0
          %v2044 = vadd.f32 0.0, %v2043
          %v2045 = vpop.f32.mrf.mxu0
          %v2046 = vadd.f32 0.0, %v2045
          %v2047 = vpop.f32.mrf.mxu0
          %v2048 = vadd.f32 0.0, %v2047
          %v2049 = vpop.f32.mrf.mxu0
          %v2050 = vadd.f32 0.0, %v2049
          %2051 = vmatprep.mubr.bf16.mxu0 0
          %2052 = vmatmul.mubr.bf16.gmra.mxu0 %v1412
          %v2053 = vpop.f32.mrf.mxu0
          %v2054 = vadd.f32 0.0, %v2053
          %v2055 = vpop.f32.mrf.mxu0
          %v2056 = vadd.f32 0.0, %v2055
          %v2057 = vpop.f32.mrf.mxu0
          %v2058 = vadd.f32 0.0, %v2057
          %v2059 = vpop.f32.mrf.mxu0
          %v2060 = vadd.f32 0.0, %v2059
          %2061 = vmatprep.mubr.bf16.mxu0 0
          %2062 = vmatmul.mubr.bf16.gmra.mxu0 %v1413
          %v2063 = vpop.f32.mrf.mxu0
          %v2064 = vadd.f32 0.0, %v2063
          %v2065 = vpop.f32.mrf.mxu0
          %v2066 = vadd.f32 0.0, %v2065
          %v2067 = vpop.f32.mrf.mxu0
          %v2068 = vadd.f32 0.0, %v2067
          %v2069 = vpop.f32.mrf.mxu0
          %v2070 = vadd.f32 0.0, %v2069
          %2071 = vmatprep.mubr.bf16.mxu0 0
          %2072 = vmatmul.mubr.bf16.gmra.mxu0 %v1414
          %v2073 = vpop.f32.mrf.mxu0
          %v2074 = vadd.f32 0.0, %v2073
          %v2075 = vpop.f32.mrf.mxu0
          %v2076 = vadd.f32 0.0, %v2075
          %v2077 = vpop.f32.mrf.mxu0
          %v2078 = vadd.f32 0.0, %v2077
          %v2079 = vpop.f32.mrf.mxu0
          %v2080 = vadd.f32 0.0, %v2079
          %2081 = vdwg.mxu0
          %2082 = vmatprep.subr.bf16.mxu0 %v1798
          %2083 = vmatpush1.bf16.msra.mxu0 %v1797
          %2084 = vmatprep.subr.bf16.mxu0 %v1790
          %2085 = vmatpush1.bf16.msra.mxu0 %v1789
          %2086 = vmatprep.subr.bf16.mxu0 %v1782
          %2087 = vmatpush1.bf16.msra.mxu0 %v1781
          %2088 = vmatprep.subr.bf16.mxu0 %v1774
          %2089 = vmatpush1.bf16.msra.mxu0 %v1773
          %2090 = vmatprep.subr.bf16.mxu0 %v1766
          %2091 = vmatpush1.bf16.msra.mxu0 %v1765
          %2092 = vmatprep.subr.bf16.mxu0 %v1758
          %2093 = vmatpush1.bf16.msra.mxu0 %v1757
          %2094 = vmatprep.subr.bf16.mxu0 %v1750
          %2095 = vmatpush1.bf16.msra.mxu0 %v1749
          %2096 = vmatprep.subr.bf16.mxu0 %v1742
          %2097 = vmatpush1.bf16.msra.mxu0 %v1741
          %2098 = vmatprep.subr.bf16.mxu0 0
          %2099 = vmatpush2.bf16.msra.mxu0 0
          %2100 = vmatprep.subr.bf16.mxu0 0
          %2101 = vmatpush2.bf16.msra.mxu0 0
          %2102 = vmatprep.subr.bf16.mxu0 0
          %2103 = vmatpush2.bf16.msra.mxu0 0
          %2104 = vmatprep.subr.bf16.mxu0 0
          %2105 = vmatpush2.bf16.msra.mxu0 0
          %2106 = vmatprep.subr.bf16.mxu0 0
          %2107 = vmatpush2.bf16.msra.mxu0 0
          %2108 = vmatprep.subr.bf16.mxu0 0
          %2109 = vmatpush2.bf16.msra.mxu0 0
          %2110 = vmatprep.subr.bf16.mxu0 0
          %2111 = vmatpush2.bf16.msra.mxu0 0
          %2112 = vmatprep.subr.bf16.mxu0 0
          %2113 = vmatpush2.bf16.msra.mxu0 0
          %2114 = vmatprep.mubr.bf16.mxu0 0
          %2115 = vmatmul.mubr.bf16.gmra.mxu0 %v1411
          %v2116 = vpop.f32.mrf.mxu0
          %v2117 = vadd.f32 0.0, %v2116
          %v2118 = vpop.f32.mrf.mxu0
          %v2119 = vadd.f32 0.0, %v2118
          %v2120 = vpop.f32.mrf.mxu0
          %v2121 = vadd.f32 0.0, %v2120
          %v2122 = vpop.f32.mrf.mxu0
          %v2123 = vadd.f32 0.0, %v2122
          %2124 = vmatprep.mubr.bf16.mxu0 0
          %2125 = vmatmul.mubr.bf16.gmra.mxu0 %v1412
          %v2126 = vpop.f32.mrf.mxu0
          %v2127 = vadd.f32 0.0, %v2126
          %v2128 = vpop.f32.mrf.mxu0
          %v2129 = vadd.f32 0.0, %v2128
          %v2130 = vpop.f32.mrf.mxu0
          %v2131 = vadd.f32 0.0, %v2130
          %v2132 = vpop.f32.mrf.mxu0
          %v2133 = vadd.f32 0.0, %v2132
          %2134 = vmatprep.mubr.bf16.mxu0 0
          %2135 = vmatmul.mubr.bf16.gmra.mxu0 %v1413
          %v2136 = vpop.f32.mrf.mxu0
          %v2137 = vadd.f32 0.0, %v2136
          %v2138 = vpop.f32.mrf.mxu0
          %v2139 = vadd.f32 0.0, %v2138
          %v2140 = vpop.f32.mrf.mxu0
          %v2141 = vadd.f32 0.0, %v2140
          %v2142 = vpop.f32.mrf.mxu0
          %v2143 = vadd.f32 0.0, %v2142
          %2144 = vmatprep.mubr.bf16.mxu0 0
          %2145 = vmatmul.mubr.bf16.gmra.mxu0 %v1414
          %v2146 = vpop.f32.mrf.mxu0
          %v2147 = vadd.f32 0.0, %v2146
          %v2148 = vpop.f32.mrf.mxu0
          %v2149 = vadd.f32 0.0, %v2148
          %v2150 = vpop.f32.mrf.mxu0
          %v2151 = vadd.f32 0.0, %v2150
          %v2152 = vpop.f32.mrf.mxu0
          %v2153 = vadd.f32 0.0, %v2152
          %2154 = vdwg.mxu0
          %v2219 = vunpack.c.l.b16 %v1415
          %v2220 = vunpack.c.h.b16 %v1415
          %v2221 = vunpack.c.l.b16 %v1416
          %v2222 = vunpack.c.h.b16 %v1416
          %v2223 = vunpack.c.l.b16 %v1417
          %v2224 = vunpack.c.h.b16 %v1417
          %v2225 = vunpack.c.l.b16 %v1418
          %v2226 = vunpack.c.h.b16 %v1418
          %v2227 = vunpack.c.l.b16 %v1419
          %v2228 = vunpack.c.h.b16 %v1419
          %v2229 = vunpack.c.l.b16 %v1420
          %v2230 = vunpack.c.h.b16 %v1420
          %v2231 = vunpack.c.l.b16 %v1421
          %v2232 = vunpack.c.h.b16 %v1421
          %v2233 = vunpack.c.l.b16 %v1422
          %v2234 = vunpack.c.h.b16 %v1422
          %v2235 = vunpack.c.l.b16 %v1423
          %v2236 = vunpack.c.h.b16 %v1423
          %v2237 = vunpack.c.l.b16 %v1424
          %v2238 = vunpack.c.h.b16 %v1424
          %v2239 = vunpack.c.l.b16 %v1425
          %v2240 = vunpack.c.h.b16 %v1425
          %v2241 = vunpack.c.l.b16 %v1426
          %v2242 = vunpack.c.h.b16 %v1426
          %v2243 = vunpack.c.l.b16 %v1427
          %v2244 = vunpack.c.h.b16 %v1427
          %v2245 = vunpack.c.l.b16 %v1428
          %v2246 = vunpack.c.h.b16 %v1428
          %v2247 = vunpack.c.l.b16 %v1429
          %v2248 = vunpack.c.h.b16 %v1429
          %v2249 = vunpack.c.l.b16 %v1430
          %v2250 = vunpack.c.h.b16 %v1430
          %v2251 = vunpack.c.l.b16 %v1431
          %v2252 = vunpack.c.h.b16 %v1431
          %v2253 = vunpack.c.l.b16 %v1432
          %v2254 = vunpack.c.h.b16 %v1432
          %v2255 = vunpack.c.l.b16 %v1433
          %v2256 = vunpack.c.h.b16 %v1433
          %v2257 = vunpack.c.l.b16 %v1434
          %v2258 = vunpack.c.h.b16 %v1434
          %v2259 = vunpack.c.l.b16 %v1435
          %v2260 = vunpack.c.h.b16 %v1435
          %v2261 = vunpack.c.l.b16 %v1436
          %v2262 = vunpack.c.h.b16 %v1436
          %v2263 = vunpack.c.l.b16 %v1437
          %v2264 = vunpack.c.h.b16 %v1437
          %v2265 = vunpack.c.l.b16 %v1438
          %v2266 = vunpack.c.h.b16 %v1438
          %v2267 = vunpack.c.l.b16 %v1439
          %v2268 = vunpack.c.h.b16 %v1439
          %v2269 = vunpack.c.l.b16 %v1440
          %v2270 = vunpack.c.h.b16 %v1440
          %v2271 = vunpack.c.l.b16 %v1441
          %v2272 = vunpack.c.h.b16 %v1441
          %v2273 = vunpack.c.l.b16 %v1442
          %v2274 = vunpack.c.h.b16 %v1442
          %v2275 = vunpack.c.l.b16 %v1443
          %v2276 = vunpack.c.h.b16 %v1443
          %v2277 = vunpack.c.l.b16 %v1444
          %v2278 = vunpack.c.h.b16 %v1444
          %v2279 = vunpack.c.l.b16 %v1445
          %v2280 = vunpack.c.h.b16 %v1445
          %v2281 = vunpack.c.l.b16 %v1446
          %v2282 = vunpack.c.h.b16 %v1446
          %v2283 = vunpack.c.l.b16 %v1447
          %v2284 = vunpack.c.h.b16 %v1447
          %v2285 = vunpack.c.l.b16 %v1448
          %v2286 = vunpack.c.h.b16 %v1448
          %v2287 = vunpack.c.l.b16 %v1449
          %v2288 = vunpack.c.h.b16 %v1449
          %v2289 = vunpack.c.l.b16 %v1450
          %v2290 = vunpack.c.h.b16 %v1450
          %v2291 = vunpack.c.l.b16 %v1451
          %v2292 = vunpack.c.h.b16 %v1451
          %v2293 = vunpack.c.l.b16 %v1452
          %v2294 = vunpack.c.h.b16 %v1452
          %v2295 = vunpack.c.l.b16 %v1453
          %v2296 = vunpack.c.h.b16 %v1453
          %v2297 = vunpack.c.l.b16 %v1454
          %v2298 = vunpack.c.h.b16 %v1454
          %v2299 = vunpack.c.l.b16 %v1455
          %v2300 = vunpack.c.h.b16 %v1455
          %v2301 = vunpack.c.l.b16 %v1456
          %v2302 = vunpack.c.h.b16 %v1456
          %v2303 = vunpack.c.l.b16 %v1457
          %v2304 = vunpack.c.h.b16 %v1457
          %v2305 = vunpack.c.l.b16 %v1458
          %v2306 = vunpack.c.h.b16 %v1458
          %v2307 = vunpack.c.l.b16 %v1459
          %v2308 = vunpack.c.h.b16 %v1459
          %v2309 = vunpack.c.l.b16 %v1460
          %v2310 = vunpack.c.h.b16 %v1460
          %v2311 = vunpack.c.l.b16 %v1461
          %v2312 = vunpack.c.h.b16 %v1461
          %v2313 = vunpack.c.l.b16 %v1462
          %v2314 = vunpack.c.h.b16 %v1462
          %v2315 = vunpack.c.l.b16 %v1463
          %v2316 = vunpack.c.h.b16 %v1463
          %v2317 = vunpack.c.l.b16 %v1464
          %v2318 = vunpack.c.h.b16 %v1464
          %v2319 = vunpack.c.l.b16 %v1465
          %v2320 = vunpack.c.h.b16 %v1465
          %v2321 = vunpack.c.l.b16 %v1466
          %v2322 = vunpack.c.h.b16 %v1466
          %v2323 = vunpack.c.l.b16 %v1467
          %v2324 = vunpack.c.h.b16 %v1467
          %v2325 = vunpack.c.l.b16 %v1468
          %v2326 = vunpack.c.h.b16 %v1468
          %v2327 = vunpack.c.l.b16 %v1469
          %v2328 = vunpack.c.h.b16 %v1469
          %v2329 = vunpack.c.l.b16 %v1470
          %v2330 = vunpack.c.h.b16 %v1470
          %v2331 = vunpack.c.l.b16 %v1471
          %v2332 = vunpack.c.h.b16 %v1471
          %v2333 = vunpack.c.l.b16 %v1472
          %v2334 = vunpack.c.h.b16 %v1472
          %v2335 = vunpack.c.l.b16 %v1473
          %v2336 = vunpack.c.h.b16 %v1473
          %v2337 = vunpack.c.l.b16 %v1474
          %v2338 = vunpack.c.h.b16 %v1474
          %v2339 = vunpack.c.l.b16 %v1475
          %v2340 = vunpack.c.h.b16 %v1475
          %v2341 = vunpack.c.l.b16 %v1476
          %v2342 = vunpack.c.h.b16 %v1476
          %v2343 = vunpack.c.l.b16 %v1477
          %v2344 = vunpack.c.h.b16 %v1477
          %v2345 = vunpack.c.l.b16 %v1478
          %v2346 = vunpack.c.h.b16 %v1478
          %v2347 = vpack.c.b16 %v2227, %v2219
          %v2348 = vpack.c.b16 %v2228, %v2220
          %v2349 = vpack.c.b16 %v2229, %v2221
          %v2350 = vpack.c.b16 %v2230, %v2222
          %v2351 = vpack.c.b16 %v2231, %v2223
          %v2352 = vpack.c.b16 %v2232, %v2224
          %v2353 = vpack.c.b16 %v2233, %v2225
          %v2354 = vpack.c.b16 %v2234, %v2226
          %v2355 = vpack.c.b16 %v2243, %v2235
          %v2356 = vpack.c.b16 %v2244, %v2236
          %v2357 = vpack.c.b16 %v2245, %v2237
          %v2358 = vpack.c.b16 %v2246, %v2238
          %v2359 = vpack.c.b16 %v2247, %v2239
          %v2360 = vpack.c.b16 %v2248, %v2240
          %v2361 = vpack.c.b16 %v2249, %v2241
          %v2362 = vpack.c.b16 %v2250, %v2242
          %v2363 = vpack.c.b16 %v2259, %v2251
          %v2364 = vpack.c.b16 %v2260, %v2252
          %v2365 = vpack.c.b16 %v2261, %v2253
          %v2366 = vpack.c.b16 %v2262, %v2254
          %v2367 = vpack.c.b16 %v2263, %v2255
          %v2368 = vpack.c.b16 %v2264, %v2256
          %v2369 = vpack.c.b16 %v2265, %v2257
          %v2370 = vpack.c.b16 %v2266, %v2258
          %v2371 = vpack.c.b16 %v2275, %v2267
          %v2372 = vpack.c.b16 %v2276, %v2268
          %v2373 = vpack.c.b16 %v2277, %v2269
          %v2374 = vpack.c.b16 %v2278, %v2270
          %v2375 = vpack.c.b16 %v2279, %v2271
          %v2376 = vpack.c.b16 %v2280, %v2272
          %v2377 = vpack.c.b16 %v2281, %v2273
          %v2378 = vpack.c.b16 %v2282, %v2274
          %v2379 = vpack.c.b16 %v2291, %v2283
          %v2380 = vpack.c.b16 %v2292, %v2284
          %v2381 = vpack.c.b16 %v2293, %v2285
          %v2382 = vpack.c.b16 %v2294, %v2286
          %v2383 = vpack.c.b16 %v2295, %v2287
          %v2384 = vpack.c.b16 %v2296, %v2288
          %v2385 = vpack.c.b16 %v2297, %v2289
          %v2386 = vpack.c.b16 %v2298, %v2290
          %v2387 = vpack.c.b16 %v2307, %v2299
          %v2388 = vpack.c.b16 %v2308, %v2300
          %v2389 = vpack.c.b16 %v2309, %v2301
          %v2390 = vpack.c.b16 %v2310, %v2302
          %v2391 = vpack.c.b16 %v2311, %v2303
          %v2392 = vpack.c.b16 %v2312, %v2304
          %v2393 = vpack.c.b16 %v2313, %v2305
          %v2394 = vpack.c.b16 %v2314, %v2306
          %v2395 = vpack.c.b16 %v2323, %v2315
          %v2396 = vpack.c.b16 %v2324, %v2316
          %v2397 = vpack.c.b16 %v2325, %v2317
          %v2398 = vpack.c.b16 %v2326, %v2318
          %v2399 = vpack.c.b16 %v2327, %v2319
          %v2400 = vpack.c.b16 %v2328, %v2320
          %v2401 = vpack.c.b16 %v2329, %v2321
          %v2402 = vpack.c.b16 %v2330, %v2322
          %v2403 = vpack.c.b16 %v2339, %v2331
          %v2404 = vpack.c.b16 %v2340, %v2332
          %v2405 = vpack.c.b16 %v2341, %v2333
          %v2406 = vpack.c.b16 %v2342, %v2334
          %v2407 = vpack.c.b16 %v2343, %v2335
          %v2408 = vpack.c.b16 %v2344, %v2336
          %v2409 = vpack.c.b16 %v2345, %v2337
          %v2410 = vpack.c.b16 %v2346, %v2338
          %2475 = vmatprep.subr.bf16.mxu0 %v2404
          %2476 = vmatpush1.bf16.msra.mxu0 %v2403
          %2477 = vmatprep.subr.bf16.mxu0 %v2396
          %2478 = vmatpush1.bf16.msra.mxu0 %v2395
          %2479 = vmatprep.subr.bf16.mxu0 %v2388
          %2480 = vmatpush1.bf16.msra.mxu0 %v2387
          %2481 = vmatprep.subr.bf16.mxu0 %v2380
          %2482 = vmatpush1.bf16.msra.mxu0 %v2379
          %2483 = vmatprep.subr.bf16.mxu0 %v2372
          %2484 = vmatpush1.bf16.msra.mxu0 %v2371
          %2485 = vmatprep.subr.bf16.mxu0 %v2364
          %2486 = vmatpush1.bf16.msra.mxu0 %v2363
          %2487 = vmatprep.subr.bf16.mxu0 %v2356
          %2488 = vmatpush1.bf16.msra.mxu0 %v2355
          %2489 = vmatprep.subr.bf16.mxu0 %v2348
          %2490 = vmatpush1.bf16.msra.mxu0 %v2347
          %2491 = vmatprep.subr.bf16.mxu0 0
          %2492 = vmatpush2.bf16.msra.mxu0 0
          %2493 = vmatprep.subr.bf16.mxu0 0
          %2494 = vmatpush2.bf16.msra.mxu0 0
          %2495 = vmatprep.subr.bf16.mxu0 0
          %2496 = vmatpush2.bf16.msra.mxu0 0
          %2497 = vmatprep.subr.bf16.mxu0 0
          %2498 = vmatpush2.bf16.msra.mxu0 0
          %2499 = vmatprep.subr.bf16.mxu0 0
          %2500 = vmatpush2.bf16.msra.mxu0 0
          %2501 = vmatprep.subr.bf16.mxu0 0
          %2502 = vmatpush2.bf16.msra.mxu0 0
          %2503 = vmatprep.subr.bf16.mxu0 0
          %2504 = vmatpush2.bf16.msra.mxu0 0
          %2505 = vmatprep.subr.bf16.mxu0 0
          %2506 = vmatpush2.bf16.msra.mxu0 0
          %2507 = vmatprep.mubr.bf16.mxu0 0
          %2508 = vmatmul.mubr.bf16.gmra.mxu0 %v1399
          %v2509 = vpop.f32.mrf.mxu0
          %v2510 = vadd.f32 %v1898, %v2509
          %v2511 = vpop.f32.mrf.mxu0
          %v2512 = vadd.f32 %v1900, %v2511
          %v2513 = vpop.f32.mrf.mxu0
          %v2514 = vadd.f32 %v1902, %v2513
          %v2515 = vpop.f32.mrf.mxu0
          %v2516 = vadd.f32 %v1904, %v2515
          %2517 = vmatprep.mubr.bf16.mxu0 0
          %2518 = vmatmul.mubr.bf16.gmra.mxu0 %v1400
          %v2519 = vpop.f32.mrf.mxu0
          %v2520 = vadd.f32 %v1908, %v2519
          %v2521 = vpop.f32.mrf.mxu0
          %v2522 = vadd.f32 %v1910, %v2521
          %v2523 = vpop.f32.mrf.mxu0
          %v2524 = vadd.f32 %v1912, %v2523
          %v2525 = vpop.f32.mrf.mxu0
          %v2526 = vadd.f32 %v1914, %v2525
          %2527 = vmatprep.mubr.bf16.mxu0 0
          %2528 = vmatmul.mubr.bf16.gmra.mxu0 %v1401
          %v2529 = vpop.f32.mrf.mxu0
          %v2530 = vadd.f32 %v1918, %v2529
          %v2531 = vpop.f32.mrf.mxu0
          %v2532 = vadd.f32 %v1920, %v2531
          %v2533 = vpop.f32.mrf.mxu0
          %v2534 = vadd.f32 %v1922, %v2533
          %v2535 = vpop.f32.mrf.mxu0
          %v2536 = vadd.f32 %v1924, %v2535
          %2537 = vmatprep.mubr.bf16.mxu0 0
          %2538 = vmatmul.mubr.bf16.gmra.mxu0 %v1402
          %v2539 = vpop.f32.mrf.mxu0
          %v2540 = vadd.f32 %v1928, %v2539
          %v2541 = vpop.f32.mrf.mxu0
          %v2542 = vadd.f32 %v1930, %v2541
          %v2543 = vpop.f32.mrf.mxu0
          %v2544 = vadd.f32 %v1932, %v2543
          %v2545 = vpop.f32.mrf.mxu0
          %v2546 = vadd.f32 %v1934, %v2545
          %2547 = vdwg.mxu0
          %2548 = vmatprep.subr.bf16.mxu0 %v2406
          %2549 = vmatpush1.bf16.msra.mxu0 %v2405
          %2550 = vmatprep.subr.bf16.mxu0 %v2398
          %2551 = vmatpush1.bf16.msra.mxu0 %v2397
          %2552 = vmatprep.subr.bf16.mxu0 %v2390
          %2553 = vmatpush1.bf16.msra.mxu0 %v2389
          %2554 = vmatprep.subr.bf16.mxu0 %v2382
          %2555 = vmatpush1.bf16.msra.mxu0 %v2381
          %2556 = vmatprep.subr.bf16.mxu0 %v2374
          %2557 = vmatpush1.bf16.msra.mxu0 %v2373
          %2558 = vmatprep.subr.bf16.mxu0 %v2366
          %2559 = vmatpush1.bf16.msra.mxu0 %v2365
          %2560 = vmatprep.subr.bf16.mxu0 %v2358
          %2561 = vmatpush1.bf16.msra.mxu0 %v2357
          %2562 = vmatprep.subr.bf16.mxu0 %v2350
          %2563 = vmatpush1.bf16.msra.mxu0 %v2349
          %2564 = vmatprep.subr.bf16.mxu0 0
          %2565 = vmatpush2.bf16.msra.mxu0 0
          %2566 = vmatprep.subr.bf16.mxu0 0
          %2567 = vmatpush2.bf16.msra.mxu0 0
          %2568 = vmatprep.subr.bf16.mxu0 0
          %2569 = vmatpush2.bf16.msra.mxu0 0
          %2570 = vmatprep.subr.bf16.mxu0 0
          %2571 = vmatpush2.bf16.msra.mxu0 0
          %2572 = vmatprep.subr.bf16.mxu0 0
          %2573 = vmatpush2.bf16.msra.mxu0 0
          %2574 = vmatprep.subr.bf16.mxu0 0
          %2575 = vmatpush2.bf16.msra.mxu0 0
          %2576 = vmatprep.subr.bf16.mxu0 0
          %2577 = vmatpush2.bf16.msra.mxu0 0
          %2578 = vmatprep.subr.bf16.mxu0 0
          %2579 = vmatpush2.bf16.msra.mxu0 0
          %2580 = vmatprep.mubr.bf16.mxu0 0
          %2581 = vmatmul.mubr.bf16.gmra.mxu0 %v1399
          %v2582 = vpop.f32.mrf.mxu0
          %v2583 = vadd.f32 %v1971, %v2582
          %v2584 = vpop.f32.mrf.mxu0
          %v2585 = vadd.f32 %v1973, %v2584
          %v2586 = vpop.f32.mrf.mxu0
          %v2587 = vadd.f32 %v1975, %v2586
          %v2588 = vpop.f32.mrf.mxu0
          %v2589 = vadd.f32 %v1977, %v2588
          %2590 = vmatprep.mubr.bf16.mxu0 0
          %2591 = vmatmul.mubr.bf16.gmra.mxu0 %v1400
          %v2592 = vpop.f32.mrf.mxu0
          %v2593 = vadd.f32 %v1981, %v2592
          %v2594 = vpop.f32.mrf.mxu0
          %v2595 = vadd.f32 %v1983, %v2594
          %v2596 = vpop.f32.mrf.mxu0
          %v2597 = vadd.f32 %v1985, %v2596
          %v2598 = vpop.f32.mrf.mxu0
          %v2599 = vadd.f32 %v1987, %v2598
          %2600 = vmatprep.mubr.bf16.mxu0 0
          %2601 = vmatmul.mubr.bf16.gmra.mxu0 %v1401
          %v2602 = vpop.f32.mrf.mxu0
          %v2603 = vadd.f32 %v1991, %v2602
          %v2604 = vpop.f32.mrf.mxu0
          %v2605 = vadd.f32 %v1993, %v2604
          %v2606 = vpop.f32.mrf.mxu0
          %v2607 = vadd.f32 %v1995, %v2606
          %v2608 = vpop.f32.mrf.mxu0
          %v2609 = vadd.f32 %v1997, %v2608
          %2610 = vmatprep.mubr.bf16.mxu0 0
          %2611 = vmatmul.mubr.bf16.gmra.mxu0 %v1402
          %v2612 = vpop.f32.mrf.mxu0
          %v2613 = vadd.f32 %v2001, %v2612
          %v2614 = vpop.f32.mrf.mxu0
          %v2615 = vadd.f32 %v2003, %v2614
          %v2616 = vpop.f32.mrf.mxu0
          %v2617 = vadd.f32 %v2005, %v2616
          %v2618 = vpop.f32.mrf.mxu0
          %v2619 = vadd.f32 %v2007, %v2618
          %2620 = vdwg.mxu0
          %2621 = vmatprep.subr.bf16.mxu0 %v2408
          %2622 = vmatpush1.bf16.msra.mxu0 %v2407
          %2623 = vmatprep.subr.bf16.mxu0 %v2400
          %2624 = vmatpush1.bf16.msra.mxu0 %v2399
          %2625 = vmatprep.subr.bf16.mxu0 %v2392
          %2626 = vmatpush1.bf16.msra.mxu0 %v2391
          %2627 = vmatprep.subr.bf16.mxu0 %v2384
          %2628 = vmatpush1.bf16.msra.mxu0 %v2383
          %2629 = vmatprep.subr.bf16.mxu0 %v2376
          %2630 = vmatpush1.bf16.msra.mxu0 %v2375
          %2631 = vmatprep.subr.bf16.mxu0 %v2368
          %2632 = vmatpush1.bf16.msra.mxu0 %v2367
          %2633 = vmatprep.subr.bf16.mxu0 %v2360
          %2634 = vmatpush1.bf16.msra.mxu0 %v2359
          %2635 = vmatprep.subr.bf16.mxu0 %v2352
          %2636 = vmatpush1.bf16.msra.mxu0 %v2351
          %2637 = vmatprep.subr.bf16.mxu0 0
          %2638 = vmatpush2.bf16.msra.mxu0 0
          %2639 = vmatprep.subr.bf16.mxu0 0
          %2640 = vmatpush2.bf16.msra.mxu0 0
          %2641 = vmatprep.subr.bf16.mxu0 0
          %2642 = vmatpush2.bf16.msra.mxu0 0
          %2643 = vmatprep.subr.bf16.mxu0 0
          %2644 = vmatpush2.bf16.msra.mxu0 0
          %2645 = vmatprep.subr.bf16.mxu0 0
          %2646 = vmatpush2.bf16.msra.mxu0 0
          %2647 = vmatprep.subr.bf16.mxu0 0
          %2648 = vmatpush2.bf16.msra.mxu0 0
          %2649 = vmatprep.subr.bf16.mxu0 0
          %2650 = vmatpush2.bf16.msra.mxu0 0
          %2651 = vmatprep.subr.bf16.mxu0 0
          %2652 = vmatpush2.bf16.msra.mxu0 0
          %2653 = vmatprep.mubr.bf16.mxu0 0
          %2654 = vmatmul.mubr.bf16.gmra.mxu0 %v1399
          %v2655 = vpop.f32.mrf.mxu0
          %v2656 = vadd.f32 %v2044, %v2655
          %v2657 = vpop.f32.mrf.mxu0
          %v2658 = vadd.f32 %v2046, %v2657
          %v2659 = vpop.f32.mrf.mxu0
          %v2660 = vadd.f32 %v2048, %v2659
          %v2661 = vpop.f32.mrf.mxu0
          %v2662 = vadd.f32 %v2050, %v2661
          %2663 = vmatprep.mubr.bf16.mxu0 0
          %2664 = vmatmul.mubr.bf16.gmra.mxu0 %v1400
          %v2665 = vpop.f32.mrf.mxu0
          %v2666 = vadd.f32 %v2054, %v2665
          %v2667 = vpop.f32.mrf.mxu0
          %v2668 = vadd.f32 %v2056, %v2667
          %v2669 = vpop.f32.mrf.mxu0
          %v2670 = vadd.f32 %v2058, %v2669
          %v2671 = vpop.f32.mrf.mxu0
          %v2672 = vadd.f32 %v2060, %v2671
          %2673 = vmatprep.mubr.bf16.mxu0 0
          %2674 = vmatmul.mubr.bf16.gmra.mxu0 %v1401
          %v2675 = vpop.f32.mrf.mxu0
          %v2676 = vadd.f32 %v2064, %v2675
          %v2677 = vpop.f32.mrf.mxu0
          %v2678 = vadd.f32 %v2066, %v2677
          %v2679 = vpop.f32.mrf.mxu0
          %v2680 = vadd.f32 %v2068, %v2679
          %v2681 = vpop.f32.mrf.mxu0
          %v2682 = vadd.f32 %v2070, %v2681
          %2683 = vmatprep.mubr.bf16.mxu0 0
          %2684 = vmatmul.mubr.bf16.gmra.mxu0 %v1402
          %v2685 = vpop.f32.mrf.mxu0
          %v2686 = vadd.f32 %v2074, %v2685
          %v2687 = vpop.f32.mrf.mxu0
          %v2688 = vadd.f32 %v2076, %v2687
          %v2689 = vpop.f32.mrf.mxu0
          %v2690 = vadd.f32 %v2078, %v2689
          %v2691 = vpop.f32.mrf.mxu0
          %v2692 = vadd.f32 %v2080, %v2691
          %2693 = vdwg.mxu0
          %2694 = vmatprep.subr.bf16.mxu0 %v2410
          %2695 = vmatpush1.bf16.msra.mxu0 %v2409
          %2696 = vmatprep.subr.bf16.mxu0 %v2402
          %2697 = vmatpush1.bf16.msra.mxu0 %v2401
          %2698 = vmatprep.subr.bf16.mxu0 %v2394
          %2699 = vmatpush1.bf16.msra.mxu0 %v2393
          %2700 = vmatprep.subr.bf16.mxu0 %v2386
          %2701 = vmatpush1.bf16.msra.mxu0 %v2385
          %2702 = vmatprep.subr.bf16.mxu0 %v2378
          %2703 = vmatpush1.bf16.msra.mxu0 %v2377
          %2704 = vmatprep.subr.bf16.mxu0 %v2370
          %2705 = vmatpush1.bf16.msra.mxu0 %v2369
          %2706 = vmatprep.subr.bf16.mxu0 %v2362
          %2707 = vmatpush1.bf16.msra.mxu0 %v2361
          %2708 = vmatprep.subr.bf16.mxu0 %v2354
          %2709 = vmatpush1.bf16.msra.mxu0 %v2353
          %2710 = vmatprep.subr.bf16.mxu0 0
          %2711 = vmatpush2.bf16.msra.mxu0 0
          %2712 = vmatprep.subr.bf16.mxu0 0
          %2713 = vmatpush2.bf16.msra.mxu0 0
          %2714 = vmatprep.subr.bf16.mxu0 0
          %2715 = vmatpush2.bf16.msra.mxu0 0
          %2716 = vmatprep.subr.bf16.mxu0 0
          %2717 = vmatpush2.bf16.msra.mxu0 0
          %2718 = vmatprep.subr.bf16.mxu0 0
          %2719 = vmatpush2.bf16.msra.mxu0 0
          %2720 = vmatprep.subr.bf16.mxu0 0
          %2721 = vmatpush2.bf16.msra.mxu0 0
          %2722 = vmatprep.subr.bf16.mxu0 0
          %2723 = vmatpush2.bf16.msra.mxu0 0
          %2724 = vmatprep.subr.bf16.mxu0 0
          %2725 = vmatpush2.bf16.msra.mxu0 0
          %2726 = vmatprep.mubr.bf16.mxu0 0
          %2727 = vmatmul.mubr.bf16.gmra.mxu0 %v1399
          %v2728 = vpop.f32.mrf.mxu0
          %v2729 = vadd.f32 %v2117, %v2728
          %v2730 = vpop.f32.mrf.mxu0
          %v2731 = vadd.f32 %v2119, %v2730
          %v2732 = vpop.f32.mrf.mxu0
          %v2733 = vadd.f32 %v2121, %v2732
          %v2734 = vpop.f32.mrf.mxu0
          %v2735 = vadd.f32 %v2123, %v2734
          %2736 = vmatprep.mubr.bf16.mxu0 0
          %2737 = vmatmul.mubr.bf16.gmra.mxu0 %v1400
          %v2738 = vpop.f32.mrf.mxu0
          %v2739 = vadd.f32 %v2127, %v2738
          %v2740 = vpop.f32.mrf.mxu0
          %v2741 = vadd.f32 %v2129, %v2740
          %v2742 = vpop.f32.mrf.mxu0
          %v2743 = vadd.f32 %v2131, %v2742
          %v2744 = vpop.f32.mrf.mxu0
          %v2745 = vadd.f32 %v2133, %v2744
          %2746 = vmatprep.mubr.bf16.mxu0 0
          %2747 = vmatmul.mubr.bf16.gmra.mxu0 %v1401
          %v2748 = vpop.f32.mrf.mxu0
          %v2749 = vadd.f32 %v2137, %v2748
          %v2750 = vpop.f32.mrf.mxu0
          %v2751 = vadd.f32 %v2139, %v2750
          %v2752 = vpop.f32.mrf.mxu0
          %v2753 = vadd.f32 %v2141, %v2752
          %v2754 = vpop.f32.mrf.mxu0
          %v2755 = vadd.f32 %v2143, %v2754
          %2756 = vmatprep.mubr.bf16.mxu0 0
          %2757 = vmatmul.mubr.bf16.gmra.mxu0 %v1402
          %v2758 = vpop.f32.mrf.mxu0
          %v2759 = vadd.f32 %v2147, %v2758
          %v2760 = vpop.f32.mrf.mxu0
          %v2761 = vadd.f32 %v2149, %v2760
          %v2762 = vpop.f32.mrf.mxu0
          %v2763 = vadd.f32 %v2151, %v2762
          %v2764 = vpop.f32.mrf.mxu0
          %v2765 = vadd.f32 %v2153, %v2764
          %2766 = vdwg.mxu0
          %v2767 = vld [vmem:[%s502] sm:$0xff]
          %v2769 = vlaneseq
          %v2770 = vshrl.u32 %v2769, 7
          %v2771 = vsub.s32 0, %v2770
          %v2772 = vrot.slane %v2767, %v2771
          %v2773 = vlaneseq
          %v2774 = vshrl.u32 %v2773, 7
          %v2775 = vsub.s32 1, %v2774
          %v2776 = vrot.slane %v2767, %v2775
          %v2777 = vlaneseq
          %v2778 = vshrl.u32 %v2777, 7
          %v2779 = vsub.s32 2, %v2778
          %v2780 = vrot.slane %v2767, %v2779
          %v2781 = vlaneseq
          %v2782 = vshrl.u32 %v2781, 7
          %v2783 = vsub.s32 3, %v2782
          %v2784 = vrot.slane %v2767, %v2783
          %v2785 = vlaneseq
          %v2786 = vshrl.u32 %v2785, 7
          %v2787 = vsub.s32 4, %v2786
          %v2788 = vrot.slane %v2767, %v2787
          %v2789 = vlaneseq
          %v2790 = vshrl.u32 %v2789, 7
          %v2791 = vsub.s32 5, %v2790
          %v2792 = vrot.slane %v2767, %v2791
          %v2793 = vlaneseq
          %v2794 = vshrl.u32 %v2793, 7
          %v2795 = vsub.s32 6, %v2794
          %v2796 = vrot.slane %v2767, %v2795
          %v2797 = vlaneseq
          %v2798 = vshrl.u32 %v2797, 7
          %v2799 = vsub.s32 7, %v2798
          %v2800 = vrot.slane %v2767, %v2799
          %v2809 = vadd.f32 %v2510, %v2772
          %v2810 = vadd.f32 %v2512, %v2776
          %v2811 = vadd.f32 %v2583, %v2780
          %v2812 = vadd.f32 %v2585, %v2784
          %v2813 = vadd.f32 %v2656, %v2788
          %v2814 = vadd.f32 %v2658, %v2792
          %v2815 = vadd.f32 %v2729, %v2796
          %v2816 = vadd.f32 %v2731, %v2800
          %v2817 = vadd.f32 %v2514, %v2772
          %v2818 = vadd.f32 %v2516, %v2776
          %v2819 = vadd.f32 %v2587, %v2780
          %v2820 = vadd.f32 %v2589, %v2784
          %v2821 = vadd.f32 %v2660, %v2788
          %v2822 = vadd.f32 %v2662, %v2792
          %v2823 = vadd.f32 %v2733, %v2796
          %v2824 = vadd.f32 %v2735, %v2800
          %v2825 = vadd.f32 %v2520, %v2772
          %v2826 = vadd.f32 %v2522, %v2776
          %v2827 = vadd.f32 %v2593, %v2780
          %v2828 = vadd.f32 %v2595, %v2784
          %v2829 = vadd.f32 %v2666, %v2788
          %v2830 = vadd.f32 %v2668, %v2792
          %v2831 = vadd.f32 %v2739, %v2796
          %v2832 = vadd.f32 %v2741, %v2800
          %v2833 = vadd.f32 %v2524, %v2772
          %v2834 = vadd.f32 %v2526, %v2776
          %v2835 = vadd.f32 %v2597, %v2780
          %v2836 = vadd.f32 %v2599, %v2784
          %v2837 = vadd.f32 %v2670, %v2788
          %v2838 = vadd.f32 %v2672, %v2792
          %v2839 = vadd.f32 %v2743, %v2796
          %v2840 = vadd.f32 %v2745, %v2800
          %v2841 = vadd.f32 %v2530, %v2772
          %v2842 = vadd.f32 %v2532, %v2776
          %v2843 = vadd.f32 %v2603, %v2780
          %v2844 = vadd.f32 %v2605, %v2784
          %v2845 = vadd.f32 %v2676, %v2788
          %v2846 = vadd.f32 %v2678, %v2792
          %v2847 = vadd.f32 %v2749, %v2796
          %v2848 = vadd.f32 %v2751, %v2800
          %v2849 = vadd.f32 %v2534, %v2772
          %v2850 = vadd.f32 %v2536, %v2776
          %v2851 = vadd.f32 %v2607, %v2780
          %v2852 = vadd.f32 %v2609, %v2784
          %v2853 = vadd.f32 %v2680, %v2788
          %v2854 = vadd.f32 %v2682, %v2792
          %v2855 = vadd.f32 %v2753, %v2796
          %v2856 = vadd.f32 %v2755, %v2800
          %v2857 = vadd.f32 %v2540, %v2772
          %v2858 = vadd.f32 %v2542, %v2776
          %v2859 = vadd.f32 %v2613, %v2780
          %v2860 = vadd.f32 %v2615, %v2784
          %v2861 = vadd.f32 %v2686, %v2788
          %v2862 = vadd.f32 %v2688, %v2792
          %v2863 = vadd.f32 %v2759, %v2796
          %v2864 = vadd.f32 %v2761, %v2800
          %v2865 = vadd.f32 %v2544, %v2772
          %v2866 = vadd.f32 %v2546, %v2776
          %v2867 = vadd.f32 %v2617, %v2780
          %v2868 = vadd.f32 %v2619, %v2784
          %v2869 = vadd.f32 %v2690, %v2788
          %v2870 = vadd.f32 %v2692, %v2792
          %v2871 = vadd.f32 %v2763, %v2796
          %v2872 = vadd.f32 %v2765, %v2800
          %2873 = vst [vmem:[#allocation4] sm:$0xff] %v2809
          %2874 = vst [vmem:[#allocation4 + $0x8] sm:$0xff] %v2810
          %2875 = vst [vmem:[#allocation4 + $0x10] sm:$0xff] %v2811
          %2876 = vst [vmem:[#allocation4 + $0x18] sm:$0xff] %v2812
          %2877 = vst [vmem:[#allocation4 + $0x20] sm:$0xff] %v2813
          %2878 = vst [vmem:[#allocation4 + $0x28] sm:$0xff] %v2814
          %2879 = vst [vmem:[#allocation4 + $0x30] sm:$0xff] %v2815
          %2880 = vst [vmem:[#allocation4 + $0x38] sm:$0xff] %v2816
          %2881 = vst [vmem:[#allocation4 + $0x40] sm:$0xff] %v2817
          %2882 = vst [vmem:[#allocation4 + $0x48] sm:$0xff] %v2818
          %2883 = vst [vmem:[#allocation4 + $0x50] sm:$0xff] %v2819
          %2884 = vst [vmem:[#allocation4 + $0x58] sm:$0xff] %v2820
          %2885 = vst [vmem:[#allocation4 + $0x60] sm:$0xff] %v2821
          %2886 = vst [vmem:[#allocation4 + $0x68] sm:$0xff] %v2822
          %2887 = vst [vmem:[#allocation4 + $0x70] sm:$0xff] %v2823
          %2888 = vst [vmem:[#allocation4 + $0x78] sm:$0xff] %v2824
          %2889 = vst [vmem:[#allocation4 + $0x80] sm:$0xff] %v2825
          %2890 = vst [vmem:[#allocation4 + $0x88] sm:$0xff] %v2826
          %2891 = vst [vmem:[#allocation4 + $0x90] sm:$0xff] %v2827
          %2892 = vst [vmem:[#allocation4 + $0x98] sm:$0xff] %v2828
          %2893 = vst [vmem:[#allocation4 + $0xa0] sm:$0xff] %v2829
          %2894 = vst [vmem:[#allocation4 + $0xa8] sm:$0xff] %v2830
          %2895 = vst [vmem:[#allocation4 + $0xb0] sm:$0xff] %v2831
          %2896 = vst [vmem:[#allocation4 + $0xb8] sm:$0xff] %v2832
          %2897 = vst [vmem:[#allocation4 + $0xc0] sm:$0xff] %v2833
          %2898 = vst [vmem:[#allocation4 + $0xc8] sm:$0xff] %v2834
          %2899 = vst [vmem:[#allocation4 + $0xd0] sm:$0xff] %v2835
          %2900 = vst [vmem:[#allocation4 + $0xd8] sm:$0xff] %v2836
          %2901 = vst [vmem:[#allocation4 + $0xe0] sm:$0xff] %v2837
          %2902 = vst [vmem:[#allocation4 + $0xe8] sm:$0xff] %v2838
          %2903 = vst [vmem:[#allocation4 + $0xf0] sm:$0xff] %v2839
          %2904 = vst [vmem:[#allocation4 + $0xf8] sm:$0xff] %v2840
          %2905 = vst [vmem:[#allocation4 + $0x100] sm:$0xff] %v2841
          %2906 = vst [vmem:[#allocation4 + $0x108] sm:$0xff] %v2842
          %2907 = vst [vmem:[#allocation4 + $0x110] sm:$0xff] %v2843
          %2908 = vst [vmem:[#allocation4 + $0x118] sm:$0xff] %v2844
          %2909 = vst [vmem:[#allocation4 + $0x120] sm:$0xff] %v2845
          %2910 = vst [vmem:[#allocation4 + $0x128] sm:$0xff] %v2846
          %2911 = vst [vmem:[#allocation4 + $0x130] sm:$0xff] %v2847
          %2912 = vst [vmem:[#allocation4 + $0x138] sm:$0xff] %v2848
          %2913 = vst [vmem:[#allocation4 + $0x140] sm:$0xff] %v2849
          %2914 = vst [vmem:[#allocation4 + $0x148] sm:$0xff] %v2850
          %2915 = vst [vmem:[#allocation4 + $0x150] sm:$0xff] %v2851
          %2916 = vst [vmem:[#allocation4 + $0x158] sm:$0xff] %v2852
          %2917 = vst [vmem:[#allocation4 + $0x160] sm:$0xff] %v2853
          %2918 = vst [vmem:[#allocation4 + $0x168] sm:$0xff] %v2854
          %2919 = vst [vmem:[#allocation4 + $0x170] sm:$0xff] %v2855
          %2920 = vst [vmem:[#allocation4 + $0x178] sm:$0xff] %v2856
          %2921 = vst [vmem:[#allocation4 + $0x180] sm:$0xff] %v2857
          %2922 = vst [vmem:[#allocation4 + $0x188] sm:$0xff] %v2858
          %2923 = vst [vmem:[#allocation4 + $0x190] sm:$0xff] %v2859
          %2924 = vst [vmem:[#allocation4 + $0x198] sm:$0xff] %v2860
          %2925 = vst [vmem:[#allocation4 + $0x1a0] sm:$0xff] %v2861
          %2926 = vst [vmem:[#allocation4 + $0x1a8] sm:$0xff] %v2862
          %2927 = vst [vmem:[#allocation4 + $0x1b0] sm:$0xff] %v2863
          %2928 = vst [vmem:[#allocation4 + $0x1b8] sm:$0xff] %v2864
          %2929 = vst [vmem:[#allocation4 + $0x1c0] sm:$0xff] %v2865
          %2930 = vst [vmem:[#allocation4 + $0x1c8] sm:$0xff] %v2866
          %2931 = vst [vmem:[#allocation4 + $0x1d0] sm:$0xff] %v2867
          %2932 = vst [vmem:[#allocation4 + $0x1d8] sm:$0xff] %v2868
          %2933 = vst [vmem:[#allocation4 + $0x1e0] sm:$0xff] %v2869
          %2934 = vst [vmem:[#allocation4 + $0x1e8] sm:$0xff] %v2870
          %2935 = vst [vmem:[#allocation4 + $0x1f0] sm:$0xff] %v2871
          %2936 = vst [vmem:[#allocation4 + $0x1f8] sm:$0xff] %v2872
        $region104: #{tpu_custom_call.1} parent=59 // pred_fallthru
          _
        %v2937 = vld [vmem:[%s493] sm:$0xff]
        %v2938 = vld [vmem:[%s493 + $0x8] sm:$0xff]
        %v2939 = vld [vmem:[%s493 + $0x10] sm:$0xff]
        %v2940 = vld [vmem:[%s493 + $0x18] sm:$0xff]
        %v2941 = vld [vmem:[%s493 + $0x20] sm:$0xff]
        %v2942 = vld [vmem:[%s493 + $0x28] sm:$0xff]
        %v2943 = vld [vmem:[%s493 + $0x30] sm:$0xff]
        %v2944 = vld [vmem:[%s493 + $0x38] sm:$0xff]
        %v2945 = vld [vmem:[%s493 + $0x40] sm:$0xff]
        %v2946 = vld [vmem:[%s493 + $0x48] sm:$0xff]
        %v2947 = vld [vmem:[%s493 + $0x50] sm:$0xff]
        %v2948 = vld [vmem:[%s493 + $0x58] sm:$0xff]
        %v2949 = vld [vmem:[%s493 + $0x60] sm:$0xff]
        %v2950 = vld [vmem:[%s493 + $0x68] sm:$0xff]
        %v2951 = vld [vmem:[%s493 + $0x70] sm:$0xff]
        %v2952 = vld [vmem:[%s493 + $0x78] sm:$0xff]
        %v2953 = vld [vmem:[%s493 + $0x80] sm:$0xff]
        %v2954 = vld [vmem:[%s493 + $0x88] sm:$0xff]
        %v2955 = vld [vmem:[%s493 + $0x90] sm:$0xff]
        %v2956 = vld [vmem:[%s493 + $0x98] sm:$0xff]
        %v2957 = vld [vmem:[%s493 + $0xa0] sm:$0xff]
        %v2958 = vld [vmem:[%s493 + $0xa8] sm:$0xff]
        %v2959 = vld [vmem:[%s493 + $0xb0] sm:$0xff]
        %v2960 = vld [vmem:[%s493 + $0xb8] sm:$0xff]
        %v2961 = vld [vmem:[%s493 + $0xc0] sm:$0xff]
        %v2962 = vld [vmem:[%s493 + $0xc8] sm:$0xff]
        %v2963 = vld [vmem:[%s493 + $0xd0] sm:$0xff]
        %v2964 = vld [vmem:[%s493 + $0xd8] sm:$0xff]
        %v2965 = vld [vmem:[%s493 + $0xe0] sm:$0xff]
        %v2966 = vld [vmem:[%s493 + $0xe8] sm:$0xff]
        %v2967 = vld [vmem:[%s493 + $0xf0] sm:$0xff]
        %v2968 = vld [vmem:[%s493 + $0xf8] sm:$0xff]
        %s2969 = scalar_lea.vmem %s493, 256 [#allocation12]
        %v2970 = vld [vmem:[%s2969] sm:$0xff]
        %v2971 = vld [vmem:[%s2969 + $0x8] sm:$0xff]
        %v2972 = vld [vmem:[%s2969 + $0x10] sm:$0xff]
        %v2973 = vld [vmem:[%s2969 + $0x18] sm:$0xff]
        %v2974 = vld [vmem:[%s2969 + $0x20] sm:$0xff]
        %v2975 = vld [vmem:[%s2969 + $0x28] sm:$0xff]
        %v2976 = vld [vmem:[%s2969 + $0x30] sm:$0xff]
        %v2977 = vld [vmem:[%s2969 + $0x38] sm:$0xff]
        %v2978 = vld [vmem:[%s2969 + $0x40] sm:$0xff]
        %v2979 = vld [vmem:[%s2969 + $0x48] sm:$0xff]
        %v2980 = vld [vmem:[%s2969 + $0x50] sm:$0xff]
        %v2981 = vld [vmem:[%s2969 + $0x58] sm:$0xff]
        %v2982 = vld [vmem:[%s2969 + $0x60] sm:$0xff]
        %v2983 = vld [vmem:[%s2969 + $0x68] sm:$0xff]
        %v2984 = vld [vmem:[%s2969 + $0x70] sm:$0xff]
        %v2985 = vld [vmem:[%s2969 + $0x78] sm:$0xff]
        %v2986 = vld [vmem:[%s2969 + $0x80] sm:$0xff]
        %v2987 = vld [vmem:[%s2969 + $0x88] sm:$0xff]
        %v2988 = vld [vmem:[%s2969 + $0x90] sm:$0xff]
        %v2989 = vld [vmem:[%s2969 + $0x98] sm:$0xff]
        %v2990 = vld [vmem:[%s2969 + $0xa0] sm:$0xff]
        %v2991 = vld [vmem:[%s2969 + $0xa8] sm:$0xff]
        %v2992 = vld [vmem:[%s2969 + $0xb0] sm:$0xff]
        %v2993 = vld [vmem:[%s2969 + $0xb8] sm:$0xff]
        %v2994 = vld [vmem:[%s2969 + $0xc0] sm:$0xff]
        %v2995 = vld [vmem:[%s2969 + $0xc8] sm:$0xff]
        %v2996 = vld [vmem:[%s2969 + $0xd0] sm:$0xff]
        %v2997 = vld [vmem:[%s2969 + $0xd8] sm:$0xff]
        %v2998 = vld [vmem:[%s2969 + $0xe0] sm:$0xff]
        %v2999 = vld [vmem:[%s2969 + $0xe8] sm:$0xff]
        %v3000 = vld [vmem:[%s2969 + $0xf0] sm:$0xff]
        %v3001 = vld [vmem:[%s2969 + $0xf8] sm:$0xff]
        %v3002 = vld [vmem:[#allocation4] sm:$0xff]
        %v3003 = vld [vmem:[#allocation4 + $0x8] sm:$0xff]
        %v3004 = vld [vmem:[#allocation4 + $0x10] sm:$0xff]
        %v3005 = vld [vmem:[#allocation4 + $0x18] sm:$0xff]
        %v3038 = vunpack.c.l.b16 %v2937
        %v3039 = vunpack.c.h.b16 %v2937
        %v3040 = vunpack.c.l.b16 %v2938
        %v3041 = vunpack.c.h.b16 %v2938
        %v3042 = vunpack.c.l.b16 %v2939
        %v3043 = vunpack.c.h.b16 %v2939
        %v3044 = vunpack.c.l.b16 %v2940
        %v3045 = vunpack.c.h.b16 %v2940
        %v3046 = vunpack.c.l.b16 %v2941
        %v3047 = vunpack.c.h.b16 %v2941
        %v3048 = vunpack.c.l.b16 %v2942
        %v3049 = vunpack.c.h.b16 %v2942
        %v3050 = vunpack.c.l.b16 %v2943
        %v3051 = vunpack.c.h.b16 %v2943
        %v3052 = vunpack.c.l.b16 %v2944
        %v3053 = vunpack.c.h.b16 %v2944
        %v3054 = vunpack.c.l.b16 %v2945
        %v3055 = vunpack.c.h.b16 %v2945
        %v3056 = vunpack.c.l.b16 %v2946
        %v3057 = vunpack.c.h.b16 %v2946
        %v3058 = vunpack.c.l.b16 %v2947
        %v3059 = vunpack.c.h.b16 %v2947
        %v3060 = vunpack.c.l.b16 %v2948
        %v3061 = vunpack.c.h.b16 %v2948
        %v3062 = vunpack.c.l.b16 %v2949
        %v3063 = vunpack.c.h.b16 %v2949
        %v3064 = vunpack.c.l.b16 %v2950
        %v3065 = vunpack.c.h.b16 %v2950
        %v3066 = vunpack.c.l.b16 %v2951
        %v3067 = vunpack.c.h.b16 %v2951
        %v3068 = vunpack.c.l.b16 %v2952
        %v3069 = vunpack.c.h.b16 %v2952
        %v3070 = vunpack.c.l.b16 %v2953
        %v3071 = vunpack.c.h.b16 %v2953
        %v3072 = vunpack.c.l.b16 %v2954
        %v3073 = vunpack.c.h.b16 %v2954
        %v3074 = vunpack.c.l.b16 %v2955
        %v3075 = vunpack.c.h.b16 %v2955
        %v3076 = vunpack.c.l.b16 %v2956
        %v3077 = vunpack.c.h.b16 %v2956
        %v3078 = vunpack.c.l.b16 %v2957
        %v3079 = vunpack.c.h.b16 %v2957
        %v3080 = vunpack.c.l.b16 %v2958
        %v3081 = vunpack.c.h.b16 %v2958
        %v3082 = vunpack.c.l.b16 %v2959
        %v3083 = vunpack.c.h.b16 %v2959
        %v3084 = vunpack.c.l.b16 %v2960
        %v3085 = vunpack.c.h.b16 %v2960
        %v3086 = vunpack.c.l.b16 %v2961
        %v3087 = vunpack.c.h.b16 %v2961
        %v3088 = vunpack.c.l.b16 %v2962
        %v3089 = vunpack.c.h.b16 %v2962
        %v3090 = vunpack.c.l.b16 %v2963
        %v3091 = vunpack.c.h.b16 %v2963
        %v3092 = vunpack.c.l.b16 %v2964
        %v3093 = vunpack.c.h.b16 %v2964
        %v3094 = vunpack.c.l.b16 %v2965
        %v3095 = vunpack.c.h.b16 %v2965
        %v3096 = vunpack.c.l.b16 %v2966
        %v3097 = vunpack.c.h.b16 %v2966
        %v3098 = vunpack.c.l.b16 %v2967
        %v3099 = vunpack.c.h.b16 %v2967
        %v3100 = vunpack.c.l.b16 %v2968
        %v3101 = vunpack.c.h.b16 %v2968
        %v3102 = vpack.c.b16 %v3042, %v3038
        %v3103 = vpack.c.b16 %v3043, %v3039
        %v3104 = vpack.c.b16 %v3044, %v3040
        %v3105 = vpack.c.b16 %v3045, %v3041
        %v3106 = vpack.c.b16 %v3050, %v3046
        %v3107 = vpack.c.b16 %v3051, %v3047
        %v3108 = vpack.c.b16 %v3052, %v3048
        %v3109 = vpack.c.b16 %v3053, %v3049
        %v3110 = vpack.c.b16 %v3058, %v3054
        %v3111 = vpack.c.b16 %v3059, %v3055
        %v3112 = vpack.c.b16 %v3060, %v3056
        %v3113 = vpack.c.b16 %v3061, %v3057
        %v3114 = vpack.c.b16 %v3066, %v3062
        %v3115 = vpack.c.b16 %v3067, %v3063
        %v3116 = vpack.c.b16 %v3068, %v3064
        %v3117 = vpack.c.b16 %v3069, %v3065
        %v3118 = vpack.c.b16 %v3074, %v3070
        %v3119 = vpack.c.b16 %v3075, %v3071
        %v3120 = vpack.c.b16 %v3076, %v3072
        %v3121 = vpack.c.b16 %v3077, %v3073
        %v3122 = vpack.c.b16 %v3082, %v3078
        %v3123 = vpack.c.b16 %v3083, %v3079
        %v3124 = vpack.c.b16 %v3084, %v3080
        %v3125 = vpack.c.b16 %v3085, %v3081
        %v3126 = vpack.c.b16 %v3090, %v3086
        %v3127 = vpack.c.b16 %v3091, %v3087
        %v3128 = vpack.c.b16 %v3092, %v3088
        %v3129 = vpack.c.b16 %v3093, %v3089
        %v3130 = vpack.c.b16 %v3098, %v3094
        %v3131 = vpack.c.b16 %v3099, %v3095
        %v3132 = vpack.c.b16 %v3100, %v3096
        %v3133 = vpack.c.b16 %v3101, %v3097
        %3166 = vmatprep.subr.bf16.mxu0 %v3131
        %3167 = vmatpush1.bf16.msra.mxu0 %v3130
        %3168 = vmatprep.subr.bf16.mxu0 %v3127
        %3169 = vmatpush1.bf16.msra.mxu0 %v3126
        %3170 = vmatprep.subr.bf16.mxu0 %v3123
        %3171 = vmatpush1.bf16.msra.mxu0 %v3122
        %3172 = vmatprep.subr.bf16.mxu0 %v3119
        %3173 = vmatpush1.bf16.msra.mxu0 %v3118
        %3174 = vmatprep.subr.bf16.mxu0 %v3115
        %3175 = vmatpush1.bf16.msra.mxu0 %v3114
        %3176 = vmatprep.subr.bf16.mxu0 %v3111
        %3177 = vmatpush1.bf16.msra.mxu0 %v3110
        %3178 = vmatprep.subr.bf16.mxu0 %v3107
        %3179 = vmatpush1.bf16.msra.mxu0 %v3106
        %3180 = vmatprep.subr.bf16.mxu0 %v3103
        %3181 = vmatpush1.bf16.msra.mxu0 %v3102
        %3182 = vmatprep.subr.bf16.mxu0 0
        %3183 = vmatpush2.bf16.msra.mxu0 0
        %3184 = vmatprep.subr.bf16.mxu0 0
        %3185 = vmatpush2.bf16.msra.mxu0 0
        %3186 = vmatprep.subr.bf16.mxu0 0
        %3187 = vmatpush2.bf16.msra.mxu0 0
        %3188 = vmatprep.subr.bf16.mxu0 0
        %3189 = vmatpush2.bf16.msra.mxu0 0
        %3190 = vmatprep.subr.bf16.mxu0 0
        %3191 = vmatpush2.bf16.msra.mxu0 0
        %3192 = vmatprep.subr.bf16.mxu0 0
        %3193 = vmatpush2.bf16.msra.mxu0 0
        %3194 = vmatprep.subr.bf16.mxu0 0
        %3195 = vmatpush2.bf16.msra.mxu0 0
        %3196 = vmatprep.subr.bf16.mxu0 0
        %3197 = vmatpush2.bf16.msra.mxu0 0
        %3198 = vmatprep.mubr.bf16.mxu0 0
        %3199 = vmatmul.mubr.bf16.gmra.mxu0 0
        %v3200 = vpop.f32.mrf.mxu0
        %v3201 = vadd.f32 0.0, %v3200
        %v3202 = vpop.f32.mrf.mxu0
        %v3203 = vadd.f32 0.0, %v3202
        %v3204 = vpop.f32.mrf.mxu0
        %v3205 = vpop.f32.mrf.mxu0
        %3206 = vdwg.mxu0
        %3207 = vmatprep.subr.bf16.mxu0 %v3133
        %3208 = vmatpush1.bf16.msra.mxu0 %v3132
        %3209 = vmatprep.subr.bf16.mxu0 %v3129
        %3210 = vmatpush1.bf16.msra.mxu0 %v3128
        %3211 = vmatprep.subr.bf16.mxu0 %v3125
        %3212 = vmatpush1.bf16.msra.mxu0 %v3124
        %3213 = vmatprep.subr.bf16.mxu0 %v3121
        %3214 = vmatpush1.bf16.msra.mxu0 %v3120
        %3215 = vmatprep.subr.bf16.mxu0 %v3117
        %3216 = vmatpush1.bf16.msra.mxu0 %v3116
        %3217 = vmatprep.subr.bf16.mxu0 %v3113
        %3218 = vmatpush1.bf16.msra.mxu0 %v3112
        %3219 = vmatprep.subr.bf16.mxu0 %v3109
        %3220 = vmatpush1.bf16.msra.mxu0 %v3108
        %3221 = vmatprep.subr.bf16.mxu0 %v3105
        %3222 = vmatpush1.bf16.msra.mxu0 %v3104
        %3223 = vmatprep.subr.bf16.mxu0 0
        %3224 = vmatpush2.bf16.msra.mxu0 0
        %3225 = vmatprep.subr.bf16.mxu0 0
        %3226 = vmatpush2.bf16.msra.mxu0 0
        %3227 = vmatprep.subr.bf16.mxu0 0
        %3228 = vmatpush2.bf16.msra.mxu0 0
        %3229 = vmatprep.subr.bf16.mxu0 0
        %3230 = vmatpush2.bf16.msra.mxu0 0
        %3231 = vmatprep.subr.bf16.mxu0 0
        %3232 = vmatpush2.bf16.msra.mxu0 0
        %3233 = vmatprep.subr.bf16.mxu0 0
        %3234 = vmatpush2.bf16.msra.mxu0 0
        %3235 = vmatprep.subr.bf16.mxu0 0
        %3236 = vmatpush2.bf16.msra.mxu0 0
        %3237 = vmatprep.subr.bf16.mxu0 0
        %3238 = vmatpush2.bf16.msra.mxu0 0
        %3239 = vmatprep.mubr.bf16.mxu0 0
        %3240 = vmatmul.mubr.bf16.gmra.mxu0 0
        %v3241 = vpop.f32.mrf.mxu0
        %v3242 = vadd.f32 0.0, %v3241
        %v3243 = vpop.f32.mrf.mxu0
        %v3244 = vadd.f32 0.0, %v3243
        %v3245 = vpop.f32.mrf.mxu0
        %v3246 = vpop.f32.mrf.mxu0
        %3247 = vdwg.mxu0
        %v3248 = vadd.f32 %v3002, %v3201
        %v3249 = vadd.f32 %v3003, %v3203
        %v3250 = vadd.f32 %v3004, %v3242
        %v3251 = vadd.f32 %v3005, %v3244
        %v3252 = vld [vmem:[#allocation4 + $0x1e0] sm:$0xff]
        %v3253 = vld [vmem:[#allocation4 + $0x1e8] sm:$0xff]
        %v3254 = vld [vmem:[#allocation4 + $0x1f0] sm:$0xff]
        %v3255 = vld [vmem:[#allocation4 + $0x1f8] sm:$0xff]
        %v3288 = vunpack.c.l.b16 %v2970
        %v3289 = vunpack.c.h.b16 %v2970
        %v3290 = vunpack.c.l.b16 %v2971
        %v3291 = vunpack.c.h.b16 %v2971
        %v3292 = vunpack.c.l.b16 %v2972
        %v3293 = vunpack.c.h.b16 %v2972
        %v3294 = vunpack.c.l.b16 %v2973
        %v3295 = vunpack.c.h.b16 %v2973
        %v3296 = vunpack.c.l.b16 %v2974
        %v3297 = vunpack.c.h.b16 %v2974
        %v3298 = vunpack.c.l.b16 %v2975
        %v3299 = vunpack.c.h.b16 %v2975
        %v3300 = vunpack.c.l.b16 %v2976
        %v3301 = vunpack.c.h.b16 %v2976
        %v3302 = vunpack.c.l.b16 %v2977
        %v3303 = vunpack.c.h.b16 %v2977
        %v3304 = vunpack.c.l.b16 %v2978
        %v3305 = vunpack.c.h.b16 %v2978
        %v3306 = vunpack.c.l.b16 %v2979
        %v3307 = vunpack.c.h.b16 %v2979
        %v3308 = vunpack.c.l.b16 %v2980
        %v3309 = vunpack.c.h.b16 %v2980
        %v3310 = vunpack.c.l.b16 %v2981
        %v3311 = vunpack.c.h.b16 %v2981
        %v3312 = vunpack.c.l.b16 %v2982
        %v3313 = vunpack.c.h.b16 %v2982
        %v3314 = vunpack.c.l.b16 %v2983
        %v3315 = vunpack.c.h.b16 %v2983
        %v3316 = vunpack.c.l.b16 %v2984
        %v3317 = vunpack.c.h.b16 %v2984
        %v3318 = vunpack.c.l.b16 %v2985
        %v3319 = vunpack.c.h.b16 %v2985
        %v3320 = vunpack.c.l.b16 %v2986
        %v3321 = vunpack.c.h.b16 %v2986
        %v3322 = vunpack.c.l.b16 %v2987
        %v3323 = vunpack.c.h.b16 %v2987
        %v3324 = vunpack.c.l.b16 %v2988
        %v3325 = vunpack.c.h.b16 %v2988
        %v3326 = vunpack.c.l.b16 %v2989
        %v3327 = vunpack.c.h.b16 %v2989
        %v3328 = vunpack.c.l.b16 %v2990
        %v3329 = vunpack.c.h.b16 %v2990
        %v3330 = vunpack.c.l.b16 %v2991
        %v3331 = vunpack.c.h.b16 %v2991
        %v3332 = vunpack.c.l.b16 %v2992
        %v3333 = vunpack.c.h.b16 %v2992
        %v3334 = vunpack.c.l.b16 %v2993
        %v3335 = vunpack.c.h.b16 %v2993
        %v3336 = vunpack.c.l.b16 %v2994
        %v3337 = vunpack.c.h.b16 %v2994
        %v3338 = vunpack.c.l.b16 %v2995
        %v3339 = vunpack.c.h.b16 %v2995
        %v3340 = vunpack.c.l.b16 %v2996
        %v3341 = vunpack.c.h.b16 %v2996
        %v3342 = vunpack.c.l.b16 %v2997
        %v3343 = vunpack.c.h.b16 %v2997
        %v3344 = vunpack.c.l.b16 %v2998
        %v3345 = vunpack.c.h.b16 %v2998
        %v3346 = vunpack.c.l.b16 %v2999
        %v3347 = vunpack.c.h.b16 %v2999
        %v3348 = vunpack.c.l.b16 %v3000
        %v3349 = vunpack.c.h.b16 %v3000
        %v3350 = vunpack.c.l.b16 %v3001
        %v3351 = vunpack.c.h.b16 %v3001
        %v3352 = vpack.c.b16 %v3292, %v3288
        %v3353 = vpack.c.b16 %v3293, %v3289
        %v3354 = vpack.c.b16 %v3294, %v3290
        %v3355 = vpack.c.b16 %v3295, %v3291
        %v3356 = vpack.c.b16 %v3300, %v3296
        %v3357 = vpack.c.b16 %v3301, %v3297
        %v3358 = vpack.c.b16 %v3302, %v3298
        %v3359 = vpack.c.b16 %v3303, %v3299
        %v3360 = vpack.c.b16 %v3308, %v3304
        %v3361 = vpack.c.b16 %v3309, %v3305
        %v3362 = vpack.c.b16 %v3310, %v3306
        %v3363 = vpack.c.b16 %v3311, %v3307
        %v3364 = vpack.c.b16 %v3316, %v3312
        %v3365 = vpack.c.b16 %v3317, %v3313
        %v3366 = vpack.c.b16 %v3318, %v3314
        %v3367 = vpack.c.b16 %v3319, %v3315
        %v3368 = vpack.c.b16 %v3324, %v3320
        %v3369 = vpack.c.b16 %v3325, %v3321
        %v3370 = vpack.c.b16 %v3326, %v3322
        %v3371 = vpack.c.b16 %v3327, %v3323
        %v3372 = vpack.c.b16 %v3332, %v3328
        %v3373 = vpack.c.b16 %v3333, %v3329
        %v3374 = vpack.c.b16 %v3334, %v3330
        %v3375 = vpack.c.b16 %v3335, %v3331
        %v3376 = vpack.c.b16 %v3340, %v3336
        %v3377 = vpack.c.b16 %v3341, %v3337
        %v3378 = vpack.c.b16 %v3342, %v3338
        %v3379 = vpack.c.b16 %v3343, %v3339
        %v3380 = vpack.c.b16 %v3348, %v3344
        %v3381 = vpack.c.b16 %v3349, %v3345
        %v3382 = vpack.c.b16 %v3350, %v3346
        %v3383 = vpack.c.b16 %v3351, %v3347
        %3416 = vmatprep.subr.bf16.mxu0 %v3381
        %3417 = vmatpush1.bf16.msra.mxu0 %v3380
        %3418 = vmatprep.subr.bf16.mxu0 %v3377
        %3419 = vmatpush1.bf16.msra.mxu0 %v3376
        %3420 = vmatprep.subr.bf16.mxu0 %v3373
        %3421 = vmatpush1.bf16.msra.mxu0 %v3372
        %3422 = vmatprep.subr.bf16.mxu0 %v3369
        %3423 = vmatpush1.bf16.msra.mxu0 %v3368
        %3424 = vmatprep.subr.bf16.mxu0 %v3365
        %3425 = vmatpush1.bf16.msra.mxu0 %v3364
        %3426 = vmatprep.subr.bf16.mxu0 %v3361
        %3427 = vmatpush1.bf16.msra.mxu0 %v3360
        %3428 = vmatprep.subr.bf16.mxu0 %v3357
        %3429 = vmatpush1.bf16.msra.mxu0 %v3356
        %3430 = vmatprep.subr.bf16.mxu0 %v3353
        %3431 = vmatpush1.bf16.msra.mxu0 %v3352
        %3432 = vmatprep.subr.bf16.mxu0 0
        %3433 = vmatpush2.bf16.msra.mxu0 0
        %3434 = vmatprep.subr.bf16.mxu0 0
        %3435 = vmatpush2.bf16.msra.mxu0 0
        %3436 = vmatprep.subr.bf16.mxu0 0
        %3437 = vmatpush2.bf16.msra.mxu0 0
        %3438 = vmatprep.subr.bf16.mxu0 0
        %3439 = vmatpush2.bf16.msra.mxu0 0
        %3440 = vmatprep.subr.bf16.mxu0 0
        %3441 = vmatpush2.bf16.msra.mxu0 0
        %3442 = vmatprep.subr.bf16.mxu0 0
        %3443 = vmatpush2.bf16.msra.mxu0 0
        %3444 = vmatprep.subr.bf16.mxu0 0
        %3445 = vmatpush2.bf16.msra.mxu0 0
        %3446 = vmatprep.subr.bf16.mxu0 0
        %3447 = vmatpush2.bf16.msra.mxu0 0
        %3448 = vmatprep.mubr.bf16.mxu0 0
        %3449 = vmatmul.mubr.bf16.gmra.mxu0 0
        %v3450 = vpop.f32.mrf.mxu0
        %v3451 = vadd.f32 0.0, %v3450
        %v3452 = vpop.f32.mrf.mxu0
        %v3453 = vadd.f32 0.0, %v3452
        %v3454 = vpop.f32.mrf.mxu0
        %v3455 = vpop.f32.mrf.mxu0
        %3456 = vdwg.mxu0
        %3457 = vmatprep.subr.bf16.mxu0 %v3383
        %3458 = vmatpush1.bf16.msra.mxu0 %v3382
        %3459 = vmatprep.subr.bf16.mxu0 %v3379
        %3460 = vmatpush1.bf16.msra.mxu0 %v3378
        %3461 = vmatprep.subr.bf16.mxu0 %v3375
        %3462 = vmatpush1.bf16.msra.mxu0 %v3374
        %3463 = vmatprep.subr.bf16.mxu0 %v3371
        %3464 = vmatpush1.bf16.msra.mxu0 %v3370
        %3465 = vmatprep.subr.bf16.mxu0 %v3367
        %3466 = vmatpush1.bf16.msra.mxu0 %v3366
        %3467 = vmatprep.subr.bf16.mxu0 %v3363
        %3468 = vmatpush1.bf16.msra.mxu0 %v3362
        %3469 = vmatprep.subr.bf16.mxu0 %v3359
        %3470 = vmatpush1.bf16.msra.mxu0 %v3358
        %3471 = vmatprep.subr.bf16.mxu0 %v3355
        %3472 = vmatpush1.bf16.msra.mxu0 %v3354
        %3473 = vmatprep.subr.bf16.mxu0 0
        %3474 = vmatpush2.bf16.msra.mxu0 0
        %3475 = vmatprep.subr.bf16.mxu0 0
        %3476 = vmatpush2.bf16.msra.mxu0 0
        %3477 = vmatprep.subr.bf16.mxu0 0
        %3478 = vmatpush2.bf16.msra.mxu0 0
        %3479 = vmatprep.subr.bf16.mxu0 0
        %3480 = vmatpush2.bf16.msra.mxu0 0
        %3481 = vmatprep.subr.bf16.mxu0 0
        %3482 = vmatpush2.bf16.msra.mxu0 0
        %3483 = vmatprep.subr.bf16.mxu0 0
        %3484 = vmatpush2.bf16.msra.mxu0 0
        %3485 = vmatprep.subr.bf16.mxu0 0
        %3486 = vmatpush2.bf16.msra.mxu0 0
        %3487 = vmatprep.subr.bf16.mxu0 0
        %3488 = vmatpush2.bf16.msra.mxu0 0
        %3489 = vmatprep.mubr.bf16.mxu0 0
        %3490 = vmatmul.mubr.bf16.gmra.mxu0 0
        %v3491 = vpop.f32.mrf.mxu0
        %v3492 = vadd.f32 0.0, %v3491
        %v3493 = vpop.f32.mrf.mxu0
        %v3494 = vadd.f32 0.0, %v3493
        %v3495 = vpop.f32.mrf.mxu0
        %v3496 = vpop.f32.mrf.mxu0
        %3497 = vdwg.mxu0
        %v3498 = vadd.f32 %v3252, %v3451
        %v3499 = vadd.f32 %v3253, %v3453
        %v3500 = vadd.f32 %v3254, %v3492
        %v3501 = vadd.f32 %v3255, %v3494
        %v3502 = vxor.u32 %v3248, 2147483648
        %v3503 = vxor.u32 %v3249, 2147483648
        %v3504 = vxor.u32 %v3250, 2147483648
        %v3505 = vmul.f32 %v3502, 1.442695
        %v3506 = vpow.pop %v3505
        %v3507 = vmul.f32 %v3503, 1.442695
        %v3508 = vpow.pop %v3507
        %v3509 = vmul.f32 %v3504, 1.442695
        %v3510 = vpow.pop %v3509
        %v3511 = vadd.f32 %v3506, 1.0
        %v3512 = vadd.f32 %v3508, 1.0
        %v3513 = vadd.f32 %v3510, 1.0
        %v3514 = vrcp.pop %v3511
        %v3515 = vmul.f32 1.0, %v3514
        %v3516 = vrcp.pop %v3512
        %v3517 = vmul.f32 1.0, %v3516
        %v3518 = vrcp.pop %v3513
        %v3519 = vmul.f32 1.0, %v3518
        %v3520 = vtanh.pop %v3251
        %v3521 = vmul.f32 %v3517, 0.0
        %v3522 = vmul.f32 %v3515, %v3520
        %v3523 = vadd.f32 %v3521, %v3522
        %v3524 = vtanh.pop %v3523
        %v3525 = vmul.f32 %v3519, %v3524
        %v3526 = vxor.u32 %v3498, 2147483648
        %v3527 = vxor.u32 %v3499, 2147483648
        %v3528 = vxor.u32 %v3500, 2147483648
        %v3529 = vmul.f32 %v3526, 1.442695
        %v3530 = vpow.pop %v3529
        %v3531 = vmul.f32 %v3527, 1.442695
        %v3532 = vpow.pop %v3531
        %v3533 = vmul.f32 %v3528, 1.442695
        %v3534 = vpow.pop %v3533
        %v3535 = vadd.f32 %v3530, 1.0
        %v3536 = vadd.f32 %v3532, 1.0
        %v3537 = vadd.f32 %v3534, 1.0
        %v3538 = vrcp.pop %v3535
        %v3539 = vmul.f32 1.0, %v3538
        %v3540 = vrcp.pop %v3536
        %v3541 = vmul.f32 1.0, %v3540
        %v3542 = vrcp.pop %v3537
        %v3543 = vmul.f32 1.0, %v3542
        %v3544 = vtanh.pop %v3501
        %v3545 = vmul.f32 %v3541, 0.0
        %v3546 = vmul.f32 %v3539, %v3544
        %v3547 = vadd.f32 %v3545, %v3546
        %v3548 = vtanh.pop %v3547
        %v3549 = vmul.f32 %v3543, %v3548
        %vm3550 = vcmp.gt.s32.totalorder %v568, 0
        %vm3551 = vcmp.gt.s32.totalorder %v568, 7
        %v3552 = vsel %vm3550, 1, 0
        %3553 = vset.pattern.permute.xlu0 0
        %3554 = vperm.xlu0 %3553, %v3552
        %v3555 = vpop.permute.xlu0 %3554
        %vm3556 = vcmp.eq.s32.totalorder %v3555, 1
        %v3557 = vsel %vm3556, %v3525, 0.0
        %v3558 = vsel %vm3556, %v3523, 0.0
        %v3559 = vsel %vm3551, 1, 0
        %3560 = vset.pattern.permute.xlu0 0
        %3561 = vperm.xlu0 %3560, %v3559
        %v3562 = vpop.permute.xlu0 %3561
        %vm3563 = vcmp.eq.s32.totalorder %v3562, 1
        %v3564 = vsel %vm3563, %v3549, 0.0
        %v3565 = vsel %vm3563, %v3547, 0.0
        %3566 = vst [vmem:[#allocation2] sm:$0xff] %v3557
        %3567 = vst [vmem:[#allocation3 + $0x38] sm:$0xff] %v3564
        %v3568 = vld [vmem:[#allocation4 + $0x40] sm:$0xff]
        %v3569 = vld [vmem:[#allocation4 + $0x48] sm:$0xff]
        %v3570 = vld [vmem:[#allocation4 + $0x50] sm:$0xff]
        %v3571 = vld [vmem:[#allocation4 + $0x58] sm:$0xff]
        %v3572 = vpack.c.bf16 %v3557, %v3557
        %3573 = vmatprep.subr.bf16.mxu0 %v3131
        %3574 = vmatpush1.bf16.msra.mxu0 %v3130
        %3575 = vmatprep.subr.bf16.mxu0 %v3127
        %3576 = vmatpush1.bf16.msra.mxu0 %v3126
        %3577 = vmatprep.subr.bf16.mxu0 %v3123
        %3578 = vmatpush1.bf16.msra.mxu0 %v3122
        %3579 = vmatprep.subr.bf16.mxu0 %v3119
        %3580 = vmatpush1.bf16.msra.mxu0 %v3118
        %3581 = vmatprep.subr.bf16.mxu0 %v3115
        %3582 = vmatpush1.bf16.msra.mxu0 %v3114
        %3583 = vmatprep.subr.bf16.mxu0 %v3111
        %3584 = vmatpush1.bf16.msra.mxu0 %v3110
        %3585 = vmatprep.subr.bf16.mxu0 %v3107
        %3586 = vmatpush1.bf16.msra.mxu0 %v3106
        %3587 = vmatprep.subr.bf16.mxu0 %v3103
        %3588 = vmatpush1.bf16.msra.mxu0 %v3102
        %3589 = vmatprep.subr.bf16.mxu0 0
        %3590 = vmatpush2.bf16.msra.mxu0 0
        %3591 = vmatprep.subr.bf16.mxu0 0
        %3592 = vmatpush2.bf16.msra.mxu0 0
        %3593 = vmatprep.subr.bf16.mxu0 0
        %3594 = vmatpush2.bf16.msra.mxu0 0
        %3595 = vmatprep.subr.bf16.mxu0 0
        %3596 = vmatpush2.bf16.msra.mxu0 0
        %3597 = vmatprep.subr.bf16.mxu0 0
        %3598 = vmatpush2.bf16.msra.mxu0 0
        %3599 = vmatprep.subr.bf16.mxu0 0
        %3600 = vmatpush2.bf16.msra.mxu0 0
        %3601 = vmatprep.subr.bf16.mxu0 0
        %3602 = vmatpush2.bf16.msra.mxu0 0
        %3603 = vmatprep.subr.bf16.mxu0 0
        %3604 = vmatpush2.bf16.msra.mxu0 0
        %3605 = vmatprep.mubr.bf16.mxu0 0
        %3606 = vmatmul.mubr.bf16.gmra.mxu0 %v3572
        %v3607 = vpop.f32.mrf.mxu0
        %v3608 = vadd.f32 0.0, %v3607
        %v3609 = vpop.f32.mrf.mxu0
        %v3610 = vadd.f32 0.0, %v3609
        %v3611 = vpop.f32.mrf.mxu0
        %v3612 = vpop.f32.mrf.mxu0
        %3613 = vdwg.mxu0
        %3614 = vmatprep.subr.bf16.mxu0 %v3133
        %3615 = vmatpush1.bf16.msra.mxu0 %v3132
        %3616 = vmatprep.subr.bf16.mxu0 %v3129
        %3617 = vmatpush1.bf16.msra.mxu0 %v3128
        %3618 = vmatprep.subr.bf16.mxu0 %v3125
        %3619 = vmatpush1.bf16.msra.mxu0 %v3124
        %3620 = vmatprep.subr.bf16.mxu0 %v3121
        %3621 = vmatpush1.bf16.msra.mxu0 %v3120
        %3622 = vmatprep.subr.bf16.mxu0 %v3117
        %3623 = vmatpush1.bf16.msra.mxu0 %v3116
        %3624 = vmatprep.subr.bf16.mxu0 %v3113
        %3625 = vmatpush1.bf16.msra.mxu0 %v3112
        %3626 = vmatprep.subr.bf16.mxu0 %v3109
        %3627 = vmatpush1.bf16.msra.mxu0 %v3108
        %3628 = vmatprep.subr.bf16.mxu0 %v3105
        %3629 = vmatpush1.bf16.msra.mxu0 %v3104
        %3630 = vmatprep.subr.bf16.mxu0 0
        %3631 = vmatpush2.bf16.msra.mxu0 0
        %3632 = vmatprep.subr.bf16.mxu0 0
        %3633 = vmatpush2.bf16.msra.mxu0 0
        %3634 = vmatprep.subr.bf16.mxu0 0
        %3635 = vmatpush2.bf16.msra.mxu0 0
        %3636 = vmatprep.subr.bf16.mxu0 0
        %3637 = vmatpush2.bf16.msra.mxu0 0
        %3638 = vmatprep.subr.bf16.mxu0 0
        %3639 = vmatpush2.bf16.msra.mxu0 0
        %3640 = vmatprep.subr.bf16.mxu0 0
        %3641 = vmatpush2.bf16.msra.mxu0 0
        %3642 = vmatprep.subr.bf16.mxu0 0
        %3643 = vmatpush2.bf16.msra.mxu0 0
        %3644 = vmatprep.subr.bf16.mxu0 0
        %3645 = vmatpush2.bf16.msra.mxu0 0
        %3646 = vmatprep.mubr.bf16.mxu0 0
        %3647 = vmatmul.mubr.bf16.gmra.mxu0 %v3572
        %v3648 = vpop.f32.mrf.mxu0
        %v3649 = vadd.f32 0.0, %v3648
        %v3650 = vpop.f32.mrf.mxu0
        %v3651 = vadd.f32 0.0, %v3650
        %v3652 = vpop.f32.mrf.mxu0
        %v3653 = vpop.f32.mrf.mxu0
        %3654 = vdwg.mxu0
        %v3655 = vadd.f32 %v3568, %v3608
        %v3656 = vadd.f32 %v3569, %v3610
        %v3657 = vadd.f32 %v3570, %v3649
        %v3658 = vadd.f32 %v3571, %v3651
        %v3659 = vld [vmem:[#allocation4 + $0x1a0] sm:$0xff]
        %v3660 = vld [vmem:[#allocation4 + $0x1a8] sm:$0xff]
        %v3661 = vld [vmem:[#allocation4 + $0x1b0] sm:$0xff]
        %v3662 = vld [vmem:[#allocation4 + $0x1b8] sm:$0xff]
        %v3663 = vpack.c.bf16 %v3564, %v3564
        %3664 = vmatprep.subr.bf16.mxu0 %v3381
        %3665 = vmatpush1.bf16.msra.mxu0 %v3380
        %3666 = vmatprep.subr.bf16.mxu0 %v3377
        %3667 = vmatpush1.bf16.msra.mxu0 %v3376
        %3668 = vmatprep.subr.bf16.mxu0 %v3373
        %3669 = vmatpush1.bf16.msra.mxu0 %v3372
        %3670 = vmatprep.subr.bf16.mxu0 %v3369
        %3671 = vmatpush1.bf16.msra.mxu0 %v3368
        %3672 = vmatprep.subr.bf16.mxu0 %v3365
        %3673 = vmatpush1.bf16.msra.mxu0 %v3364
        %3674 = vmatprep.subr.bf16.mxu0 %v3361
        %3675 = vmatpush1.bf16.msra.mxu0 %v3360
        %3676 = vmatprep.subr.bf16.mxu0 %v3357
        %3677 = vmatpush1.bf16.msra.mxu0 %v3356
        %3678 = vmatprep.subr.bf16.mxu0 %v3353
        %3679 = vmatpush1.bf16.msra.mxu0 %v3352
        %3680 = vmatprep.subr.bf16.mxu0 0
        %3681 = vmatpush2.bf16.msra.mxu0 0
        %3682 = vmatprep.subr.bf16.mxu0 0
        %3683 = vmatpush2.bf16.msra.mxu0 0
        %3684 = vmatprep.subr.bf16.mxu0 0
        %3685 = vmatpush2.bf16.msra.mxu0 0
        %3686 = vmatprep.subr.bf16.mxu0 0
        %3687 = vmatpush2.bf16.msra.mxu0 0
        %3688 = vmatprep.subr.bf16.mxu0 0
        %3689 = vmatpush2.bf16.msra.mxu0 0
        %3690 = vmatprep.subr.bf16.mxu0 0
        %3691 = vmatpush2.bf16.msra.mxu0 0
        %3692 = vmatprep.subr.bf16.mxu0 0
        %3693 = vmatpush2.bf16.msra.mxu0 0
        %3694 = vmatprep.subr.bf16.mxu0 0
        %3695 = vmatpush2.bf16.msra.mxu0 0
        %3696 = vmatprep.mubr.bf16.mxu0 0
        %3697 = vmatmul.mubr.bf16.gmra.mxu0 %v3663
        %v3698 = vpop.f32.mrf.mxu0
        %v3699 = vadd.f32 0.0, %v3698
        %v3700 = vpop.f32.mrf.mxu0
        %v3701 = vadd.f32 0.0, %v3700
        %v3702 = vpop.f32.mrf.mxu0
        %v3703 = vpop.f32.mrf.mxu0
        %3704 = vdwg.mxu0
        %3705 = vmatprep.subr.bf16.mxu0 %v3383
        %3706 = vmatpush1.bf16.msra.mxu0 %v3382
        %3707 = vmatprep.subr.bf16.mxu0 %v3379
        %3708 = vmatpush1.bf16.msra.mxu0 %v3378
        %3709 = vmatprep.subr.bf16.mxu0 %v3375
        %3710 = vmatpush1.bf16.msra.mxu0 %v3374
        %3711 = vmatprep.subr.bf16.mxu0 %v3371
        %3712 = vmatpush1.bf16.msra.mxu0 %v3370
        %3713 = vmatprep.subr.bf16.mxu0 %v3367
        %3714 = vmatpush1.bf16.msra.mxu0 %v3366
        %3715 = vmatprep.subr.bf16.mxu0 %v3363
        %3716 = vmatpush1.bf16.msra.mxu0 %v3362
        %3717 = vmatprep.subr.bf16.mxu0 %v3359
        %3718 = vmatpush1.bf16.msra.mxu0 %v3358
        %3719 = vmatprep.subr.bf16.mxu0 %v3355
        %3720 = vmatpush1.bf16.msra.mxu0 %v3354
        %3721 = vmatprep.subr.bf16.mxu0 0
        %3722 = vmatpush2.bf16.msra.mxu0 0
        %3723 = vmatprep.subr.bf16.mxu0 0
        %3724 = vmatpush2.bf16.msra.mxu0 0
        %3725 = vmatprep.subr.bf16.mxu0 0
        %3726 = vmatpush2.bf16.msra.mxu0 0
        %3727 = vmatprep.subr.bf16.mxu0 0
        %3728 = vmatpush2.bf16.msra.mxu0 0
        %3729 = vmatprep.subr.bf16.mxu0 0
        %3730 = vmatpush2.bf16.msra.mxu0 0
        %3731 = vmatprep.subr.bf16.mxu0 0
        %3732 = vmatpush2.bf16.msra.mxu0 0
        %3733 = vmatprep.subr.bf16.mxu0 0
        %3734 = vmatpush2.bf16.msra.mxu0 0
        %3735 = vmatprep.subr.bf16.mxu0 0
        %3736 = vmatpush2.bf16.msra.mxu0 0
        %3737 = vmatprep.mubr.bf16.mxu0 0
        %3738 = vmatmul.mubr.bf16.gmra.mxu0 %v3663
        %v3739 = vpop.f32.mrf.mxu0
        %v3740 = vadd.f32 0.0, %v3739
        %v3741 = vpop.f32.mrf.mxu0
        %v3742 = vadd.f32 0.0, %v3741
        %v3743 = vpop.f32.mrf.mxu0
        %v3744 = vpop.f32.mrf.mxu0
        %3745 = vdwg.mxu0
        %v3746 = vadd.f32 %v3659, %v3699
        %v3747 = vadd.f32 %v3660, %v3701
        %v3748 = vadd.f32 %v3661, %v3740
        %v3749 = vadd.f32 %v3662, %v3742
        %v3750 = vxor.u32 %v3655, 2147483648
        %v3751 = vxor.u32 %v3656, 2147483648
        %v3752 = vxor.u32 %v3657, 2147483648
        %v3753 = vmul.f32 %v3750, 1.442695
        %v3754 = vpow.pop %v3753
        %v3755 = vmul.f32 %v3751, 1.442695
        %v3756 = vpow.pop %v3755
        %v3757 = vmul.f32 %v3752, 1.442695
        %v3758 = vpow.pop %v3757
        %v3759 = vadd.f32 %v3754, 1.0
        %v3760 = vadd.f32 %v3756, 1.0
        %v3761 = vadd.f32 %v3758, 1.0
        %v3762 = vrcp.pop %v3759
        %v3763 = vmul.f32 1.0, %v3762
        %v3764 = vrcp.pop %v3760
        %v3765 = vmul.f32 1.0, %v3764
        %v3766 = vrcp.pop %v3761
        %v3767 = vmul.f32 1.0, %v3766
        %v3768 = vtanh.pop %v3658
        %v3769 = vmul.f32 %v3765, %v3558
        %v3770 = vmul.f32 %v3763, %v3768
        %v3771 = vadd.f32 %v3769, %v3770
        %v3772 = vtanh.pop %v3771
        %v3773 = vmul.f32 %v3767, %v3772
        %v3774 = vxor.u32 %v3746, 2147483648
        %v3775 = vxor.u32 %v3747, 2147483648
        %v3776 = vxor.u32 %v3748, 2147483648
        %v3777 = vmul.f32 %v3774, 1.442695
        %v3778 = vpow.pop %v3777
        %v3779 = vmul.f32 %v3775, 1.442695
        %v3780 = vpow.pop %v3779
        %v3781 = vmul.f32 %v3776, 1.442695
        %v3782 = vpow.pop %v3781
        %v3783 = vadd.f32 %v3778, 1.0
        %v3784 = vadd.f32 %v3780, 1.0
        %v3785 = vadd.f32 %v3782, 1.0
        %v3786 = vrcp.pop %v3783
        %v3787 = vmul.f32 1.0, %v3786
        %v3788 = vrcp.pop %v3784
        %v3789 = vmul.f32 1.0, %v3788
        %v3790 = vrcp.pop %v3785
        %v3791 = vmul.f32 1.0, %v3790
        %v3792 = vtanh.pop %v3749
        %v3793 = vmul.f32 %v3789, %v3565
        %v3794 = vmul.f32 %v3787, %v3792
        %v3795 = vadd.f32 %v3793, %v3794
        %v3796 = vtanh.pop %v3795
        %v3797 = vmul.f32 %v3791, %v3796
        %vm3798 = vcmp.gt.s32.totalorder %v568, 1
        %vm3799 = vcmp.gt.s32.totalorder %v568, 6
        %v3800 = vsel %vm3798, 1, 0
        %3801 = vset.pattern.permute.xlu0 0
        %3802 = vperm.xlu0 %3801, %v3800
        %v3803 = vpop.permute.xlu0 %3802
        %vm3804 = vcmp.eq.s32.totalorder %v3803, 1
        %v3805 = vsel %vm3804, %v3773, %v3557
        %v3806 = vsel %vm3804, %v3771, %v3558
        %v3807 = vsel %vm3799, 1, 0
        %3808 = vset.pattern.permute.xlu0 0
        %3809 = vperm.xlu0 %3808, %v3807
        %v3810 = vpop.permute.xlu0 %3809
        %vm3811 = vcmp.eq.s32.totalorder %v3810, 1
        %v3812 = vsel %vm3811, %v3797, %v3564
        %v3813 = vsel %vm3811, %v3795, %v3565
        %v3814 = vsel %vm3804, %v3773, 0.0
        %3815 = vst [vmem:[#allocation2 + $0x8] sm:$0xff] %v3814
        %v3816 = vsel %vm3811, %v3797, 0.0
        %3817 = vst [vmem:[#allocation3 + $0x30] sm:$0xff] %v3816
        %v3818 = vld [vmem:[#allocation4 + $0x80] sm:$0xff]
        %v3819 = vld [vmem:[#allocation4 + $0x88] sm:$0xff]
        %v3820 = vld [vmem:[#allocation4 + $0x90] sm:$0xff]
        %v3821 = vld [vmem:[#allocation4 + $0x98] sm:$0xff]
        %v3822 = vpack.c.bf16 %v3805, %v3805
        %3823 = vmatprep.subr.bf16.mxu0 %v3131
        %3824 = vmatpush1.bf16.msra.mxu0 %v3130
        %3825 = vmatprep.subr.bf16.mxu0 %v3127
        %3826 = vmatpush1.bf16.msra.mxu0 %v3126
        %3827 = vmatprep.subr.bf16.mxu0 %v3123
        %3828 = vmatpush1.bf16.msra.mxu0 %v3122
        %3829 = vmatprep.subr.bf16.mxu0 %v3119
        %3830 = vmatpush1.bf16.msra.mxu0 %v3118
        %3831 = vmatprep.subr.bf16.mxu0 %v3115
        %3832 = vmatpush1.bf16.msra.mxu0 %v3114
        %3833 = vmatprep.subr.bf16.mxu0 %v3111
        %3834 = vmatpush1.bf16.msra.mxu0 %v3110
        %3835 = vmatprep.subr.bf16.mxu0 %v3107
        %3836 = vmatpush1.bf16.msra.mxu0 %v3106
        %3837 = vmatprep.subr.bf16.mxu0 %v3103
        %3838 = vmatpush1.bf16.msra.mxu0 %v3102
        %3839 = vmatprep.subr.bf16.mxu0 0
        %3840 = vmatpush2.bf16.msra.mxu0 0
        %3841 = vmatprep.subr.bf16.mxu0 0
        %3842 = vmatpush2.bf16.msra.mxu0 0
        %3843 = vmatprep.subr.bf16.mxu0 0
        %3844 = vmatpush2.bf16.msra.mxu0 0
        %3845 = vmatprep.subr.bf16.mxu0 0
        %3846 = vmatpush2.bf16.msra.mxu0 0
        %3847 = vmatprep.subr.bf16.mxu0 0
        %3848 = vmatpush2.bf16.msra.mxu0 0
        %3849 = vmatprep.subr.bf16.mxu0 0
        %3850 = vmatpush2.bf16.msra.mxu0 0
        %3851 = vmatprep.subr.bf16.mxu0 0
        %3852 = vmatpush2.bf16.msra.mxu0 0
        %3853 = vmatprep.subr.bf16.mxu0 0
        %3854 = vmatpush2.bf16.msra.mxu0 0
        %3855 = vmatprep.mubr.bf16.mxu0 0
        %3856 = vmatmul.mubr.bf16.gmra.mxu0 %v3822
        %v3857 = vpop.f32.mrf.mxu0
        %v3858 = vadd.f32 0.0, %v3857
        %v3859 = vpop.f32.mrf.mxu0
        %v3860 = vadd.f32 0.0, %v3859
        %v3861 = vpop.f32.mrf.mxu0
        %v3862 = vpop.f32.mrf.mxu0
        %3863 = vdwg.mxu0
        %3864 = vmatprep.subr.bf16.mxu0 %v3133
        %3865 = vmatpush1.bf16.msra.mxu0 %v3132
        %3866 = vmatprep.subr.bf16.mxu0 %v3129
        %3867 = vmatpush1.bf16.msra.mxu0 %v3128
        %3868 = vmatprep.subr.bf16.mxu0 %v3125
        %3869 = vmatpush1.bf16.msra.mxu0 %v3124
        %3870 = vmatprep.subr.bf16.mxu0 %v3121
        %3871 = vmatpush1.bf16.msra.mxu0 %v3120
        %3872 = vmatprep.subr.bf16.mxu0 %v3117
        %3873 = vmatpush1.bf16.msra.mxu0 %v3116
        %3874 = vmatprep.subr.bf16.mxu0 %v3113
        %3875 = vmatpush1.bf16.msra.mxu0 %v3112
        %3876 = vmatprep.subr.bf16.mxu0 %v3109
        %3877 = vmatpush1.bf16.msra.mxu0 %v3108
        %3878 = vmatprep.subr.bf16.mxu0 %v3105
        %3879 = vmatpush1.bf16.msra.mxu0 %v3104
        %3880 = vmatprep.subr.bf16.mxu0 0
        %3881 = vmatpush2.bf16.msra.mxu0 0
        %3882 = vmatprep.subr.bf16.mxu0 0
        %3883 = vmatpush2.bf16.msra.mxu0 0
        %3884 = vmatprep.subr.bf16.mxu0 0
        %3885 = vmatpush2.bf16.msra.mxu0 0
        %3886 = vmatprep.subr.bf16.mxu0 0
        %3887 = vmatpush2.bf16.msra.mxu0 0
        %3888 = vmatprep.subr.bf16.mxu0 0
        %3889 = vmatpush2.bf16.msra.mxu0 0
        %3890 = vmatprep.subr.bf16.mxu0 0
        %3891 = vmatpush2.bf16.msra.mxu0 0
        %3892 = vmatprep.subr.bf16.mxu0 0
        %3893 = vmatpush2.bf16.msra.mxu0 0
        %3894 = vmatprep.subr.bf16.mxu0 0
        %3895 = vmatpush2.bf16.msra.mxu0 0
        %3896 = vmatprep.mubr.bf16.mxu0 0
        %3897 = vmatmul.mubr.bf16.gmra.mxu0 %v3822
        %v3898 = vpop.f32.mrf.mxu0
        %v3899 = vadd.f32 0.0, %v3898
        %v3900 = vpop.f32.mrf.mxu0
        %v3901 = vadd.f32 0.0, %v3900
        %v3902 = vpop.f32.mrf.mxu0
        %v3903 = vpop.f32.mrf.mxu0
        %3904 = vdwg.mxu0
        %v3905 = vadd.f32 %v3818, %v3858
        %v3906 = vadd.f32 %v3819, %v3860
        %v3907 = vadd.f32 %v3820, %v3899
        %v3908 = vadd.f32 %v3821, %v3901
        %v3909 = vld [vmem:[#allocation4 + $0x160] sm:$0xff]
        %v3910 = vld [vmem:[#allocation4 + $0x168] sm:$0xff]
        %v3911 = vld [vmem:[#allocation4 + $0x170] sm:$0xff]
        %v3912 = vld [vmem:[#allocation4 + $0x178] sm:$0xff]
        %v3913 = vpack.c.bf16 %v3812, %v3812
        %3914 = vmatprep.subr.bf16.mxu0 %v3381
        %3915 = vmatpush1.bf16.msra.mxu0 %v3380
        %3916 = vmatprep.subr.bf16.mxu0 %v3377
        %3917 = vmatpush1.bf16.msra.mxu0 %v3376
        %3918 = vmatprep.subr.bf16.mxu0 %v3373
        %3919 = vmatpush1.bf16.msra.mxu0 %v3372
        %3920 = vmatprep.subr.bf16.mxu0 %v3369
        %3921 = vmatpush1.bf16.msra.mxu0 %v3368
        %3922 = vmatprep.subr.bf16.mxu0 %v3365
        %3923 = vmatpush1.bf16.msra.mxu0 %v3364
        %3924 = vmatprep.subr.bf16.mxu0 %v3361
        %3925 = vmatpush1.bf16.msra.mxu0 %v3360
        %3926 = vmatprep.subr.bf16.mxu0 %v3357
        %3927 = vmatpush1.bf16.msra.mxu0 %v3356
        %3928 = vmatprep.subr.bf16.mxu0 %v3353
        %3929 = vmatpush1.bf16.msra.mxu0 %v3352
        %3930 = vmatprep.subr.bf16.mxu0 0
        %3931 = vmatpush2.bf16.msra.mxu0 0
        %3932 = vmatprep.subr.bf16.mxu0 0
        %3933 = vmatpush2.bf16.msra.mxu0 0
        %3934 = vmatprep.subr.bf16.mxu0 0
        %3935 = vmatpush2.bf16.msra.mxu0 0
        %3936 = vmatprep.subr.bf16.mxu0 0
        %3937 = vmatpush2.bf16.msra.mxu0 0
        %3938 = vmatprep.subr.bf16.mxu0 0
        %3939 = vmatpush2.bf16.msra.mxu0 0
        %3940 = vmatprep.subr.bf16.mxu0 0
        %3941 = vmatpush2.bf16.msra.mxu0 0
        %3942 = vmatprep.subr.bf16.mxu0 0
        %3943 = vmatpush2.bf16.msra.mxu0 0
        %3944 = vmatprep.subr.bf16.mxu0 0
        %3945 = vmatpush2.bf16.msra.mxu0 0
        %3946 = vmatprep.mubr.bf16.mxu0 0
        %3947 = vmatmul.mubr.bf16.gmra.mxu0 %v3913
        %v3948 = vpop.f32.mrf.mxu0
        %v3949 = vadd.f32 0.0, %v3948
        %v3950 = vpop.f32.mrf.mxu0
        %v3951 = vadd.f32 0.0, %v3950
        %v3952 = vpop.f32.mrf.mxu0
        %v3953 = vpop.f32.mrf.mxu0
        %3954 = vdwg.mxu0
        %3955 = vmatprep.subr.bf16.mxu0 %v3383
        %3956 = vmatpush1.bf16.msra.mxu0 %v3382
        %3957 = vmatprep.subr.bf16.mxu0 %v3379
        %3958 = vmatpush1.bf16.msra.mxu0 %v3378
        %3959 = vmatprep.subr.bf16.mxu0 %v3375
        %3960 = vmatpush1.bf16.msra.mxu0 %v3374
        %3961 = vmatprep.subr.bf16.mxu0 %v3371
        %3962 = vmatpush1.bf16.msra.mxu0 %v3370
        %3963 = vmatprep.subr.bf16.mxu0 %v3367
        %3964 = vmatpush1.bf16.msra.mxu0 %v3366
        %3965 = vmatprep.subr.bf16.mxu0 %v3363
        %3966 = vmatpush1.bf16.msra.mxu0 %v3362
        %3967 = vmatprep.subr.bf16.mxu0 %v3359
        %3968 = vmatpush1.bf16.msra.mxu0 %v3358
        %3969 = vmatprep.subr.bf16.mxu0 %v3355
        %3970 = vmatpush1.bf16.msra.mxu0 %v3354
        %3971 = vmatprep.subr.bf16.mxu0 0
        %3972 = vmatpush2.bf16.msra.mxu0 0
        %3973 = vmatprep.subr.bf16.mxu0 0
        %3974 = vmatpush2.bf16.msra.mxu0 0
        %3975 = vmatprep.subr.bf16.mxu0 0
        %3976 = vmatpush2.bf16.msra.mxu0 0
        %3977 = vmatprep.subr.bf16.mxu0 0
        %3978 = vmatpush2.bf16.msra.mxu0 0
        %3979 = vmatprep.subr.bf16.mxu0 0
        %3980 = vmatpush2.bf16.msra.mxu0 0
        %3981 = vmatprep.subr.bf16.mxu0 0
        %3982 = vmatpush2.bf16.msra.mxu0 0
        %3983 = vmatprep.subr.bf16.mxu0 0
        %3984 = vmatpush2.bf16.msra.mxu0 0
        %3985 = vmatprep.subr.bf16.mxu0 0
        %3986 = vmatpush2.bf16.msra.mxu0 0
        %3987 = vmatprep.mubr.bf16.mxu0 0
        %3988 = vmatmul.mubr.bf16.gmra.mxu0 %v3913
        %v3989 = vpop.f32.mrf.mxu0
        %v3990 = vadd.f32 0.0, %v3989
        %v3991 = vpop.f32.mrf.mxu0
        %v3992 = vadd.f32 0.0, %v3991
        %v3993 = vpop.f32.mrf.mxu0
        %v3994 = vpop.f32.mrf.mxu0
        %3995 = vdwg.mxu0
        %v3996 = vadd.f32 %v3909, %v3949
        %v3997 = vadd.f32 %v3910, %v3951
        %v3998 = vadd.f32 %v3911, %v3990
        %v3999 = vadd.f32 %v3912, %v3992
        %v4000 = vxor.u32 %v3905, 2147483648
        %v4001 = vxor.u32 %v3906, 2147483648
        %v4002 = vxor.u32 %v3907, 2147483648
        %v4003 = vmul.f32 %v4000, 1.442695
        %v4004 = vpow.pop %v4003
        %v4005 = vmul.f32 %v4001, 1.442695
        %v4006 = vpow.pop %v4005
        %v4007 = vmul.f32 %v4002, 1.442695
        %v4008 = vpow.pop %v4007
        %v4009 = vadd.f32 %v4004, 1.0
        %v4010 = vadd.f32 %v4006, 1.0
        %v4011 = vadd.f32 %v4008, 1.0
        %v4012 = vrcp.pop %v4009
        %v4013 = vmul.f32 1.0, %v4012
        %v4014 = vrcp.pop %v4010
        %v4015 = vmul.f32 1.0, %v4014
        %v4016 = vrcp.pop %v4011
        %v4017 = vmul.f32 1.0, %v4016
        %v4018 = vtanh.pop %v3908
        %v4019 = vmul.f32 %v4015, %v3806
        %v4020 = vmul.f32 %v4013, %v4018
        %v4021 = vadd.f32 %v4019, %v4020
        %v4022 = vtanh.pop %v4021
        %v4023 = vmul.f32 %v4017, %v4022
        %v4024 = vxor.u32 %v3996, 2147483648
        %v4025 = vxor.u32 %v3997, 2147483648
        %v4026 = vxor.u32 %v3998, 2147483648
        %v4027 = vmul.f32 %v4024, 1.442695
        %v4028 = vpow.pop %v4027
        %v4029 = vmul.f32 %v4025, 1.442695
        %v4030 = vpow.pop %v4029
        %v4031 = vmul.f32 %v4026, 1.442695
        %v4032 = vpow.pop %v4031
        %v4033 = vadd.f32 %v4028, 1.0
        %v4034 = vadd.f32 %v4030, 1.0
        %v4035 = vadd.f32 %v4032, 1.0
        %v4036 = vrcp.pop %v4033
        %v4037 = vmul.f32 1.0, %v4036
        %v4038 = vrcp.pop %v4034
        %v4039 = vmul.f32 1.0, %v4038
        %v4040 = vrcp.pop %v4035
        %v4041 = vmul.f32 1.0, %v4040
        %v4042 = vtanh.pop %v3999
        %v4043 = vmul.f32 %v4039, %v3813
        %v4044 = vmul.f32 %v4037, %v4042
        %v4045 = vadd.f32 %v4043, %v4044
        %v4046 = vtanh.pop %v4045
        %v4047 = vmul.f32 %v4041, %v4046
        %vm4048 = vcmp.gt.s32.totalorder %v568, 2
        %vm4049 = vcmp.gt.s32.totalorder %v568, 5
        %v4050 = vsel %vm4048, 1, 0
        %4051 = vset.pattern.permute.xlu0 0
        %4052 = vperm.xlu0 %4051, %v4050
        %v4053 = vpop.permute.xlu0 %4052
        %vm4054 = vcmp.eq.s32.totalorder %v4053, 1
        %v4055 = vsel %vm4054, %v4023, %v3805
        %v4056 = vsel %vm4054, %v4021, %v3806
        %v4057 = vsel %vm4049, 1, 0
        %4058 = vset.pattern.permute.xlu0 0
        %4059 = vperm.xlu0 %4058, %v4057
        %v4060 = vpop.permute.xlu0 %4059
        %vm4061 = vcmp.eq.s32.totalorder %v4060, 1
        %v4062 = vsel %vm4061, %v4047, %v3812
        %v4063 = vsel %vm4061, %v4045, %v3813
        %v4064 = vsel %vm4054, %v4023, 0.0
        %4065 = vst [vmem:[#allocation2 + $0x10] sm:$0xff] %v4064
        %v4066 = vsel %vm4061, %v4047, 0.0
        %4067 = vst [vmem:[#allocation3 + $0x28] sm:$0xff] %v4066
        %v4068 = vld [vmem:[#allocation4 + $0xc0] sm:$0xff]
        %v4069 = vld [vmem:[#allocation4 + $0xc8] sm:$0xff]
        %v4070 = vld [vmem:[#allocation4 + $0xd0] sm:$0xff]
        %v4071 = vld [vmem:[#allocation4 + $0xd8] sm:$0xff]
        %v4072 = vpack.c.bf16 %v4055, %v4055
        %4073 = vmatprep.subr.bf16.mxu0 %v3131
        %4074 = vmatpush1.bf16.msra.mxu0 %v3130
        %4075 = vmatprep.subr.bf16.mxu0 %v3127
        %4076 = vmatpush1.bf16.msra.mxu0 %v3126
        %4077 = vmatprep.subr.bf16.mxu0 %v3123
        %4078 = vmatpush1.bf16.msra.mxu0 %v3122
        %4079 = vmatprep.subr.bf16.mxu0 %v3119
        %4080 = vmatpush1.bf16.msra.mxu0 %v3118
        %4081 = vmatprep.subr.bf16.mxu0 %v3115
        %4082 = vmatpush1.bf16.msra.mxu0 %v3114
        %4083 = vmatprep.subr.bf16.mxu0 %v3111
        %4084 = vmatpush1.bf16.msra.mxu0 %v3110
        %4085 = vmatprep.subr.bf16.mxu0 %v3107
        %4086 = vmatpush1.bf16.msra.mxu0 %v3106
        %4087 = vmatprep.subr.bf16.mxu0 %v3103
        %4088 = vmatpush1.bf16.msra.mxu0 %v3102
        %4089 = vmatprep.subr.bf16.mxu0 0
        %4090 = vmatpush2.bf16.msra.mxu0 0
        %4091 = vmatprep.subr.bf16.mxu0 0
        %4092 = vmatpush2.bf16.msra.mxu0 0
        %4093 = vmatprep.subr.bf16.mxu0 0
        %4094 = vmatpush2.bf16.msra.mxu0 0
        %4095 = vmatprep.subr.bf16.mxu0 0
        %4096 = vmatpush2.bf16.msra.mxu0 0
        %4097 = vmatprep.subr.bf16.mxu0 0
        %4098 = vmatpush2.bf16.msra.mxu0 0
        %4099 = vmatprep.subr.bf16.mxu0 0
        %4100 = vmatpush2.bf16.msra.mxu0 0
        %4101 = vmatprep.subr.bf16.mxu0 0
        %4102 = vmatpush2.bf16.msra.mxu0 0
        %4103 = vmatprep.subr.bf16.mxu0 0
        %4104 = vmatpush2.bf16.msra.mxu0 0
        %4105 = vmatprep.mubr.bf16.mxu0 0
        %4106 = vmatmul.mubr.bf16.gmra.mxu0 %v4072
        %v4107 = vpop.f32.mrf.mxu0
        %v4108 = vadd.f32 0.0, %v4107
        %v4109 = vpop.f32.mrf.mxu0
        %v4110 = vadd.f32 0.0, %v4109
        %v4111 = vpop.f32.mrf.mxu0
        %v4112 = vpop.f32.mrf.mxu0
        %4113 = vdwg.mxu0
        %4114 = vmatprep.subr.bf16.mxu0 %v3133
        %4115 = vmatpush1.bf16.msra.mxu0 %v3132
        %4116 = vmatprep.subr.bf16.mxu0 %v3129
        %4117 = vmatpush1.bf16.msra.mxu0 %v3128
        %4118 = vmatprep.subr.bf16.mxu0 %v3125
        %4119 = vmatpush1.bf16.msra.mxu0 %v3124
        %4120 = vmatprep.subr.bf16.mxu0 %v3121
        %4121 = vmatpush1.bf16.msra.mxu0 %v3120
        %4122 = vmatprep.subr.bf16.mxu0 %v3117
        %4123 = vmatpush1.bf16.msra.mxu0 %v3116
        %4124 = vmatprep.subr.bf16.mxu0 %v3113
        %4125 = vmatpush1.bf16.msra.mxu0 %v3112
        %4126 = vmatprep.subr.bf16.mxu0 %v3109
        %4127 = vmatpush1.bf16.msra.mxu0 %v3108
        %4128 = vmatprep.subr.bf16.mxu0 %v3105
        %4129 = vmatpush1.bf16.msra.mxu0 %v3104
        %4130 = vmatprep.subr.bf16.mxu0 0
        %4131 = vmatpush2.bf16.msra.mxu0 0
        %4132 = vmatprep.subr.bf16.mxu0 0
        %4133 = vmatpush2.bf16.msra.mxu0 0
        %4134 = vmatprep.subr.bf16.mxu0 0
        %4135 = vmatpush2.bf16.msra.mxu0 0
        %4136 = vmatprep.subr.bf16.mxu0 0
        %4137 = vmatpush2.bf16.msra.mxu0 0
        %4138 = vmatprep.subr.bf16.mxu0 0
        %4139 = vmatpush2.bf16.msra.mxu0 0
        %4140 = vmatprep.subr.bf16.mxu0 0
        %4141 = vmatpush2.bf16.msra.mxu0 0
        %4142 = vmatprep.subr.bf16.mxu0 0
        %4143 = vmatpush2.bf16.msra.mxu0 0
        %4144 = vmatprep.subr.bf16.mxu0 0
        %4145 = vmatpush2.bf16.msra.mxu0 0
        %4146 = vmatprep.mubr.bf16.mxu0 0
        %4147 = vmatmul.mubr.bf16.gmra.mxu0 %v4072
        %v4148 = vpop.f32.mrf.mxu0
        %v4149 = vadd.f32 0.0, %v4148
        %v4150 = vpop.f32.mrf.mxu0
        %v4151 = vadd.f32 0.0, %v4150
        %v4152 = vpop.f32.mrf.mxu0
        %v4153 = vpop.f32.mrf.mxu0
        %4154 = vdwg.mxu0
        %v4155 = vadd.f32 %v4068, %v4108
        %v4156 = vadd.f32 %v4069, %v4110
        %v4157 = vadd.f32 %v4070, %v4149
        %v4158 = vadd.f32 %v4071, %v4151
        %v4159 = vld [vmem:[#allocation4 + $0x120] sm:$0xff]
        %v4160 = vld [vmem:[#allocation4 + $0x128] sm:$0xff]
        %v4161 = vld [vmem:[#allocation4 + $0x130] sm:$0xff]
        %v4162 = vld [vmem:[#allocation4 + $0x138] sm:$0xff]
        %v4163 = vpack.c.bf16 %v4062, %v4062
        %4164 = vmatprep.subr.bf16.mxu0 %v3381
        %4165 = vmatpush1.bf16.msra.mxu0 %v3380
        %4166 = vmatprep.subr.bf16.mxu0 %v3377
        %4167 = vmatpush1.bf16.msra.mxu0 %v3376
        %4168 = vmatprep.subr.bf16.mxu0 %v3373
        %4169 = vmatpush1.bf16.msra.mxu0 %v3372
        %4170 = vmatprep.subr.bf16.mxu0 %v3369
        %4171 = vmatpush1.bf16.msra.mxu0 %v3368
        %4172 = vmatprep.subr.bf16.mxu0 %v3365
        %4173 = vmatpush1.bf16.msra.mxu0 %v3364
        %4174 = vmatprep.subr.bf16.mxu0 %v3361
        %4175 = vmatpush1.bf16.msra.mxu0 %v3360
        %4176 = vmatprep.subr.bf16.mxu0 %v3357
        %4177 = vmatpush1.bf16.msra.mxu0 %v3356
        %4178 = vmatprep.subr.bf16.mxu0 %v3353
        %4179 = vmatpush1.bf16.msra.mxu0 %v3352
        %4180 = vmatprep.subr.bf16.mxu0 0
        %4181 = vmatpush2.bf16.msra.mxu0 0
        %4182 = vmatprep.subr.bf16.mxu0 0
        %4183 = vmatpush2.bf16.msra.mxu0 0
        %4184 = vmatprep.subr.bf16.mxu0 0
        %4185 = vmatpush2.bf16.msra.mxu0 0
        %4186 = vmatprep.subr.bf16.mxu0 0
        %4187 = vmatpush2.bf16.msra.mxu0 0
        %4188 = vmatprep.subr.bf16.mxu0 0
        %4189 = vmatpush2.bf16.msra.mxu0 0
        %4190 = vmatprep.subr.bf16.mxu0 0
        %4191 = vmatpush2.bf16.msra.mxu0 0
        %4192 = vmatprep.subr.bf16.mxu0 0
        %4193 = vmatpush2.bf16.msra.mxu0 0
        %4194 = vmatprep.subr.bf16.mxu0 0
        %4195 = vmatpush2.bf16.msra.mxu0 0
        %4196 = vmatprep.mubr.bf16.mxu0 0
        %4197 = vmatmul.mubr.bf16.gmra.mxu0 %v4163
        %v4198 = vpop.f32.mrf.mxu0
        %v4199 = vadd.f32 0.0, %v4198
        %v4200 = vpop.f32.mrf.mxu0
        %v4201 = vadd.f32 0.0, %v4200
        %v4202 = vpop.f32.mrf.mxu0
        %v4203 = vpop.f32.mrf.mxu0
        %4204 = vdwg.mxu0
        %4205 = vmatprep.subr.bf16.mxu0 %v3383
        %4206 = vmatpush1.bf16.msra.mxu0 %v3382
        %4207 = vmatprep.subr.bf16.mxu0 %v3379
        %4208 = vmatpush1.bf16.msra.mxu0 %v3378
        %4209 = vmatprep.subr.bf16.mxu0 %v3375
        %4210 = vmatpush1.bf16.msra.mxu0 %v3374
        %4211 = vmatprep.subr.bf16.mxu0 %v3371
        %4212 = vmatpush1.bf16.msra.mxu0 %v3370
        %4213 = vmatprep.subr.bf16.mxu0 %v3367
        %4214 = vmatpush1.bf16.msra.mxu0 %v3366
        %4215 = vmatprep.subr.bf16.mxu0 %v3363
        %4216 = vmatpush1.bf16.msra.mxu0 %v3362
        %4217 = vmatprep.subr.bf16.mxu0 %v3359
        %4218 = vmatpush1.bf16.msra.mxu0 %v3358
        %4219 = vmatprep.subr.bf16.mxu0 %v3355
        %4220 = vmatpush1.bf16.msra.mxu0 %v3354
        %4221 = vmatprep.subr.bf16.mxu0 0
        %4222 = vmatpush2.bf16.msra.mxu0 0
        %4223 = vmatprep.subr.bf16.mxu0 0
        %4224 = vmatpush2.bf16.msra.mxu0 0
        %4225 = vmatprep.subr.bf16.mxu0 0
        %4226 = vmatpush2.bf16.msra.mxu0 0
        %4227 = vmatprep.subr.bf16.mxu0 0
        %4228 = vmatpush2.bf16.msra.mxu0 0
        %4229 = vmatprep.subr.bf16.mxu0 0
        %4230 = vmatpush2.bf16.msra.mxu0 0
        %4231 = vmatprep.subr.bf16.mxu0 0
        %4232 = vmatpush2.bf16.msra.mxu0 0
        %4233 = vmatprep.subr.bf16.mxu0 0
        %4234 = vmatpush2.bf16.msra.mxu0 0
        %4235 = vmatprep.subr.bf16.mxu0 0
        %4236 = vmatpush2.bf16.msra.mxu0 0
        %4237 = vmatprep.mubr.bf16.mxu0 0
        %4238 = vmatmul.mubr.bf16.gmra.mxu0 %v4163
        %v4239 = vpop.f32.mrf.mxu0
        %v4240 = vadd.f32 0.0, %v4239
        %v4241 = vpop.f32.mrf.mxu0
        %v4242 = vadd.f32 0.0, %v4241
        %v4243 = vpop.f32.mrf.mxu0
        %v4244 = vpop.f32.mrf.mxu0
        %4245 = vdwg.mxu0
        %v4246 = vadd.f32 %v4159, %v4199
        %v4247 = vadd.f32 %v4160, %v4201
        %v4248 = vadd.f32 %v4161, %v4240
        %v4249 = vadd.f32 %v4162, %v4242
        %v4250 = vxor.u32 %v4155, 2147483648
        %v4251 = vxor.u32 %v4156, 2147483648
        %v4252 = vxor.u32 %v4157, 2147483648
        %v4253 = vmul.f32 %v4250, 1.442695
        %v4254 = vpow.pop %v4253
        %v4255 = vmul.f32 %v4251, 1.442695
        %v4256 = vpow.pop %v4255
        %v4257 = vmul.f32 %v4252, 1.442695
        %v4258 = vpow.pop %v4257
        %v4259 = vadd.f32 %v4254, 1.0
        %v4260 = vadd.f32 %v4256, 1.0
        %v4261 = vadd.f32 %v4258, 1.0
        %v4262 = vrcp.pop %v4259
        %v4263 = vmul.f32 1.0, %v4262
        %v4264 = vrcp.pop %v4260
        %v4265 = vmul.f32 1.0, %v4264
        %v4266 = vrcp.pop %v4261
        %v4267 = vmul.f32 1.0, %v4266
        %v4268 = vtanh.pop %v4158
        %v4269 = vmul.f32 %v4265, %v4056
        %v4270 = vmul.f32 %v4263, %v4268
        %v4271 = vadd.f32 %v4269, %v4270
        %v4272 = vtanh.pop %v4271
        %v4273 = vmul.f32 %v4267, %v4272
        %v4274 = vxor.u32 %v4246, 2147483648
        %v4275 = vxor.u32 %v4247, 2147483648
        %v4276 = vxor.u32 %v4248, 2147483648
        %v4277 = vmul.f32 %v4274, 1.442695
        %v4278 = vpow.pop %v4277
        %v4279 = vmul.f32 %v4275, 1.442695
        %v4280 = vpow.pop %v4279
        %v4281 = vmul.f32 %v4276, 1.442695
        %v4282 = vpow.pop %v4281
        %v4283 = vadd.f32 %v4278, 1.0
        %v4284 = vadd.f32 %v4280, 1.0
        %v4285 = vadd.f32 %v4282, 1.0
        %v4286 = vrcp.pop %v4283
        %v4287 = vmul.f32 1.0, %v4286
        %v4288 = vrcp.pop %v4284
        %v4289 = vmul.f32 1.0, %v4288
        %v4290 = vrcp.pop %v4285
        %v4291 = vmul.f32 1.0, %v4290
        %v4292 = vtanh.pop %v4249
        %v4293 = vmul.f32 %v4289, %v4063
        %v4294 = vmul.f32 %v4287, %v4292
        %v4295 = vadd.f32 %v4293, %v4294
        %v4296 = vtanh.pop %v4295
        %v4297 = vmul.f32 %v4291, %v4296
        %vm4298 = vcmp.gt.s32.totalorder %v568, 3
        %vm4299 = vcmp.gt.s32.totalorder %v568, 4
        %v4300 = vsel %vm4298, 1, 0
        %4301 = vset.pattern.permute.xlu0 0
        %4302 = vperm.xlu0 %4301, %v4300
        %v4303 = vpop.permute.xlu0 %4302
        %vm4304 = vcmp.eq.s32.totalorder %v4303, 1
        %v4305 = vsel %vm4304, %v4273, %v4055
        %v4306 = vsel %vm4304, %v4271, %v4056
        %v4307 = vsel %vm4299, 1, 0
        %4308 = vset.pattern.permute.xlu0 0
        %4309 = vperm.xlu0 %4308, %v4307
        %v4310 = vpop.permute.xlu0 %4309
        %vm4311 = vcmp.eq.s32.totalorder %v4310, 1
        %v4312 = vsel %vm4311, %v4297, %v4062
        %v4313 = vsel %vm4311, %v4295, %v4063
        %v4314 = vsel %vm4304, %v4273, 0.0
        %4315 = vst [vmem:[#allocation2 + $0x18] sm:$0xff] %v4314
        %v4316 = vsel %vm4311, %v4297, 0.0
        %4317 = vst [vmem:[#allocation3 + $0x20] sm:$0xff] %v4316
        %v4318 = vld [vmem:[#allocation4 + $0x100] sm:$0xff]
        %v4319 = vld [vmem:[#allocation4 + $0x108] sm:$0xff]
        %v4320 = vld [vmem:[#allocation4 + $0x110] sm:$0xff]
        %v4321 = vld [vmem:[#allocation4 + $0x118] sm:$0xff]
        %v4322 = vpack.c.bf16 %v4305, %v4305
        %4323 = vmatprep.subr.bf16.mxu0 %v3131
        %4324 = vmatpush1.bf16.msra.mxu0 %v3130
        %4325 = vmatprep.subr.bf16.mxu0 %v3127
        %4326 = vmatpush1.bf16.msra.mxu0 %v3126
        %4327 = vmatprep.subr.bf16.mxu0 %v3123
        %4328 = vmatpush1.bf16.msra.mxu0 %v3122
        %4329 = vmatprep.subr.bf16.mxu0 %v3119
        %4330 = vmatpush1.bf16.msra.mxu0 %v3118
        %4331 = vmatprep.subr.bf16.mxu0 %v3115
        %4332 = vmatpush1.bf16.msra.mxu0 %v3114
        %4333 = vmatprep.subr.bf16.mxu0 %v3111
        %4334 = vmatpush1.bf16.msra.mxu0 %v3110
        %4335 = vmatprep.subr.bf16.mxu0 %v3107
        %4336 = vmatpush1.bf16.msra.mxu0 %v3106
        %4337 = vmatprep.subr.bf16.mxu0 %v3103
        %4338 = vmatpush1.bf16.msra.mxu0 %v3102
        %4339 = vmatprep.subr.bf16.mxu0 0
        %4340 = vmatpush2.bf16.msra.mxu0 0
        %4341 = vmatprep.subr.bf16.mxu0 0
        %4342 = vmatpush2.bf16.msra.mxu0 0
        %4343 = vmatprep.subr.bf16.mxu0 0
        %4344 = vmatpush2.bf16.msra.mxu0 0
        %4345 = vmatprep.subr.bf16.mxu0 0
        %4346 = vmatpush2.bf16.msra.mxu0 0
        %4347 = vmatprep.subr.bf16.mxu0 0
        %4348 = vmatpush2.bf16.msra.mxu0 0
        %4349 = vmatprep.subr.bf16.mxu0 0
        %4350 = vmatpush2.bf16.msra.mxu0 0
        %4351 = vmatprep.subr.bf16.mxu0 0
        %4352 = vmatpush2.bf16.msra.mxu0 0
        %4353 = vmatprep.subr.bf16.mxu0 0
        %4354 = vmatpush2.bf16.msra.mxu0 0
        %4355 = vmatprep.mubr.bf16.mxu0 0
        %4356 = vmatmul.mubr.bf16.gmra.mxu0 %v4322
        %v4357 = vpop.f32.mrf.mxu0
        %v4358 = vadd.f32 0.0, %v4357
        %v4359 = vpop.f32.mrf.mxu0
        %v4360 = vadd.f32 0.0, %v4359
        %v4361 = vpop.f32.mrf.mxu0
        %v4362 = vpop.f32.mrf.mxu0
        %4363 = vdwg.mxu0
        %4364 = vmatprep.subr.bf16.mxu0 %v3133
        %4365 = vmatpush1.bf16.msra.mxu0 %v3132
        %4366 = vmatprep.subr.bf16.mxu0 %v3129
        %4367 = vmatpush1.bf16.msra.mxu0 %v3128
        %4368 = vmatprep.subr.bf16.mxu0 %v3125
        %4369 = vmatpush1.bf16.msra.mxu0 %v3124
        %4370 = vmatprep.subr.bf16.mxu0 %v3121
        %4371 = vmatpush1.bf16.msra.mxu0 %v3120
        %4372 = vmatprep.subr.bf16.mxu0 %v3117
        %4373 = vmatpush1.bf16.msra.mxu0 %v3116
        %4374 = vmatprep.subr.bf16.mxu0 %v3113
        %4375 = vmatpush1.bf16.msra.mxu0 %v3112
        %4376 = vmatprep.subr.bf16.mxu0 %v3109
        %4377 = vmatpush1.bf16.msra.mxu0 %v3108
        %4378 = vmatprep.subr.bf16.mxu0 %v3105
        %4379 = vmatpush1.bf16.msra.mxu0 %v3104
        %4380 = vmatprep.subr.bf16.mxu0 0
        %4381 = vmatpush2.bf16.msra.mxu0 0
        %4382 = vmatprep.subr.bf16.mxu0 0
        %4383 = vmatpush2.bf16.msra.mxu0 0
        %4384 = vmatprep.subr.bf16.mxu0 0
        %4385 = vmatpush2.bf16.msra.mxu0 0
        %4386 = vmatprep.subr.bf16.mxu0 0
        %4387 = vmatpush2.bf16.msra.mxu0 0
        %4388 = vmatprep.subr.bf16.mxu0 0
        %4389 = vmatpush2.bf16.msra.mxu0 0
        %4390 = vmatprep.subr.bf16.mxu0 0
        %4391 = vmatpush2.bf16.msra.mxu0 0
        %4392 = vmatprep.subr.bf16.mxu0 0
        %4393 = vmatpush2.bf16.msra.mxu0 0
        %4394 = vmatprep.subr.bf16.mxu0 0
        %4395 = vmatpush2.bf16.msra.mxu0 0
        %4396 = vmatprep.mubr.bf16.mxu0 0
        %4397 = vmatmul.mubr.bf16.gmra.mxu0 %v4322
        %v4398 = vpop.f32.mrf.mxu0
        %v4399 = vadd.f32 0.0, %v4398
        %v4400 = vpop.f32.mrf.mxu0
        %v4401 = vadd.f32 0.0, %v4400
        %v4402 = vpop.f32.mrf.mxu0
        %v4403 = vpop.f32.mrf.mxu0
        %4404 = vdwg.mxu0
        %v4405 = vadd.f32 %v4318, %v4358
        %v4406 = vadd.f32 %v4319, %v4360
        %v4407 = vadd.f32 %v4320, %v4399
        %v4408 = vadd.f32 %v4321, %v4401
        %v4409 = vld [vmem:[#allocation4 + $0xe0] sm:$0xff]
        %v4410 = vld [vmem:[#allocation4 + $0xe8] sm:$0xff]
        %v4411 = vld [vmem:[#allocation4 + $0xf0] sm:$0xff]
        %v4412 = vld [vmem:[#allocation4 + $0xf8] sm:$0xff]
        %v4413 = vpack.c.bf16 %v4312, %v4312
        %4414 = vmatprep.subr.bf16.mxu0 %v3381
        %4415 = vmatpush1.bf16.msra.mxu0 %v3380
        %4416 = vmatprep.subr.bf16.mxu0 %v3377
        %4417 = vmatpush1.bf16.msra.mxu0 %v3376
        %4418 = vmatprep.subr.bf16.mxu0 %v3373
        %4419 = vmatpush1.bf16.msra.mxu0 %v3372
        %4420 = vmatprep.subr.bf16.mxu0 %v3369
        %4421 = vmatpush1.bf16.msra.mxu0 %v3368
        %4422 = vmatprep.subr.bf16.mxu0 %v3365
        %4423 = vmatpush1.bf16.msra.mxu0 %v3364
        %4424 = vmatprep.subr.bf16.mxu0 %v3361
        %4425 = vmatpush1.bf16.msra.mxu0 %v3360
        %4426 = vmatprep.subr.bf16.mxu0 %v3357
        %4427 = vmatpush1.bf16.msra.mxu0 %v3356
        %4428 = vmatprep.subr.bf16.mxu0 %v3353
        %4429 = vmatpush1.bf16.msra.mxu0 %v3352
        %4430 = vmatprep.subr.bf16.mxu0 0
        %4431 = vmatpush2.bf16.msra.mxu0 0
        %4432 = vmatprep.subr.bf16.mxu0 0
        %4433 = vmatpush2.bf16.msra.mxu0 0
        %4434 = vmatprep.subr.bf16.mxu0 0
        %4435 = vmatpush2.bf16.msra.mxu0 0
        %4436 = vmatprep.subr.bf16.mxu0 0
        %4437 = vmatpush2.bf16.msra.mxu0 0
        %4438 = vmatprep.subr.bf16.mxu0 0
        %4439 = vmatpush2.bf16.msra.mxu0 0
        %4440 = vmatprep.subr.bf16.mxu0 0
        %4441 = vmatpush2.bf16.msra.mxu0 0
        %4442 = vmatprep.subr.bf16.mxu0 0
        %4443 = vmatpush2.bf16.msra.mxu0 0
        %4444 = vmatprep.subr.bf16.mxu0 0
        %4445 = vmatpush2.bf16.msra.mxu0 0
        %4446 = vmatprep.mubr.bf16.mxu0 0
        %4447 = vmatmul.mubr.bf16.gmra.mxu0 %v4413
        %v4448 = vpop.f32.mrf.mxu0
        %v4449 = vadd.f32 0.0, %v4448
        %v4450 = vpop.f32.mrf.mxu0
        %v4451 = vadd.f32 0.0, %v4450
        %v4452 = vpop.f32.mrf.mxu0
        %v4453 = vpop.f32.mrf.mxu0
        %4454 = vdwg.mxu0
        %4455 = vmatprep.subr.bf16.mxu0 %v3383
        %4456 = vmatpush1.bf16.msra.mxu0 %v3382
        %4457 = vmatprep.subr.bf16.mxu0 %v3379
        %4458 = vmatpush1.bf16.msra.mxu0 %v3378
        %4459 = vmatprep.subr.bf16.mxu0 %v3375
        %4460 = vmatpush1.bf16.msra.mxu0 %v3374
        %4461 = vmatprep.subr.bf16.mxu0 %v3371
        %4462 = vmatpush1.bf16.msra.mxu0 %v3370
        %4463 = vmatprep.subr.bf16.mxu0 %v3367
        %4464 = vmatpush1.bf16.msra.mxu0 %v3366
        %4465 = vmatprep.subr.bf16.mxu0 %v3363
        %4466 = vmatpush1.bf16.msra.mxu0 %v3362
        %4467 = vmatprep.subr.bf16.mxu0 %v3359
        %4468 = vmatpush1.bf16.msra.mxu0 %v3358
        %4469 = vmatprep.subr.bf16.mxu0 %v3355
        %4470 = vmatpush1.bf16.msra.mxu0 %v3354
        %4471 = vmatprep.subr.bf16.mxu0 0
        %4472 = vmatpush2.bf16.msra.mxu0 0
        %4473 = vmatprep.subr.bf16.mxu0 0
        %4474 = vmatpush2.bf16.msra.mxu0 0
        %4475 = vmatprep.subr.bf16.mxu0 0
        %4476 = vmatpush2.bf16.msra.mxu0 0
        %4477 = vmatprep.subr.bf16.mxu0 0
        %4478 = vmatpush2.bf16.msra.mxu0 0
        %4479 = vmatprep.subr.bf16.mxu0 0
        %4480 = vmatpush2.bf16.msra.mxu0 0
        %4481 = vmatprep.subr.bf16.mxu0 0
        %4482 = vmatpush2.bf16.msra.mxu0 0
        %4483 = vmatprep.subr.bf16.mxu0 0
        %4484 = vmatpush2.bf16.msra.mxu0 0
        %4485 = vmatprep.subr.bf16.mxu0 0
        %4486 = vmatpush2.bf16.msra.mxu0 0
        %4487 = vmatprep.mubr.bf16.mxu0 0
        %4488 = vmatmul.mubr.bf16.gmra.mxu0 %v4413
        %v4489 = vpop.f32.mrf.mxu0
        %v4490 = vadd.f32 0.0, %v4489
        %v4491 = vpop.f32.mrf.mxu0
        %v4492 = vadd.f32 0.0, %v4491
        %v4493 = vpop.f32.mrf.mxu0
        %v4494 = vpop.f32.mrf.mxu0
        %4495 = vdwg.mxu0
        %v4496 = vadd.f32 %v4409, %v4449
        %v4497 = vadd.f32 %v4410, %v4451
        %v4498 = vadd.f32 %v4411, %v4490
        %v4499 = vadd.f32 %v4412, %v4492
        %v4500 = vxor.u32 %v4405, 2147483648
        %v4501 = vxor.u32 %v4406, 2147483648
        %v4502 = vxor.u32 %v4407, 2147483648
        %v4503 = vmul.f32 %v4500, 1.442695
        %v4504 = vpow.pop %v4503
        %v4505 = vmul.f32 %v4501, 1.442695
        %v4506 = vpow.pop %v4505
        %v4507 = vmul.f32 %v4502, 1.442695
        %v4508 = vpow.pop %v4507
        %v4509 = vadd.f32 %v4504, 1.0
        %v4510 = vadd.f32 %v4506, 1.0
        %v4511 = vadd.f32 %v4508, 1.0
        %v4512 = vrcp.pop %v4509
        %v4513 = vmul.f32 1.0, %v4512
        %v4514 = vrcp.pop %v4510
        %v4515 = vmul.f32 1.0, %v4514
        %v4516 = vrcp.pop %v4511
        %v4517 = vmul.f32 1.0, %v4516
        %v4518 = vtanh.pop %v4408
        %v4519 = vmul.f32 %v4515, %v4306
        %v4520 = vmul.f32 %v4513, %v4518
        %v4521 = vadd.f32 %v4519, %v4520
        %v4522 = vtanh.pop %v4521
        %v4523 = vmul.f32 %v4517, %v4522
        %v4524 = vxor.u32 %v4496, 2147483648
        %v4525 = vxor.u32 %v4497, 2147483648
        %v4526 = vxor.u32 %v4498, 2147483648
        %v4527 = vmul.f32 %v4524, 1.442695
        %v4528 = vpow.pop %v4527
        %v4529 = vmul.f32 %v4525, 1.442695
        %v4530 = vpow.pop %v4529
        %v4531 = vmul.f32 %v4526, 1.442695
        %v4532 = vpow.pop %v4531
        %v4533 = vadd.f32 %v4528, 1.0
        %v4534 = vadd.f32 %v4530, 1.0
        %v4535 = vadd.f32 %v4532, 1.0
        %v4536 = vrcp.pop %v4533
        %v4537 = vmul.f32 1.0, %v4536
        %v4538 = vrcp.pop %v4534
        %v4539 = vmul.f32 1.0, %v4538
        %v4540 = vrcp.pop %v4535
        %v4541 = vmul.f32 1.0, %v4540
        %v4542 = vtanh.pop %v4499
        %v4543 = vmul.f32 %v4539, %v4313
        %v4544 = vmul.f32 %v4537, %v4542
        %v4545 = vadd.f32 %v4543, %v4544
        %v4546 = vtanh.pop %v4545
        %v4547 = vmul.f32 %v4541, %v4546
        %v4548 = vsel %vm4311, %v4523, %v4305
        %v4549 = vsel %vm4311, %v4521, %v4306
        %v4550 = vsel %vm4304, %v4547, %v4312
        %v4551 = vsel %vm4304, %v4545, %v4313
        %v4552 = vsel %vm4311, %v4523, 0.0
        %4553 = vst [vmem:[#allocation2 + $0x20] sm:$0xff] %v4552
        %v4554 = vsel %vm4304, %v4547, 0.0
        %4555 = vst [vmem:[#allocation3 + $0x18] sm:$0xff] %v4554
        %v4556 = vld [vmem:[#allocation4 + $0x140] sm:$0xff]
        %v4557 = vld [vmem:[#allocation4 + $0x148] sm:$0xff]
        %v4558 = vld [vmem:[#allocation4 + $0x150] sm:$0xff]
        %v4559 = vld [vmem:[#allocation4 + $0x158] sm:$0xff]
        %v4560 = vpack.c.bf16 %v4548, %v4548
        %4561 = vmatprep.subr.bf16.mxu0 %v3131
        %4562 = vmatpush1.bf16.msra.mxu0 %v3130
        %4563 = vmatprep.subr.bf16.mxu0 %v3127
        %4564 = vmatpush1.bf16.msra.mxu0 %v3126
        %4565 = vmatprep.subr.bf16.mxu0 %v3123
        %4566 = vmatpush1.bf16.msra.mxu0 %v3122
        %4567 = vmatprep.subr.bf16.mxu0 %v3119
        %4568 = vmatpush1.bf16.msra.mxu0 %v3118
        %4569 = vmatprep.subr.bf16.mxu0 %v3115
        %4570 = vmatpush1.bf16.msra.mxu0 %v3114
        %4571 = vmatprep.subr.bf16.mxu0 %v3111
        %4572 = vmatpush1.bf16.msra.mxu0 %v3110
        %4573 = vmatprep.subr.bf16.mxu0 %v3107
        %4574 = vmatpush1.bf16.msra.mxu0 %v3106
        %4575 = vmatprep.subr.bf16.mxu0 %v3103
        %4576 = vmatpush1.bf16.msra.mxu0 %v3102
        %4577 = vmatprep.subr.bf16.mxu0 0
        %4578 = vmatpush2.bf16.msra.mxu0 0
        %4579 = vmatprep.subr.bf16.mxu0 0
        %4580 = vmatpush2.bf16.msra.mxu0 0
        %4581 = vmatprep.subr.bf16.mxu0 0
        %4582 = vmatpush2.bf16.msra.mxu0 0
        %4583 = vmatprep.subr.bf16.mxu0 0
        %4584 = vmatpush2.bf16.msra.mxu0 0
        %4585 = vmatprep.subr.bf16.mxu0 0
        %4586 = vmatpush2.bf16.msra.mxu0 0
        %4587 = vmatprep.subr.bf16.mxu0 0
        %4588 = vmatpush2.bf16.msra.mxu0 0
        %4589 = vmatprep.subr.bf16.mxu0 0
        %4590 = vmatpush2.bf16.msra.mxu0 0
        %4591 = vmatprep.subr.bf16.mxu0 0
        %4592 = vmatpush2.bf16.msra.mxu0 0
        %4593 = vmatprep.mubr.bf16.mxu0 0
        %4594 = vmatmul.mubr.bf16.gmra.mxu0 %v4560
        %v4595 = vpop.f32.mrf.mxu0
        %v4596 = vadd.f32 0.0, %v4595
        %v4597 = vpop.f32.mrf.mxu0
        %v4598 = vadd.f32 0.0, %v4597
        %v4599 = vpop.f32.mrf.mxu0
        %v4600 = vpop.f32.mrf.mxu0
        %4601 = vdwg.mxu0
        %4602 = vmatprep.subr.bf16.mxu0 %v3133
        %4603 = vmatpush1.bf16.msra.mxu0 %v3132
        %4604 = vmatprep.subr.bf16.mxu0 %v3129
        %4605 = vmatpush1.bf16.msra.mxu0 %v3128
        %4606 = vmatprep.subr.bf16.mxu0 %v3125
        %4607 = vmatpush1.bf16.msra.mxu0 %v3124
        %4608 = vmatprep.subr.bf16.mxu0 %v3121
        %4609 = vmatpush1.bf16.msra.mxu0 %v3120
        %4610 = vmatprep.subr.bf16.mxu0 %v3117
        %4611 = vmatpush1.bf16.msra.mxu0 %v3116
        %4612 = vmatprep.subr.bf16.mxu0 %v3113
        %4613 = vmatpush1.bf16.msra.mxu0 %v3112
        %4614 = vmatprep.subr.bf16.mxu0 %v3109
        %4615 = vmatpush1.bf16.msra.mxu0 %v3108
        %4616 = vmatprep.subr.bf16.mxu0 %v3105
        %4617 = vmatpush1.bf16.msra.mxu0 %v3104
        %4618 = vmatprep.subr.bf16.mxu0 0
        %4619 = vmatpush2.bf16.msra.mxu0 0
        %4620 = vmatprep.subr.bf16.mxu0 0
        %4621 = vmatpush2.bf16.msra.mxu0 0
        %4622 = vmatprep.subr.bf16.mxu0 0
        %4623 = vmatpush2.bf16.msra.mxu0 0
        %4624 = vmatprep.subr.bf16.mxu0 0
        %4625 = vmatpush2.bf16.msra.mxu0 0
        %4626 = vmatprep.subr.bf16.mxu0 0
        %4627 = vmatpush2.bf16.msra.mxu0 0
        %4628 = vmatprep.subr.bf16.mxu0 0
        %4629 = vmatpush2.bf16.msra.mxu0 0
        %4630 = vmatprep.subr.bf16.mxu0 0
        %4631 = vmatpush2.bf16.msra.mxu0 0
        %4632 = vmatprep.subr.bf16.mxu0 0
        %4633 = vmatpush2.bf16.msra.mxu0 0
        %4634 = vmatprep.mubr.bf16.mxu0 0
        %4635 = vmatmul.mubr.bf16.gmra.mxu0 %v4560
        %v4636 = vpop.f32.mrf.mxu0
        %v4637 = vadd.f32 0.0, %v4636
        %v4638 = vpop.f32.mrf.mxu0
        %v4639 = vadd.f32 0.0, %v4638
        %v4640 = vpop.f32.mrf.mxu0
        %v4641 = vpop.f32.mrf.mxu0
        %4642 = vdwg.mxu0
        %v4643 = vadd.f32 %v4556, %v4596
        %v4644 = vadd.f32 %v4557, %v4598
        %v4645 = vadd.f32 %v4558, %v4637
        %v4646 = vadd.f32 %v4559, %v4639
        %v4647 = vld [vmem:[#allocation4 + $0xa0] sm:$0xff]
        %v4648 = vld [vmem:[#allocation4 + $0xa8] sm:$0xff]
        %v4649 = vld [vmem:[#allocation4 + $0xb0] sm:$0xff]
        %v4650 = vld [vmem:[#allocation4 + $0xb8] sm:$0xff]
        %v4651 = vpack.c.bf16 %v4550, %v4550
        %4652 = vmatprep.subr.bf16.mxu0 %v3381
        %4653 = vmatpush1.bf16.msra.mxu0 %v3380
        %4654 = vmatprep.subr.bf16.mxu0 %v3377
        %4655 = vmatpush1.bf16.msra.mxu0 %v3376
        %4656 = vmatprep.subr.bf16.mxu0 %v3373
        %4657 = vmatpush1.bf16.msra.mxu0 %v3372
        %4658 = vmatprep.subr.bf16.mxu0 %v3369
        %4659 = vmatpush1.bf16.msra.mxu0 %v3368
        %4660 = vmatprep.subr.bf16.mxu0 %v3365
        %4661 = vmatpush1.bf16.msra.mxu0 %v3364
        %4662 = vmatprep.subr.bf16.mxu0 %v3361
        %4663 = vmatpush1.bf16.msra.mxu0 %v3360
        %4664 = vmatprep.subr.bf16.mxu0 %v3357
        %4665 = vmatpush1.bf16.msra.mxu0 %v3356
        %4666 = vmatprep.subr.bf16.mxu0 %v3353
        %4667 = vmatpush1.bf16.msra.mxu0 %v3352
        %4668 = vmatprep.subr.bf16.mxu0 0
        %4669 = vmatpush2.bf16.msra.mxu0 0
        %4670 = vmatprep.subr.bf16.mxu0 0
        %4671 = vmatpush2.bf16.msra.mxu0 0
        %4672 = vmatprep.subr.bf16.mxu0 0
        %4673 = vmatpush2.bf16.msra.mxu0 0
        %4674 = vmatprep.subr.bf16.mxu0 0
        %4675 = vmatpush2.bf16.msra.mxu0 0
        %4676 = vmatprep.subr.bf16.mxu0 0
        %4677 = vmatpush2.bf16.msra.mxu0 0
        %4678 = vmatprep.subr.bf16.mxu0 0
        %4679 = vmatpush2.bf16.msra.mxu0 0
        %4680 = vmatprep.subr.bf16.mxu0 0
        %4681 = vmatpush2.bf16.msra.mxu0 0
        %4682 = vmatprep.subr.bf16.mxu0 0
        %4683 = vmatpush2.bf16.msra.mxu0 0
        %4684 = vmatprep.mubr.bf16.mxu0 0
        %4685 = vmatmul.mubr.bf16.gmra.mxu0 %v4651
        %v4686 = vpop.f32.mrf.mxu0
        %v4687 = vadd.f32 0.0, %v4686
        %v4688 = vpop.f32.mrf.mxu0
        %v4689 = vadd.f32 0.0, %v4688
        %v4690 = vpop.f32.mrf.mxu0
        %v4691 = vpop.f32.mrf.mxu0
        %4692 = vdwg.mxu0
        %4693 = vmatprep.subr.bf16.mxu0 %v3383
        %4694 = vmatpush1.bf16.msra.mxu0 %v3382
        %4695 = vmatprep.subr.bf16.mxu0 %v3379
        %4696 = vmatpush1.bf16.msra.mxu0 %v3378
        %4697 = vmatprep.subr.bf16.mxu0 %v3375
        %4698 = vmatpush1.bf16.msra.mxu0 %v3374
        %4699 = vmatprep.subr.bf16.mxu0 %v3371
        %4700 = vmatpush1.bf16.msra.mxu0 %v3370
        %4701 = vmatprep.subr.bf16.mxu0 %v3367
        %4702 = vmatpush1.bf16.msra.mxu0 %v3366
        %4703 = vmatprep.subr.bf16.mxu0 %v3363
        %4704 = vmatpush1.bf16.msra.mxu0 %v3362
        %4705 = vmatprep.subr.bf16.mxu0 %v3359
        %4706 = vmatpush1.bf16.msra.mxu0 %v3358
        %4707 = vmatprep.subr.bf16.mxu0 %v3355
        %4708 = vmatpush1.bf16.msra.mxu0 %v3354
        %4709 = vmatprep.subr.bf16.mxu0 0
        %4710 = vmatpush2.bf16.msra.mxu0 0
        %4711 = vmatprep.subr.bf16.mxu0 0
        %4712 = vmatpush2.bf16.msra.mxu0 0
        %4713 = vmatprep.subr.bf16.mxu0 0
        %4714 = vmatpush2.bf16.msra.mxu0 0
        %4715 = vmatprep.subr.bf16.mxu0 0
        %4716 = vmatpush2.bf16.msra.mxu0 0
        %4717 = vmatprep.subr.bf16.mxu0 0
        %4718 = vmatpush2.bf16.msra.mxu0 0
        %4719 = vmatprep.subr.bf16.mxu0 0
        %4720 = vmatpush2.bf16.msra.mxu0 0
        %4721 = vmatprep.subr.bf16.mxu0 0
        %4722 = vmatpush2.bf16.msra.mxu0 0
        %4723 = vmatprep.subr.bf16.mxu0 0
        %4724 = vmatpush2.bf16.msra.mxu0 0
        %4725 = vmatprep.mubr.bf16.mxu0 0
        %4726 = vmatmul.mubr.bf16.gmra.mxu0 %v4651
        %v4727 = vpop.f32.mrf.mxu0
        %v4728 = vadd.f32 0.0, %v4727
        %v4729 = vpop.f32.mrf.mxu0
        %v4730 = vadd.f32 0.0, %v4729
        %v4731 = vpop.f32.mrf.mxu0
        %v4732 = vpop.f32.mrf.mxu0
        %4733 = vdwg.mxu0
        %v4734 = vadd.f32 %v4647, %v4687
        %v4735 = vadd.f32 %v4648, %v4689
        %v4736 = vadd.f32 %v4649, %v4728
        %v4737 = vadd.f32 %v4650, %v4730
        %v4738 = vxor.u32 %v4643, 2147483648
        %v4739 = vxor.u32 %v4644, 2147483648
        %v4740 = vxor.u32 %v4645, 2147483648
        %v4741 = vmul.f32 %v4738, 1.442695
        %v4742 = vpow.pop %v4741
        %v4743 = vmul.f32 %v4739, 1.442695
        %v4744 = vpow.pop %v4743
        %v4745 = vmul.f32 %v4740, 1.442695
        %v4746 = vpow.pop %v4745
        %v4747 = vadd.f32 %v4742, 1.0
        %v4748 = vadd.f32 %v4744, 1.0
        %v4749 = vadd.f32 %v4746, 1.0
        %v4750 = vrcp.pop %v4747
        %v4751 = vmul.f32 1.0, %v4750
        %v4752 = vrcp.pop %v4748
        %v4753 = vmul.f32 1.0, %v4752
        %v4754 = vrcp.pop %v4749
        %v4755 = vmul.f32 1.0, %v4754
        %v4756 = vtanh.pop %v4646
        %v4757 = vmul.f32 %v4753, %v4549
        %v4758 = vmul.f32 %v4751, %v4756
        %v4759 = vadd.f32 %v4757, %v4758
        %v4760 = vtanh.pop %v4759
        %v4761 = vmul.f32 %v4755, %v4760
        %v4762 = vxor.u32 %v4734, 2147483648
        %v4763 = vxor.u32 %v4735, 2147483648
        %v4764 = vxor.u32 %v4736, 2147483648
        %v4765 = vmul.f32 %v4762, 1.442695
        %v4766 = vpow.pop %v4765
        %v4767 = vmul.f32 %v4763, 1.442695
        %v4768 = vpow.pop %v4767
        %v4769 = vmul.f32 %v4764, 1.442695
        %v4770 = vpow.pop %v4769
        %v4771 = vadd.f32 %v4766, 1.0
        %v4772 = vadd.f32 %v4768, 1.0
        %v4773 = vadd.f32 %v4770, 1.0
        %v4774 = vrcp.pop %v4771
        %v4775 = vmul.f32 1.0, %v4774
        %v4776 = vrcp.pop %v4772
        %v4777 = vmul.f32 1.0, %v4776
        %v4778 = vrcp.pop %v4773
        %v4779 = vmul.f32 1.0, %v4778
        %v4780 = vtanh.pop %v4737
        %v4781 = vmul.f32 %v4777, %v4551
        %v4782 = vmul.f32 %v4775, %v4780
        %v4783 = vadd.f32 %v4781, %v4782
        %v4784 = vtanh.pop %v4783
        %v4785 = vmul.f32 %v4779, %v4784
        %v4786 = vsel %vm4061, %v4761, %v4548
        %v4787 = vsel %vm4061, %v4759, %v4549
        %v4788 = vsel %vm4054, %v4785, %v4550
        %v4789 = vsel %vm4054, %v4783, %v4551
        %v4790 = vsel %vm4061, %v4761, 0.0
        %4791 = vst [vmem:[#allocation2 + $0x28] sm:$0xff] %v4790
        %v4792 = vsel %vm4054, %v4785, 0.0
        %4793 = vst [vmem:[#allocation3 + $0x10] sm:$0xff] %v4792
        %v4794 = vld [vmem:[#allocation4 + $0x180] sm:$0xff]
        %v4795 = vld [vmem:[#allocation4 + $0x188] sm:$0xff]
        %v4796 = vld [vmem:[#allocation4 + $0x190] sm:$0xff]
        %v4797 = vld [vmem:[#allocation4 + $0x198] sm:$0xff]
        %v4798 = vpack.c.bf16 %v4786, %v4786
        %4799 = vmatprep.subr.bf16.mxu0 %v3131
        %4800 = vmatpush1.bf16.msra.mxu0 %v3130
        %4801 = vmatprep.subr.bf16.mxu0 %v3127
        %4802 = vmatpush1.bf16.msra.mxu0 %v3126
        %4803 = vmatprep.subr.bf16.mxu0 %v3123
        %4804 = vmatpush1.bf16.msra.mxu0 %v3122
        %4805 = vmatprep.subr.bf16.mxu0 %v3119
        %4806 = vmatpush1.bf16.msra.mxu0 %v3118
        %4807 = vmatprep.subr.bf16.mxu0 %v3115
        %4808 = vmatpush1.bf16.msra.mxu0 %v3114
        %4809 = vmatprep.subr.bf16.mxu0 %v3111
        %4810 = vmatpush1.bf16.msra.mxu0 %v3110
        %4811 = vmatprep.subr.bf16.mxu0 %v3107
        %4812 = vmatpush1.bf16.msra.mxu0 %v3106
        %4813 = vmatprep.subr.bf16.mxu0 %v3103
        %4814 = vmatpush1.bf16.msra.mxu0 %v3102
        %4815 = vmatprep.subr.bf16.mxu0 0
        %4816 = vmatpush2.bf16.msra.mxu0 0
        %4817 = vmatprep.subr.bf16.mxu0 0
        %4818 = vmatpush2.bf16.msra.mxu0 0
        %4819 = vmatprep.subr.bf16.mxu0 0
        %4820 = vmatpush2.bf16.msra.mxu0 0
        %4821 = vmatprep.subr.bf16.mxu0 0
        %4822 = vmatpush2.bf16.msra.mxu0 0
        %4823 = vmatprep.subr.bf16.mxu0 0
        %4824 = vmatpush2.bf16.msra.mxu0 0
        %4825 = vmatprep.subr.bf16.mxu0 0
        %4826 = vmatpush2.bf16.msra.mxu0 0
        %4827 = vmatprep.subr.bf16.mxu0 0
        %4828 = vmatpush2.bf16.msra.mxu0 0
        %4829 = vmatprep.subr.bf16.mxu0 0
        %4830 = vmatpush2.bf16.msra.mxu0 0
        %4831 = vmatprep.mubr.bf16.mxu0 0
        %4832 = vmatmul.mubr.bf16.gmra.mxu0 %v4798
        %v4833 = vpop.f32.mrf.mxu0
        %v4834 = vadd.f32 0.0, %v4833
        %v4835 = vpop.f32.mrf.mxu0
        %v4836 = vadd.f32 0.0, %v4835
        %v4837 = vpop.f32.mrf.mxu0
        %v4838 = vpop.f32.mrf.mxu0
        %4839 = vdwg.mxu0
        %4840 = vmatprep.subr.bf16.mxu0 %v3133
        %4841 = vmatpush1.bf16.msra.mxu0 %v3132
        %4842 = vmatprep.subr.bf16.mxu0 %v3129
        %4843 = vmatpush1.bf16.msra.mxu0 %v3128
        %4844 = vmatprep.subr.bf16.mxu0 %v3125
        %4845 = vmatpush1.bf16.msra.mxu0 %v3124
        %4846 = vmatprep.subr.bf16.mxu0 %v3121
        %4847 = vmatpush1.bf16.msra.mxu0 %v3120
        %4848 = vmatprep.subr.bf16.mxu0 %v3117
        %4849 = vmatpush1.bf16.msra.mxu0 %v3116
        %4850 = vmatprep.subr.bf16.mxu0 %v3113
        %4851 = vmatpush1.bf16.msra.mxu0 %v3112
        %4852 = vmatprep.subr.bf16.mxu0 %v3109
        %4853 = vmatpush1.bf16.msra.mxu0 %v3108
        %4854 = vmatprep.subr.bf16.mxu0 %v3105
        %4855 = vmatpush1.bf16.msra.mxu0 %v3104
        %4856 = vmatprep.subr.bf16.mxu0 0
        %4857 = vmatpush2.bf16.msra.mxu0 0
        %4858 = vmatprep.subr.bf16.mxu0 0
        %4859 = vmatpush2.bf16.msra.mxu0 0
        %4860 = vmatprep.subr.bf16.mxu0 0
        %4861 = vmatpush2.bf16.msra.mxu0 0
        %4862 = vmatprep.subr.bf16.mxu0 0
        %4863 = vmatpush2.bf16.msra.mxu0 0
        %4864 = vmatprep.subr.bf16.mxu0 0
        %4865 = vmatpush2.bf16.msra.mxu0 0
        %4866 = vmatprep.subr.bf16.mxu0 0
        %4867 = vmatpush2.bf16.msra.mxu0 0
        %4868 = vmatprep.subr.bf16.mxu0 0
        %4869 = vmatpush2.bf16.msra.mxu0 0
        %4870 = vmatprep.subr.bf16.mxu0 0
        %4871 = vmatpush2.bf16.msra.mxu0 0
        %4872 = vmatprep.mubr.bf16.mxu0 0
        %4873 = vmatmul.mubr.bf16.gmra.mxu0 %v4798
        %v4874 = vpop.f32.mrf.mxu0
        %v4875 = vadd.f32 0.0, %v4874
        %v4876 = vpop.f32.mrf.mxu0
        %v4877 = vadd.f32 0.0, %v4876
        %v4878 = vpop.f32.mrf.mxu0
        %v4879 = vpop.f32.mrf.mxu0
        %4880 = vdwg.mxu0
        %v4881 = vadd.f32 %v4794, %v4834
        %v4882 = vadd.f32 %v4795, %v4836
        %v4883 = vadd.f32 %v4796, %v4875
        %v4884 = vadd.f32 %v4797, %v4877
        %v4885 = vld [vmem:[#allocation4 + $0x60] sm:$0xff]
        %v4886 = vld [vmem:[#allocation4 + $0x68] sm:$0xff]
        %v4887 = vld [vmem:[#allocation4 + $0x70] sm:$0xff]
        %v4888 = vld [vmem:[#allocation4 + $0x78] sm:$0xff]
        %v4889 = vpack.c.bf16 %v4788, %v4788
        %4890 = vmatprep.subr.bf16.mxu0 %v3381
        %4891 = vmatpush1.bf16.msra.mxu0 %v3380
        %4892 = vmatprep.subr.bf16.mxu0 %v3377
        %4893 = vmatpush1.bf16.msra.mxu0 %v3376
        %4894 = vmatprep.subr.bf16.mxu0 %v3373
        %4895 = vmatpush1.bf16.msra.mxu0 %v3372
        %4896 = vmatprep.subr.bf16.mxu0 %v3369
        %4897 = vmatpush1.bf16.msra.mxu0 %v3368
        %4898 = vmatprep.subr.bf16.mxu0 %v3365
        %4899 = vmatpush1.bf16.msra.mxu0 %v3364
        %4900 = vmatprep.subr.bf16.mxu0 %v3361
        %4901 = vmatpush1.bf16.msra.mxu0 %v3360
        %4902 = vmatprep.subr.bf16.mxu0 %v3357
        %4903 = vmatpush1.bf16.msra.mxu0 %v3356
        %4904 = vmatprep.subr.bf16.mxu0 %v3353
        %4905 = vmatpush1.bf16.msra.mxu0 %v3352
        %4906 = vmatprep.subr.bf16.mxu0 0
        %4907 = vmatpush2.bf16.msra.mxu0 0
        %4908 = vmatprep.subr.bf16.mxu0 0
        %4909 = vmatpush2.bf16.msra.mxu0 0
        %4910 = vmatprep.subr.bf16.mxu0 0
        %4911 = vmatpush2.bf16.msra.mxu0 0
        %4912 = vmatprep.subr.bf16.mxu0 0
        %4913 = vmatpush2.bf16.msra.mxu0 0
        %4914 = vmatprep.subr.bf16.mxu0 0
        %4915 = vmatpush2.bf16.msra.mxu0 0
        %4916 = vmatprep.subr.bf16.mxu0 0
        %4917 = vmatpush2.bf16.msra.mxu0 0
        %4918 = vmatprep.subr.bf16.mxu0 0
        %4919 = vmatpush2.bf16.msra.mxu0 0
        %4920 = vmatprep.subr.bf16.mxu0 0
        %4921 = vmatpush2.bf16.msra.mxu0 0
        %4922 = vmatprep.mubr.bf16.mxu0 0
        %4923 = vmatmul.mubr.bf16.gmra.mxu0 %v4889
        %v4924 = vpop.f32.mrf.mxu0
        %v4925 = vadd.f32 0.0, %v4924
        %v4926 = vpop.f32.mrf.mxu0
        %v4927 = vadd.f32 0.0, %v4926
        %v4928 = vpop.f32.mrf.mxu0
        %v4929 = vpop.f32.mrf.mxu0
        %4930 = vdwg.mxu0
        %4931 = vmatprep.subr.bf16.mxu0 %v3383
        %4932 = vmatpush1.bf16.msra.mxu0 %v3382
        %4933 = vmatprep.subr.bf16.mxu0 %v3379
        %4934 = vmatpush1.bf16.msra.mxu0 %v3378
        %4935 = vmatprep.subr.bf16.mxu0 %v3375
        %4936 = vmatpush1.bf16.msra.mxu0 %v3374
        %4937 = vmatprep.subr.bf16.mxu0 %v3371
        %4938 = vmatpush1.bf16.msra.mxu0 %v3370
        %4939 = vmatprep.subr.bf16.mxu0 %v3367
        %4940 = vmatpush1.bf16.msra.mxu0 %v3366
        %4941 = vmatprep.subr.bf16.mxu0 %v3363
        %4942 = vmatpush1.bf16.msra.mxu0 %v3362
        %4943 = vmatprep.subr.bf16.mxu0 %v3359
        %4944 = vmatpush1.bf16.msra.mxu0 %v3358
        %4945 = vmatprep.subr.bf16.mxu0 %v3355
        %4946 = vmatpush1.bf16.msra.mxu0 %v3354
        %4947 = vmatprep.subr.bf16.mxu0 0
        %4948 = vmatpush2.bf16.msra.mxu0 0
        %4949 = vmatprep.subr.bf16.mxu0 0
        %4950 = vmatpush2.bf16.msra.mxu0 0
        %4951 = vmatprep.subr.bf16.mxu0 0
        %4952 = vmatpush2.bf16.msra.mxu0 0
        %4953 = vmatprep.subr.bf16.mxu0 0
        %4954 = vmatpush2.bf16.msra.mxu0 0
        %4955 = vmatprep.subr.bf16.mxu0 0
        %4956 = vmatpush2.bf16.msra.mxu0 0
        %4957 = vmatprep.subr.bf16.mxu0 0
        %4958 = vmatpush2.bf16.msra.mxu0 0
        %4959 = vmatprep.subr.bf16.mxu0 0
        %4960 = vmatpush2.bf16.msra.mxu0 0
        %4961 = vmatprep.subr.bf16.mxu0 0
        %4962 = vmatpush2.bf16.msra.mxu0 0
        %4963 = vmatprep.mubr.bf16.mxu0 0
        %4964 = vmatmul.mubr.bf16.gmra.mxu0 %v4889
        %v4965 = vpop.f32.mrf.mxu0
        %v4966 = vadd.f32 0.0, %v4965
        %v4967 = vpop.f32.mrf.mxu0
        %v4968 = vadd.f32 0.0, %v4967
        %v4969 = vpop.f32.mrf.mxu0
        %v4970 = vpop.f32.mrf.mxu0
        %4971 = vdwg.mxu0
        %v4972 = vadd.f32 %v4885, %v4925
        %v4973 = vadd.f32 %v4886, %v4927
        %v4974 = vadd.f32 %v4887, %v4966
        %v4975 = vadd.f32 %v4888, %v4968
        %v4976 = vxor.u32 %v4881, 2147483648
        %v4977 = vxor.u32 %v4882, 2147483648
        %v4978 = vxor.u32 %v4883, 2147483648
        %v4979 = vmul.f32 %v4976, 1.442695
        %v4980 = vpow.pop %v4979
        %v4981 = vmul.f32 %v4977, 1.442695
        %v4982 = vpow.pop %v4981
        %v4983 = vmul.f32 %v4978, 1.442695
        %v4984 = vpow.pop %v4983
        %v4985 = vadd.f32 %v4980, 1.0
        %v4986 = vadd.f32 %v4982, 1.0
        %v4987 = vadd.f32 %v4984, 1.0
        %v4988 = vrcp.pop %v4985
        %v4989 = vmul.f32 1.0, %v4988
        %v4990 = vrcp.pop %v4986
        %v4991 = vmul.f32 1.0, %v4990
        %v4992 = vrcp.pop %v4987
        %v4993 = vmul.f32 1.0, %v4992
        %v4994 = vtanh.pop %v4884
        %v4995 = vmul.f32 %v4991, %v4787
        %v4996 = vmul.f32 %v4989, %v4994
        %v4997 = vadd.f32 %v4995, %v4996
        %v4998 = vtanh.pop %v4997
        %v4999 = vmul.f32 %v4993, %v4998
        %v5000 = vxor.u32 %v4972, 2147483648
        %v5001 = vxor.u32 %v4973, 2147483648
        %v5002 = vxor.u32 %v4974, 2147483648
        %v5003 = vmul.f32 %v5000, 1.442695
        %v5004 = vpow.pop %v5003
        %v5005 = vmul.f32 %v5001, 1.442695
        %v5006 = vpow.pop %v5005
        %v5007 = vmul.f32 %v5002, 1.442695
        %v5008 = vpow.pop %v5007
        %v5009 = vadd.f32 %v5004, 1.0
        %v5010 = vadd.f32 %v5006, 1.0
        %v5011 = vadd.f32 %v5008, 1.0
        %v5012 = vrcp.pop %v5009
        %v5013 = vmul.f32 1.0, %v5012
        %v5014 = vrcp.pop %v5010
        %v5015 = vmul.f32 1.0, %v5014
        %v5016 = vrcp.pop %v5011
        %v5017 = vmul.f32 1.0, %v5016
        %v5018 = vtanh.pop %v4975
        %v5019 = vmul.f32 %v5015, %v4789
        %v5020 = vmul.f32 %v5013, %v5018
        %v5021 = vadd.f32 %v5019, %v5020
        %v5022 = vtanh.pop %v5021
        %v5023 = vmul.f32 %v5017, %v5022
        %v5024 = vsel %vm3811, %v4999, %v4786
        %v5025 = vsel %vm3811, %v4997, %v4787
        %v5026 = vsel %vm3804, %v5023, %v4788
        %v5027 = vsel %vm3804, %v5021, %v4789
        %v5028 = vsel %vm3811, %v4999, 0.0
        %5029 = vst [vmem:[#allocation2 + $0x30] sm:$0xff] %v5028
        %v5030 = vsel %vm3804, %v5023, 0.0
        %5031 = vst [vmem:[#allocation3 + $0x8] sm:$0xff] %v5030
        %v5032 = vld [vmem:[#allocation4 + $0x1c0] sm:$0xff]
        %v5033 = vld [vmem:[#allocation4 + $0x1c8] sm:$0xff]
        %v5034 = vld [vmem:[#allocation4 + $0x1d0] sm:$0xff]
        %v5035 = vld [vmem:[#allocation4 + $0x1d8] sm:$0xff]
        %v5036 = vpack.c.bf16 %v5024, %v5024
        %5037 = vmatprep.subr.bf16.mxu0 %v3131
        %5038 = vmatpush1.bf16.msra.mxu0 %v3130
        %5039 = vmatprep.subr.bf16.mxu0 %v3127
        %5040 = vmatpush1.bf16.msra.mxu0 %v3126
        %5041 = vmatprep.subr.bf16.mxu0 %v3123
        %5042 = vmatpush1.bf16.msra.mxu0 %v3122
        %5043 = vmatprep.subr.bf16.mxu0 %v3119
        %5044 = vmatpush1.bf16.msra.mxu0 %v3118
        %5045 = vmatprep.subr.bf16.mxu0 %v3115
        %5046 = vmatpush1.bf16.msra.mxu0 %v3114
        %5047 = vmatprep.subr.bf16.mxu0 %v3111
        %5048 = vmatpush1.bf16.msra.mxu0 %v3110
        %5049 = vmatprep.subr.bf16.mxu0 %v3107
        %5050 = vmatpush1.bf16.msra.mxu0 %v3106
        %5051 = vmatprep.subr.bf16.mxu0 %v3103
        %5052 = vmatpush1.bf16.msra.mxu0 %v3102
        %5053 = vmatprep.subr.bf16.mxu0 0
        %5054 = vmatpush2.bf16.msra.mxu0 0
        %5055 = vmatprep.subr.bf16.mxu0 0
        %5056 = vmatpush2.bf16.msra.mxu0 0
        %5057 = vmatprep.subr.bf16.mxu0 0
        %5058 = vmatpush2.bf16.msra.mxu0 0
        %5059 = vmatprep.subr.bf16.mxu0 0
        %5060 = vmatpush2.bf16.msra.mxu0 0
        %5061 = vmatprep.subr.bf16.mxu0 0
        %5062 = vmatpush2.bf16.msra.mxu0 0
        %5063 = vmatprep.subr.bf16.mxu0 0
        %5064 = vmatpush2.bf16.msra.mxu0 0
        %5065 = vmatprep.subr.bf16.mxu0 0
        %5066 = vmatpush2.bf16.msra.mxu0 0
        %5067 = vmatprep.subr.bf16.mxu0 0
        %5068 = vmatpush2.bf16.msra.mxu0 0
        %5069 = vmatprep.mubr.bf16.mxu0 0
        %5070 = vmatmul.mubr.bf16.gmra.mxu0 %v5036
        %v5071 = vpop.f32.mrf.mxu0
        %v5072 = vadd.f32 0.0, %v5071
        %v5073 = vpop.f32.mrf.mxu0
        %v5074 = vadd.f32 0.0, %v5073
        %v5075 = vpop.f32.mrf.mxu0
        %v5076 = vpop.f32.mrf.mxu0
        %5077 = vdwg.mxu0
        %5078 = vmatprep.subr.bf16.mxu0 %v3133
        %5079 = vmatpush1.bf16.msra.mxu0 %v3132
        %5080 = vmatprep.subr.bf16.mxu0 %v3129
        %5081 = vmatpush1.bf16.msra.mxu0 %v3128
        %5082 = vmatprep.subr.bf16.mxu0 %v3125
        %5083 = vmatpush1.bf16.msra.mxu0 %v3124
        %5084 = vmatprep.subr.bf16.mxu0 %v3121
        %5085 = vmatpush1.bf16.msra.mxu0 %v3120
        %5086 = vmatprep.subr.bf16.mxu0 %v3117
        %5087 = vmatpush1.bf16.msra.mxu0 %v3116
        %5088 = vmatprep.subr.bf16.mxu0 %v3113
        %5089 = vmatpush1.bf16.msra.mxu0 %v3112
        %5090 = vmatprep.subr.bf16.mxu0 %v3109
        %5091 = vmatpush1.bf16.msra.mxu0 %v3108
        %5092 = vmatprep.subr.bf16.mxu0 %v3105
        %5093 = vmatpush1.bf16.msra.mxu0 %v3104
        %5094 = vmatprep.subr.bf16.mxu0 0
        %5095 = vmatpush2.bf16.msra.mxu0 0
        %5096 = vmatprep.subr.bf16.mxu0 0
        %5097 = vmatpush2.bf16.msra.mxu0 0
        %5098 = vmatprep.subr.bf16.mxu0 0
        %5099 = vmatpush2.bf16.msra.mxu0 0
        %5100 = vmatprep.subr.bf16.mxu0 0
        %5101 = vmatpush2.bf16.msra.mxu0 0
        %5102 = vmatprep.subr.bf16.mxu0 0
        %5103 = vmatpush2.bf16.msra.mxu0 0
        %5104 = vmatprep.subr.bf16.mxu0 0
        %5105 = vmatpush2.bf16.msra.mxu0 0
        %5106 = vmatprep.subr.bf16.mxu0 0
        %5107 = vmatpush2.bf16.msra.mxu0 0
        %5108 = vmatprep.subr.bf16.mxu0 0
        %5109 = vmatpush2.bf16.msra.mxu0 0
        %5110 = vmatprep.mubr.bf16.mxu0 0
        %5111 = vmatmul.mubr.bf16.gmra.mxu0 %v5036
        %v5112 = vpop.f32.mrf.mxu0
        %v5113 = vadd.f32 0.0, %v5112
        %v5114 = vpop.f32.mrf.mxu0
        %v5115 = vadd.f32 0.0, %v5114
        %v5116 = vpop.f32.mrf.mxu0
        %v5117 = vpop.f32.mrf.mxu0
        %5118 = vdwg.mxu0
        %v5119 = vadd.f32 %v5032, %v5072
        %v5120 = vadd.f32 %v5033, %v5074
        %v5121 = vadd.f32 %v5034, %v5113
        %v5122 = vadd.f32 %v5035, %v5115
        %v5123 = vld [vmem:[#allocation4 + $0x20] sm:$0xff]
        %v5124 = vld [vmem:[#allocation4 + $0x28] sm:$0xff]
        %v5125 = vld [vmem:[#allocation4 + $0x30] sm:$0xff]
        %v5126 = vld [vmem:[#allocation4 + $0x38] sm:$0xff]
        %v5127 = vpack.c.bf16 %v5026, %v5026
        %5128 = vmatprep.subr.bf16.mxu0 %v3381
        %5129 = vmatpush1.bf16.msra.mxu0 %v3380
        %5130 = vmatprep.subr.bf16.mxu0 %v3377
        %5131 = vmatpush1.bf16.msra.mxu0 %v3376
        %5132 = vmatprep.subr.bf16.mxu0 %v3373
        %5133 = vmatpush1.bf16.msra.mxu0 %v3372
        %5134 = vmatprep.subr.bf16.mxu0 %v3369
        %5135 = vmatpush1.bf16.msra.mxu0 %v3368
        %5136 = vmatprep.subr.bf16.mxu0 %v3365
        %5137 = vmatpush1.bf16.msra.mxu0 %v3364
        %5138 = vmatprep.subr.bf16.mxu0 %v3361
        %5139 = vmatpush1.bf16.msra.mxu0 %v3360
        %5140 = vmatprep.subr.bf16.mxu0 %v3357
        %5141 = vmatpush1.bf16.msra.mxu0 %v3356
        %5142 = vmatprep.subr.bf16.mxu0 %v3353
        %5143 = vmatpush1.bf16.msra.mxu0 %v3352
        %5144 = vmatprep.subr.bf16.mxu0 0
        %5145 = vmatpush2.bf16.msra.mxu0 0
        %5146 = vmatprep.subr.bf16.mxu0 0
        %5147 = vmatpush2.bf16.msra.mxu0 0
        %5148 = vmatprep.subr.bf16.mxu0 0
        %5149 = vmatpush2.bf16.msra.mxu0 0
        %5150 = vmatprep.subr.bf16.mxu0 0
        %5151 = vmatpush2.bf16.msra.mxu0 0
        %5152 = vmatprep.subr.bf16.mxu0 0
        %5153 = vmatpush2.bf16.msra.mxu0 0
        %5154 = vmatprep.subr.bf16.mxu0 0
        %5155 = vmatpush2.bf16.msra.mxu0 0
        %5156 = vmatprep.subr.bf16.mxu0 0
        %5157 = vmatpush2.bf16.msra.mxu0 0
        %5158 = vmatprep.subr.bf16.mxu0 0
        %5159 = vmatpush2.bf16.msra.mxu0 0
        %5160 = vmatprep.mubr.bf16.mxu0 0
        %5161 = vmatmul.mubr.bf16.gmra.mxu0 %v5127
        %v5162 = vpop.f32.mrf.mxu0
        %v5163 = vadd.f32 0.0, %v5162
        %v5164 = vpop.f32.mrf.mxu0
        %v5165 = vadd.f32 0.0, %v5164
        %v5166 = vpop.f32.mrf.mxu0
        %v5167 = vpop.f32.mrf.mxu0
        %5168 = vdwg.mxu0
        %5169 = vmatprep.subr.bf16.mxu0 %v3383
        %5170 = vmatpush1.bf16.msra.mxu0 %v3382
        %5171 = vmatprep.subr.bf16.mxu0 %v3379
        %5172 = vmatpush1.bf16.msra.mxu0 %v3378
        %5173 = vmatprep.subr.bf16.mxu0 %v3375
        %5174 = vmatpush1.bf16.msra.mxu0 %v3374
        %5175 = vmatprep.subr.bf16.mxu0 %v3371
        %5176 = vmatpush1.bf16.msra.mxu0 %v3370
        %5177 = vmatprep.subr.bf16.mxu0 %v3367
        %5178 = vmatpush1.bf16.msra.mxu0 %v3366
        %5179 = vmatprep.subr.bf16.mxu0 %v3363
        %5180 = vmatpush1.bf16.msra.mxu0 %v3362
        %5181 = vmatprep.subr.bf16.mxu0 %v3359
        %5182 = vmatpush1.bf16.msra.mxu0 %v3358
        %5183 = vmatprep.subr.bf16.mxu0 %v3355
        %5184 = vmatpush1.bf16.msra.mxu0 %v3354
        %5185 = vmatprep.subr.bf16.mxu0 0
        %5186 = vmatpush2.bf16.msra.mxu0 0
        %5187 = vmatprep.subr.bf16.mxu0 0
        %5188 = vmatpush2.bf16.msra.mxu0 0
        %5189 = vmatprep.subr.bf16.mxu0 0
        %5190 = vmatpush2.bf16.msra.mxu0 0
        %5191 = vmatprep.subr.bf16.mxu0 0
        %5192 = vmatpush2.bf16.msra.mxu0 0
        %5193 = vmatprep.subr.bf16.mxu0 0
        %5194 = vmatpush2.bf16.msra.mxu0 0
        %5195 = vmatprep.subr.bf16.mxu0 0
        %5196 = vmatpush2.bf16.msra.mxu0 0
        %5197 = vmatprep.subr.bf16.mxu0 0
        %5198 = vmatpush2.bf16.msra.mxu0 0
        %5199 = vmatprep.subr.bf16.mxu0 0
        %5200 = vmatpush2.bf16.msra.mxu0 0
        %5201 = vmatprep.mubr.bf16.mxu0 0
        %5202 = vmatmul.mubr.bf16.gmra.mxu0 %v5127
        %v5203 = vpop.f32.mrf.mxu0
        %v5204 = vadd.f32 0.0, %v5203
        %v5205 = vpop.f32.mrf.mxu0
        %v5206 = vadd.f32 0.0, %v5205
        %v5207 = vpop.f32.mrf.mxu0
        %v5208 = vpop.f32.mrf.mxu0
        %5209 = vdwg.mxu0
        %v5210 = vadd.f32 %v5123, %v5163
        %v5211 = vadd.f32 %v5124, %v5165
        %v5212 = vadd.f32 %v5125, %v5204
        %v5213 = vadd.f32 %v5126, %v5206
        %v5214 = vxor.u32 %v5119, 2147483648
        %v5215 = vxor.u32 %v5120, 2147483648
        %v5216 = vxor.u32 %v5121, 2147483648
        %v5217 = vmul.f32 %v5214, 1.442695
        %v5218 = vpow.pop %v5217
        %v5219 = vmul.f32 %v5215, 1.442695
        %v5220 = vpow.pop %v5219
        %v5221 = vmul.f32 %v5216, 1.442695
        %v5222 = vpow.pop %v5221
        %v5223 = vadd.f32 %v5218, 1.0
        %v5224 = vadd.f32 %v5220, 1.0
        %v5225 = vadd.f32 %v5222, 1.0
        %v5226 = vrcp.pop %v5223
        %v5227 = vmul.f32 1.0, %v5226
        %v5228 = vrcp.pop %v5224
        %v5229 = vmul.f32 1.0, %v5228
        %v5230 = vrcp.pop %v5225
        %v5231 = vmul.f32 1.0, %v5230
        %v5232 = vtanh.pop %v5122
        %v5233 = vmul.f32 %v5229, %v5025
        %v5234 = vmul.f32 %v5227, %v5232
        %v5235 = vadd.f32 %v5233, %v5234
        %v5236 = vtanh.pop %v5235
        %v5237 = vmul.f32 %v5231, %v5236
        %v5238 = vxor.u32 %v5210, 2147483648
        %v5239 = vxor.u32 %v5211, 2147483648
        %v5240 = vxor.u32 %v5212, 2147483648
        %v5241 = vmul.f32 %v5238, 1.442695
        %v5242 = vpow.pop %v5241
        %v5243 = vmul.f32 %v5239, 1.442695
        %v5244 = vpow.pop %v5243
        %v5245 = vmul.f32 %v5240, 1.442695
        %v5246 = vpow.pop %v5245
        %v5247 = vadd.f32 %v5242, 1.0
        %v5248 = vadd.f32 %v5244, 1.0
        %v5249 = vadd.f32 %v5246, 1.0
        %v5250 = vrcp.pop %v5247
        %v5251 = vmul.f32 1.0, %v5250
        %v5252 = vrcp.pop %v5248
        %v5253 = vmul.f32 1.0, %v5252
        %v5254 = vrcp.pop %v5249
        %v5255 = vmul.f32 1.0, %v5254
        %v5256 = vtanh.pop %v5213
        %v5257 = vmul.f32 %v5253, %v5027
        %v5258 = vmul.f32 %v5251, %v5256
        %v5259 = vadd.f32 %v5257, %v5258
        %v5260 = vtanh.pop %v5259
        %v5261 = vmul.f32 %v5255, %v5260
        %v5262 = vsel %vm3563, %v5237, 0.0
        %5263 = vst [vmem:[#allocation2 + $0x38] sm:$0xff] %v5262
        %v5264 = vsel %vm3556, %v5261, 0.0
        %5265 = vst [vmem:[#allocation3] sm:$0xff] %v5264
        %p5266 = scmp.eq.s32.totalorder %s25, 4
        // Predicated region
        $region105: #{tpu_custom_call.1} parent=59 // pred_check
          %p5267 = pneg %p5266
        $region106: #{tpu_custom_call.1} parent=59 // pred_check_branch
          %5269 = sbr.rel (%p5267) target = $region108
        $region107: #{tpu_custom_call.1} parent=59 // pred_region
          %v5270 = vld [vmem:[#allocation2 + $0x38] sm:$0xff]
          %v5271 = vld [vmem:[#allocation3 + $0x38] sm:$0xff]
          %v5272 = vld [vmem:[#allocation14] sm:$0xff]
          %v5273 = vld [vmem:[#allocation14 + $0x8] sm:$0xff]
          %v5274 = vld [vmem:[#allocation14 + $0x10] sm:$0xff]
          %v5275 = vld [vmem:[#allocation14 + $0x18] sm:$0xff]
          %v5276 = vld [vmem:[#allocation14 + $0x20] sm:$0xff]
          %v5277 = vld [vmem:[#allocation14 + $0x28] sm:$0xff]
          %v5278 = vld [vmem:[#allocation14 + $0x30] sm:$0xff]
          %v5279 = vld [vmem:[#allocation14 + $0x38] sm:$0xff]
          %v5280 = vld [vmem:[#allocation14 + $0x40] sm:$0xff]
          %v5281 = vld [vmem:[#allocation14 + $0x48] sm:$0xff]
          %v5282 = vld [vmem:[#allocation14 + $0x50] sm:$0xff]
          %v5283 = vld [vmem:[#allocation14 + $0x58] sm:$0xff]
          %v5284 = vld [vmem:[#allocation14 + $0x60] sm:$0xff]
          %v5285 = vld [vmem:[#allocation14 + $0x68] sm:$0xff]
          %v5286 = vld [vmem:[#allocation14 + $0x70] sm:$0xff]
          %v5287 = vld [vmem:[#allocation14 + $0x78] sm:$0xff]
          %v5288 = vld [vmem:[#allocation15] sm:$0xff]
          %v5289 = vld [vmem:[#allocation15 + $0x8] sm:$0xff]
          %v5290 = vld [vmem:[#allocation15 + $0x10] sm:$0xff]
          %v5291 = vld [vmem:[#allocation15 + $0x18] sm:$0xff]
          %v5292 = vld [vmem:[#allocation15 + $0x20] sm:$0xff]
          %v5293 = vld [vmem:[#allocation15 + $0x28] sm:$0xff]
          %v5294 = vld [vmem:[#allocation15 + $0x30] sm:$0xff]
          %v5295 = vld [vmem:[#allocation15 + $0x38] sm:$0xff]
          %v5296 = vld [vmem:[#allocation15 + $0x40] sm:$0xff]
          %v5297 = vld [vmem:[#allocation15 + $0x48] sm:$0xff]
          %v5298 = vld [vmem:[#allocation15 + $0x50] sm:$0xff]
          %v5299 = vld [vmem:[#allocation15 + $0x58] sm:$0xff]
          %v5300 = vld [vmem:[#allocation15 + $0x60] sm:$0xff]
          %v5301 = vld [vmem:[#allocation15 + $0x68] sm:$0xff]
          %v5302 = vld [vmem:[#allocation15 + $0x70] sm:$0xff]
          %v5303 = vld [vmem:[#allocation15 + $0x78] sm:$0xff]
          %5304 = vmatprep.subr.mxu0 0.0
          %5305 = vmatpush1.msra.mxu0 %v5303
          %5306 = vmatprep.subr.mxu0 0.0
          %5307 = vmatpush1.msra.mxu0 %v5302
          %5308 = vmatprep.subr.mxu0 0.0
          %5309 = vmatpush1.msra.mxu0 %v5301
          %5310 = vmatprep.subr.mxu0 0.0
          %5311 = vmatpush1.msra.mxu0 %v5300
          %5312 = vmatprep.subr.mxu0 0.0
          %5313 = vmatpush1.msra.mxu0 %v5299
          %5314 = vmatprep.subr.mxu0 0.0
          %5315 = vmatpush1.msra.mxu0 %v5298
          %5316 = vmatprep.subr.mxu0 0.0
          %5317 = vmatpush1.msra.mxu0 %v5297
          %5318 = vmatprep.subr.mxu0 0.0
          %5319 = vmatpush1.msra.mxu0 %v5296
          %5320 = vmatprep.subr.mxu0 0.0
          %5321 = vmatpush1.msra.mxu0 %v5295
          %5322 = vmatprep.subr.mxu0 0.0
          %5323 = vmatpush1.msra.mxu0 %v5294
          %5324 = vmatprep.subr.mxu0 0.0
          %5325 = vmatpush1.msra.mxu0 %v5293
          %5326 = vmatprep.subr.mxu0 0.0
          %5327 = vmatpush1.msra.mxu0 %v5292
          %5328 = vmatprep.subr.mxu0 0.0
          %5329 = vmatpush1.msra.mxu0 %v5291
          %5330 = vmatprep.subr.mxu0 0.0
          %5331 = vmatpush1.msra.mxu0 %v5290
          %5332 = vmatprep.subr.mxu0 0.0
          %5333 = vmatpush1.msra.mxu0 %v5289
          %5334 = vmatprep.subr.mxu0 0.0
          %5335 = vmatpush1.msra.mxu0 %v5288
          %5336 = vmatprep.subr.mxu0 0.0
          %5337 = vmatpush2.msra.mxu0 0.0
          %5338 = vmatprep.subr.mxu0 0.0
          %5339 = vmatpush2.msra.mxu0 0.0
          %5340 = vmatprep.subr.mxu0 0.0
          %5341 = vmatpush2.msra.mxu0 0.0
          %5342 = vmatprep.subr.mxu0 0.0
          %5343 = vmatpush2.msra.mxu0 0.0
          %5344 = vmatprep.subr.mxu0 0.0
          %5345 = vmatpush2.msra.mxu0 0.0
          %5346 = vmatprep.subr.mxu0 0.0
          %5347 = vmatpush2.msra.mxu0 0.0
          %5348 = vmatprep.subr.mxu0 0.0
          %5349 = vmatpush2.msra.mxu0 0.0
          %5350 = vmatprep.subr.mxu0 0.0
          %5351 = vmatpush2.msra.mxu0 0.0
          %5352 = vmatprep.subr.mxu0 0.0
          %5353 = vmatpush2.msra.mxu0 0.0
          %5354 = vmatprep.subr.mxu0 0.0
          %5355 = vmatpush2.msra.mxu0 0.0
          %5356 = vmatprep.subr.mxu0 0.0
          %5357 = vmatpush2.msra.mxu0 0.0
          %5358 = vmatprep.subr.mxu0 0.0
          %5359 = vmatpush2.msra.mxu0 0.0
          %5360 = vmatprep.subr.mxu0 0.0
          %5361 = vmatpush2.msra.mxu0 0.0
          %5362 = vmatprep.subr.mxu0 0.0
          %5363 = vmatpush2.msra.mxu0 0.0
          %5364 = vmatprep.subr.mxu0 0.0
          %5365 = vmatpush2.msra.mxu0 0.0
          %5366 = vmatprep.subr.mxu0 0.0
          %5367 = vmatpush2.msra.mxu0 0.0
          %5368 = vmatprep.mubr.f32.mxu0 0.0
          %5369 = vmatmul.mubr.f32.gmra.mxu0 %v5271
          %v5370 = vpop.f32.mrf.mxu0
          %v5371 = vadd.f32 0.0, %v5370
          %v5372 = vpop.f32.mrf.mxu0
          %5373 = vdwg.mxu0
          %5374 = vmatprep.subr.mxu0 0.0
          %5375 = vmatpush1.msra.mxu0 %v5287
          %5376 = vmatprep.subr.mxu0 0.0
          %5377 = vmatpush1.msra.mxu0 %v5286
          %5378 = vmatprep.subr.mxu0 0.0
          %5379 = vmatpush1.msra.mxu0 %v5285
          %5380 = vmatprep.subr.mxu0 0.0
          %5381 = vmatpush1.msra.mxu0 %v5284
          %5382 = vmatprep.subr.mxu0 0.0
          %5383 = vmatpush1.msra.mxu0 %v5283
          %5384 = vmatprep.subr.mxu0 0.0
          %5385 = vmatpush1.msra.mxu0 %v5282
          %5386 = vmatprep.subr.mxu0 0.0
          %5387 = vmatpush1.msra.mxu0 %v5281
          %5388 = vmatprep.subr.mxu0 0.0
          %5389 = vmatpush1.msra.mxu0 %v5280
          %5390 = vmatprep.subr.mxu0 0.0
          %5391 = vmatpush1.msra.mxu0 %v5279
          %5392 = vmatprep.subr.mxu0 0.0
          %5393 = vmatpush1.msra.mxu0 %v5278
          %5394 = vmatprep.subr.mxu0 0.0
          %5395 = vmatpush1.msra.mxu0 %v5277
          %5396 = vmatprep.subr.mxu0 0.0
          %5397 = vmatpush1.msra.mxu0 %v5276
          %5398 = vmatprep.subr.mxu0 0.0
          %5399 = vmatpush1.msra.mxu0 %v5275
          %5400 = vmatprep.subr.mxu0 0.0
          %5401 = vmatpush1.msra.mxu0 %v5274
          %5402 = vmatprep.subr.mxu0 0.0
          %5403 = vmatpush1.msra.mxu0 %v5273
          %5404 = vmatprep.subr.mxu0 0.0
          %5405 = vmatpush1.msra.mxu0 %v5272
          %5406 = vmatprep.subr.mxu0 0.0
          %5407 = vmatpush2.msra.mxu0 0.0
          %5408 = vmatprep.subr.mxu0 0.0
          %5409 = vmatpush2.msra.mxu0 0.0
          %5410 = vmatprep.subr.mxu0 0.0
          %5411 = vmatpush2.msra.mxu0 0.0
          %5412 = vmatprep.subr.mxu0 0.0
          %5413 = vmatpush2.msra.mxu0 0.0
          %5414 = vmatprep.subr.mxu0 0.0
          %5415 = vmatpush2.msra.mxu0 0.0
          %5416 = vmatprep.subr.mxu0 0.0
          %5417 = vmatpush2.msra.mxu0 0.0
          %5418 = vmatprep.subr.mxu0 0.0
          %5419 = vmatpush2.msra.mxu0 0.0
          %5420 = vmatprep.subr.mxu0 0.0
          %5421 = vmatpush2.msra.mxu0 0.0
          %5422 = vmatprep.subr.mxu0 0.0
          %5423 = vmatpush2.msra.mxu0 0.0
          %5424 = vmatprep.subr.mxu0 0.0
          %5425 = vmatpush2.msra.mxu0 0.0
          %5426 = vmatprep.subr.mxu0 0.0
          %5427 = vmatpush2.msra.mxu0 0.0
          %5428 = vmatprep.subr.mxu0 0.0
          %5429 = vmatpush2.msra.mxu0 0.0
          %5430 = vmatprep.subr.mxu0 0.0
          %5431 = vmatpush2.msra.mxu0 0.0
          %5432 = vmatprep.subr.mxu0 0.0
          %5433 = vmatpush2.msra.mxu0 0.0
          %5434 = vmatprep.subr.mxu0 0.0
          %5435 = vmatpush2.msra.mxu0 0.0
          %5436 = vmatprep.subr.mxu0 0.0
          %5437 = vmatpush2.msra.mxu0 0.0
          %5438 = vmatprep.mubr.f32.mxu0 0.0
          %5439 = vmatmul.mubr.f32.gmra.mxu0 %v5270
          %v5440 = vpop.f32.mrf.mxu0
          %v5441 = vadd.f32 %v5371, %v5440
          %v5442 = vpop.f32.mrf.mxu0
          %5443 = vdwg.mxu0
          %v5444 = vld [vmem:[#allocation17] sm:$0x1]
          %v5446 = vlaneseq
          %v5447 = vshrl.u32 %v5446, 7
          %v5448 = vsub.s32 0, %v5447
          %v5449 = vrot.slane %v5444, %v5448
          %v5451 = vadd.f32 %v5441, %v5449
          %5452 = vst [vmem:[#allocation18] sm:$0xff] %v5451
        $region108: #{tpu_custom_call.1} parent=59 // pred_fallthru
          _
        // Predicated region
        $region109: #{tpu_custom_call.1} parent=59 // pred_check
          %p5453 = pneg %p280
        $region110: #{tpu_custom_call.1} parent=59 // pred_check_branch
          %5455 = sbr.rel (%p5453) target = $region112
        $region111: #{tpu_custom_call.1} parent=59 // pred_region
          %s5457 = ssub.s32 128, 128
          %5458 = vsyncadd [#allocation7], %s5457
          %s5460 = sshll.u32 [#allocation18], 4
          %s5461 = int_to_ptr.vmem [resolvable:$true] %s5460
          %5463 = dma.vmem_to_hbm [thread:$0]  %s5461, 128, %s10, [#allocation7]
        $region112: #{tpu_custom_call.1} parent=59 // pred_fallthru
          _
        // Predicated region
        $region113: #{tpu_custom_call.1} parent=59 // pred_check
          %p5464 = pneg %p280
        $region114: #{tpu_custom_call.1} parent=59 // pred_check_branch
          %5466 = sbr.rel (%p5464) target = $region116
        $region115: #{tpu_custom_call.1} parent=59 // pred_region
          %5467 = dma.done [#allocation7], 128
        $region116: #{tpu_custom_call.1} parent=59 // pred_fallthru
          _
      $region60: #{tpu_custom_call.1} parent=5 // pred_fallthru
        _
      %p5468 = scmp.le.s32.totalorder 2, %s20
      // Predicated region
      $region117: #{tpu_custom_call.1} parent=5 // pred_check
        %p5469 = pneg %p5468
      $region118: #{tpu_custom_call.1} parent=5 // pred_check_branch
        %5471 = sbr.rel (%p5469) target = $region120
      $region119: #{tpu_custom_call.1} parent=5 // pred_region
        %s5472 = ssub.s32 %s20, 2
      $region120: #{tpu_custom_call.1} parent=5 // pred_fallthru
        _
    $region6: #{tpu_custom_call.1} parent=1 // loop_footer
      %s24 = sadd.s32 1, %s20
    $region7: #{tpu_custom_call.1} parent=1 // loop_footer_branch
      %19 = sbr.rel target = $region3
    $region8: #{tpu_custom_call.1} parent=1 // loop_exit
      _
    %5473 = vsyncpa [#allocation6], 1
    %s5474 = scalar_lea.sflag [#allocation6], 1
    %5475 = vsyncpa %s5474, 1
    %5476 = vsyncpa [#allocation9], 1
    %5477 = vsyncpa [#allocation16], 1
    %5478 = vsyncpa [#allocation7], 1
    %s5479 = scalar_lea.sflag [#allocation7], 1
    %5480 = vsyncpa %s5479, 1

</llo_original>
